<compile_context>
chip_gen: v7x
topology: tpu7x:2x2x1
jax: 0.10.0
libtpu: 0.0.40
codegen_flags: <defaults>
</compile_context>

<pallas_src>
import functools
import math

import jax
import jax.numpy as jnp
from jax.experimental import pallas as pl
from jax.experimental.pallas import tpu as pltpu


_TAPS = tuple((ky, kx) for ky in range(3) for kx in range(3))
_LANE = 128      # pad channel dims to a multiple of the 128-lane vreg width
_W_OFF = 8       # sublane-aligned interior offset of the conv1->conv2 staging buffer


def _round_up(n, m):
    return ((n + m - 1) // m) * m


def _upblock_kernel(xp_ref, w1_ref, s1_ref, t1_ref, w2_ref, s2_ref, t2_ref,
                    o_ref, hpad_ref, acc_ref, *, Ho, Wo):
    """One batch element: (conv3x3 -> folded bias+BN -> ReLU) twice.

    xp_ref : (Ho+2, Wo+2, Cin_p)      upsample+concat input, zero halo, lane-padded
    w1_ref : (9, Cin_p, C_p)          conv1 taps, index = ky*3+kx
    s1/t1  : (1, C_p)                 folded conv-bias + BatchNorm scale / shift (f32)
    w2_ref : (9, C_p, C_p)            conv2 taps
    o_ref  : (Ho*Wo, C_p)             lane-dense output rows
    hpad   : (Ho+2, Wo+2*_W_OFF, C_p) f32 scratch: conv1 activation with zero halo
    acc    : (Ho*Wo, C_p)             f32 accumulator, reused by both convs
    """
    cin_p = xp_ref.shape[-1]
    cm = acc_ref.shape[-1]

    # ---- conv1: 9 shifted MXU matmuls, f32 accumulation, native-dtype operands ----
    for k, (ky, kx) in enumerate(_TAPS):
        patch = xp_ref[ky:ky + Ho, kx:kx + Wo, :].reshape(Ho * Wo, cin_p)
        contrib = jnp.dot(patch, w1_ref[k], preferred_element_type=jnp.float32)
        if k == 0:
            acc_ref[...] = contrib
        else:
            acc_ref[...] += contrib
    h = jnp.maximum(acc_ref[...] * s1_ref[...] + t1_ref[...], 0.0)   # bias+BN fold, ReLU

    # Stage conv1 activation into a zero-bordered buffer so conv2 sees its 1-pixel
    # halo. Interior starts at column _W_OFF so the store is sublane-aligned.
    hpad_ref[...] = jnp.zeros_like(hpad_ref)
    hpad_ref[1:1 + Ho, _W_OFF:_W_OFF + Wo, :] = h.reshape(Ho, Wo, cm)

    # ---- conv2 ----
    for k, (ky, kx) in enumerate(_TAPS):
        c0 = _W_OFF - 1 + kx
        patch = hpad_ref[ky:ky + Ho, c0:c0 + Wo, :].reshape(Ho * Wo, cm)
        contrib = jnp.dot(patch, w2_ref[k], preferred_element_type=jnp.float32)
        if k == 0:
            acc_ref[...] = contrib
        else:
            acc_ref[...] += contrib
    out = jnp.maximum(acc_ref[...] * s2_ref[...] + t2_ref[...], 0.0)
    o_ref[...] = out.astype(o_ref.dtype)


def _fold_conv_bn(w, b, gamma, beta, mean, var, *, cin_pad, cout_pad, eps=1e-5):
    """OIHW conv weight -> 9 (cin, cout) taps; fold bias + eval-mode BN into scale/shift."""
    cout, cin, kh, kw = w.shape
    assert (kh, kw) == (3, 3)
    inv = gamma.astype(jnp.float32) / jnp.sqrt(var.astype(jnp.float32) + eps)
    scale = inv
    shift = (b.astype(jnp.float32) - mean.astype(jnp.float32)) * inv + beta.astype(jnp.float32)
    taps = jnp.transpose(w, (2, 3, 1, 0)).reshape(9, cin, cout)      # (ky*3+kx, cin, cout)
    taps = jnp.pad(taps, ((0, 0), (0, cin_pad - cin), (0, cout_pad - cout)))
    scale = jnp.pad(scale, (0, cout_pad - cout)).reshape(1, cout_pad)
    shift = jnp.pad(shift, (0, cout_pad - cout)).reshape(1, cout_pad)
    return taps, scale, shift


def upblock_attention_pallas(x, skip_x, params, *, eps=1e-5):
    """UpBlock_attention forward (inference).

    x      : (B, Cx, H, W)     NCHW decoder feature
    skip_x : (B, Cs, 2H, 2W)   NCHW encoder skip feature
    params : [(w, b, gamma, beta, running_mean, running_var)] * 2   (nb_Conv = 2)
    returns: (B, out_channels, 2H, 2W)  NCHW
    """
    assert len(params) == 2, "only nb_Conv=2 is implemented"
    B, Cx, H, W = x.shape
    Bs, Cs, Hs, Ws = skip_x.shape
    assert (Bs, Hs, Ws) == (B, 2 * H, 2 * W)
    Ho, Wo = 2 * H, 2 * W
    Cin = Cs + Cx
    Cmid = params[0][0].shape[0]
    Cout = params[1][0].shape[0]
    assert params[0][0].shape[1] == Cin and params[1][0].shape[1] == Cmid

    cin_p = _round_up(Cin, _LANE)
    cm_p = _round_up(max(Cmid, Cout), _LANE)

    w1, s1, t1 = _fold_conv_bn(*params[0], cin_pad=cin_p, cout_pad=cm_p, eps=eps)
    w2, s2, t2 = _fold_conv_bn(*params[1], cin_pad=cm_p, cout_pad=cm_p, eps=eps)

    # Layout prep in the wrapper (pure data movement): NCHW->NHWC, nearest 2x
    # upsample, channel concat (skip first, matching torch.cat([skip_x, up], 1)),
    # lane padding, and the 1-pixel zero halo for conv1.
    xn = jnp.transpose(x, (0, 2, 3, 1))
    sn = jnp.transpose(skip_x, (0, 2, 3, 1))
    up = jnp.repeat(jnp.repeat(xn, 2, axis=1), 2, axis=2)
    cat = jnp.concatenate([sn, up], axis=-1)                          # (B, Ho, Wo, Cin)
    cat = jnp.pad(cat, ((0, 0), (0, 0), (0, 0), (0, cin_p - Cin)))
    xp = jnp.pad(cat, ((0, 0), (1, 1), (1, 1), (0, 0)))               # (B, Ho+2, Wo+2, cin_p)

    Hp, Wp = Ho + 2, Wo + 2
    M = Ho * Wo
    kernel = functools.partial(_upblock_kernel, Ho=Ho, Wo=Wo)

    out = pl.pallas_call(
        kernel,
        out_shape=jax.ShapeDtypeStruct((B, M, cm_p), x.dtype),
        grid_spec=pltpu.PrefetchScalarGridSpec(
            num_scalar_prefetch=0,
            grid=(B,),
            in_specs=[
                pl.BlockSpec((None, Hp, Wp, cin_p), lambda b: (b, 0, 0, 0)),
                # constant index_maps -> weights/scales DMA'd once, VMEM-resident
                pl.BlockSpec((9, cin_p, cm_p), lambda b: (0, 0, 0)),
                pl.BlockSpec((1, cm_p), lambda b: (0, 0)),
                pl.BlockSpec((1, cm_p), lambda b: (0, 0)),
                pl.BlockSpec((9, cm_p, cm_p), lambda b: (0, 0, 0)),
                pl.BlockSpec((1, cm_p), lambda b: (0, 0)),
                pl.BlockSpec((1, cm_p), lambda b: (0, 0)),
            ],
            out_specs=pl.BlockSpec((None, M, cm_p), lambda b: (b, 0, 0)),
            scratch_shapes=[
                pltpu.VMEM((Ho + 2, Wo + 2 * _W_OFF, cm_p), jnp.float32),
                pltpu.VMEM((M, cm_p), jnp.float32),
            ]),
        compiler_params=pltpu.CompilerParams(
            dimension_semantics=("parallel",),        # batch axis -> both v7x TCs
            vmem_limit_bytes=64 * 1024 * 1024),       # explicit; ~4 MiB actually used
    )(xp, w1, s1, t1, w2, s2, t2)

    out = out.reshape(B, Ho, Wo, cm_p)[..., :Cout]
    return jnp.transpose(out, (0, 3, 1, 2))


def make_params(key, in_channels, out_channels, dtype=jnp.float32):
    """Deterministic Conv2d + BatchNorm2d parameters for nb_Conv=2."""
    ks = jax.random.split(key, 12)
    params = []
    for i, cin in enumerate((in_channels, out_channels)):
        k = ks[6 * i:6 * (i + 1)]
        fan_in = cin * 9
        w = jax.random.normal(k[0], (out_channels, cin, 3, 3), dtype) / math.sqrt(fan_in)
        b = 0.1 * jax.random.normal(k[1], (out_channels,), dtype)
        gamma = 1.0 + 0.1 * jax.random.normal(k[2], (out_channels,), dtype)
        beta = 0.1 * jax.random.normal(k[3], (out_channels,), dtype)
        mean = 0.1 * jax.random.normal(k[4], (out_channels,), dtype)
        var = 0.5 + jnp.abs(jax.random.normal(k[5], (out_channels,), dtype))
        params.append((w, b, gamma, beta, mean, var))
    return params


def upblock_attention_ref(x, skip_x, params, eps=1e-5):
    """Pure-JAX/XLA reference (eval-mode BatchNorm)."""
    up = jnp.repeat(jnp.repeat(x, 2, axis=2), 2, axis=3)   # nearest, scale_factor=2
    h = jnp.concatenate([skip_x, up], axis=1)
    for (w, b, gamma, beta, mean, var) in params:
        h = jax.lax.conv_general_dilated(
            h, w, window_strides=(1, 1), padding=((1, 1), (1, 1)),
            dimension_numbers=("NCHW", "OIHW", "NCHW"))
        h = h + b[None, :, None, None]
        h = (h - mean[None, :, None, None]) * (gamma / jnp.sqrt(var + eps))[None, :, None, None] \
            + beta[None, :, None, None]
        h = jnp.maximum(h, 0.0)
    return h


if __name__ == "__main__":
    key = jax.random.PRNGKey(0)
    kx, ks, kp = jax.random.split(key, 3)

    B, Cx, H, W = 2, 8, 8, 8          # decoder feature (upsampled to 16x16)
    Cs = 8                            # skip channels; in_channels = Cs + Cx
    in_channels, out_channels = Cs + Cx, 8

    x = jax.random.normal(kx, (B, Cx, H, W), jnp.float32)
    skip_x = jax.random.normal(ks, (B, Cs, 2 * H, 2 * W), jnp.float32)
    params = make_params(kp, in_channels, out_channels)

    out = upblock_attention_pallas(x, skip_x, params)
    out = jax.block_until_ready(out)

    ref = upblock_attention_ref(x, skip_x, params)
    assert out.shape == (B, out_channels, 2 * H, 2 * W), out.shape
    err = float(jnp.max(jnp.abs(out - ref)))
    assert jnp.allclose(out, ref, atol=2e-2, rtol=2e-2), f"mismatch vs reference, max abs err={err}"

    print("KERNEL_OK")
</pallas_src>

<mosaic_0001>
module attributes {stable_mosaic.version = 11 : i64} {
  func.func @_upblock_kernel(%arg0: i32, %arg1: memref<1x18x18x128xf32, #tpu.memory_space<vmem>>, %arg2: memref<9x128x128xf32, #tpu.memory_space<vmem>>, %arg3: memref<1x128xf32, #tpu.memory_space<vmem>>, %arg4: memref<1x128xf32, #tpu.memory_space<vmem>>, %arg5: memref<9x128x128xf32, #tpu.memory_space<vmem>>, %arg6: memref<1x128xf32, #tpu.memory_space<vmem>>, %arg7: memref<1x128xf32, #tpu.memory_space<vmem>>, %arg8: memref<1x256x128xf32, #tpu.memory_space<vmem>>, %arg9: memref<18x32x128xf32, #tpu.memory_space<vmem>>, %arg10: memref<256x128xf32, #tpu.memory_space<vmem>>) attributes {dimension_semantics = [#tpu.dimension_semantics<parallel>], iteration_bounds = array<i64: 2>, scalar_prefetch = 0 : i64, scratch_operands = 2 : i64, tpu.core_type = #tpu.core_type<tc>, window_params = [{transform_indices = @transform_0, window_bounds = array<i64: 1, 18, 18, 128>}, {pipeline_mode = #tpu.pipeline_mode<synchronous>, transform_indices = @transform_1, window_bounds = array<i64: 9, 128, 128>}, {pipeline_mode = #tpu.pipeline_mode<synchronous>, transform_indices = @transform_2, window_bounds = array<i64: 1, 128>}, {pipeline_mode = #tpu.pipeline_mode<synchronous>, transform_indices = @transform_3, window_bounds = array<i64: 1, 128>}, {pipeline_mode = #tpu.pipeline_mode<synchronous>, transform_indices = @transform_4, window_bounds = array<i64: 9, 128, 128>}, {pipeline_mode = #tpu.pipeline_mode<synchronous>, transform_indices = @transform_5, window_bounds = array<i64: 1, 128>}, {pipeline_mode = #tpu.pipeline_mode<synchronous>, transform_indices = @transform_6, window_bounds = array<i64: 1, 128>}, {transform_indices = @transform_7, window_bounds = array<i64: 1, 256, 128>}]} {
    %c0 = arith.constant 0 : index
    %c0_0 = arith.constant 0 : index
    %c0_1 = arith.constant 0 : index
    %c0_2 = arith.constant 0 : index
    %0 = vector.load %arg1[%c0, %c0_0, %c0_1, %c0_2] : memref<1x18x18x128xf32, #tpu.memory_space<vmem>>, vector<1x16x16x128xf32>
    %1 = vector.shape_cast %0 : vector<1x16x16x128xf32> to vector<16x16x128xf32>
    %2 = vector.shape_cast %1 : vector<16x16x128xf32> to vector<256x128xf32>
    %c0_3 = arith.constant 0 : index
    %c0_4 = arith.constant 0 : index
    %c0_5 = arith.constant 0 : index
    %3 = vector.load %arg2[%c0_3, %c0_4, %c0_5] : memref<9x128x128xf32, #tpu.memory_space<vmem>>, vector<1x128x128xf32>
    %4 = vector.shape_cast %3 : vector<1x128x128xf32> to vector<128x128xf32>
    %cst = arith.constant dense<0.000000e+00> : vector<256x128xf32>
    %5 = tpu.matmul %2, %4, %cst {dimension_numbers = #tpu.dot_dimension_numbers<[1], [0], [0], [1], [0, 0, 1, 1], [], []>} : vector<256x128xf32>, vector<128x128xf32>, vector<256x128xf32> -> vector<256x128xf32>
    %c0_6 = arith.constant 0 : index
    %c0_7 = arith.constant 0 : index
    %6 = vector.load %arg10[%c0_6, %c0_7] : memref<256x128xf32, #tpu.memory_space<vmem>>, vector<256x128xf32>
    tpu.vector_store %arg10[%c0_6, %c0_7], %5 {strides = array<i32>} : memref<256x128xf32, #tpu.memory_space<vmem>>, vector<256x128xf32>,
    %c0_8 = arith.constant 0 : index
    %c0_9 = arith.constant 0 : index
    %c1 = arith.constant 1 : index
    %c0_10 = arith.constant 0 : index
    %7 = vector.load %arg1[%c0_8, %c0_9, %c1, %c0_10] : memref<1x18x18x128xf32, #tpu.memory_space<vmem>>, vector<1x16x16x128xf32>
    %8 = vector.shape_cast %7 : vector<1x16x16x128xf32> to vector<16x16x128xf32>
    %9 = vector.shape_cast %8 : vector<16x16x128xf32> to vector<256x128xf32>
    %c1_11 = arith.constant 1 : index
    %c0_12 = arith.constant 0 : index
    %c0_13 = arith.constant 0 : index
    %10 = vector.load %arg2[%c1_11, %c0_12, %c0_13] : memref<9x128x128xf32, #tpu.memory_space<vmem>>, vector<1x128x128xf32>
    %11 = vector.shape_cast %10 : vector<1x128x128xf32> to vector<128x128xf32>
    %cst_14 = arith.constant dense<0.000000e+00> : vector<256x128xf32>
    %12 = tpu.matmul %9, %11, %cst_14 {dimension_numbers = #tpu.dot_dimension_numbers<[1], [0], [0], [1], [0, 0, 1, 1], [], []>} : vector<256x128xf32>, vector<128x128xf32>, vector<256x128xf32> -> vector<256x128xf32>
    %c0_15 = arith.constant 0 : index
    %c0_16 = arith.constant 0 : index
    %13 = vector.load %arg10[%c0_15, %c0_16] : memref<256x128xf32, #tpu.memory_space<vmem>>, vector<256x128xf32>
    %14 = arith.addf %13, %12 : vector<256x128xf32>
    %c0_17 = arith.constant 0 : index
    %c0_18 = arith.constant 0 : index
    %15 = vector.load %arg10[%c0_17, %c0_18] : memref<256x128xf32, #tpu.memory_space<vmem>>, vector<256x128xf32>
    tpu.vector_store %arg10[%c0_17, %c0_18], %14 {strides = array<i32>} : memref<256x128xf32, #tpu.memory_space<vmem>>, vector<256x128xf32>,
    %c0_19 = arith.constant 0 : index
    %c0_20 = arith.constant 0 : index
    %c2 = arith.constant 2 : index
    %c0_21 = arith.constant 0 : index
    %16 = vector.load %arg1[%c0_19, %c0_20, %c2, %c0_21] : memref<1x18x18x128xf32, #tpu.memory_space<vmem>>, vector<1x16x16x128xf32>
    %17 = vector.shape_cast %16 : vector<1x16x16x128xf32> to vector<16x16x128xf32>
    %18 = vector.shape_cast %17 : vector<16x16x128xf32> to vector<256x128xf32>
    %c2_22 = arith.constant 2 : index
    %c0_23 = arith.constant 0 : index
    %c0_24 = arith.constant 0 : index
    %19 = vector.load %arg2[%c2_22, %c0_23, %c0_24] : memref<9x128x128xf32, #tpu.memory_space<vmem>>, vector<1x128x128xf32>
    %20 = vector.shape_cast %19 : vector<1x128x128xf32> to vector<128x128xf32>
    %cst_25 = arith.constant dense<0.000000e+00> : vector<256x128xf32>
    %21 = tpu.matmul %18, %20, %cst_25 {dimension_numbers = #tpu.dot_dimension_numbers<[1], [0], [0], [1], [0, 0, 1, 1], [], []>} : vector<256x128xf32>, vector<128x128xf32>, vector<256x128xf32> -> vector<256x128xf32>
    %c0_26 = arith.constant 0 : index
    %c0_27 = arith.constant 0 : index
    %22 = vector.load %arg10[%c0_26, %c0_27] : memref<256x128xf32, #tpu.memory_space<vmem>>, vector<256x128xf32>
    %23 = arith.addf %22, %21 : vector<256x128xf32>
    %c0_28 = arith.constant 0 : index
    %c0_29 = arith.constant 0 : index
    %24 = vector.load %arg10[%c0_28, %c0_29] : memref<256x128xf32, #tpu.memory_space<vmem>>, vector<256x128xf32>
    tpu.vector_store %arg10[%c0_28, %c0_29], %23 {strides = array<i32>} : memref<256x128xf32, #tpu.memory_space<vmem>>, vector<256x128xf32>,
    %c0_30 = arith.constant 0 : index
    %c1_31 = arith.constant 1 : index
    %c0_32 = arith.constant 0 : index
    %c0_33 = arith.constant 0 : index
    %25 = vector.load %arg1[%c0_30, %c1_31, %c0_32, %c0_33] : memref<1x18x18x128xf32, #tpu.memory_space<vmem>>, vector<1x16x16x128xf32>
    %26 = vector.shape_cast %25 : vector<1x16x16x128xf32> to vector<16x16x128xf32>
    %27 = vector.shape_cast %26 : vector<16x16x128xf32> to vector<256x128xf32>
    %c3 = arith.constant 3 : index
    %c0_34 = arith.constant 0 : index
    %c0_35 = arith.constant 0 : index
    %28 = vector.load %arg2[%c3, %c0_34, %c0_35] : memref<9x128x128xf32, #tpu.memory_space<vmem>>, vector<1x128x128xf32>
    %29 = vector.shape_cast %28 : vector<1x128x128xf32> to vector<128x128xf32>
    %cst_36 = arith.constant dense<0.000000e+00> : vector<256x128xf32>
    %30 = tpu.matmul %27, %29, %cst_36 {dimension_numbers = #tpu.dot_dimension_numbers<[1], [0], [0], [1], [0, 0, 1, 1], [], []>} : vector<256x128xf32>, vector<128x128xf32>, vector<256x128xf32> -> vector<256x128xf32>
    %c0_37 = arith.constant 0 : index
    %c0_38 = arith.constant 0 : index
    %31 = vector.load %arg10[%c0_37, %c0_38] : memref<256x128xf32, #tpu.memory_space<vmem>>, vector<256x128xf32>
    %32 = arith.addf %31, %30 : vector<256x128xf32>
    %c0_39 = arith.constant 0 : index
    %c0_40 = arith.constant 0 : index
    %33 = vector.load %arg10[%c0_39, %c0_40] : memref<256x128xf32, #tpu.memory_space<vmem>>, vector<256x128xf32>
    tpu.vector_store %arg10[%c0_39, %c0_40], %32 {strides = array<i32>} : memref<256x128xf32, #tpu.memory_space<vmem>>, vector<256x128xf32>,
    %c0_41 = arith.constant 0 : index
    %c1_42 = arith.constant 1 : index
    %c1_43 = arith.constant 1 : index
    %c0_44 = arith.constant 0 : index
    %34 = vector.load %arg1[%c0_41, %c1_42, %c1_43, %c0_44] : memref<1x18x18x128xf32, #tpu.memory_space<vmem>>, vector<1x16x16x128xf32>
    %35 = vector.shape_cast %34 : vector<1x16x16x128xf32> to vector<16x16x128xf32>
    %36 = vector.shape_cast %35 : vector<16x16x128xf32> to vector<256x128xf32>
    %c4 = arith.constant 4 : index
    %c0_45 = arith.constant 0 : index
    %c0_46 = arith.constant 0 : index
    %37 = vector.load %arg2[%c4, %c0_45, %c0_46] : memref<9x128x128xf32, #tpu.memory_space<vmem>>, vector<1x128x128xf32>
    %38 = vector.shape_cast %37 : vector<1x128x128xf32> to vector<128x128xf32>
    %cst_47 = arith.constant dense<0.000000e+00> : vector<256x128xf32>
    %39 = tpu.matmul %36, %38, %cst_47 {dimension_numbers = #tpu.dot_dimension_numbers<[1], [0], [0], [1], [0, 0, 1, 1], [], []>} : vector<256x128xf32>, vector<128x128xf32>, vector<256x128xf32> -> vector<256x128xf32>
    %c0_48 = arith.constant 0 : index
    %c0_49 = arith.constant 0 : index
    %40 = vector.load %arg10[%c0_48, %c0_49] : memref<256x128xf32, #tpu.memory_space<vmem>>, vector<256x128xf32>
    %41 = arith.addf %40, %39 : vector<256x128xf32>
    %c0_50 = arith.constant 0 : index
    %c0_51 = arith.constant 0 : index
    %42 = vector.load %arg10[%c0_50, %c0_51] : memref<256x128xf32, #tpu.memory_space<vmem>>, vector<256x128xf32>
    tpu.vector_store %arg10[%c0_50, %c0_51], %41 {strides = array<i32>} : memref<256x128xf32, #tpu.memory_space<vmem>>, vector<256x128xf32>,
    %c0_52 = arith.constant 0 : index
    %c1_53 = arith.constant 1 : index
    %c2_54 = arith.constant 2 : index
    %c0_55 = arith.constant 0 : index
    %43 = vector.load %arg1[%c0_52, %c1_53, %c2_54, %c0_55] : memref<1x18x18x128xf32, #tpu.memory_space<vmem>>, vector<1x16x16x128xf32>
    %44 = vector.shape_cast %43 : vector<1x16x16x128xf32> to vector<16x16x128xf32>
    %45 = vector.shape_cast %44 : vector<16x16x128xf32> to vector<256x128xf32>
    %c5 = arith.constant 5 : index
    %c0_56 = arith.constant 0 : index
    %c0_57 = arith.constant 0 : index
    %46 = vector.load %arg2[%c5, %c0_56, %c0_57] : memref<9x128x128xf32, #tpu.memory_space<vmem>>, vector<1x128x128xf32>
    %47 = vector.shape_cast %46 : vector<1x128x128xf32> to vector<128x128xf32>
    %cst_58 = arith.constant dense<0.000000e+00> : vector<256x128xf32>
    %48 = tpu.matmul %45, %47, %cst_58 {dimension_numbers = #tpu.dot_dimension_numbers<[1], [0], [0], [1], [0, 0, 1, 1], [], []>} : vector<256x128xf32>, vector<128x128xf32>, vector<256x128xf32> -> vector<256x128xf32>
    %c0_59 = arith.constant 0 : index
    %c0_60 = arith.constant 0 : index
    %49 = vector.load %arg10[%c0_59, %c0_60] : memref<256x128xf32, #tpu.memory_space<vmem>>, vector<256x128xf32>
    %50 = arith.addf %49, %48 : vector<256x128xf32>
    %c0_61 = arith.constant 0 : index
    %c0_62 = arith.constant 0 : index
    %51 = vector.load %arg10[%c0_61, %c0_62] : memref<256x128xf32, #tpu.memory_space<vmem>>, vector<256x128xf32>
    tpu.vector_store %arg10[%c0_61, %c0_62], %50 {strides = array<i32>} : memref<256x128xf32, #tpu.memory_space<vmem>>, vector<256x128xf32>,
    %c0_63 = arith.constant 0 : index
    %c2_64 = arith.constant 2 : index
    %c0_65 = arith.constant 0 : index
    %c0_66 = arith.constant 0 : index
    %52 = vector.load %arg1[%c0_63, %c2_64, %c0_65, %c0_66] : memref<1x18x18x128xf32, #tpu.memory_space<vmem>>, vector<1x16x16x128xf32>
    %53 = vector.shape_cast %52 : vector<1x16x16x128xf32> to vector<16x16x128xf32>
    %54 = vector.shape_cast %53 : vector<16x16x128xf32> to vector<256x128xf32>
    %c6 = arith.constant 6 : index
    %c0_67 = arith.constant 0 : index
    %c0_68 = arith.constant 0 : index
    %55 = vector.load %arg2[%c6, %c0_67, %c0_68] : memref<9x128x128xf32, #tpu.memory_space<vmem>>, vector<1x128x128xf32>
    %56 = vector.shape_cast %55 : vector<1x128x128xf32> to vector<128x128xf32>
    %cst_69 = arith.constant dense<0.000000e+00> : vector<256x128xf32>
    %57 = tpu.matmul %54, %56, %cst_69 {dimension_numbers = #tpu.dot_dimension_numbers<[1], [0], [0], [1], [0, 0, 1, 1], [], []>} : vector<256x128xf32>, vector<128x128xf32>, vector<256x128xf32> -> vector<256x128xf32>
    %c0_70 = arith.constant 0 : index
    %c0_71 = arith.constant 0 : index
    %58 = vector.load %arg10[%c0_70, %c0_71] : memref<256x128xf32, #tpu.memory_space<vmem>>, vector<256x128xf32>
    %59 = arith.addf %58, %57 : vector<256x128xf32>
    %c0_72 = arith.constant 0 : index
    %c0_73 = arith.constant 0 : index
    %60 = vector.load %arg10[%c0_72, %c0_73] : memref<256x128xf32, #tpu.memory_space<vmem>>, vector<256x128xf32>
    tpu.vector_store %arg10[%c0_72, %c0_73], %59 {strides = array<i32>} : memref<256x128xf32, #tpu.memory_space<vmem>>, vector<256x128xf32>,
    %c0_74 = arith.constant 0 : index
    %c2_75 = arith.constant 2 : index
    %c1_76 = arith.constant 1 : index
    %c0_77 = arith.constant 0 : index
    %61 = vector.load %arg1[%c0_74, %c2_75, %c1_76, %c0_77] : memref<1x18x18x128xf32, #tpu.memory_space<vmem>>, vector<1x16x16x128xf32>
    %62 = vector.shape_cast %61 : vector<1x16x16x128xf32> to vector<16x16x128xf32>
    %63 = vector.shape_cast %62 : vector<16x16x128xf32> to vector<256x128xf32>
    %c7 = arith.constant 7 : index
    %c0_78 = arith.constant 0 : index
    %c0_79 = arith.constant 0 : index
    %64 = vector.load %arg2[%c7, %c0_78, %c0_79] : memref<9x128x128xf32, #tpu.memory_space<vmem>>, vector<1x128x128xf32>
    %65 = vector.shape_cast %64 : vector<1x128x128xf32> to vector<128x128xf32>
    %cst_80 = arith.constant dense<0.000000e+00> : vector<256x128xf32>
    %66 = tpu.matmul %63, %65, %cst_80 {dimension_numbers = #tpu.dot_dimension_numbers<[1], [0], [0], [1], [0, 0, 1, 1], [], []>} : vector<256x128xf32>, vector<128x128xf32>, vector<256x128xf32> -> vector<256x128xf32>
    %c0_81 = arith.constant 0 : index
    %c0_82 = arith.constant 0 : index
    %67 = vector.load %arg10[%c0_81, %c0_82] : memref<256x128xf32, #tpu.memory_space<vmem>>, vector<256x128xf32>
    %68 = arith.addf %67, %66 : vector<256x128xf32>
    %c0_83 = arith.constant 0 : index
    %c0_84 = arith.constant 0 : index
    %69 = vector.load %arg10[%c0_83, %c0_84] : memref<256x128xf32, #tpu.memory_space<vmem>>, vector<256x128xf32>
    tpu.vector_store %arg10[%c0_83, %c0_84], %68 {strides = array<i32>} : memref<256x128xf32, #tpu.memory_space<vmem>>, vector<256x128xf32>,
    %c0_85 = arith.constant 0 : index
    %c2_86 = arith.constant 2 : index
    %c2_87 = arith.constant 2 : index
    %c0_88 = arith.constant 0 : index
    %70 = vector.load %arg1[%c0_85, %c2_86, %c2_87, %c0_88] : memref<1x18x18x128xf32, #tpu.memory_space<vmem>>, vector<1x16x16x128xf32>
    %71 = vector.shape_cast %70 : vector<1x16x16x128xf32> to vector<16x16x128xf32>
    %72 = vector.shape_cast %71 : vector<16x16x128xf32> to vector<256x128xf32>
    %c8 = arith.constant 8 : index
    %c0_89 = arith.constant 0 : index
    %c0_90 = arith.constant 0 : index
    %73 = vector.load %arg2[%c8, %c0_89, %c0_90] : memref<9x128x128xf32, #tpu.memory_space<vmem>>, vector<1x128x128xf32>
    %74 = vector.shape_cast %73 : vector<1x128x128xf32> to vector<128x128xf32>
    %cst_91 = arith.constant dense<0.000000e+00> : vector<256x128xf32>
    %75 = tpu.matmul %72, %74, %cst_91 {dimension_numbers = #tpu.dot_dimension_numbers<[1], [0], [0], [1], [0, 0, 1, 1], [], []>} : vector<256x128xf32>, vector<128x128xf32>, vector<256x128xf32> -> vector<256x128xf32>
    %c0_92 = arith.constant 0 : index
    %c0_93 = arith.constant 0 : index
    %76 = vector.load %arg10[%c0_92, %c0_93] : memref<256x128xf32, #tpu.memory_space<vmem>>, vector<256x128xf32>
    %77 = arith.addf %76, %75 : vector<256x128xf32>
    %c0_94 = arith.constant 0 : index
    %c0_95 = arith.constant 0 : index
    %78 = vector.load %arg10[%c0_94, %c0_95] : memref<256x128xf32, #tpu.memory_space<vmem>>, vector<256x128xf32>
    tpu.vector_store %arg10[%c0_94, %c0_95], %77 {strides = array<i32>} : memref<256x128xf32, #tpu.memory_space<vmem>>, vector<256x128xf32>,
    %c0_96 = arith.constant 0 : index
    %c0_97 = arith.constant 0 : index
    %79 = vector.load %arg10[%c0_96, %c0_97] : memref<256x128xf32, #tpu.memory_space<vmem>>, vector<256x128xf32>
    %c0_98 = arith.constant 0 : index
    %c0_99 = arith.constant 0 : index
    %80 = vector.load %arg3[%c0_98, %c0_99] : memref<1x128xf32, #tpu.memory_space<vmem>>, vector<1x128xf32>
    %81 = vector.broadcast %80 : vector<1x128xf32> to vector<256x128xf32>
    %82 = arith.mulf %79, %81 : vector<256x128xf32>
    %c0_100 = arith.constant 0 : index
    %c0_101 = arith.constant 0 : index
    %83 = vector.load %arg4[%c0_100, %c0_101] : memref<1x128xf32, #tpu.memory_space<vmem>>, vector<1x128xf32>
    %84 = vector.broadcast %83 : vector<1x128xf32> to vector<256x128xf32>
    %85 = arith.addf %82, %84 : vector<256x128xf32>
    %cst_102 = arith.constant 0.000000e+00 : f32
    %86 = vector.broadcast %cst_102 : f32 to vector<256x128xf32>
    %87 = arith.maximumf %85, %86 : vector<256x128xf32>
    %cst_103 = arith.constant 0.000000e+00 : f32
    %88 = vector.broadcast %cst_103 : f32 to vector<18x32x128xf32>
    %c0_104 = arith.constant 0 : index
    %c0_105 = arith.constant 0 : index
    %c0_106 = arith.constant 0 : index
    %89 = vector.load %arg9[%c0_104, %c0_105, %c0_106] : memref<18x32x128xf32, #tpu.memory_space<vmem>>, vector<18x32x128xf32>
    tpu.vector_store %arg9[%c0_104, %c0_105, %c0_106], %88 {strides = array<i32>} : memref<18x32x128xf32, #tpu.memory_space<vmem>>, vector<18x32x128xf32>,
    %90 = vector.shape_cast %87 : vector<256x128xf32> to vector<16x16x128xf32>
    %c1_107 = arith.constant 1 : index
    %c8_108 = arith.constant 8 : index
    %c0_109 = arith.constant 0 : index
    %91 = vector.load %arg9[%c1_107, %c8_108, %c0_109] : memref<18x32x128xf32, #tpu.memory_space<vmem>>, vector<16x16x128xf32>
    tpu.vector_store %arg9[%c1_107, %c8_108, %c0_109], %90 {strides = array<i32>} : memref<18x32x128xf32, #tpu.memory_space<vmem>>, vector<16x16x128xf32>,
    %c0_110 = arith.constant 0 : index
    %c7_111 = arith.constant 7 : index
    %c0_112 = arith.constant 0 : index
    %92 = vector.load %arg9[%c0_110, %c7_111, %c0_112] : memref<18x32x128xf32, #tpu.memory_space<vmem>>, vector<16x16x128xf32>
    %93 = vector.shape_cast %92 : vector<16x16x128xf32> to vector<256x128xf32>
    %c0_113 = arith.constant 0 : index
    %c0_114 = arith.constant 0 : index
    %c0_115 = arith.constant 0 : index
    %94 = vector.load %arg5[%c0_113, %c0_114, %c0_115] : memref<9x128x128xf32, #tpu.memory_space<vmem>>, vector<1x128x128xf32>
    %95 = vector.shape_cast %94 : vector<1x128x128xf32> to vector<128x128xf32>
    %cst_116 = arith.constant dense<0.000000e+00> : vector<256x128xf32>
    %96 = tpu.matmul %93, %95, %cst_116 {dimension_numbers = #tpu.dot_dimension_numbers<[1], [0], [0], [1], [0, 0, 1, 1], [], []>} : vector<256x128xf32>, vector<128x128xf32>, vector<256x128xf32> -> vector<256x128xf32>
    %c0_117 = arith.constant 0 : index
    %c0_118 = arith.constant 0 : index
    %97 = vector.load %arg10[%c0_117, %c0_118] : memref<256x128xf32, #tpu.memory_space<vmem>>, vector<256x128xf32>
    tpu.vector_store %arg10[%c0_117, %c0_118], %96 {strides = array<i32>} : memref<256x128xf32, #tpu.memory_space<vmem>>, vector<256x128xf32>,
    %c0_119 = arith.constant 0 : index
    %c8_120 = arith.constant 8 : index
    %c0_121 = arith.constant 0 : index
    %98 = vector.load %arg9[%c0_119, %c8_120, %c0_121] : memref<18x32x128xf32, #tpu.memory_space<vmem>>, vector<16x16x128xf32>
    %99 = vector.shape_cast %98 : vector<16x16x128xf32> to vector<256x128xf32>
    %c1_122 = arith.constant 1 : index
    %c0_123 = arith.constant 0 : index
    %c0_124 = arith.constant 0 : index
    %100 = vector.load %arg5[%c1_122, %c0_123, %c0_124] : memref<9x128x128xf32, #tpu.memory_space<vmem>>, vector<1x128x128xf32>
    %101 = vector.shape_cast %100 : vector<1x128x128xf32> to vector<128x128xf32>
    %cst_125 = arith.constant dense<0.000000e+00> : vector<256x128xf32>
    %102 = tpu.matmul %99, %101, %cst_125 {dimension_numbers = #tpu.dot_dimension_numbers<[1], [0], [0], [1], [0, 0, 1, 1], [], []>} : vector<256x128xf32>, vector<128x128xf32>, vector<256x128xf32> -> vector<256x128xf32>
    %c0_126 = arith.constant 0 : index
    %c0_127 = arith.constant 0 : index
    %103 = vector.load %arg10[%c0_126, %c0_127] : memref<256x128xf32, #tpu.memory_space<vmem>>, vector<256x128xf32>
    %104 = arith.addf %103, %102 : vector<256x128xf32>
    %c0_128 = arith.constant 0 : index
    %c0_129 = arith.constant 0 : index
    %105 = vector.load %arg10[%c0_128, %c0_129] : memref<256x128xf32, #tpu.memory_space<vmem>>, vector<256x128xf32>
    tpu.vector_store %arg10[%c0_128, %c0_129], %104 {strides = array<i32>} : memref<256x128xf32, #tpu.memory_space<vmem>>, vector<256x128xf32>,
    %c0_130 = arith.constant 0 : index
    %c9 = arith.constant 9 : index
    %c0_131 = arith.constant 0 : index
    %106 = vector.load %arg9[%c0_130, %c9, %c0_131] : memref<18x32x128xf32, #tpu.memory_space<vmem>>, vector<16x16x128xf32>
    %107 = vector.shape_cast %106 : vector<16x16x128xf32> to vector<256x128xf32>
    %c2_132 = arith.constant 2 : index
    %c0_133 = arith.constant 0 : index
    %c0_134 = arith.constant 0 : index
    %108 = vector.load %arg5[%c2_132, %c0_133, %c0_134] : memref<9x128x128xf32, #tpu.memory_space<vmem>>, vector<1x128x128xf32>
    %109 = vector.shape_cast %108 : vector<1x128x128xf32> to vector<128x128xf32>
    %cst_135 = arith.constant dense<0.000000e+00> : vector<256x128xf32>
    %110 = tpu.matmul %107, %109, %cst_135 {dimension_numbers = #tpu.dot_dimension_numbers<[1], [0], [0], [1], [0, 0, 1, 1], [], []>} : vector<256x128xf32>, vector<128x128xf32>, vector<256x128xf32> -> vector<256x128xf32>
    %c0_136 = arith.constant 0 : index
    %c0_137 = arith.constant 0 : index
    %111 = vector.load %arg10[%c0_136, %c0_137] : memref<256x128xf32, #tpu.memory_space<vmem>>, vector<256x128xf32>
    %112 = arith.addf %111, %110 : vector<256x128xf32>
    %c0_138 = arith.constant 0 : index
    %c0_139 = arith.constant 0 : index
    %113 = vector.load %arg10[%c0_138, %c0_139] : memref<256x128xf32, #tpu.memory_space<vmem>>, vector<256x128xf32>
    tpu.vector_store %arg10[%c0_138, %c0_139], %112 {strides = array<i32>} : memref<256x128xf32, #tpu.memory_space<vmem>>, vector<256x128xf32>,
    %c1_140 = arith.constant 1 : index
    %c7_141 = arith.constant 7 : index
    %c0_142 = arith.constant 0 : index
    %114 = vector.load %arg9[%c1_140, %c7_141, %c0_142] : memref<18x32x128xf32, #tpu.memory_space<vmem>>, vector<16x16x128xf32>
    %115 = vector.shape_cast %114 : vector<16x16x128xf32> to vector<256x128xf32>
    %c3_143 = arith.constant 3 : index
    %c0_144 = arith.constant 0 : index
    %c0_145 = arith.constant 0 : index
    %116 = vector.load %arg5[%c3_143, %c0_144, %c0_145] : memref<9x128x128xf32, #tpu.memory_space<vmem>>, vector<1x128x128xf32>
    %117 = vector.shape_cast %116 : vector<1x128x128xf32> to vector<128x128xf32>
    %cst_146 = arith.constant dense<0.000000e+00> : vector<256x128xf32>
    %118 = tpu.matmul %115, %117, %cst_146 {dimension_numbers = #tpu.dot_dimension_numbers<[1], [0], [0], [1], [0, 0, 1, 1], [], []>} : vector<256x128xf32>, vector<128x128xf32>, vector<256x128xf32> -> vector<256x128xf32>
    %c0_147 = arith.constant 0 : index
    %c0_148 = arith.constant 0 : index
    %119 = vector.load %arg10[%c0_147, %c0_148] : memref<256x128xf32, #tpu.memory_space<vmem>>, vector<256x128xf32>
    %120 = arith.addf %119, %118 : vector<256x128xf32>
    %c0_149 = arith.constant 0 : index
    %c0_150 = arith.constant 0 : index
    %121 = vector.load %arg10[%c0_149, %c0_150] : memref<256x128xf32, #tpu.memory_space<vmem>>, vector<256x128xf32>
    tpu.vector_store %arg10[%c0_149, %c0_150], %120 {strides = array<i32>} : memref<256x128xf32, #tpu.memory_space<vmem>>, vector<256x128xf32>,
    %c1_151 = arith.constant 1 : index
    %c8_152 = arith.constant 8 : index
    %c0_153 = arith.constant 0 : index
    %122 = vector.load %arg9[%c1_151, %c8_152, %c0_153] : memref<18x32x128xf32, #tpu.memory_space<vmem>>, vector<16x16x128xf32>
    %123 = vector.shape_cast %122 : vector<16x16x128xf32> to vector<256x128xf32>
    %c4_154 = arith.constant 4 : index
    %c0_155 = arith.constant 0 : index
    %c0_156 = arith.constant 0 : index
    %124 = vector.load %arg5[%c4_154, %c0_155, %c0_156] : memref<9x128x128xf32, #tpu.memory_space<vmem>>, vector<1x128x128xf32>
    %125 = vector.shape_cast %124 : vector<1x128x128xf32> to vector<128x128xf32>
    %cst_157 = arith.constant dense<0.000000e+00> : vector<256x128xf32>
    %126 = tpu.matmul %123, %125, %cst_157 {dimension_numbers = #tpu.dot_dimension_numbers<[1], [0], [0], [1], [0, 0, 1, 1], [], []>} : vector<256x128xf32>, vector<128x128xf32>, vector<256x128xf32> -> vector<256x128xf32>
    %c0_158 = arith.constant 0 : index
    %c0_159 = arith.constant 0 : index
    %127 = vector.load %arg10[%c0_158, %c0_159] : memref<256x128xf32, #tpu.memory_space<vmem>>, vector<256x128xf32>
    %128 = arith.addf %127, %126 : vector<256x128xf32>
    %c0_160 = arith.constant 0 : index
    %c0_161 = arith.constant 0 : index
    %129 = vector.load %arg10[%c0_160, %c0_161] : memref<256x128xf32, #tpu.memory_space<vmem>>, vector<256x128xf32>
    tpu.vector_store %arg10[%c0_160, %c0_161], %128 {strides = array<i32>} : memref<256x128xf32, #tpu.memory_space<vmem>>, vector<256x128xf32>,
    %c1_162 = arith.constant 1 : index
    %c9_163 = arith.constant 9 : index
    %c0_164 = arith.constant 0 : index
    %130 = vector.load %arg9[%c1_162, %c9_163, %c0_164] : memref<18x32x128xf32, #tpu.memory_space<vmem>>, vector<16x16x128xf32>
    %131 = vector.shape_cast %130 : vector<16x16x128xf32> to vector<256x128xf32>
    %c5_165 = arith.constant 5 : index
    %c0_166 = arith.constant 0 : index
    %c0_167 = arith.constant 0 : index
    %132 = vector.load %arg5[%c5_165, %c0_166, %c0_167] : memref<9x128x128xf32, #tpu.memory_space<vmem>>, vector<1x128x128xf32>
    %133 = vector.shape_cast %132 : vector<1x128x128xf32> to vector<128x128xf32>
    %cst_168 = arith.constant dense<0.000000e+00> : vector<256x128xf32>
    %134 = tpu.matmul %131, %133, %cst_168 {dimension_numbers = #tpu.dot_dimension_numbers<[1], [0], [0], [1], [0, 0, 1, 1], [], []>} : vector<256x128xf32>, vector<128x128xf32>, vector<256x128xf32> -> vector<256x128xf32>
    %c0_169 = arith.constant 0 : index
    %c0_170 = arith.constant 0 : index
    %135 = vector.load %arg10[%c0_169, %c0_170] : memref<256x128xf32, #tpu.memory_space<vmem>>, vector<256x128xf32>
    %136 = arith.addf %135, %134 : vector<256x128xf32>
    %c0_171 = arith.constant 0 : index
    %c0_172 = arith.constant 0 : index
    %137 = vector.load %arg10[%c0_171, %c0_172] : memref<256x128xf32, #tpu.memory_space<vmem>>, vector<256x128xf32>
    tpu.vector_store %arg10[%c0_171, %c0_172], %136 {strides = array<i32>} : memref<256x128xf32, #tpu.memory_space<vmem>>, vector<256x128xf32>,
    %c2_173 = arith.constant 2 : index
    %c7_174 = arith.constant 7 : index
    %c0_175 = arith.constant 0 : index
    %138 = vector.load %arg9[%c2_173, %c7_174, %c0_175] : memref<18x32x128xf32, #tpu.memory_space<vmem>>, vector<16x16x128xf32>
    %139 = vector.shape_cast %138 : vector<16x16x128xf32> to vector<256x128xf32>
    %c6_176 = arith.constant 6 : index
    %c0_177 = arith.constant 0 : index
    %c0_178 = arith.constant 0 : index
    %140 = vector.load %arg5[%c6_176, %c0_177, %c0_178] : memref<9x128x128xf32, #tpu.memory_space<vmem>>, vector<1x128x128xf32>
    %141 = vector.shape_cast %140 : vector<1x128x128xf32> to vector<128x128xf32>
    %cst_179 = arith.constant dense<0.000000e+00> : vector<256x128xf32>
    %142 = tpu.matmul %139, %141, %cst_179 {dimension_numbers = #tpu.dot_dimension_numbers<[1], [0], [0], [1], [0, 0, 1, 1], [], []>} : vector<256x128xf32>, vector<128x128xf32>, vector<256x128xf32> -> vector<256x128xf32>
    %c0_180 = arith.constant 0 : index
    %c0_181 = arith.constant 0 : index
    %143 = vector.load %arg10[%c0_180, %c0_181] : memref<256x128xf32, #tpu.memory_space<vmem>>, vector<256x128xf32>
    %144 = arith.addf %143, %142 : vector<256x128xf32>
    %c0_182 = arith.constant 0 : index
    %c0_183 = arith.constant 0 : index
    %145 = vector.load %arg10[%c0_182, %c0_183] : memref<256x128xf32, #tpu.memory_space<vmem>>, vector<256x128xf32>
    tpu.vector_store %arg10[%c0_182, %c0_183], %144 {strides = array<i32>} : memref<256x128xf32, #tpu.memory_space<vmem>>, vector<256x128xf32>,
    %c2_184 = arith.constant 2 : index
    %c8_185 = arith.constant 8 : index
    %c0_186 = arith.constant 0 : index
    %146 = vector.load %arg9[%c2_184, %c8_185, %c0_186] : memref<18x32x128xf32, #tpu.memory_space<vmem>>, vector<16x16x128xf32>
    %147 = vector.shape_cast %146 : vector<16x16x128xf32> to vector<256x128xf32>
    %c7_187 = arith.constant 7 : index
    %c0_188 = arith.constant 0 : index
    %c0_189 = arith.constant 0 : index
    %148 = vector.load %arg5[%c7_187, %c0_188, %c0_189] : memref<9x128x128xf32, #tpu.memory_space<vmem>>, vector<1x128x128xf32>
    %149 = vector.shape_cast %148 : vector<1x128x128xf32> to vector<128x128xf32>
    %cst_190 = arith.constant dense<0.000000e+00> : vector<256x128xf32>
    %150 = tpu.matmul %147, %149, %cst_190 {dimension_numbers = #tpu.dot_dimension_numbers<[1], [0], [0], [1], [0, 0, 1, 1], [], []>} : vector<256x128xf32>, vector<128x128xf32>, vector<256x128xf32> -> vector<256x128xf32>
    %c0_191 = arith.constant 0 : index
    %c0_192 = arith.constant 0 : index
    %151 = vector.load %arg10[%c0_191, %c0_192] : memref<256x128xf32, #tpu.memory_space<vmem>>, vector<256x128xf32>
    %152 = arith.addf %151, %150 : vector<256x128xf32>
    %c0_193 = arith.constant 0 : index
    %c0_194 = arith.constant 0 : index
    %153 = vector.load %arg10[%c0_193, %c0_194] : memref<256x128xf32, #tpu.memory_space<vmem>>, vector<256x128xf32>
    tpu.vector_store %arg10[%c0_193, %c0_194], %152 {strides = array<i32>} : memref<256x128xf32, #tpu.memory_space<vmem>>, vector<256x128xf32>,
    %c2_195 = arith.constant 2 : index
    %c9_196 = arith.constant 9 : index
    %c0_197 = arith.constant 0 : index
    %154 = vector.load %arg9[%c2_195, %c9_196, %c0_197] : memref<18x32x128xf32, #tpu.memory_space<vmem>>, vector<16x16x128xf32>
    %155 = vector.shape_cast %154 : vector<16x16x128xf32> to vector<256x128xf32>
    %c8_198 = arith.constant 8 : index
    %c0_199 = arith.constant 0 : index
    %c0_200 = arith.constant 0 : index
    %156 = vector.load %arg5[%c8_198, %c0_199, %c0_200] : memref<9x128x128xf32, #tpu.memory_space<vmem>>, vector<1x128x128xf32>
    %157 = vector.shape_cast %156 : vector<1x128x128xf32> to vector<128x128xf32>
    %cst_201 = arith.constant dense<0.000000e+00> : vector<256x128xf32>
    %158 = tpu.matmul %155, %157, %cst_201 {dimension_numbers = #tpu.dot_dimension_numbers<[1], [0], [0], [1], [0, 0, 1, 1], [], []>} : vector<256x128xf32>, vector<128x128xf32>, vector<256x128xf32> -> vector<256x128xf32>
    %c0_202 = arith.constant 0 : index
    %c0_203 = arith.constant 0 : index
    %159 = vector.load %arg10[%c0_202, %c0_203] : memref<256x128xf32, #tpu.memory_space<vmem>>, vector<256x128xf32>
    %160 = arith.addf %159, %158 : vector<256x128xf32>
    %c0_204 = arith.constant 0 : index
    %c0_205 = arith.constant 0 : index
    %161 = vector.load %arg10[%c0_204, %c0_205] : memref<256x128xf32, #tpu.memory_space<vmem>>, vector<256x128xf32>
    tpu.vector_store %arg10[%c0_204, %c0_205], %160 {strides = array<i32>} : memref<256x128xf32, #tpu.memory_space<vmem>>, vector<256x128xf32>,
    %c0_206 = arith.constant 0 : index
    %c0_207 = arith.constant 0 : index
    %162 = vector.load %arg10[%c0_206, %c0_207] : memref<256x128xf32, #tpu.memory_space<vmem>>, vector<256x128xf32>
    %c0_208 = arith.constant 0 : index
    %c0_209 = arith.constant 0 : index
    %163 = vector.load %arg6[%c0_208, %c0_209] : memref<1x128xf32, #tpu.memory_space<vmem>>, vector<1x128xf32>
    %164 = vector.broadcast %163 : vector<1x128xf32> to vector<256x128xf32>
    %165 = arith.mulf %162, %164 : vector<256x128xf32>
    %c0_210 = arith.constant 0 : index
    %c0_211 = arith.constant 0 : index
    %166 = vector.load %arg7[%c0_210, %c0_211] : memref<1x128xf32, #tpu.memory_space<vmem>>, vector<1x128xf32>
    %167 = vector.broadcast %166 : vector<1x128xf32> to vector<256x128xf32>
    %168 = arith.addf %165, %167 : vector<256x128xf32>
    %cst_212 = arith.constant 0.000000e+00 : f32
    %169 = vector.broadcast %cst_212 : f32 to vector<256x128xf32>
    %170 = arith.maximumf %168, %169 : vector<256x128xf32>
    %c0_213 = arith.constant 0 : index
    %c0_214 = arith.constant 0 : index
    %c0_215 = arith.constant 0 : index
    %171 = vector.load %arg8[%c0_213, %c0_214, %c0_215] : memref<1x256x128xf32, #tpu.memory_space<vmem>>, vector<1x256x128xf32>
    %172 = vector.shape_cast %171 : vector<1x256x128xf32> to vector<256x128xf32>
    %173 = vector.shape_cast %170 : vector<256x128xf32> to vector<1x256x128xf32>
    tpu.vector_store %arg8[%c0_213, %c0_214, %c0_215], %173 {strides = array<i32>} : memref<1x256x128xf32, #tpu.memory_space<vmem>>, vector<1x256x128xf32>,
    return
  }
  func.func @transform_0(%arg0: i32) -> (i32, i32, i32, i32) {
    %c0_i32 = arith.constant 0 : i32
    %c0_i32_0 = arith.constant 0 : i32
    %c0_i32_1 = arith.constant 0 : i32
    %c0_i32_2 = arith.constant 0 : i32
    return %arg0, %c0_i32, %c0_i32_0, %c0_i32_1 : i32, i32, i32, i32
  }
  func.func @transform_1(%arg0: i32) -> (i32, i32, i32) {
    %c0_i32 = arith.constant 0 : i32
    %c0_i32_0 = arith.constant 0 : i32
    %c0_i32_1 = arith.constant 0 : i32
    %c0_i32_2 = arith.constant 0 : i32
    return %c0_i32, %c0_i32_0, %c0_i32_1 : i32, i32, i32
  }
  func.func @transform_2(%arg0: i32) -> (i32, i32) {
    %c0_i32 = arith.constant 0 : i32
    %c0_i32_0 = arith.constant 0 : i32
    %c0_i32_1 = arith.constant 0 : i32
    return %c0_i32, %c0_i32_0 : i32, i32
  }
  func.func @transform_3(%arg0: i32) -> (i32, i32) {
    %c0_i32 = arith.constant 0 : i32
    %c0_i32_0 = arith.constant 0 : i32
    %c0_i32_1 = arith.constant 0 : i32
    return %c0_i32, %c0_i32_0 : i32, i32
  }
  func.func @transform_4(%arg0: i32) -> (i32, i32, i32) {
    %c0_i32 = arith.constant 0 : i32
    %c0_i32_0 = arith.constant 0 : i32
    %c0_i32_1 = arith.constant 0 : i32
    %c0_i32_2 = arith.constant 0 : i32
    return %c0_i32, %c0_i32_0, %c0_i32_1 : i32, i32, i32
  }
  func.func @transform_5(%arg0: i32) -> (i32, i32) {
    %c0_i32 = arith.constant 0 : i32
    %c0_i32_0 = arith.constant 0 : i32
    %c0_i32_1 = arith.constant 0 : i32
    return %c0_i32, %c0_i32_0 : i32, i32
  }
  func.func @transform_6(%arg0: i32) -> (i32, i32) {
    %c0_i32 = arith.constant 0 : i32
    %c0_i32_0 = arith.constant 0 : i32
    %c0_i32_1 = arith.constant 0 : i32
    return %c0_i32, %c0_i32_0 : i32, i32
  }
  func.func @transform_7(%arg0: i32) -> (i32, i32, i32) {
    %c0_i32 = arith.constant 0 : i32
    %c0_i32_0 = arith.constant 0 : i32
    %c0_i32_1 = arith.constant 0 : i32
    return %arg0, %c0_i32, %c0_i32_0 : i32, i32, i32
  }
}

</mosaic_0001>

<llo_original>
// kernel: tpu_custom_call.1
$region0: #{tpu_custom_call.1}
  #allocation0 [shape = 'u32[]', space=smem, size = 0x4, offset = 0x4, fixed_abs, tag = 'smem constant byte address 0x4 - core index']
  #allocation1 [shape = 'u32[144,128]{1,0:T(1,128)}', space=vmem, size = 0x12000, scoped, tag = 'internal scratch']
  #allocation2 [shape = 'f32[18,32,128]{2,1,0:T(8,128)}', space=vmem, size = 0x48000, scoped, tag = 'scratch operand']
  #allocation3 [shape = 'f32[256,128]{1,0:T(8,128)}', space=vmem, size = 0x20000, scoped, tag = 'scratch operand']
  %s0 = inlined_call_operand.hbm [shape: f32[2,18,18,128], index: 0, kind: input, shape index: {}]
  %s1 = inlined_call_operand.hbm [shape: f32[9,128,128], index: 1, kind: input, shape index: {}]
  %s2 = inlined_call_operand.hbm [shape: f32[1,128], index: 2, kind: input, shape index: {}]
  %s3 = inlined_call_operand.hbm [shape: f32[1,128], index: 3, kind: input, shape index: {}]
  %s4 = inlined_call_operand.hbm [shape: f32[9,128,128], index: 4, kind: input, shape index: {}]
  %s5 = inlined_call_operand.hbm [shape: f32[1,128], index: 5, kind: input, shape index: {}]
  %s6 = inlined_call_operand.hbm [shape: f32[1,128], index: 6, kind: input, shape index: {}]
  %s7 = inlined_call_operand.hbm [shape: f32[2,256,128], index: 7, kind: output, shape index: {}]
  %s8 = sld [smem:[#allocation0]]
  $region89: #{tpu_custom_call.1} parent=0
    _
  %s10 = ssub.s32 1, %s8
  %s11 = scalar_select 0, %s10, %s8
  $region1: #{tpu_custom_call.1} parent=0
    #allocation4 [shape = 'u8[442368]{0}', space=vmem, size = 0x6c000, scoped, tag = 'input window, operand 0']
    #allocation5 [shape = 's32[2]{0}', space=sflag, size = 0x8, scoped, tag = 'scoped memory for tpu_custom_call.1']
    #allocation6 [shape = 's32[2]{0}', space=sflag, size = 0x8, scoped, tag = 'scoped memory for tpu_custom_call.1']
    #allocation7 [shape = 'u8[589824]{0}', space=vmem, size = 0x90000, scoped, tag = 'input window, operand 1, single buffered']
    #allocation8 [shape = 's32[1]{0}', space=sflag, size = 0x4, scoped, tag = 'scoped memory for tpu_custom_call.1']
    #allocation9 [shape = 'u8[512]{0}', space=vmem, size = 0x400, scoped, tag = 'input window, operand 2, single buffered']
    #allocation10 [shape = 'u8[512]{0}', space=vmem, size = 0x400, scoped, tag = 'input window, operand 3, single buffered']
    #allocation11 [shape = 's32[1]{0}', space=sflag, size = 0x4, scoped, tag = 'scoped memory for tpu_custom_call.1']
    #allocation12 [shape = 'u8[589824]{0}', space=vmem, size = 0x90000, scoped, tag = 'input window, operand 4, single buffered']
    #allocation13 [shape = 'u8[512]{0}', space=vmem, size = 0x400, scoped, tag = 'input window, operand 5, single buffered']
    #allocation14 [shape = 's32[1]{0}', space=sflag, size = 0x4, scoped, tag = 'scoped memory for tpu_custom_call.1']
    #allocation15 [shape = 'u8[512]{0}', space=vmem, size = 0x400, scoped, tag = 'input window, operand 6, single buffered']
    #allocation16 [shape = 'u8[262144]{0}', space=vmem, size = 0x40000, scoped, tag = 'output window, operand 0']
    %12 = vsyncpa [#allocation5], 0
    %s13 = scalar_lea.sflag [#allocation5], 1
    %14 = vsyncpa %s13, 0
    %15 = vsyncpa [#allocation8], 0
    %16 = vsyncpa [#allocation11], 0
    %17 = vsyncpa [#allocation14], 0
    %18 = vsyncpa [#allocation6], 0
    %s19 = scalar_lea.sflag [#allocation6], 1
    %20 = vsyncpa %s19, 0
    loop: start=0, step=1, limit=4
    $region2: #{tpu_custom_call.1} parent=1 // loop_pre_header
      _
    $region3: #{tpu_custom_call.1} parent=1 // loop_header
      %s22 = sphi 0, %s26
      %p23 = scmp.ge.s32.totalorder %s22, 4
      %s32 = sphi 0, %s34
      %s35 = sphi 0, %s32
      %s36 = sphi 0, %s35
      %s52 = sphi 0, %s36
      %s56 = sphi 0, %s56
      %s58 = sphi 0, %s56
      %s59 = sphi 0, %s58
      %s73 = sphi 0, %s59
      %s77 = sphi 0, %s77
      %s79 = sphi 0, %s77
      %s80 = sphi 0, %s79
      %s94 = sphi 0, %s80
      %s98 = sphi 0, %s98
      %s100 = sphi 0, %s98
      %s101 = sphi 0, %s100
      %s115 = sphi 0, %s101
      %s119 = sphi 0, %s119
      %s121 = sphi 0, %s119
      %s122 = sphi 0, %s121
      %s136 = sphi 0, %s122
      %s140 = sphi 0, %s140
      %s142 = sphi 0, %s140
      %s143 = sphi 0, %s142
      %s157 = sphi 0, %s143
      %s161 = sphi 0, %s161
      %s163 = sphi 0, %s161
      %s164 = sphi 0, %s163
      %s178 = sphi 0, %s164
      %s184 = sphi 0, %s186
      %s187 = sphi 0, %s184
      %s188 = sphi 0, %s187
      %s204 = sphi 0, %s188
    $region4: #{tpu_custom_call.1} parent=1 // loop_header_branch
      %25 = sbr.rel (%p23) target = $region8
    $region5: #{tpu_custom_call.1} parent=1 // loop_body
      %s27 = ssub.s32 %s22, 1
      %s28 = ssub.s32 %s22, 2
      %s29 = sadd.s32 %s22, 1
      %s30 = ssub.s32 %s22, %s29
      %p31 = scmp.eq.s32.totalorder %s30, 0
      %s33 = sadd.s32 %s32, 1
      %s34 = scalar_select %p31, %s32, %s33
      %p37 = pneg %p31
      %p38 = scmp.eq.s32.totalorder %s22, 1
      %p39 = por %p37, %p38
      %p40 = scmp.ne.s32.totalorder %s32, %s35
      %p41 = scmp.eq.s32.totalorder %s22, 0
      %p42 = por %p40, %p41
      %p43 = scmp.ne.s32.totalorder %s32, %s35
      %p44 = scmp.eq.s32.totalorder %s27, 1
      %p45 = por %p43, %p44
      %p46 = scmp.ne.s32.totalorder %s35, %s36
      %p47 = scmp.eq.s32.totalorder %s27, 0
      %p48 = por %p46, %p47
      %p49 = scmp.ne.s32.totalorder %s35, %s36
      %p50 = scmp.eq.s32.totalorder %s28, 1
      %p51 = por %p49, %p50
      %p53 = scmp.ne.s32.totalorder %s36, %s52
      %p54 = scmp.eq.s32.totalorder %s28, 0
      %p55 = por %p53, %p54
      %s57 = sadd.s32 %s56, 1
      %p60 = scmp.eq.s32.totalorder %s22, 1
      %p61 = scmp.ne.s32.totalorder %s56, %s58
      %p62 = scmp.eq.s32.totalorder %s22, 0
      %p63 = por %p61, %p62
      %p64 = scmp.ne.s32.totalorder %s56, %s58
      %p65 = scmp.eq.s32.totalorder %s27, 1
      %p66 = por %p64, %p65
      %p67 = scmp.ne.s32.totalorder %s58, %s59
      %p68 = scmp.eq.s32.totalorder %s27, 0
      %p69 = por %p67, %p68
      %p70 = scmp.ne.s32.totalorder %s58, %s59
      %p71 = scmp.eq.s32.totalorder %s28, 1
      %p72 = por %p70, %p71
      %p74 = scmp.ne.s32.totalorder %s59, %s73
      %p75 = scmp.eq.s32.totalorder %s28, 0
      %p76 = por %p74, %p75
      %s78 = sadd.s32 %s77, 1
      %p81 = scmp.eq.s32.totalorder %s22, 1
      %p82 = scmp.ne.s32.totalorder %s77, %s79
      %p83 = scmp.eq.s32.totalorder %s22, 0
      %p84 = por %p82, %p83
      %p85 = scmp.ne.s32.totalorder %s77, %s79
      %p86 = scmp.eq.s32.totalorder %s27, 1
      %p87 = por %p85, %p86
      %p88 = scmp.ne.s32.totalorder %s79, %s80
      %p89 = scmp.eq.s32.totalorder %s27, 0
      %p90 = por %p88, %p89
      %p91 = scmp.ne.s32.totalorder %s79, %s80
      %p92 = scmp.eq.s32.totalorder %s28, 1
      %p93 = por %p91, %p92
      %p95 = scmp.ne.s32.totalorder %s80, %s94
      %p96 = scmp.eq.s32.totalorder %s28, 0
      %p97 = por %p95, %p96
      %s99 = sadd.s32 %s98, 1
      %p102 = scmp.eq.s32.totalorder %s22, 1
      %p103 = scmp.ne.s32.totalorder %s98, %s100
      %p104 = scmp.eq.s32.totalorder %s22, 0
      %p105 = por %p103, %p104
      %p106 = scmp.ne.s32.totalorder %s98, %s100
      %p107 = scmp.eq.s32.totalorder %s27, 1
      %p108 = por %p106, %p107
      %p109 = scmp.ne.s32.totalorder %s100, %s101
      %p110 = scmp.eq.s32.totalorder %s27, 0
      %p111 = por %p109, %p110
      %p112 = scmp.ne.s32.totalorder %s100, %s101
      %p113 = scmp.eq.s32.totalorder %s28, 1
      %p114 = por %p112, %p113
      %p116 = scmp.ne.s32.totalorder %s101, %s115
      %p117 = scmp.eq.s32.totalorder %s28, 0
      %p118 = por %p116, %p117
      %s120 = sadd.s32 %s119, 1
      %p123 = scmp.eq.s32.totalorder %s22, 1
      %p124 = scmp.ne.s32.totalorder %s119, %s121
      %p125 = scmp.eq.s32.totalorder %s22, 0
      %p126 = por %p124, %p125
      %p127 = scmp.ne.s32.totalorder %s119, %s121
      %p128 = scmp.eq.s32.totalorder %s27, 1
      %p129 = por %p127, %p128
      %p130 = scmp.ne.s32.totalorder %s121, %s122
      %p131 = scmp.eq.s32.totalorder %s27, 0
      %p132 = por %p130, %p131
      %p133 = scmp.ne.s32.totalorder %s121, %s122
      %p134 = scmp.eq.s32.totalorder %s28, 1
      %p135 = por %p133, %p134
      %p137 = scmp.ne.s32.totalorder %s122, %s136
      %p138 = scmp.eq.s32.totalorder %s28, 0
      %p139 = por %p137, %p138
      %s141 = sadd.s32 %s140, 1
      %p144 = scmp.eq.s32.totalorder %s22, 1
      %p145 = scmp.ne.s32.totalorder %s140, %s142
      %p146 = scmp.eq.s32.totalorder %s22, 0
      %p147 = por %p145, %p146
      %p148 = scmp.ne.s32.totalorder %s140, %s142
      %p149 = scmp.eq.s32.totalorder %s27, 1
      %p150 = por %p148, %p149
      %p151 = scmp.ne.s32.totalorder %s142, %s143
      %p152 = scmp.eq.s32.totalorder %s27, 0
      %p153 = por %p151, %p152
      %p154 = scmp.ne.s32.totalorder %s142, %s143
      %p155 = scmp.eq.s32.totalorder %s28, 1
      %p156 = por %p154, %p155
      %p158 = scmp.ne.s32.totalorder %s143, %s157
      %p159 = scmp.eq.s32.totalorder %s28, 0
      %p160 = por %p158, %p159
      %s162 = sadd.s32 %s161, 1
      %p165 = scmp.eq.s32.totalorder %s22, 1
      %p166 = scmp.ne.s32.totalorder %s161, %s163
      %p167 = scmp.eq.s32.totalorder %s22, 0
      %p168 = por %p166, %p167
      %p169 = scmp.ne.s32.totalorder %s161, %s163
      %p170 = scmp.eq.s32.totalorder %s27, 1
      %p171 = por %p169, %p170
      %p172 = scmp.ne.s32.totalorder %s163, %s164
      %p173 = scmp.eq.s32.totalorder %s27, 0
      %p174 = por %p172, %p173
      %p175 = scmp.ne.s32.totalorder %s163, %s164
      %p176 = scmp.eq.s32.totalorder %s28, 1
      %p177 = por %p175, %p176
      %p179 = scmp.ne.s32.totalorder %s164, %s178
      %p180 = scmp.eq.s32.totalorder %s28, 0
      %p181 = por %p179, %p180
      %s182 = ssub.s32 %s22, %s29
      %p183 = scmp.eq.s32.totalorder %s182, 0
      %s185 = sadd.s32 %s184, 1
      %s186 = scalar_select %p183, %s184, %s185
      %p189 = pneg %p183
      %p190 = scmp.eq.s32.totalorder %s22, 1
      %p191 = por %p189, %p190
      %p192 = scmp.ne.s32.totalorder %s184, %s187
      %p193 = scmp.eq.s32.totalorder %s22, 0
      %p194 = por %p192, %p193
      %p195 = scmp.ne.s32.totalorder %s184, %s187
      %p196 = scmp.eq.s32.totalorder %s27, 1
      %p197 = por %p195, %p196
      %p198 = scmp.ne.s32.totalorder %s187, %s188
      %p199 = scmp.eq.s32.totalorder %s27, 0
      %p200 = por %p198, %p199
      %p201 = scmp.ne.s32.totalorder %s187, %s188
      %p202 = scmp.eq.s32.totalorder %s28, 1
      %p203 = por %p201, %p202
      %p205 = scmp.ne.s32.totalorder %s188, %s204
      %p206 = scmp.eq.s32.totalorder %s28, 0
      %p207 = por %p205, %p206
      %p208 = scmp.le.s32.totalorder 1, %s22
      %p209 = scmp.lt.s32.totalorder %s22, 3
      %p210 = pnand %p208, %p209
      %p211 = pneg %p210
      // Predicated region
      $region9: #{tpu_custom_call.1} parent=5 // pred_check
        _
      $region10: #{tpu_custom_call.1} parent=5 // pred_check_branch
        %213 = sbr.rel (%p210) target = $region12
      $region11: #{tpu_custom_call.1} parent=5 // pred_region
        %s214 = ssub.s32 %s22, 1
        // Predicated region
        $region13: #{tpu_custom_call.1} parent=11 // pred_check
          %p215 = pneg %p69
        $region14: #{tpu_custom_call.1} parent=11 // pred_check_branch
          %217 = sbr.rel (%p215) target = $region16
        $region15: #{tpu_custom_call.1} parent=11 // pred_region
          %s219 = ssub.s32 18432, 18432
          %220 = vsyncadd [#allocation8], %s219
          %s221 = sshll.u32 [#allocation7], 4
          %s222 = int_to_ptr.vmem [resolvable:$true] %s221
          %227 = dma.hbm_to_vmem [thread:$0]  %s1, 18432, %s222, [#allocation8], 128, 128, 8
        $region16: #{tpu_custom_call.1} parent=11 // pred_fallthru
          _
        // Predicated region
        $region17: #{tpu_custom_call.1} parent=11 // pred_check
          %p228 = pneg %p90
        $region18: #{tpu_custom_call.1} parent=11 // pred_check_branch
          %230 = sbr.rel (%p228) target = $region20
        $region19: #{tpu_custom_call.1} parent=11 // pred_region
          %s232 = ssub.s32 16, 16
          %233 = vsyncadd [#allocation8], %s232
          %s235 = sshll.u32 [#allocation9], 4
          %s236 = int_to_ptr.vmem [resolvable:$true] %s235
          %238 = dma.hbm_to_vmem [thread:$0]  %s2, 16, %s236, [#allocation8]
        $region20: #{tpu_custom_call.1} parent=11 // pred_fallthru
          _
        // Predicated region
        $region21: #{tpu_custom_call.1} parent=11 // pred_check
          %p239 = pneg %p111
        $region22: #{tpu_custom_call.1} parent=11 // pred_check_branch
          %241 = sbr.rel (%p239) target = $region24
        $region23: #{tpu_custom_call.1} parent=11 // pred_region
          %s243 = ssub.s32 16, 16
          %244 = vsyncadd [#allocation11], %s243
          %s246 = sshll.u32 [#allocation10], 4
          %s247 = int_to_ptr.vmem [resolvable:$true] %s246
          %249 = dma.hbm_to_vmem [thread:$0]  %s3, 16, %s247, [#allocation11]
        $region24: #{tpu_custom_call.1} parent=11 // pred_fallthru
          _
        // Predicated region
        $region25: #{tpu_custom_call.1} parent=11 // pred_check
          %p250 = pneg %p132
        $region26: #{tpu_custom_call.1} parent=11 // pred_check_branch
          %252 = sbr.rel (%p250) target = $region28
        $region27: #{tpu_custom_call.1} parent=11 // pred_region
          %s254 = ssub.s32 18432, 18432
          %255 = vsyncadd [#allocation11], %s254
          %s256 = sshll.u32 [#allocation12], 4
          %s257 = int_to_ptr.vmem [resolvable:$true] %s256
          %262 = dma.hbm_to_vmem [thread:$0]  %s4, 18432, %s257, [#allocation11], 128, 128, 8
        $region28: #{tpu_custom_call.1} parent=11 // pred_fallthru
          _
        // Predicated region
        $region29: #{tpu_custom_call.1} parent=11 // pred_check
          %p263 = pneg %p153
        $region30: #{tpu_custom_call.1} parent=11 // pred_check_branch
          %265 = sbr.rel (%p263) target = $region32
        $region31: #{tpu_custom_call.1} parent=11 // pred_region
          %s267 = ssub.s32 16, 16
          %268 = vsyncadd [#allocation14], %s267
          %s270 = sshll.u32 [#allocation13], 4
          %s271 = int_to_ptr.vmem [resolvable:$true] %s270
          %273 = dma.hbm_to_vmem [thread:$0]  %s5, 16, %s271, [#allocation14]
        $region32: #{tpu_custom_call.1} parent=11 // pred_fallthru
          _
        // Predicated region
        $region33: #{tpu_custom_call.1} parent=11 // pred_check
          %p274 = pneg %p174
        $region34: #{tpu_custom_call.1} parent=11 // pred_check_branch
          %276 = sbr.rel (%p274) target = $region36
        $region35: #{tpu_custom_call.1} parent=11 // pred_region
          %s278 = ssub.s32 16, 16
          %279 = vsyncadd [#allocation14], %s278
          %s281 = sshll.u32 [#allocation15], 4
          %s282 = int_to_ptr.vmem [resolvable:$true] %s281
          %284 = dma.hbm_to_vmem [thread:$0]  %s6, 16, %s282, [#allocation14]
        $region36: #{tpu_custom_call.1} parent=11 // pred_fallthru
          _
      $region12: #{tpu_custom_call.1} parent=5 // pred_fallthru
        _
      %p285 = scmp.lt.s32.totalorder %s22, 2
      // Predicated region
      $region37: #{tpu_custom_call.1} parent=5 // pred_check
        %p286 = pneg %p285
      $region38: #{tpu_custom_call.1} parent=5 // pred_check_branch
        %288 = sbr.rel (%p286) target = $region40
      $region39: #{tpu_custom_call.1} parent=5 // pred_region
        // Predicated region
        $region41: #{tpu_custom_call.1} parent=39 // pred_check
          %p289 = pneg %p42
        $region42: #{tpu_custom_call.1} parent=39 // pred_check_branch
          %291 = sbr.rel (%p289) target = $region44
        $region43: #{tpu_custom_call.1} parent=39 // pred_region
          %s292 = sand.u32 %s32, 1
          %s293 = scalar_lea.sflag [#allocation5], %s292
          %s294 = sand.u32 %s32, 1
          %s295 = smul.addr %s294, 432
          %s296 = scalar_lea.vmem [#allocation4], %s295
          %s298 = ssub.s32 6912, 6912
          %299 = vsyncadd %s293, %s298
          %s300 = smul.addr %s22, 54
          %s301 = smul.addr %s300, 128
          %s302 = scalar_lea.hbm %s0, %s301
          %s303 = sshll.u32 %s296, 4
          %s304 = int_to_ptr.vmem [resolvable:$true] %s303
          %309 = dma.hbm_to_vmem [thread:$0]  %s302, 6912, %s304, %s293, 128, 128, 8
        $region44: #{tpu_custom_call.1} parent=39 // pred_fallthru
          _
      $region40: #{tpu_custom_call.1} parent=5 // pred_fallthru
        _
      %p310 = scmp.le.s32.totalorder 1, %s22
      %p311 = scmp.lt.s32.totalorder %s22, 3
      %p312 = pnand %p310, %p311
      %p313 = pneg %p312
      // Predicated region
      $region45: #{tpu_custom_call.1} parent=5 // pred_check
        _
      $region46: #{tpu_custom_call.1} parent=5 // pred_check_branch
        %315 = sbr.rel (%p312) target = $region48
      $region47: #{tpu_custom_call.1} parent=5 // pred_region
        %s316 = ssub.s32 %s22, 1
        %s317 = sand.u32 %s35, 1
        %s318 = scalar_lea.sflag [#allocation5], %s317
        %s319 = sand.u32 %s35, 1
        %s320 = smul.addr %s319, 432
        %s321 = scalar_lea.vmem [#allocation4], %s320
        // Predicated region
        $region49: #{tpu_custom_call.1} parent=47 // pred_check
          %p322 = pneg %p48
        $region50: #{tpu_custom_call.1} parent=47 // pred_check_branch
          %324 = sbr.rel (%p322) target = $region52
        $region51: #{tpu_custom_call.1} parent=47 // pred_region
          %325 = dma.done %s318, 6912
        $region52: #{tpu_custom_call.1} parent=47 // pred_fallthru
          _
        // Predicated region
        $region53: #{tpu_custom_call.1} parent=47 // pred_check
          %p326 = pneg %p69
        $region54: #{tpu_custom_call.1} parent=47 // pred_check_branch
          %328 = sbr.rel (%p326) target = $region56
        $region55: #{tpu_custom_call.1} parent=47 // pred_region
          %329 = dma.done [#allocation8], 18432
        $region56: #{tpu_custom_call.1} parent=47 // pred_fallthru
          _
        // Predicated region
        $region57: #{tpu_custom_call.1} parent=47 // pred_check
          %p330 = pneg %p90
        $region58: #{tpu_custom_call.1} parent=47 // pred_check_branch
          %332 = sbr.rel (%p330) target = $region60
        $region59: #{tpu_custom_call.1} parent=47 // pred_region
          %333 = dma.done [#allocation8], 16
        $region60: #{tpu_custom_call.1} parent=47 // pred_fallthru
          _
        // Predicated region
        $region61: #{tpu_custom_call.1} parent=47 // pred_check
          %p334 = pneg %p111
        $region62: #{tpu_custom_call.1} parent=47 // pred_check_branch
          %336 = sbr.rel (%p334) target = $region64
        $region63: #{tpu_custom_call.1} parent=47 // pred_region
          %337 = dma.done [#allocation11], 16
        $region64: #{tpu_custom_call.1} parent=47 // pred_fallthru
          _
        // Predicated region
        $region65: #{tpu_custom_call.1} parent=47 // pred_check
          %p338 = pneg %p132
        $region66: #{tpu_custom_call.1} parent=47 // pred_check_branch
          %340 = sbr.rel (%p338) target = $region68
        $region67: #{tpu_custom_call.1} parent=47 // pred_region
          %341 = dma.done [#allocation11], 18432
        $region68: #{tpu_custom_call.1} parent=47 // pred_fallthru
          _
        // Predicated region
        $region69: #{tpu_custom_call.1} parent=47 // pred_check
          %p342 = pneg %p153
        $region70: #{tpu_custom_call.1} parent=47 // pred_check_branch
          %344 = sbr.rel (%p342) target = $region72
        $region71: #{tpu_custom_call.1} parent=47 // pred_region
          %345 = dma.done [#allocation14], 16
        $region72: #{tpu_custom_call.1} parent=47 // pred_fallthru
          _
        // Predicated region
        $region73: #{tpu_custom_call.1} parent=47 // pred_check
          %p346 = pneg %p174
        $region74: #{tpu_custom_call.1} parent=47 // pred_check_branch
          %348 = sbr.rel (%p346) target = $region76
        $region75: #{tpu_custom_call.1} parent=47 // pred_region
          %349 = dma.done [#allocation14], 16
        $region76: #{tpu_custom_call.1} parent=47 // pred_fallthru
          _
        %s350 = sand.u32 %s35, 1
        %s351 = scalar_lea.sflag [#allocation5], %s350
        %s352 = sand.u32 %s35, 1
        %s353 = smul.addr %s352, 432
        %s354 = scalar_lea.vmem [#allocation4], %s353
        %p355 = pneg %p48
        %p356 = pneg %p45
        %p357 = pneg %p69
        %p358 = pneg %p66
        %p359 = pneg %p90
        %p360 = pneg %p87
        %p361 = pneg %p111
        %p362 = pneg %p108
        %p363 = pneg %p132
        %p364 = pneg %p129
        %p365 = pneg %p153
        %p366 = pneg %p150
        %p367 = pneg %p174
        %p368 = pneg %p171
        %p369 = pneg %p200
        %p370 = pneg %p197
        %s371 = sand.u32 %s187, 1
        %s372 = scalar_lea.sflag [#allocation6], %s371
        %s373 = sand.u32 %s187, 1
        %s374 = smul.addr %s373, 256
        %s375 = scalar_lea.vmem [#allocation16], %s374
        %v376 = vld [vmem:[%s321] sm:$0xff]
        %v377 = vld [vmem:[%s321 + $0x8] sm:$0xff]
        %v378 = vld [vmem:[%s321 + $0x18] sm:$0xff]
        %v379 = vld [vmem:[%s321 + $0x20] sm:$0xff]
        %v380 = vld [vmem:[%s321 + $0x30] sm:$0xff]
        %v381 = vld [vmem:[%s321 + $0x38] sm:$0xff]
        %v382 = vld [vmem:[%s321 + $0x48] sm:$0xff]
        %v383 = vld [vmem:[%s321 + $0x50] sm:$0xff]
        %v384 = vld [vmem:[%s321 + $0x60] sm:$0xff]
        %v385 = vld [vmem:[%s321 + $0x68] sm:$0xff]
        %v386 = vld [vmem:[%s321 + $0x78] sm:$0xff]
        %v387 = vld [vmem:[%s321 + $0x80] sm:$0xff]
        %v388 = vld [vmem:[%s321 + $0x90] sm:$0xff]
        %v389 = vld [vmem:[%s321 + $0x98] sm:$0xff]
        %v390 = vld [vmem:[%s321 + $0xa8] sm:$0xff]
        %v391 = vld [vmem:[%s321 + $0xb0] sm:$0xff]
        %v392 = vld [vmem:[%s321 + $0xc0] sm:$0xff]
        %v393 = vld [vmem:[%s321 + $0xc8] sm:$0xff]
        %v394 = vld [vmem:[%s321 + $0xd8] sm:$0xff]
        %v395 = vld [vmem:[%s321 + $0xe0] sm:$0xff]
        %v396 = vld [vmem:[%s321 + $0xf0] sm:$0xff]
        %v397 = vld [vmem:[%s321 + $0xf8] sm:$0xff]
        %v398 = vld [vmem:[%s321 + $0x108] sm:$0xff]
        %v399 = vld [vmem:[%s321 + $0x110] sm:$0xff]
        %v400 = vld [vmem:[%s321 + $0x120] sm:$0xff]
        %v401 = vld [vmem:[%s321 + $0x128] sm:$0xff]
        %v402 = vld [vmem:[%s321 + $0x138] sm:$0xff]
        %v403 = vld [vmem:[%s321 + $0x140] sm:$0xff]
        %v404 = vld [vmem:[%s321 + $0x150] sm:$0xff]
        %v405 = vld [vmem:[%s321 + $0x158] sm:$0xff]
        %v406 = vld [vmem:[%s321 + $0x168] sm:$0xff]
        %v407 = vld [vmem:[%s321 + $0x170] sm:$0xff]
        %v408 = vld [vmem:[#allocation7] sm:$0xff]
        %v409 = vld [vmem:[#allocation7 + $0x8] sm:$0xff]
        %v410 = vld [vmem:[#allocation7 + $0x10] sm:$0xff]
        %v411 = vld [vmem:[#allocation7 + $0x18] sm:$0xff]
        %v412 = vld [vmem:[#allocation7 + $0x20] sm:$0xff]
        %v413 = vld [vmem:[#allocation7 + $0x28] sm:$0xff]
        %v414 = vld [vmem:[#allocation7 + $0x30] sm:$0xff]
        %v415 = vld [vmem:[#allocation7 + $0x38] sm:$0xff]
        %v416 = vld [vmem:[#allocation7 + $0x40] sm:$0xff]
        %v417 = vld [vmem:[#allocation7 + $0x48] sm:$0xff]
        %v418 = vld [vmem:[#allocation7 + $0x50] sm:$0xff]
        %v419 = vld [vmem:[#allocation7 + $0x58] sm:$0xff]
        %v420 = vld [vmem:[#allocation7 + $0x60] sm:$0xff]
        %v421 = vld [vmem:[#allocation7 + $0x68] sm:$0xff]
        %v422 = vld [vmem:[#allocation7 + $0x70] sm:$0xff]
        %v423 = vld [vmem:[#allocation7 + $0x78] sm:$0xff]
        %424 = vmatprep.subr.mxu0 0.0
        %425 = vmatpush1.msra.mxu0 %v408
        %426 = vmatprep.subr.mxu0 0.0
        %427 = vmatpush1.msra.mxu0 %v409
        %428 = vmatprep.subr.mxu0 0.0
        %429 = vmatpush1.msra.mxu0 %v410
        %430 = vmatprep.subr.mxu0 0.0
        %431 = vmatpush1.msra.mxu0 %v411
        %432 = vmatprep.subr.mxu0 0.0
        %433 = vmatpush1.msra.mxu0 %v412
        %434 = vmatprep.subr.mxu0 0.0
        %435 = vmatpush1.msra.mxu0 %v413
        %436 = vmatprep.subr.mxu0 0.0
        %437 = vmatpush1.msra.mxu0 %v414
        %438 = vmatprep.subr.mxu0 0.0
        %439 = vmatpush1.msra.mxu0 %v415
        %440 = vmatprep.subr.mxu0 0.0
        %441 = vmatpush1.msra.mxu0 %v416
        %442 = vmatprep.subr.mxu0 0.0
        %443 = vmatpush1.msra.mxu0 %v417
        %444 = vmatprep.subr.mxu0 0.0
        %445 = vmatpush1.msra.mxu0 %v418
        %446 = vmatprep.subr.mxu0 0.0
        %447 = vmatpush1.msra.mxu0 %v419
        %448 = vmatprep.subr.mxu0 0.0
        %449 = vmatpush1.msra.mxu0 %v420
        %450 = vmatprep.subr.mxu0 0.0
        %451 = vmatpush1.msra.mxu0 %v421
        %452 = vmatprep.subr.mxu0 0.0
        %453 = vmatpush1.msra.mxu0 %v422
        %454 = vmatprep.subr.mxu0 0.0
        %455 = vmatpush1.msra.mxu0 %v423
        %456 = vmatprep.subr.mxu0 0.0
        %457 = vmatpush1.msra.mxu0 0.0
        %458 = vmatprep.subr.mxu0 0.0
        %459 = vmatpush1.msra.mxu0 0.0
        %460 = vmatprep.subr.mxu0 0.0
        %461 = vmatpush1.msra.mxu0 0.0
        %462 = vmatprep.subr.mxu0 0.0
        %463 = vmatpush1.msra.mxu0 0.0
        %464 = vmatprep.subr.mxu0 0.0
        %465 = vmatpush1.msra.mxu0 0.0
        %466 = vmatprep.subr.mxu0 0.0
        %467 = vmatpush1.msra.mxu0 0.0
        %468 = vmatprep.subr.mxu0 0.0
        %469 = vmatpush1.msra.mxu0 0.0
        %470 = vmatprep.subr.mxu0 0.0
        %471 = vmatpush1.msra.mxu0 0.0
        %472 = vmatprep.subr.mxu0 0.0
        %473 = vmatpush1.msra.mxu0 0.0
        %474 = vmatprep.subr.mxu0 0.0
        %475 = vmatpush1.msra.mxu0 0.0
        %476 = vmatprep.subr.mxu0 0.0
        %477 = vmatpush1.msra.mxu0 0.0
        %478 = vmatprep.subr.mxu0 0.0
        %479 = vmatpush1.msra.mxu0 0.0
        %480 = vmatprep.subr.mxu0 0.0
        %481 = vmatpush1.msra.mxu0 0.0
        %482 = vmatprep.subr.mxu0 0.0
        %483 = vmatpush1.msra.mxu0 0.0
        %484 = vmatprep.subr.mxu0 0.0
        %485 = vmatpush1.msra.mxu0 0.0
        %486 = vmatprep.subr.mxu0 0.0
        %487 = vmatpush1.msra.mxu0 0.0
        %488 = vmatprep.mubr.f32.mxu0 0.0
        %489 = vmatmul.mubr.f32.gmra.mrb[0].mxu0 %v376
        %v490 = vpop.f32.mrb[0].mxu0
        %v491 = vadd.f32 0.0, %v490
        %v492 = vpop.f32.mrb[0].mxu0
        %493 = vmatprep.mubr.f32.mxu0 0.0
        %494 = vmatmul.mubr.f32.gmra.mrb[0].mxu0 %v377
        %v495 = vpop.f32.mrb[0].mxu0
        %v496 = vadd.f32 0.0, %v495
        %v497 = vpop.f32.mrb[0].mxu0
        %498 = vmatprep.mubr.f32.mxu0 0.0
        %499 = vmatmul.mubr.f32.gmra.mrb[0].mxu0 %v378
        %v500 = vpop.f32.mrb[0].mxu0
        %v501 = vadd.f32 0.0, %v500
        %v502 = vpop.f32.mrb[0].mxu0
        %503 = vmatprep.mubr.f32.mxu0 0.0
        %504 = vmatmul.mubr.f32.gmra.mrb[0].mxu0 %v379
        %v505 = vpop.f32.mrb[0].mxu0
        %v506 = vadd.f32 0.0, %v505
        %v507 = vpop.f32.mrb[0].mxu0
        %508 = vmatprep.mubr.f32.mxu0 0.0
        %509 = vmatmul.mubr.f32.gmra.mrb[0].mxu0 %v380
        %v510 = vpop.f32.mrb[0].mxu0
        %v511 = vadd.f32 0.0, %v510
        %v512 = vpop.f32.mrb[0].mxu0
        %513 = vmatprep.mubr.f32.mxu0 0.0
        %514 = vmatmul.mubr.f32.gmra.mrb[0].mxu0 %v381
        %v515 = vpop.f32.mrb[0].mxu0
        %v516 = vadd.f32 0.0, %v515
        %v517 = vpop.f32.mrb[0].mxu0
        %518 = vmatprep.mubr.f32.mxu0 0.0
        %519 = vmatmul.mubr.f32.gmra.mrb[0].mxu0 %v382
        %v520 = vpop.f32.mrb[0].mxu0
        %v521 = vadd.f32 0.0, %v520
        %v522 = vpop.f32.mrb[0].mxu0
        %523 = vmatprep.mubr.f32.mxu0 0.0
        %524 = vmatmul.mubr.f32.gmra.mrb[0].mxu0 %v383
        %v525 = vpop.f32.mrb[0].mxu0
        %v526 = vadd.f32 0.0, %v525
        %v527 = vpop.f32.mrb[0].mxu0
        %528 = vmatprep.mubr.f32.mxu0 0.0
        %529 = vmatmul.mubr.f32.gmra.mrb[0].mxu0 %v384
        %v530 = vpop.f32.mrb[0].mxu0
        %v531 = vadd.f32 0.0, %v530
        %v532 = vpop.f32.mrb[0].mxu0
        %533 = vmatprep.mubr.f32.mxu0 0.0
        %534 = vmatmul.mubr.f32.gmra.mrb[0].mxu0 %v385
        %v535 = vpop.f32.mrb[0].mxu0
        %v536 = vadd.f32 0.0, %v535
        %v537 = vpop.f32.mrb[0].mxu0
        %538 = vmatprep.mubr.f32.mxu0 0.0
        %539 = vmatmul.mubr.f32.gmra.mrb[0].mxu0 %v386
        %v540 = vpop.f32.mrb[0].mxu0
        %v541 = vadd.f32 0.0, %v540
        %v542 = vpop.f32.mrb[0].mxu0
        %543 = vmatprep.mubr.f32.mxu0 0.0
        %544 = vmatmul.mubr.f32.gmra.mrb[0].mxu0 %v387
        %v545 = vpop.f32.mrb[0].mxu0
        %v546 = vadd.f32 0.0, %v545
        %v547 = vpop.f32.mrb[0].mxu0
        %548 = vmatprep.mubr.f32.mxu0 0.0
        %549 = vmatmul.mubr.f32.gmra.mrb[0].mxu0 %v388
        %v550 = vpop.f32.mrb[0].mxu0
        %v551 = vadd.f32 0.0, %v550
        %v552 = vpop.f32.mrb[0].mxu0
        %553 = vmatprep.mubr.f32.mxu0 0.0
        %554 = vmatmul.mubr.f32.gmra.mrb[0].mxu0 %v389
        %v555 = vpop.f32.mrb[0].mxu0
        %v556 = vadd.f32 0.0, %v555
        %v557 = vpop.f32.mrb[0].mxu0
        %558 = vmatprep.mubr.f32.mxu0 0.0
        %559 = vmatmul.mubr.f32.gmra.mrb[0].mxu0 %v390
        %v560 = vpop.f32.mrb[0].mxu0
        %v561 = vadd.f32 0.0, %v560
        %v562 = vpop.f32.mrb[0].mxu0
        %563 = vmatprep.mubr.f32.mxu0 0.0
        %564 = vmatmul.mubr.f32.gmra.mrb[0].mxu0 %v391
        %v565 = vpop.f32.mrb[0].mxu0
        %v566 = vadd.f32 0.0, %v565
        %v567 = vpop.f32.mrb[0].mxu0
        %568 = vmatprep.mubr.f32.mxu0 0.0
        %569 = vmatmul.mubr.f32.gmra.mrb[0].mxu0 %v392
        %v570 = vpop.f32.mrb[0].mxu0
        %v571 = vadd.f32 0.0, %v570
        %v572 = vpop.f32.mrb[0].mxu0
        %573 = vmatprep.mubr.f32.mxu0 0.0
        %574 = vmatmul.mubr.f32.gmra.mrb[0].mxu0 %v393
        %v575 = vpop.f32.mrb[0].mxu0
        %v576 = vadd.f32 0.0, %v575
        %v577 = vpop.f32.mrb[0].mxu0
        %578 = vmatprep.mubr.f32.mxu0 0.0
        %579 = vmatmul.mubr.f32.gmra.mrb[0].mxu0 %v394
        %v580 = vpop.f32.mrb[0].mxu0
        %v581 = vadd.f32 0.0, %v580
        %v582 = vpop.f32.mrb[0].mxu0
        %583 = vmatprep.mubr.f32.mxu0 0.0
        %584 = vmatmul.mubr.f32.gmra.mrb[0].mxu0 %v395
        %v585 = vpop.f32.mrb[0].mxu0
        %v586 = vadd.f32 0.0, %v585
        %v587 = vpop.f32.mrb[0].mxu0
        %588 = vmatprep.mubr.f32.mxu0 0.0
        %589 = vmatmul.mubr.f32.gmra.mrb[0].mxu0 %v396
        %v590 = vpop.f32.mrb[0].mxu0
        %v591 = vadd.f32 0.0, %v590
        %v592 = vpop.f32.mrb[0].mxu0
        %593 = vmatprep.mubr.f32.mxu0 0.0
        %594 = vmatmul.mubr.f32.gmra.mrb[0].mxu0 %v397
        %v595 = vpop.f32.mrb[0].mxu0
        %v596 = vadd.f32 0.0, %v595
        %v597 = vpop.f32.mrb[0].mxu0
        %598 = vmatprep.mubr.f32.mxu0 0.0
        %599 = vmatmul.mubr.f32.gmra.mrb[0].mxu0 %v398
        %v600 = vpop.f32.mrb[0].mxu0
        %v601 = vadd.f32 0.0, %v600
        %v602 = vpop.f32.mrb[0].mxu0
        %603 = vmatprep.mubr.f32.mxu0 0.0
        %604 = vmatmul.mubr.f32.gmra.mrb[0].mxu0 %v399
        %v605 = vpop.f32.mrb[0].mxu0
        %v606 = vadd.f32 0.0, %v605
        %v607 = vpop.f32.mrb[0].mxu0
        %608 = vmatprep.mubr.f32.mxu0 0.0
        %609 = vmatmul.mubr.f32.gmra.mrb[0].mxu0 %v400
        %v610 = vpop.f32.mrb[0].mxu0
        %v611 = vadd.f32 0.0, %v610
        %v612 = vpop.f32.mrb[0].mxu0
        %613 = vmatprep.mubr.f32.mxu0 0.0
        %614 = vmatmul.mubr.f32.gmra.mrb[0].mxu0 %v401
        %v615 = vpop.f32.mrb[0].mxu0
        %v616 = vadd.f32 0.0, %v615
        %v617 = vpop.f32.mrb[0].mxu0
        %618 = vmatprep.mubr.f32.mxu0 0.0
        %619 = vmatmul.mubr.f32.gmra.mrb[0].mxu0 %v402
        %v620 = vpop.f32.mrb[0].mxu0
        %v621 = vadd.f32 0.0, %v620
        %v622 = vpop.f32.mrb[0].mxu0
        %623 = vmatprep.mubr.f32.mxu0 0.0
        %624 = vmatmul.mubr.f32.gmra.mrb[0].mxu0 %v403
        %v625 = vpop.f32.mrb[0].mxu0
        %v626 = vadd.f32 0.0, %v625
        %v627 = vpop.f32.mrb[0].mxu0
        %628 = vmatprep.mubr.f32.mxu0 0.0
        %629 = vmatmul.mubr.f32.gmra.mrb[0].mxu0 %v404
        %v630 = vpop.f32.mrb[0].mxu0
        %v631 = vadd.f32 0.0, %v630
        %v632 = vpop.f32.mrb[0].mxu0
        %633 = vmatprep.mubr.f32.mxu0 0.0
        %634 = vmatmul.mubr.f32.gmra.mrb[0].mxu0 %v405
        %v635 = vpop.f32.mrb[0].mxu0
        %v636 = vadd.f32 0.0, %v635
        %v637 = vpop.f32.mrb[0].mxu0
        %638 = vmatprep.mubr.f32.mxu0 0.0
        %639 = vmatmul.mubr.f32.gmra.mrb[0].mxu0 %v406
        %v640 = vpop.f32.mrb[0].mxu0
        %v641 = vadd.f32 0.0, %v640
        %v642 = vpop.f32.mrb[0].mxu0
        %643 = vmatprep.mubr.f32.mxu0 0.0
        %644 = vmatmul.mubr.f32.gmra.mrb[0].mxu0 %v407
        %v645 = vpop.f32.mrb[0].mxu0
        %v646 = vadd.f32 0.0, %v645
        %v647 = vpop.f32.mrb[0].mxu0
        %648 = vdwg.mxu0
        %649 = vst [vmem:[#allocation3] sm:$0xff] %v491
        %650 = vst [vmem:[#allocation3 + $0x8] sm:$0xff] %v496
        %651 = vst [vmem:[#allocation3 + $0x10] sm:$0xff] %v501
        %652 = vst [vmem:[#allocation3 + $0x18] sm:$0xff] %v506
        %653 = vst [vmem:[#allocation3 + $0x20] sm:$0xff] %v511
        %654 = vst [vmem:[#allocation3 + $0x28] sm:$0xff] %v516
        %655 = vst [vmem:[#allocation3 + $0x30] sm:$0xff] %v521
        %656 = vst [vmem:[#allocation3 + $0x38] sm:$0xff] %v526
        %657 = vst [vmem:[#allocation3 + $0x40] sm:$0xff] %v531
        %658 = vst [vmem:[#allocation3 + $0x48] sm:$0xff] %v536
        %659 = vst [vmem:[#allocation3 + $0x50] sm:$0xff] %v541
        %660 = vst [vmem:[#allocation3 + $0x58] sm:$0xff] %v546
        %661 = vst [vmem:[#allocation3 + $0x60] sm:$0xff] %v551
        %662 = vst [vmem:[#allocation3 + $0x68] sm:$0xff] %v556
        %663 = vst [vmem:[#allocation3 + $0x70] sm:$0xff] %v561
        %664 = vst [vmem:[#allocation3 + $0x78] sm:$0xff] %v566
        %665 = vst [vmem:[#allocation3 + $0x80] sm:$0xff] %v571
        %666 = vst [vmem:[#allocation3 + $0x88] sm:$0xff] %v576
        %667 = vst [vmem:[#allocation3 + $0x90] sm:$0xff] %v581
        %668 = vst [vmem:[#allocation3 + $0x98] sm:$0xff] %v586
        %669 = vst [vmem:[#allocation3 + $0xa0] sm:$0xff] %v591
        %670 = vst [vmem:[#allocation3 + $0xa8] sm:$0xff] %v596
        %671 = vst [vmem:[#allocation3 + $0xb0] sm:$0xff] %v601
        %672 = vst [vmem:[#allocation3 + $0xb8] sm:$0xff] %v606
        %673 = vst [vmem:[#allocation3 + $0xc0] sm:$0xff] %v611
        %674 = vst [vmem:[#allocation3 + $0xc8] sm:$0xff] %v616
        %675 = vst [vmem:[#allocation3 + $0xd0] sm:$0xff] %v621
        %676 = vst [vmem:[#allocation3 + $0xd8] sm:$0xff] %v626
        %677 = vst [vmem:[#allocation3 + $0xe0] sm:$0xff] %v631
        %678 = vst [vmem:[#allocation3 + $0xe8] sm:$0xff] %v636
        %679 = vst [vmem:[#allocation3 + $0xf0] sm:$0xff] %v641
        %680 = vst [vmem:[#allocation3 + $0xf8] sm:$0xff] %v646
        %v681 = vld [vmem:[%s321 + $0x1] sm:$0xff]
        %v682 = vld [vmem:[%s321 + $0x9] sm:$0xff]
        %v683 = vld [vmem:[%s321 + $0x19] sm:$0xff]
        %v684 = vld [vmem:[%s321 + $0x21] sm:$0xff]
        %v685 = vld [vmem:[%s321 + $0x31] sm:$0xff]
        %v686 = vld [vmem:[%s321 + $0x39] sm:$0xff]
        %v687 = vld [vmem:[%s321 + $0x49] sm:$0xff]
        %v688 = vld [vmem:[%s321 + $0x51] sm:$0xff]
        %v689 = vld [vmem:[%s321 + $0x61] sm:$0xff]
        %v690 = vld [vmem:[%s321 + $0x69] sm:$0xff]
        %v691 = vld [vmem:[%s321 + $0x79] sm:$0xff]
        %v692 = vld [vmem:[%s321 + $0x81] sm:$0xff]
        %v693 = vld [vmem:[%s321 + $0x91] sm:$0xff]
        %v694 = vld [vmem:[%s321 + $0x99] sm:$0xff]
        %v695 = vld [vmem:[%s321 + $0xa9] sm:$0xff]
        %v696 = vld [vmem:[%s321 + $0xb1] sm:$0xff]
        %v697 = vld [vmem:[%s321 + $0xc1] sm:$0xff]
        %v698 = vld [vmem:[%s321 + $0xc9] sm:$0xff]
        %v699 = vld [vmem:[%s321 + $0xd9] sm:$0xff]
        %v700 = vld [vmem:[%s321 + $0xe1] sm:$0xff]
        %v701 = vld [vmem:[%s321 + $0xf1] sm:$0xff]
        %v702 = vld [vmem:[%s321 + $0xf9] sm:$0xff]
        %v703 = vld [vmem:[%s321 + $0x109] sm:$0xff]
        %v704 = vld [vmem:[%s321 + $0x111] sm:$0xff]
        %v705 = vld [vmem:[%s321 + $0x121] sm:$0xff]
        %v706 = vld [vmem:[%s321 + $0x129] sm:$0xff]
        %v707 = vld [vmem:[%s321 + $0x139] sm:$0xff]
        %v708 = vld [vmem:[%s321 + $0x141] sm:$0xff]
        %v709 = vld [vmem:[%s321 + $0x151] sm:$0xff]
        %v710 = vld [vmem:[%s321 + $0x159] sm:$0xff]
        %v711 = vld [vmem:[%s321 + $0x169] sm:$0xff]
        %v712 = vld [vmem:[%s321 + $0x171] sm:$0xff]
        %s713 = scalar_lea.vmem [#allocation7], 128
        %v714 = vld [vmem:[%s713] sm:$0xff]
        %v715 = vld [vmem:[%s713 + $0x8] sm:$0xff]
        %v716 = vld [vmem:[%s713 + $0x10] sm:$0xff]
        %v717 = vld [vmem:[%s713 + $0x18] sm:$0xff]
        %v718 = vld [vmem:[%s713 + $0x20] sm:$0xff]
        %v719 = vld [vmem:[%s713 + $0x28] sm:$0xff]
        %v720 = vld [vmem:[%s713 + $0x30] sm:$0xff]
        %v721 = vld [vmem:[%s713 + $0x38] sm:$0xff]
        %v722 = vld [vmem:[%s713 + $0x40] sm:$0xff]
        %v723 = vld [vmem:[%s713 + $0x48] sm:$0xff]
        %v724 = vld [vmem:[%s713 + $0x50] sm:$0xff]
        %v725 = vld [vmem:[%s713 + $0x58] sm:$0xff]
        %v726 = vld [vmem:[%s713 + $0x60] sm:$0xff]
        %v727 = vld [vmem:[%s713 + $0x68] sm:$0xff]
        %v728 = vld [vmem:[%s713 + $0x70] sm:$0xff]
        %v729 = vld [vmem:[%s713 + $0x78] sm:$0xff]
        %730 = vmatprep.subr.mxu0 0.0
        %731 = vmatpush1.msra.mxu0 %v714
        %732 = vmatprep.subr.mxu0 0.0
        %733 = vmatpush1.msra.mxu0 %v715
        %734 = vmatprep.subr.mxu0 0.0
        %735 = vmatpush1.msra.mxu0 %v716
        %736 = vmatprep.subr.mxu0 0.0
        %737 = vmatpush1.msra.mxu0 %v717
        %738 = vmatprep.subr.mxu0 0.0
        %739 = vmatpush1.msra.mxu0 %v718
        %740 = vmatprep.subr.mxu0 0.0
        %741 = vmatpush1.msra.mxu0 %v719
        %742 = vmatprep.subr.mxu0 0.0
        %743 = vmatpush1.msra.mxu0 %v720
        %744 = vmatprep.subr.mxu0 0.0
        %745 = vmatpush1.msra.mxu0 %v721
        %746 = vmatprep.subr.mxu0 0.0
        %747 = vmatpush1.msra.mxu0 %v722
        %748 = vmatprep.subr.mxu0 0.0
        %749 = vmatpush1.msra.mxu0 %v723
        %750 = vmatprep.subr.mxu0 0.0
        %751 = vmatpush1.msra.mxu0 %v724
        %752 = vmatprep.subr.mxu0 0.0
        %753 = vmatpush1.msra.mxu0 %v725
        %754 = vmatprep.subr.mxu0 0.0
        %755 = vmatpush1.msra.mxu0 %v726
        %756 = vmatprep.subr.mxu0 0.0
        %757 = vmatpush1.msra.mxu0 %v727
        %758 = vmatprep.subr.mxu0 0.0
        %759 = vmatpush1.msra.mxu0 %v728
        %760 = vmatprep.subr.mxu0 0.0
        %761 = vmatpush1.msra.mxu0 %v729
        %762 = vmatprep.subr.mxu0 0.0
        %763 = vmatpush1.msra.mxu0 0.0
        %764 = vmatprep.subr.mxu0 0.0
        %765 = vmatpush1.msra.mxu0 0.0
        %766 = vmatprep.subr.mxu0 0.0
        %767 = vmatpush1.msra.mxu0 0.0
        %768 = vmatprep.subr.mxu0 0.0
        %769 = vmatpush1.msra.mxu0 0.0
        %770 = vmatprep.subr.mxu0 0.0
        %771 = vmatpush1.msra.mxu0 0.0
        %772 = vmatprep.subr.mxu0 0.0
        %773 = vmatpush1.msra.mxu0 0.0
        %774 = vmatprep.subr.mxu0 0.0
        %775 = vmatpush1.msra.mxu0 0.0
        %776 = vmatprep.subr.mxu0 0.0
        %777 = vmatpush1.msra.mxu0 0.0
        %778 = vmatprep.subr.mxu0 0.0
        %779 = vmatpush1.msra.mxu0 0.0
        %780 = vmatprep.subr.mxu0 0.0
        %781 = vmatpush1.msra.mxu0 0.0
        %782 = vmatprep.subr.mxu0 0.0
        %783 = vmatpush1.msra.mxu0 0.0
        %784 = vmatprep.subr.mxu0 0.0
        %785 = vmatpush1.msra.mxu0 0.0
        %786 = vmatprep.subr.mxu0 0.0
        %787 = vmatpush1.msra.mxu0 0.0
        %788 = vmatprep.subr.mxu0 0.0
        %789 = vmatpush1.msra.mxu0 0.0
        %790 = vmatprep.subr.mxu0 0.0
        %791 = vmatpush1.msra.mxu0 0.0
        %792 = vmatprep.subr.mxu0 0.0
        %793 = vmatpush1.msra.mxu0 0.0
        %794 = vmatprep.mubr.f32.mxu0 0.0
        %795 = vmatmul.mubr.f32.gmra.mrb[0].mxu0 %v681
        %v796 = vpop.f32.mrb[0].mxu0
        %v797 = vadd.f32 0.0, %v796
        %v798 = vpop.f32.mrb[0].mxu0
        %799 = vmatprep.mubr.f32.mxu0 0.0
        %800 = vmatmul.mubr.f32.gmra.mrb[0].mxu0 %v682
        %v801 = vpop.f32.mrb[0].mxu0
        %v802 = vadd.f32 0.0, %v801
        %v803 = vpop.f32.mrb[0].mxu0
        %804 = vmatprep.mubr.f32.mxu0 0.0
        %805 = vmatmul.mubr.f32.gmra.mrb[0].mxu0 %v683
        %v806 = vpop.f32.mrb[0].mxu0
        %v807 = vadd.f32 0.0, %v806
        %v808 = vpop.f32.mrb[0].mxu0
        %809 = vmatprep.mubr.f32.mxu0 0.0
        %810 = vmatmul.mubr.f32.gmra.mrb[0].mxu0 %v684
        %v811 = vpop.f32.mrb[0].mxu0
        %v812 = vadd.f32 0.0, %v811
        %v813 = vpop.f32.mrb[0].mxu0
        %814 = vmatprep.mubr.f32.mxu0 0.0
        %815 = vmatmul.mubr.f32.gmra.mrb[0].mxu0 %v685
        %v816 = vpop.f32.mrb[0].mxu0
        %v817 = vadd.f32 0.0, %v816
        %v818 = vpop.f32.mrb[0].mxu0
        %819 = vmatprep.mubr.f32.mxu0 0.0
        %820 = vmatmul.mubr.f32.gmra.mrb[0].mxu0 %v686
        %v821 = vpop.f32.mrb[0].mxu0
        %v822 = vadd.f32 0.0, %v821
        %v823 = vpop.f32.mrb[0].mxu0
        %824 = vmatprep.mubr.f32.mxu0 0.0
        %825 = vmatmul.mubr.f32.gmra.mrb[0].mxu0 %v687
        %v826 = vpop.f32.mrb[0].mxu0
        %v827 = vadd.f32 0.0, %v826
        %v828 = vpop.f32.mrb[0].mxu0
        %829 = vmatprep.mubr.f32.mxu0 0.0
        %830 = vmatmul.mubr.f32.gmra.mrb[0].mxu0 %v688
        %v831 = vpop.f32.mrb[0].mxu0
        %v832 = vadd.f32 0.0, %v831
        %v833 = vpop.f32.mrb[0].mxu0
        %834 = vmatprep.mubr.f32.mxu0 0.0
        %835 = vmatmul.mubr.f32.gmra.mrb[0].mxu0 %v689
        %v836 = vpop.f32.mrb[0].mxu0
        %v837 = vadd.f32 0.0, %v836
        %v838 = vpop.f32.mrb[0].mxu0
        %839 = vmatprep.mubr.f32.mxu0 0.0
        %840 = vmatmul.mubr.f32.gmra.mrb[0].mxu0 %v690
        %v841 = vpop.f32.mrb[0].mxu0
        %v842 = vadd.f32 0.0, %v841
        %v843 = vpop.f32.mrb[0].mxu0
        %844 = vmatprep.mubr.f32.mxu0 0.0
        %845 = vmatmul.mubr.f32.gmra.mrb[0].mxu0 %v691
        %v846 = vpop.f32.mrb[0].mxu0
        %v847 = vadd.f32 0.0, %v846
        %v848 = vpop.f32.mrb[0].mxu0
        %849 = vmatprep.mubr.f32.mxu0 0.0
        %850 = vmatmul.mubr.f32.gmra.mrb[0].mxu0 %v692
        %v851 = vpop.f32.mrb[0].mxu0
        %v852 = vadd.f32 0.0, %v851
        %v853 = vpop.f32.mrb[0].mxu0
        %854 = vmatprep.mubr.f32.mxu0 0.0
        %855 = vmatmul.mubr.f32.gmra.mrb[0].mxu0 %v693
        %v856 = vpop.f32.mrb[0].mxu0
        %v857 = vadd.f32 0.0, %v856
        %v858 = vpop.f32.mrb[0].mxu0
        %859 = vmatprep.mubr.f32.mxu0 0.0
        %860 = vmatmul.mubr.f32.gmra.mrb[0].mxu0 %v694
        %v861 = vpop.f32.mrb[0].mxu0
        %v862 = vadd.f32 0.0, %v861
        %v863 = vpop.f32.mrb[0].mxu0
        %864 = vmatprep.mubr.f32.mxu0 0.0
        %865 = vmatmul.mubr.f32.gmra.mrb[0].mxu0 %v695
        %v866 = vpop.f32.mrb[0].mxu0
        %v867 = vadd.f32 0.0, %v866
        %v868 = vpop.f32.mrb[0].mxu0
        %869 = vmatprep.mubr.f32.mxu0 0.0
        %870 = vmatmul.mubr.f32.gmra.mrb[0].mxu0 %v696
        %v871 = vpop.f32.mrb[0].mxu0
        %v872 = vadd.f32 0.0, %v871
        %v873 = vpop.f32.mrb[0].mxu0
        %874 = vmatprep.mubr.f32.mxu0 0.0
        %875 = vmatmul.mubr.f32.gmra.mrb[0].mxu0 %v697
        %v876 = vpop.f32.mrb[0].mxu0
        %v877 = vadd.f32 0.0, %v876
        %v878 = vpop.f32.mrb[0].mxu0
        %879 = vmatprep.mubr.f32.mxu0 0.0
        %880 = vmatmul.mubr.f32.gmra.mrb[0].mxu0 %v698
        %v881 = vpop.f32.mrb[0].mxu0
        %v882 = vadd.f32 0.0, %v881
        %v883 = vpop.f32.mrb[0].mxu0
        %884 = vmatprep.mubr.f32.mxu0 0.0
        %885 = vmatmul.mubr.f32.gmra.mrb[0].mxu0 %v699
        %v886 = vpop.f32.mrb[0].mxu0
        %v887 = vadd.f32 0.0, %v886
        %v888 = vpop.f32.mrb[0].mxu0
        %889 = vmatprep.mubr.f32.mxu0 0.0
        %890 = vmatmul.mubr.f32.gmra.mrb[0].mxu0 %v700
        %v891 = vpop.f32.mrb[0].mxu0
        %v892 = vadd.f32 0.0, %v891
        %v893 = vpop.f32.mrb[0].mxu0
        %894 = vmatprep.mubr.f32.mxu0 0.0
        %895 = vmatmul.mubr.f32.gmra.mrb[0].mxu0 %v701
        %v896 = vpop.f32.mrb[0].mxu0
        %v897 = vadd.f32 0.0, %v896
        %v898 = vpop.f32.mrb[0].mxu0
        %899 = vmatprep.mubr.f32.mxu0 0.0
        %900 = vmatmul.mubr.f32.gmra.mrb[0].mxu0 %v702
        %v901 = vpop.f32.mrb[0].mxu0
        %v902 = vadd.f32 0.0, %v901
        %v903 = vpop.f32.mrb[0].mxu0
        %904 = vmatprep.mubr.f32.mxu0 0.0
        %905 = vmatmul.mubr.f32.gmra.mrb[0].mxu0 %v703
        %v906 = vpop.f32.mrb[0].mxu0
        %v907 = vadd.f32 0.0, %v906
        %v908 = vpop.f32.mrb[0].mxu0
        %909 = vmatprep.mubr.f32.mxu0 0.0
        %910 = vmatmul.mubr.f32.gmra.mrb[0].mxu0 %v704
        %v911 = vpop.f32.mrb[0].mxu0
        %v912 = vadd.f32 0.0, %v911
        %v913 = vpop.f32.mrb[0].mxu0
        %914 = vmatprep.mubr.f32.mxu0 0.0
        %915 = vmatmul.mubr.f32.gmra.mrb[0].mxu0 %v705
        %v916 = vpop.f32.mrb[0].mxu0
        %v917 = vadd.f32 0.0, %v916
        %v918 = vpop.f32.mrb[0].mxu0
        %919 = vmatprep.mubr.f32.mxu0 0.0
        %920 = vmatmul.mubr.f32.gmra.mrb[0].mxu0 %v706
        %v921 = vpop.f32.mrb[0].mxu0
        %v922 = vadd.f32 0.0, %v921
        %v923 = vpop.f32.mrb[0].mxu0
        %924 = vmatprep.mubr.f32.mxu0 0.0
        %925 = vmatmul.mubr.f32.gmra.mrb[0].mxu0 %v707
        %v926 = vpop.f32.mrb[0].mxu0
        %v927 = vadd.f32 0.0, %v926
        %v928 = vpop.f32.mrb[0].mxu0
        %929 = vmatprep.mubr.f32.mxu0 0.0
        %930 = vmatmul.mubr.f32.gmra.mrb[0].mxu0 %v708
        %v931 = vpop.f32.mrb[0].mxu0
        %v932 = vadd.f32 0.0, %v931
        %v933 = vpop.f32.mrb[0].mxu0
        %934 = vmatprep.mubr.f32.mxu0 0.0
        %935 = vmatmul.mubr.f32.gmra.mrb[0].mxu0 %v709
        %v936 = vpop.f32.mrb[0].mxu0
        %v937 = vadd.f32 0.0, %v936
        %v938 = vpop.f32.mrb[0].mxu0
        %939 = vmatprep.mubr.f32.mxu0 0.0
        %940 = vmatmul.mubr.f32.gmra.mrb[0].mxu0 %v710
        %v941 = vpop.f32.mrb[0].mxu0
        %v942 = vadd.f32 0.0, %v941
        %v943 = vpop.f32.mrb[0].mxu0
        %944 = vmatprep.mubr.f32.mxu0 0.0
        %945 = vmatmul.mubr.f32.gmra.mrb[0].mxu0 %v711
        %v946 = vpop.f32.mrb[0].mxu0
        %v947 = vadd.f32 0.0, %v946
        %v948 = vpop.f32.mrb[0].mxu0
        %949 = vmatprep.mubr.f32.mxu0 0.0
        %950 = vmatmul.mubr.f32.gmra.mrb[0].mxu0 %v712
        %v951 = vpop.f32.mrb[0].mxu0
        %v952 = vadd.f32 0.0, %v951
        %v953 = vpop.f32.mrb[0].mxu0
        %954 = vdwg.mxu0
        %v955 = vld [vmem:[#allocation3] sm:$0xff]
        %v956 = vld [vmem:[#allocation3 + $0x8] sm:$0xff]
        %v957 = vld [vmem:[#allocation3 + $0x10] sm:$0xff]
        %v958 = vld [vmem:[#allocation3 + $0x18] sm:$0xff]
        %v959 = vld [vmem:[#allocation3 + $0x20] sm:$0xff]
        %v960 = vld [vmem:[#allocation3 + $0x28] sm:$0xff]
        %v961 = vld [vmem:[#allocation3 + $0x30] sm:$0xff]
        %v962 = vld [vmem:[#allocation3 + $0x38] sm:$0xff]
        %v963 = vld [vmem:[#allocation3 + $0x40] sm:$0xff]
        %v964 = vld [vmem:[#allocation3 + $0x48] sm:$0xff]
        %v965 = vld [vmem:[#allocation3 + $0x50] sm:$0xff]
        %v966 = vld [vmem:[#allocation3 + $0x58] sm:$0xff]
        %v967 = vld [vmem:[#allocation3 + $0x60] sm:$0xff]
        %v968 = vld [vmem:[#allocation3 + $0x68] sm:$0xff]
        %v969 = vld [vmem:[#allocation3 + $0x70] sm:$0xff]
        %v970 = vld [vmem:[#allocation3 + $0x78] sm:$0xff]
        %v971 = vld [vmem:[#allocation3 + $0x80] sm:$0xff]
        %v972 = vld [vmem:[#allocation3 + $0x88] sm:$0xff]
        %v973 = vld [vmem:[#allocation3 + $0x90] sm:$0xff]
        %v974 = vld [vmem:[#allocation3 + $0x98] sm:$0xff]
        %v975 = vld [vmem:[#allocation3 + $0xa0] sm:$0xff]
        %v976 = vld [vmem:[#allocation3 + $0xa8] sm:$0xff]
        %v977 = vld [vmem:[#allocation3 + $0xb0] sm:$0xff]
        %v978 = vld [vmem:[#allocation3 + $0xb8] sm:$0xff]
        %v979 = vld [vmem:[#allocation3 + $0xc0] sm:$0xff]
        %v980 = vld [vmem:[#allocation3 + $0xc8] sm:$0xff]
        %v981 = vld [vmem:[#allocation3 + $0xd0] sm:$0xff]
        %v982 = vld [vmem:[#allocation3 + $0xd8] sm:$0xff]
        %v983 = vld [vmem:[#allocation3 + $0xe0] sm:$0xff]
        %v984 = vld [vmem:[#allocation3 + $0xe8] sm:$0xff]
        %v985 = vld [vmem:[#allocation3 + $0xf0] sm:$0xff]
        %v986 = vld [vmem:[#allocation3 + $0xf8] sm:$0xff]
        %v987 = vadd.f32 %v955, %v797
        %v988 = vadd.f32 %v956, %v802
        %v989 = vadd.f32 %v957, %v807
        %v990 = vadd.f32 %v958, %v812
        %v991 = vadd.f32 %v959, %v817
        %v992 = vadd.f32 %v960, %v822
        %v993 = vadd.f32 %v961, %v827
        %v994 = vadd.f32 %v962, %v832
        %v995 = vadd.f32 %v963, %v837
        %v996 = vadd.f32 %v964, %v842
        %v997 = vadd.f32 %v965, %v847
        %v998 = vadd.f32 %v966, %v852
        %v999 = vadd.f32 %v967, %v857
        %v1000 = vadd.f32 %v968, %v862
        %v1001 = vadd.f32 %v969, %v867
        %v1002 = vadd.f32 %v970, %v872
        %v1003 = vadd.f32 %v971, %v877
        %v1004 = vadd.f32 %v972, %v882
        %v1005 = vadd.f32 %v973, %v887
        %v1006 = vadd.f32 %v974, %v892
        %v1007 = vadd.f32 %v975, %v897
        %v1008 = vadd.f32 %v976, %v902
        %v1009 = vadd.f32 %v977, %v907
        %v1010 = vadd.f32 %v978, %v912
        %v1011 = vadd.f32 %v979, %v917
        %v1012 = vadd.f32 %v980, %v922
        %v1013 = vadd.f32 %v981, %v927
        %v1014 = vadd.f32 %v982, %v932
        %v1015 = vadd.f32 %v983, %v937
        %v1016 = vadd.f32 %v984, %v942
        %v1017 = vadd.f32 %v985, %v947
        %v1018 = vadd.f32 %v986, %v952
        %1019 = vst [vmem:[#allocation3] sm:$0xff] %v987
        %1020 = vst [vmem:[#allocation3 + $0x8] sm:$0xff] %v988
        %1021 = vst [vmem:[#allocation3 + $0x10] sm:$0xff] %v989
        %1022 = vst [vmem:[#allocation3 + $0x18] sm:$0xff] %v990
        %1023 = vst [vmem:[#allocation3 + $0x20] sm:$0xff] %v991
        %1024 = vst [vmem:[#allocation3 + $0x28] sm:$0xff] %v992
        %1025 = vst [vmem:[#allocation3 + $0x30] sm:$0xff] %v993
        %1026 = vst [vmem:[#allocation3 + $0x38] sm:$0xff] %v994
        %1027 = vst [vmem:[#allocation3 + $0x40] sm:$0xff] %v995
        %1028 = vst [vmem:[#allocation3 + $0x48] sm:$0xff] %v996
        %1029 = vst [vmem:[#allocation3 + $0x50] sm:$0xff] %v997
        %1030 = vst [vmem:[#allocation3 + $0x58] sm:$0xff] %v998
        %1031 = vst [vmem:[#allocation3 + $0x60] sm:$0xff] %v999
        %1032 = vst [vmem:[#allocation3 + $0x68] sm:$0xff] %v1000
        %1033 = vst [vmem:[#allocation3 + $0x70] sm:$0xff] %v1001
        %1034 = vst [vmem:[#allocation3 + $0x78] sm:$0xff] %v1002
        %1035 = vst [vmem:[#allocation3 + $0x80] sm:$0xff] %v1003
        %1036 = vst [vmem:[#allocation3 + $0x88] sm:$0xff] %v1004
        %1037 = vst [vmem:[#allocation3 + $0x90] sm:$0xff] %v1005
        %1038 = vst [vmem:[#allocation3 + $0x98] sm:$0xff] %v1006
        %1039 = vst [vmem:[#allocation3 + $0xa0] sm:$0xff] %v1007
        %1040 = vst [vmem:[#allocation3 + $0xa8] sm:$0xff] %v1008
        %1041 = vst [vmem:[#allocation3 + $0xb0] sm:$0xff] %v1009
        %1042 = vst [vmem:[#allocation3 + $0xb8] sm:$0xff] %v1010
        %1043 = vst [vmem:[#allocation3 + $0xc0] sm:$0xff] %v1011
        %1044 = vst [vmem:[#allocation3 + $0xc8] sm:$0xff] %v1012
        %1045 = vst [vmem:[#allocation3 + $0xd0] sm:$0xff] %v1013
        %1046 = vst [vmem:[#allocation3 + $0xd8] sm:$0xff] %v1014
        %1047 = vst [vmem:[#allocation3 + $0xe0] sm:$0xff] %v1015
        %1048 = vst [vmem:[#allocation3 + $0xe8] sm:$0xff] %v1016
        %1049 = vst [vmem:[#allocation3 + $0xf0] sm:$0xff] %v1017
        %1050 = vst [vmem:[#allocation3 + $0xf8] sm:$0xff] %v1018
        %v1051 = vld [vmem:[%s321 + $0x2] sm:$0xff]
        %v1052 = vld [vmem:[%s321 + $0xa] sm:$0xff]
        %v1053 = vld [vmem:[%s321 + $0x1a] sm:$0xff]
        %v1054 = vld [vmem:[%s321 + $0x22] sm:$0xff]
        %v1055 = vld [vmem:[%s321 + $0x32] sm:$0xff]
        %v1056 = vld [vmem:[%s321 + $0x3a] sm:$0xff]
        %v1057 = vld [vmem:[%s321 + $0x4a] sm:$0xff]
        %v1058 = vld [vmem:[%s321 + $0x52] sm:$0xff]
        %v1059 = vld [vmem:[%s321 + $0x62] sm:$0xff]
        %v1060 = vld [vmem:[%s321 + $0x6a] sm:$0xff]
        %v1061 = vld [vmem:[%s321 + $0x7a] sm:$0xff]
        %v1062 = vld [vmem:[%s321 + $0x82] sm:$0xff]
        %v1063 = vld [vmem:[%s321 + $0x92] sm:$0xff]
        %v1064 = vld [vmem:[%s321 + $0x9a] sm:$0xff]
        %v1065 = vld [vmem:[%s321 + $0xaa] sm:$0xff]
        %v1066 = vld [vmem:[%s321 + $0xb2] sm:$0xff]
        %v1067 = vld [vmem:[%s321 + $0xc2] sm:$0xff]
        %v1068 = vld [vmem:[%s321 + $0xca] sm:$0xff]
        %v1069 = vld [vmem:[%s321 + $0xda] sm:$0xff]
        %v1070 = vld [vmem:[%s321 + $0xe2] sm:$0xff]
        %v1071 = vld [vmem:[%s321 + $0xf2] sm:$0xff]
        %v1072 = vld [vmem:[%s321 + $0xfa] sm:$0xff]
        %v1073 = vld [vmem:[%s321 + $0x10a] sm:$0xff]
        %v1074 = vld [vmem:[%s321 + $0x112] sm:$0xff]
        %v1075 = vld [vmem:[%s321 + $0x122] sm:$0xff]
        %v1076 = vld [vmem:[%s321 + $0x12a] sm:$0xff]
        %v1077 = vld [vmem:[%s321 + $0x13a] sm:$0xff]
        %v1078 = vld [vmem:[%s321 + $0x142] sm:$0xff]
        %v1079 = vld [vmem:[%s321 + $0x152] sm:$0xff]
        %v1080 = vld [vmem:[%s321 + $0x15a] sm:$0xff]
        %v1081 = vld [vmem:[%s321 + $0x16a] sm:$0xff]
        %v1082 = vld [vmem:[%s321 + $0x172] sm:$0xff]
        %s1083 = scalar_lea.vmem [#allocation7], 256
        %v1084 = vld [vmem:[%s1083] sm:$0xff]
        %v1085 = vld [vmem:[%s1083 + $0x8] sm:$0xff]
        %v1086 = vld [vmem:[%s1083 + $0x10] sm:$0xff]
        %v1087 = vld [vmem:[%s1083 + $0x18] sm:$0xff]
        %v1088 = vld [vmem:[%s1083 + $0x20] sm:$0xff]
        %v1089 = vld [vmem:[%s1083 + $0x28] sm:$0xff]
        %v1090 = vld [vmem:[%s1083 + $0x30] sm:$0xff]
        %v1091 = vld [vmem:[%s1083 + $0x38] sm:$0xff]
        %v1092 = vld [vmem:[%s1083 + $0x40] sm:$0xff]
        %v1093 = vld [vmem:[%s1083 + $0x48] sm:$0xff]
        %v1094 = vld [vmem:[%s1083 + $0x50] sm:$0xff]
        %v1095 = vld [vmem:[%s1083 + $0x58] sm:$0xff]
        %v1096 = vld [vmem:[%s1083 + $0x60] sm:$0xff]
        %v1097 = vld [vmem:[%s1083 + $0x68] sm:$0xff]
        %v1098 = vld [vmem:[%s1083 + $0x70] sm:$0xff]
        %v1099 = vld [vmem:[%s1083 + $0x78] sm:$0xff]
        %1100 = vmatprep.subr.mxu0 0.0
        %1101 = vmatpush1.msra.mxu0 %v1084
        %1102 = vmatprep.subr.mxu0 0.0
        %1103 = vmatpush1.msra.mxu0 %v1085
        %1104 = vmatprep.subr.mxu0 0.0
        %1105 = vmatpush1.msra.mxu0 %v1086
        %1106 = vmatprep.subr.mxu0 0.0
        %1107 = vmatpush1.msra.mxu0 %v1087
        %1108 = vmatprep.subr.mxu0 0.0
        %1109 = vmatpush1.msra.mxu0 %v1088
        %1110 = vmatprep.subr.mxu0 0.0
        %1111 = vmatpush1.msra.mxu0 %v1089
        %1112 = vmatprep.subr.mxu0 0.0
        %1113 = vmatpush1.msra.mxu0 %v1090
        %1114 = vmatprep.subr.mxu0 0.0
        %1115 = vmatpush1.msra.mxu0 %v1091
        %1116 = vmatprep.subr.mxu0 0.0
        %1117 = vmatpush1.msra.mxu0 %v1092
        %1118 = vmatprep.subr.mxu0 0.0
        %1119 = vmatpush1.msra.mxu0 %v1093
        %1120 = vmatprep.subr.mxu0 0.0
        %1121 = vmatpush1.msra.mxu0 %v1094
        %1122 = vmatprep.subr.mxu0 0.0
        %1123 = vmatpush1.msra.mxu0 %v1095
        %1124 = vmatprep.subr.mxu0 0.0
        %1125 = vmatpush1.msra.mxu0 %v1096
        %1126 = vmatprep.subr.mxu0 0.0
        %1127 = vmatpush1.msra.mxu0 %v1097
        %1128 = vmatprep.subr.mxu0 0.0
        %1129 = vmatpush1.msra.mxu0 %v1098
        %1130 = vmatprep.subr.mxu0 0.0
        %1131 = vmatpush1.msra.mxu0 %v1099
        %1132 = vmatprep.subr.mxu0 0.0
        %1133 = vmatpush1.msra.mxu0 0.0
        %1134 = vmatprep.subr.mxu0 0.0
        %1135 = vmatpush1.msra.mxu0 0.0
        %1136 = vmatprep.subr.mxu0 0.0
        %1137 = vmatpush1.msra.mxu0 0.0
        %1138 = vmatprep.subr.mxu0 0.0
        %1139 = vmatpush1.msra.mxu0 0.0
        %1140 = vmatprep.subr.mxu0 0.0
        %1141 = vmatpush1.msra.mxu0 0.0
        %1142 = vmatprep.subr.mxu0 0.0
        %1143 = vmatpush1.msra.mxu0 0.0
        %1144 = vmatprep.subr.mxu0 0.0
        %1145 = vmatpush1.msra.mxu0 0.0
        %1146 = vmatprep.subr.mxu0 0.0
        %1147 = vmatpush1.msra.mxu0 0.0
        %1148 = vmatprep.subr.mxu0 0.0
        %1149 = vmatpush1.msra.mxu0 0.0
        %1150 = vmatprep.subr.mxu0 0.0
        %1151 = vmatpush1.msra.mxu0 0.0
        %1152 = vmatprep.subr.mxu0 0.0
        %1153 = vmatpush1.msra.mxu0 0.0
        %1154 = vmatprep.subr.mxu0 0.0
        %1155 = vmatpush1.msra.mxu0 0.0
        %1156 = vmatprep.subr.mxu0 0.0
        %1157 = vmatpush1.msra.mxu0 0.0
        %1158 = vmatprep.subr.mxu0 0.0
        %1159 = vmatpush1.msra.mxu0 0.0
        %1160 = vmatprep.subr.mxu0 0.0
        %1161 = vmatpush1.msra.mxu0 0.0
        %1162 = vmatprep.subr.mxu0 0.0
        %1163 = vmatpush1.msra.mxu0 0.0
        %1164 = vmatprep.mubr.f32.mxu0 0.0
        %1165 = vmatmul.mubr.f32.gmra.mrb[0].mxu0 %v1051
        %v1166 = vpop.f32.mrb[0].mxu0
        %v1167 = vadd.f32 0.0, %v1166
        %v1168 = vpop.f32.mrb[0].mxu0
        %1169 = vmatprep.mubr.f32.mxu0 0.0
        %1170 = vmatmul.mubr.f32.gmra.mrb[0].mxu0 %v1052
        %v1171 = vpop.f32.mrb[0].mxu0
        %v1172 = vadd.f32 0.0, %v1171
        %v1173 = vpop.f32.mrb[0].mxu0
        %1174 = vmatprep.mubr.f32.mxu0 0.0
        %1175 = vmatmul.mubr.f32.gmra.mrb[0].mxu0 %v1053
        %v1176 = vpop.f32.mrb[0].mxu0
        %v1177 = vadd.f32 0.0, %v1176
        %v1178 = vpop.f32.mrb[0].mxu0
        %1179 = vmatprep.mubr.f32.mxu0 0.0
        %1180 = vmatmul.mubr.f32.gmra.mrb[0].mxu0 %v1054
        %v1181 = vpop.f32.mrb[0].mxu0
        %v1182 = vadd.f32 0.0, %v1181
        %v1183 = vpop.f32.mrb[0].mxu0
        %1184 = vmatprep.mubr.f32.mxu0 0.0
        %1185 = vmatmul.mubr.f32.gmra.mrb[0].mxu0 %v1055
        %v1186 = vpop.f32.mrb[0].mxu0
        %v1187 = vadd.f32 0.0, %v1186
        %v1188 = vpop.f32.mrb[0].mxu0
        %1189 = vmatprep.mubr.f32.mxu0 0.0
        %1190 = vmatmul.mubr.f32.gmra.mrb[0].mxu0 %v1056
        %v1191 = vpop.f32.mrb[0].mxu0
        %v1192 = vadd.f32 0.0, %v1191
        %v1193 = vpop.f32.mrb[0].mxu0
        %1194 = vmatprep.mubr.f32.mxu0 0.0
        %1195 = vmatmul.mubr.f32.gmra.mrb[0].mxu0 %v1057
        %v1196 = vpop.f32.mrb[0].mxu0
        %v1197 = vadd.f32 0.0, %v1196
        %v1198 = vpop.f32.mrb[0].mxu0
        %1199 = vmatprep.mubr.f32.mxu0 0.0
        %1200 = vmatmul.mubr.f32.gmra.mrb[0].mxu0 %v1058
        %v1201 = vpop.f32.mrb[0].mxu0
        %v1202 = vadd.f32 0.0, %v1201
        %v1203 = vpop.f32.mrb[0].mxu0
        %1204 = vmatprep.mubr.f32.mxu0 0.0
        %1205 = vmatmul.mubr.f32.gmra.mrb[0].mxu0 %v1059
        %v1206 = vpop.f32.mrb[0].mxu0
        %v1207 = vadd.f32 0.0, %v1206
        %v1208 = vpop.f32.mrb[0].mxu0
        %1209 = vmatprep.mubr.f32.mxu0 0.0
        %1210 = vmatmul.mubr.f32.gmra.mrb[0].mxu0 %v1060
        %v1211 = vpop.f32.mrb[0].mxu0
        %v1212 = vadd.f32 0.0, %v1211
        %v1213 = vpop.f32.mrb[0].mxu0
        %1214 = vmatprep.mubr.f32.mxu0 0.0
        %1215 = vmatmul.mubr.f32.gmra.mrb[0].mxu0 %v1061
        %v1216 = vpop.f32.mrb[0].mxu0
        %v1217 = vadd.f32 0.0, %v1216
        %v1218 = vpop.f32.mrb[0].mxu0
        %1219 = vmatprep.mubr.f32.mxu0 0.0
        %1220 = vmatmul.mubr.f32.gmra.mrb[0].mxu0 %v1062
        %v1221 = vpop.f32.mrb[0].mxu0
        %v1222 = vadd.f32 0.0, %v1221
        %v1223 = vpop.f32.mrb[0].mxu0
        %1224 = vmatprep.mubr.f32.mxu0 0.0
        %1225 = vmatmul.mubr.f32.gmra.mrb[0].mxu0 %v1063
        %v1226 = vpop.f32.mrb[0].mxu0
        %v1227 = vadd.f32 0.0, %v1226
        %v1228 = vpop.f32.mrb[0].mxu0
        %1229 = vmatprep.mubr.f32.mxu0 0.0
        %1230 = vmatmul.mubr.f32.gmra.mrb[0].mxu0 %v1064
        %v1231 = vpop.f32.mrb[0].mxu0
        %v1232 = vadd.f32 0.0, %v1231
        %v1233 = vpop.f32.mrb[0].mxu0
        %1234 = vmatprep.mubr.f32.mxu0 0.0
        %1235 = vmatmul.mubr.f32.gmra.mrb[0].mxu0 %v1065
        %v1236 = vpop.f32.mrb[0].mxu0
        %v1237 = vadd.f32 0.0, %v1236
        %v1238 = vpop.f32.mrb[0].mxu0
        %1239 = vmatprep.mubr.f32.mxu0 0.0
        %1240 = vmatmul.mubr.f32.gmra.mrb[0].mxu0 %v1066
        %v1241 = vpop.f32.mrb[0].mxu0
        %v1242 = vadd.f32 0.0, %v1241
        %v1243 = vpop.f32.mrb[0].mxu0
        %1244 = vmatprep.mubr.f32.mxu0 0.0
        %1245 = vmatmul.mubr.f32.gmra.mrb[0].mxu0 %v1067
        %v1246 = vpop.f32.mrb[0].mxu0
        %v1247 = vadd.f32 0.0, %v1246
        %v1248 = vpop.f32.mrb[0].mxu0
        %1249 = vmatprep.mubr.f32.mxu0 0.0
        %1250 = vmatmul.mubr.f32.gmra.mrb[0].mxu0 %v1068
        %v1251 = vpop.f32.mrb[0].mxu0
        %v1252 = vadd.f32 0.0, %v1251
        %v1253 = vpop.f32.mrb[0].mxu0
        %1254 = vmatprep.mubr.f32.mxu0 0.0
        %1255 = vmatmul.mubr.f32.gmra.mrb[0].mxu0 %v1069
        %v1256 = vpop.f32.mrb[0].mxu0
        %v1257 = vadd.f32 0.0, %v1256
        %v1258 = vpop.f32.mrb[0].mxu0
        %1259 = vmatprep.mubr.f32.mxu0 0.0
        %1260 = vmatmul.mubr.f32.gmra.mrb[0].mxu0 %v1070
        %v1261 = vpop.f32.mrb[0].mxu0
        %v1262 = vadd.f32 0.0, %v1261
        %v1263 = vpop.f32.mrb[0].mxu0
        %1264 = vmatprep.mubr.f32.mxu0 0.0
        %1265 = vmatmul.mubr.f32.gmra.mrb[0].mxu0 %v1071
        %v1266 = vpop.f32.mrb[0].mxu0
        %v1267 = vadd.f32 0.0, %v1266
        %v1268 = vpop.f32.mrb[0].mxu0
        %1269 = vmatprep.mubr.f32.mxu0 0.0
        %1270 = vmatmul.mubr.f32.gmra.mrb[0].mxu0 %v1072
        %v1271 = vpop.f32.mrb[0].mxu0
        %v1272 = vadd.f32 0.0, %v1271
        %v1273 = vpop.f32.mrb[0].mxu0
        %1274 = vmatprep.mubr.f32.mxu0 0.0
        %1275 = vmatmul.mubr.f32.gmra.mrb[0].mxu0 %v1073
        %v1276 = vpop.f32.mrb[0].mxu0
        %v1277 = vadd.f32 0.0, %v1276
        %v1278 = vpop.f32.mrb[0].mxu0
        %1279 = vmatprep.mubr.f32.mxu0 0.0
        %1280 = vmatmul.mubr.f32.gmra.mrb[0].mxu0 %v1074
        %v1281 = vpop.f32.mrb[0].mxu0
        %v1282 = vadd.f32 0.0, %v1281
        %v1283 = vpop.f32.mrb[0].mxu0
        %1284 = vmatprep.mubr.f32.mxu0 0.0
        %1285 = vmatmul.mubr.f32.gmra.mrb[0].mxu0 %v1075
        %v1286 = vpop.f32.mrb[0].mxu0
        %v1287 = vadd.f32 0.0, %v1286
        %v1288 = vpop.f32.mrb[0].mxu0
        %1289 = vmatprep.mubr.f32.mxu0 0.0
        %1290 = vmatmul.mubr.f32.gmra.mrb[0].mxu0 %v1076
        %v1291 = vpop.f32.mrb[0].mxu0
        %v1292 = vadd.f32 0.0, %v1291
        %v1293 = vpop.f32.mrb[0].mxu0
        %1294 = vmatprep.mubr.f32.mxu0 0.0
        %1295 = vmatmul.mubr.f32.gmra.mrb[0].mxu0 %v1077
        %v1296 = vpop.f32.mrb[0].mxu0
        %v1297 = vadd.f32 0.0, %v1296
        %v1298 = vpop.f32.mrb[0].mxu0
        %1299 = vmatprep.mubr.f32.mxu0 0.0
        %1300 = vmatmul.mubr.f32.gmra.mrb[0].mxu0 %v1078
        %v1301 = vpop.f32.mrb[0].mxu0
        %v1302 = vadd.f32 0.0, %v1301
        %v1303 = vpop.f32.mrb[0].mxu0
        %1304 = vmatprep.mubr.f32.mxu0 0.0
        %1305 = vmatmul.mubr.f32.gmra.mrb[0].mxu0 %v1079
        %v1306 = vpop.f32.mrb[0].mxu0
        %v1307 = vadd.f32 0.0, %v1306
        %v1308 = vpop.f32.mrb[0].mxu0
        %1309 = vmatprep.mubr.f32.mxu0 0.0
        %1310 = vmatmul.mubr.f32.gmra.mrb[0].mxu0 %v1080
        %v1311 = vpop.f32.mrb[0].mxu0
        %v1312 = vadd.f32 0.0, %v1311
        %v1313 = vpop.f32.mrb[0].mxu0
        %1314 = vmatprep.mubr.f32.mxu0 0.0
        %1315 = vmatmul.mubr.f32.gmra.mrb[0].mxu0 %v1081
        %v1316 = vpop.f32.mrb[0].mxu0
        %v1317 = vadd.f32 0.0, %v1316
        %v1318 = vpop.f32.mrb[0].mxu0
        %1319 = vmatprep.mubr.f32.mxu0 0.0
        %1320 = vmatmul.mubr.f32.gmra.mrb[0].mxu0 %v1082
        %v1321 = vpop.f32.mrb[0].mxu0
        %v1322 = vadd.f32 0.0, %v1321
        %v1323 = vpop.f32.mrb[0].mxu0
        %1324 = vdwg.mxu0
        %v1325 = vld [vmem:[#allocation3] sm:$0xff]
        %v1326 = vld [vmem:[#allocation3 + $0x8] sm:$0xff]
        %v1327 = vld [vmem:[#allocation3 + $0x10] sm:$0xff]
        %v1328 = vld [vmem:[#allocation3 + $0x18] sm:$0xff]
        %v1329 = vld [vmem:[#allocation3 + $0x20] sm:$0xff]
        %v1330 = vld [vmem:[#allocation3 + $0x28] sm:$0xff]
        %v1331 = vld [vmem:[#allocation3 + $0x30] sm:$0xff]
        %v1332 = vld [vmem:[#allocation3 + $0x38] sm:$0xff]
        %v1333 = vld [vmem:[#allocation3 + $0x40] sm:$0xff]
        %v1334 = vld [vmem:[#allocation3 + $0x48] sm:$0xff]
        %v1335 = vld [vmem:[#allocation3 + $0x50] sm:$0xff]
        %v1336 = vld [vmem:[#allocation3 + $0x58] sm:$0xff]
        %v1337 = vld [vmem:[#allocation3 + $0x60] sm:$0xff]
        %v1338 = vld [vmem:[#allocation3 + $0x68] sm:$0xff]
        %v1339 = vld [vmem:[#allocation3 + $0x70] sm:$0xff]
        %v1340 = vld [vmem:[#allocation3 + $0x78] sm:$0xff]
        %v1341 = vld [vmem:[#allocation3 + $0x80] sm:$0xff]
        %v1342 = vld [vmem:[#allocation3 + $0x88] sm:$0xff]
        %v1343 = vld [vmem:[#allocation3 + $0x90] sm:$0xff]
        %v1344 = vld [vmem:[#allocation3 + $0x98] sm:$0xff]
        %v1345 = vld [vmem:[#allocation3 + $0xa0] sm:$0xff]
        %v1346 = vld [vmem:[#allocation3 + $0xa8] sm:$0xff]
        %v1347 = vld [vmem:[#allocation3 + $0xb0] sm:$0xff]
        %v1348 = vld [vmem:[#allocation3 + $0xb8] sm:$0xff]
        %v1349 = vld [vmem:[#allocation3 + $0xc0] sm:$0xff]
        %v1350 = vld [vmem:[#allocation3 + $0xc8] sm:$0xff]
        %v1351 = vld [vmem:[#allocation3 + $0xd0] sm:$0xff]
        %v1352 = vld [vmem:[#allocation3 + $0xd8] sm:$0xff]
        %v1353 = vld [vmem:[#allocation3 + $0xe0] sm:$0xff]
        %v1354 = vld [vmem:[#allocation3 + $0xe8] sm:$0xff]
        %v1355 = vld [vmem:[#allocation3 + $0xf0] sm:$0xff]
        %v1356 = vld [vmem:[#allocation3 + $0xf8] sm:$0xff]
        %v1357 = vadd.f32 %v1325, %v1167
        %v1358 = vadd.f32 %v1326, %v1172
        %v1359 = vadd.f32 %v1327, %v1177
        %v1360 = vadd.f32 %v1328, %v1182
        %v1361 = vadd.f32 %v1329, %v1187
        %v1362 = vadd.f32 %v1330, %v1192
        %v1363 = vadd.f32 %v1331, %v1197
        %v1364 = vadd.f32 %v1332, %v1202
        %v1365 = vadd.f32 %v1333, %v1207
        %v1366 = vadd.f32 %v1334, %v1212
        %v1367 = vadd.f32 %v1335, %v1217
        %v1368 = vadd.f32 %v1336, %v1222
        %v1369 = vadd.f32 %v1337, %v1227
        %v1370 = vadd.f32 %v1338, %v1232
        %v1371 = vadd.f32 %v1339, %v1237
        %v1372 = vadd.f32 %v1340, %v1242
        %v1373 = vadd.f32 %v1341, %v1247
        %v1374 = vadd.f32 %v1342, %v1252
        %v1375 = vadd.f32 %v1343, %v1257
        %v1376 = vadd.f32 %v1344, %v1262
        %v1377 = vadd.f32 %v1345, %v1267
        %v1378 = vadd.f32 %v1346, %v1272
        %v1379 = vadd.f32 %v1347, %v1277
        %v1380 = vadd.f32 %v1348, %v1282
        %v1381 = vadd.f32 %v1349, %v1287
        %v1382 = vadd.f32 %v1350, %v1292
        %v1383 = vadd.f32 %v1351, %v1297
        %v1384 = vadd.f32 %v1352, %v1302
        %v1385 = vadd.f32 %v1353, %v1307
        %v1386 = vadd.f32 %v1354, %v1312
        %v1387 = vadd.f32 %v1355, %v1317
        %v1388 = vadd.f32 %v1356, %v1322
        %1389 = vst [vmem:[#allocation3] sm:$0xff] %v1357
        %1390 = vst [vmem:[#allocation3 + $0x8] sm:$0xff] %v1358
        %1391 = vst [vmem:[#allocation3 + $0x10] sm:$0xff] %v1359
        %1392 = vst [vmem:[#allocation3 + $0x18] sm:$0xff] %v1360
        %1393 = vst [vmem:[#allocation3 + $0x20] sm:$0xff] %v1361
        %1394 = vst [vmem:[#allocation3 + $0x28] sm:$0xff] %v1362
        %1395 = vst [vmem:[#allocation3 + $0x30] sm:$0xff] %v1363
        %1396 = vst [vmem:[#allocation3 + $0x38] sm:$0xff] %v1364
        %1397 = vst [vmem:[#allocation3 + $0x40] sm:$0xff] %v1365
        %1398 = vst [vmem:[#allocation3 + $0x48] sm:$0xff] %v1366
        %1399 = vst [vmem:[#allocation3 + $0x50] sm:$0xff] %v1367
        %1400 = vst [vmem:[#allocation3 + $0x58] sm:$0xff] %v1368
        %1401 = vst [vmem:[#allocation3 + $0x60] sm:$0xff] %v1369
        %1402 = vst [vmem:[#allocation3 + $0x68] sm:$0xff] %v1370
        %1403 = vst [vmem:[#allocation3 + $0x70] sm:$0xff] %v1371
        %1404 = vst [vmem:[#allocation3 + $0x78] sm:$0xff] %v1372
        %1405 = vst [vmem:[#allocation3 + $0x80] sm:$0xff] %v1373
        %1406 = vst [vmem:[#allocation3 + $0x88] sm:$0xff] %v1374
        %1407 = vst [vmem:[#allocation3 + $0x90] sm:$0xff] %v1375
        %1408 = vst [vmem:[#allocation3 + $0x98] sm:$0xff] %v1376
        %1409 = vst [vmem:[#allocation3 + $0xa0] sm:$0xff] %v1377
        %1410 = vst [vmem:[#allocation3 + $0xa8] sm:$0xff] %v1378
        %1411 = vst [vmem:[#allocation3 + $0xb0] sm:$0xff] %v1379
        %1412 = vst [vmem:[#allocation3 + $0xb8] sm:$0xff] %v1380
        %1413 = vst [vmem:[#allocation3 + $0xc0] sm:$0xff] %v1381
        %1414 = vst [vmem:[#allocation3 + $0xc8] sm:$0xff] %v1382
        %1415 = vst [vmem:[#allocation3 + $0xd0] sm:$0xff] %v1383
        %1416 = vst [vmem:[#allocation3 + $0xd8] sm:$0xff] %v1384
        %1417 = vst [vmem:[#allocation3 + $0xe0] sm:$0xff] %v1385
        %1418 = vst [vmem:[#allocation3 + $0xe8] sm:$0xff] %v1386
        %1419 = vst [vmem:[#allocation3 + $0xf0] sm:$0xff] %v1387
        %1420 = vst [vmem:[#allocation3 + $0xf8] sm:$0xff] %v1388
        %s1421 = scalar_lea.vmem %s321, 24 [#allocation4]
        %v1422 = vld [vmem:[%s1421] sm:$0xff]
        %v1423 = vld [vmem:[%s1421 + $0x8] sm:$0xff]
        %v1424 = vld [vmem:[%s1421 + $0x18] sm:$0xff]
        %v1425 = vld [vmem:[%s1421 + $0x20] sm:$0xff]
        %v1426 = vld [vmem:[%s1421 + $0x30] sm:$0xff]
        %v1427 = vld [vmem:[%s1421 + $0x38] sm:$0xff]
        %v1428 = vld [vmem:[%s1421 + $0x48] sm:$0xff]
        %v1429 = vld [vmem:[%s1421 + $0x50] sm:$0xff]
        %v1430 = vld [vmem:[%s1421 + $0x60] sm:$0xff]
        %v1431 = vld [vmem:[%s1421 + $0x68] sm:$0xff]
        %v1432 = vld [vmem:[%s1421 + $0x78] sm:$0xff]
        %v1433 = vld [vmem:[%s1421 + $0x80] sm:$0xff]
        %v1434 = vld [vmem:[%s1421 + $0x90] sm:$0xff]
        %v1435 = vld [vmem:[%s1421 + $0x98] sm:$0xff]
        %v1436 = vld [vmem:[%s1421 + $0xa8] sm:$0xff]
        %v1437 = vld [vmem:[%s1421 + $0xb0] sm:$0xff]
        %v1438 = vld [vmem:[%s1421 + $0xc0] sm:$0xff]
        %v1439 = vld [vmem:[%s1421 + $0xc8] sm:$0xff]
        %v1440 = vld [vmem:[%s1421 + $0xd8] sm:$0xff]
        %v1441 = vld [vmem:[%s1421 + $0xe0] sm:$0xff]
        %v1442 = vld [vmem:[%s1421 + $0xf0] sm:$0xff]
        %v1443 = vld [vmem:[%s1421 + $0xf8] sm:$0xff]
        %v1444 = vld [vmem:[%s1421 + $0x108] sm:$0xff]
        %v1445 = vld [vmem:[%s1421 + $0x110] sm:$0xff]
        %v1446 = vld [vmem:[%s1421 + $0x120] sm:$0xff]
        %v1447 = vld [vmem:[%s1421 + $0x128] sm:$0xff]
        %v1448 = vld [vmem:[%s1421 + $0x138] sm:$0xff]
        %v1449 = vld [vmem:[%s1421 + $0x140] sm:$0xff]
        %v1450 = vld [vmem:[%s1421 + $0x150] sm:$0xff]
        %v1451 = vld [vmem:[%s1421 + $0x158] sm:$0xff]
        %v1452 = vld [vmem:[%s1421 + $0x168] sm:$0xff]
        %v1453 = vld [vmem:[%s1421 + $0x170] sm:$0xff]
        %s1454 = scalar_lea.vmem [#allocation7], 384
        %v1455 = vld [vmem:[%s1454] sm:$0xff]
        %v1456 = vld [vmem:[%s1454 + $0x8] sm:$0xff]
        %v1457 = vld [vmem:[%s1454 + $0x10] sm:$0xff]
        %v1458 = vld [vmem:[%s1454 + $0x18] sm:$0xff]
        %v1459 = vld [vmem:[%s1454 + $0x20] sm:$0xff]
        %v1460 = vld [vmem:[%s1454 + $0x28] sm:$0xff]
        %v1461 = vld [vmem:[%s1454 + $0x30] sm:$0xff]
        %v1462 = vld [vmem:[%s1454 + $0x38] sm:$0xff]
        %v1463 = vld [vmem:[%s1454 + $0x40] sm:$0xff]
        %v1464 = vld [vmem:[%s1454 + $0x48] sm:$0xff]
        %v1465 = vld [vmem:[%s1454 + $0x50] sm:$0xff]
        %v1466 = vld [vmem:[%s1454 + $0x58] sm:$0xff]
        %v1467 = vld [vmem:[%s1454 + $0x60] sm:$0xff]
        %v1468 = vld [vmem:[%s1454 + $0x68] sm:$0xff]
        %v1469 = vld [vmem:[%s1454 + $0x70] sm:$0xff]
        %v1470 = vld [vmem:[%s1454 + $0x78] sm:$0xff]
        %1471 = vmatprep.subr.mxu0 0.0
        %1472 = vmatpush1.msra.mxu0 %v1455
        %1473 = vmatprep.subr.mxu0 0.0
        %1474 = vmatpush1.msra.mxu0 %v1456
        %1475 = vmatprep.subr.mxu0 0.0
        %1476 = vmatpush1.msra.mxu0 %v1457
        %1477 = vmatprep.subr.mxu0 0.0
        %1478 = vmatpush1.msra.mxu0 %v1458
        %1479 = vmatprep.subr.mxu0 0.0
        %1480 = vmatpush1.msra.mxu0 %v1459
        %1481 = vmatprep.subr.mxu0 0.0
        %1482 = vmatpush1.msra.mxu0 %v1460
        %1483 = vmatprep.subr.mxu0 0.0
        %1484 = vmatpush1.msra.mxu0 %v1461
        %1485 = vmatprep.subr.mxu0 0.0
        %1486 = vmatpush1.msra.mxu0 %v1462
        %1487 = vmatprep.subr.mxu0 0.0
        %1488 = vmatpush1.msra.mxu0 %v1463
        %1489 = vmatprep.subr.mxu0 0.0
        %1490 = vmatpush1.msra.mxu0 %v1464
        %1491 = vmatprep.subr.mxu0 0.0
        %1492 = vmatpush1.msra.mxu0 %v1465
        %1493 = vmatprep.subr.mxu0 0.0
        %1494 = vmatpush1.msra.mxu0 %v1466
        %1495 = vmatprep.subr.mxu0 0.0
        %1496 = vmatpush1.msra.mxu0 %v1467
        %1497 = vmatprep.subr.mxu0 0.0
        %1498 = vmatpush1.msra.mxu0 %v1468
        %1499 = vmatprep.subr.mxu0 0.0
        %1500 = vmatpush1.msra.mxu0 %v1469
        %1501 = vmatprep.subr.mxu0 0.0
        %1502 = vmatpush1.msra.mxu0 %v1470
        %1503 = vmatprep.subr.mxu0 0.0
        %1504 = vmatpush1.msra.mxu0 0.0
        %1505 = vmatprep.subr.mxu0 0.0
        %1506 = vmatpush1.msra.mxu0 0.0
        %1507 = vmatprep.subr.mxu0 0.0
        %1508 = vmatpush1.msra.mxu0 0.0
        %1509 = vmatprep.subr.mxu0 0.0
        %1510 = vmatpush1.msra.mxu0 0.0
        %1511 = vmatprep.subr.mxu0 0.0
        %1512 = vmatpush1.msra.mxu0 0.0
        %1513 = vmatprep.subr.mxu0 0.0
        %1514 = vmatpush1.msra.mxu0 0.0
        %1515 = vmatprep.subr.mxu0 0.0
        %1516 = vmatpush1.msra.mxu0 0.0
        %1517 = vmatprep.subr.mxu0 0.0
        %1518 = vmatpush1.msra.mxu0 0.0
        %1519 = vmatprep.subr.mxu0 0.0
        %1520 = vmatpush1.msra.mxu0 0.0
        %1521 = vmatprep.subr.mxu0 0.0
        %1522 = vmatpush1.msra.mxu0 0.0
        %1523 = vmatprep.subr.mxu0 0.0
        %1524 = vmatpush1.msra.mxu0 0.0
        %1525 = vmatprep.subr.mxu0 0.0
        %1526 = vmatpush1.msra.mxu0 0.0
        %1527 = vmatprep.subr.mxu0 0.0
        %1528 = vmatpush1.msra.mxu0 0.0
        %1529 = vmatprep.subr.mxu0 0.0
        %1530 = vmatpush1.msra.mxu0 0.0
        %1531 = vmatprep.subr.mxu0 0.0
        %1532 = vmatpush1.msra.mxu0 0.0
        %1533 = vmatprep.subr.mxu0 0.0
        %1534 = vmatpush1.msra.mxu0 0.0
        %1535 = vmatprep.mubr.f32.mxu0 0.0
        %1536 = vmatmul.mubr.f32.gmra.mrb[0].mxu0 %v1422
        %v1537 = vpop.f32.mrb[0].mxu0
        %v1538 = vadd.f32 0.0, %v1537
        %v1539 = vpop.f32.mrb[0].mxu0
        %1540 = vmatprep.mubr.f32.mxu0 0.0
        %1541 = vmatmul.mubr.f32.gmra.mrb[0].mxu0 %v1423
        %v1542 = vpop.f32.mrb[0].mxu0
        %v1543 = vadd.f32 0.0, %v1542
        %v1544 = vpop.f32.mrb[0].mxu0
        %1545 = vmatprep.mubr.f32.mxu0 0.0
        %1546 = vmatmul.mubr.f32.gmra.mrb[0].mxu0 %v1424
        %v1547 = vpop.f32.mrb[0].mxu0
        %v1548 = vadd.f32 0.0, %v1547
        %v1549 = vpop.f32.mrb[0].mxu0
        %1550 = vmatprep.mubr.f32.mxu0 0.0
        %1551 = vmatmul.mubr.f32.gmra.mrb[0].mxu0 %v1425
        %v1552 = vpop.f32.mrb[0].mxu0
        %v1553 = vadd.f32 0.0, %v1552
        %v1554 = vpop.f32.mrb[0].mxu0
        %1555 = vmatprep.mubr.f32.mxu0 0.0
        %1556 = vmatmul.mubr.f32.gmra.mrb[0].mxu0 %v1426
        %v1557 = vpop.f32.mrb[0].mxu0
        %v1558 = vadd.f32 0.0, %v1557
        %v1559 = vpop.f32.mrb[0].mxu0
        %1560 = vmatprep.mubr.f32.mxu0 0.0
        %1561 = vmatmul.mubr.f32.gmra.mrb[0].mxu0 %v1427
        %v1562 = vpop.f32.mrb[0].mxu0
        %v1563 = vadd.f32 0.0, %v1562
        %v1564 = vpop.f32.mrb[0].mxu0
        %1565 = vmatprep.mubr.f32.mxu0 0.0
        %1566 = vmatmul.mubr.f32.gmra.mrb[0].mxu0 %v1428
        %v1567 = vpop.f32.mrb[0].mxu0
        %v1568 = vadd.f32 0.0, %v1567
        %v1569 = vpop.f32.mrb[0].mxu0
        %1570 = vmatprep.mubr.f32.mxu0 0.0
        %1571 = vmatmul.mubr.f32.gmra.mrb[0].mxu0 %v1429
        %v1572 = vpop.f32.mrb[0].mxu0
        %v1573 = vadd.f32 0.0, %v1572
        %v1574 = vpop.f32.mrb[0].mxu0
        %1575 = vmatprep.mubr.f32.mxu0 0.0
        %1576 = vmatmul.mubr.f32.gmra.mrb[0].mxu0 %v1430
        %v1577 = vpop.f32.mrb[0].mxu0
        %v1578 = vadd.f32 0.0, %v1577
        %v1579 = vpop.f32.mrb[0].mxu0
        %1580 = vmatprep.mubr.f32.mxu0 0.0
        %1581 = vmatmul.mubr.f32.gmra.mrb[0].mxu0 %v1431
        %v1582 = vpop.f32.mrb[0].mxu0
        %v1583 = vadd.f32 0.0, %v1582
        %v1584 = vpop.f32.mrb[0].mxu0
        %1585 = vmatprep.mubr.f32.mxu0 0.0
        %1586 = vmatmul.mubr.f32.gmra.mrb[0].mxu0 %v1432
        %v1587 = vpop.f32.mrb[0].mxu0
        %v1588 = vadd.f32 0.0, %v1587
        %v1589 = vpop.f32.mrb[0].mxu0
        %1590 = vmatprep.mubr.f32.mxu0 0.0
        %1591 = vmatmul.mubr.f32.gmra.mrb[0].mxu0 %v1433
        %v1592 = vpop.f32.mrb[0].mxu0
        %v1593 = vadd.f32 0.0, %v1592
        %v1594 = vpop.f32.mrb[0].mxu0
        %1595 = vmatprep.mubr.f32.mxu0 0.0
        %1596 = vmatmul.mubr.f32.gmra.mrb[0].mxu0 %v1434
        %v1597 = vpop.f32.mrb[0].mxu0
        %v1598 = vadd.f32 0.0, %v1597
        %v1599 = vpop.f32.mrb[0].mxu0
        %1600 = vmatprep.mubr.f32.mxu0 0.0
        %1601 = vmatmul.mubr.f32.gmra.mrb[0].mxu0 %v1435
        %v1602 = vpop.f32.mrb[0].mxu0
        %v1603 = vadd.f32 0.0, %v1602
        %v1604 = vpop.f32.mrb[0].mxu0
        %1605 = vmatprep.mubr.f32.mxu0 0.0
        %1606 = vmatmul.mubr.f32.gmra.mrb[0].mxu0 %v1436
        %v1607 = vpop.f32.mrb[0].mxu0
        %v1608 = vadd.f32 0.0, %v1607
        %v1609 = vpop.f32.mrb[0].mxu0
        %1610 = vmatprep.mubr.f32.mxu0 0.0
        %1611 = vmatmul.mubr.f32.gmra.mrb[0].mxu0 %v1437
        %v1612 = vpop.f32.mrb[0].mxu0
        %v1613 = vadd.f32 0.0, %v1612
        %v1614 = vpop.f32.mrb[0].mxu0
        %1615 = vmatprep.mubr.f32.mxu0 0.0
        %1616 = vmatmul.mubr.f32.gmra.mrb[0].mxu0 %v1438
        %v1617 = vpop.f32.mrb[0].mxu0
        %v1618 = vadd.f32 0.0, %v1617
        %v1619 = vpop.f32.mrb[0].mxu0
        %1620 = vmatprep.mubr.f32.mxu0 0.0
        %1621 = vmatmul.mubr.f32.gmra.mrb[0].mxu0 %v1439
        %v1622 = vpop.f32.mrb[0].mxu0
        %v1623 = vadd.f32 0.0, %v1622
        %v1624 = vpop.f32.mrb[0].mxu0
        %1625 = vmatprep.mubr.f32.mxu0 0.0
        %1626 = vmatmul.mubr.f32.gmra.mrb[0].mxu0 %v1440
        %v1627 = vpop.f32.mrb[0].mxu0
        %v1628 = vadd.f32 0.0, %v1627
        %v1629 = vpop.f32.mrb[0].mxu0
        %1630 = vmatprep.mubr.f32.mxu0 0.0
        %1631 = vmatmul.mubr.f32.gmra.mrb[0].mxu0 %v1441
        %v1632 = vpop.f32.mrb[0].mxu0
        %v1633 = vadd.f32 0.0, %v1632
        %v1634 = vpop.f32.mrb[0].mxu0
        %1635 = vmatprep.mubr.f32.mxu0 0.0
        %1636 = vmatmul.mubr.f32.gmra.mrb[0].mxu0 %v1442
        %v1637 = vpop.f32.mrb[0].mxu0
        %v1638 = vadd.f32 0.0, %v1637
        %v1639 = vpop.f32.mrb[0].mxu0
        %1640 = vmatprep.mubr.f32.mxu0 0.0
        %1641 = vmatmul.mubr.f32.gmra.mrb[0].mxu0 %v1443
        %v1642 = vpop.f32.mrb[0].mxu0
        %v1643 = vadd.f32 0.0, %v1642
        %v1644 = vpop.f32.mrb[0].mxu0
        %1645 = vmatprep.mubr.f32.mxu0 0.0
        %1646 = vmatmul.mubr.f32.gmra.mrb[0].mxu0 %v1444
        %v1647 = vpop.f32.mrb[0].mxu0
        %v1648 = vadd.f32 0.0, %v1647
        %v1649 = vpop.f32.mrb[0].mxu0
        %1650 = vmatprep.mubr.f32.mxu0 0.0
        %1651 = vmatmul.mubr.f32.gmra.mrb[0].mxu0 %v1445
        %v1652 = vpop.f32.mrb[0].mxu0
        %v1653 = vadd.f32 0.0, %v1652
        %v1654 = vpop.f32.mrb[0].mxu0
        %1655 = vmatprep.mubr.f32.mxu0 0.0
        %1656 = vmatmul.mubr.f32.gmra.mrb[0].mxu0 %v1446
        %v1657 = vpop.f32.mrb[0].mxu0
        %v1658 = vadd.f32 0.0, %v1657
        %v1659 = vpop.f32.mrb[0].mxu0
        %1660 = vmatprep.mubr.f32.mxu0 0.0
        %1661 = vmatmul.mubr.f32.gmra.mrb[0].mxu0 %v1447
        %v1662 = vpop.f32.mrb[0].mxu0
        %v1663 = vadd.f32 0.0, %v1662
        %v1664 = vpop.f32.mrb[0].mxu0
        %1665 = vmatprep.mubr.f32.mxu0 0.0
        %1666 = vmatmul.mubr.f32.gmra.mrb[0].mxu0 %v1448
        %v1667 = vpop.f32.mrb[0].mxu0
        %v1668 = vadd.f32 0.0, %v1667
        %v1669 = vpop.f32.mrb[0].mxu0
        %1670 = vmatprep.mubr.f32.mxu0 0.0
        %1671 = vmatmul.mubr.f32.gmra.mrb[0].mxu0 %v1449
        %v1672 = vpop.f32.mrb[0].mxu0
        %v1673 = vadd.f32 0.0, %v1672
        %v1674 = vpop.f32.mrb[0].mxu0
        %1675 = vmatprep.mubr.f32.mxu0 0.0
        %1676 = vmatmul.mubr.f32.gmra.mrb[0].mxu0 %v1450
        %v1677 = vpop.f32.mrb[0].mxu0
        %v1678 = vadd.f32 0.0, %v1677
        %v1679 = vpop.f32.mrb[0].mxu0
        %1680 = vmatprep.mubr.f32.mxu0 0.0
        %1681 = vmatmul.mubr.f32.gmra.mrb[0].mxu0 %v1451
        %v1682 = vpop.f32.mrb[0].mxu0
        %v1683 = vadd.f32 0.0, %v1682
        %v1684 = vpop.f32.mrb[0].mxu0
        %1685 = vmatprep.mubr.f32.mxu0 0.0
        %1686 = vmatmul.mubr.f32.gmra.mrb[0].mxu0 %v1452
        %v1687 = vpop.f32.mrb[0].mxu0
        %v1688 = vadd.f32 0.0, %v1687
        %v1689 = vpop.f32.mrb[0].mxu0
        %1690 = vmatprep.mubr.f32.mxu0 0.0
        %1691 = vmatmul.mubr.f32.gmra.mrb[0].mxu0 %v1453
        %v1692 = vpop.f32.mrb[0].mxu0
        %v1693 = vadd.f32 0.0, %v1692
        %v1694 = vpop.f32.mrb[0].mxu0
        %1695 = vdwg.mxu0
        %v1696 = vld [vmem:[#allocation3] sm:$0xff]
        %v1697 = vld [vmem:[#allocation3 + $0x8] sm:$0xff]
        %v1698 = vld [vmem:[#allocation3 + $0x10] sm:$0xff]
        %v1699 = vld [vmem:[#allocation3 + $0x18] sm:$0xff]
        %v1700 = vld [vmem:[#allocation3 + $0x20] sm:$0xff]
        %v1701 = vld [vmem:[#allocation3 + $0x28] sm:$0xff]
        %v1702 = vld [vmem:[#allocation3 + $0x30] sm:$0xff]
        %v1703 = vld [vmem:[#allocation3 + $0x38] sm:$0xff]
        %v1704 = vld [vmem:[#allocation3 + $0x40] sm:$0xff]
        %v1705 = vld [vmem:[#allocation3 + $0x48] sm:$0xff]
        %v1706 = vld [vmem:[#allocation3 + $0x50] sm:$0xff]
        %v1707 = vld [vmem:[#allocation3 + $0x58] sm:$0xff]
        %v1708 = vld [vmem:[#allocation3 + $0x60] sm:$0xff]
        %v1709 = vld [vmem:[#allocation3 + $0x68] sm:$0xff]
        %v1710 = vld [vmem:[#allocation3 + $0x70] sm:$0xff]
        %v1711 = vld [vmem:[#allocation3 + $0x78] sm:$0xff]
        %v1712 = vld [vmem:[#allocation3 + $0x80] sm:$0xff]
        %v1713 = vld [vmem:[#allocation3 + $0x88] sm:$0xff]
        %v1714 = vld [vmem:[#allocation3 + $0x90] sm:$0xff]
        %v1715 = vld [vmem:[#allocation3 + $0x98] sm:$0xff]
        %v1716 = vld [vmem:[#allocation3 + $0xa0] sm:$0xff]
        %v1717 = vld [vmem:[#allocation3 + $0xa8] sm:$0xff]
        %v1718 = vld [vmem:[#allocation3 + $0xb0] sm:$0xff]
        %v1719 = vld [vmem:[#allocation3 + $0xb8] sm:$0xff]
        %v1720 = vld [vmem:[#allocation3 + $0xc0] sm:$0xff]
        %v1721 = vld [vmem:[#allocation3 + $0xc8] sm:$0xff]
        %v1722 = vld [vmem:[#allocation3 + $0xd0] sm:$0xff]
        %v1723 = vld [vmem:[#allocation3 + $0xd8] sm:$0xff]
        %v1724 = vld [vmem:[#allocation3 + $0xe0] sm:$0xff]
        %v1725 = vld [vmem:[#allocation3 + $0xe8] sm:$0xff]
        %v1726 = vld [vmem:[#allocation3 + $0xf0] sm:$0xff]
        %v1727 = vld [vmem:[#allocation3 + $0xf8] sm:$0xff]
        %v1728 = vadd.f32 %v1696, %v1538
        %v1729 = vadd.f32 %v1697, %v1543
        %v1730 = vadd.f32 %v1698, %v1548
        %v1731 = vadd.f32 %v1699, %v1553
        %v1732 = vadd.f32 %v1700, %v1558
        %v1733 = vadd.f32 %v1701, %v1563
        %v1734 = vadd.f32 %v1702, %v1568
        %v1735 = vadd.f32 %v1703, %v1573
        %v1736 = vadd.f32 %v1704, %v1578
        %v1737 = vadd.f32 %v1705, %v1583
        %v1738 = vadd.f32 %v1706, %v1588
        %v1739 = vadd.f32 %v1707, %v1593
        %v1740 = vadd.f32 %v1708, %v1598
        %v1741 = vadd.f32 %v1709, %v1603
        %v1742 = vadd.f32 %v1710, %v1608
        %v1743 = vadd.f32 %v1711, %v1613
        %v1744 = vadd.f32 %v1712, %v1618
        %v1745 = vadd.f32 %v1713, %v1623
        %v1746 = vadd.f32 %v1714, %v1628
        %v1747 = vadd.f32 %v1715, %v1633
        %v1748 = vadd.f32 %v1716, %v1638
        %v1749 = vadd.f32 %v1717, %v1643
        %v1750 = vadd.f32 %v1718, %v1648
        %v1751 = vadd.f32 %v1719, %v1653
        %v1752 = vadd.f32 %v1720, %v1658
        %v1753 = vadd.f32 %v1721, %v1663
        %v1754 = vadd.f32 %v1722, %v1668
        %v1755 = vadd.f32 %v1723, %v1673
        %v1756 = vadd.f32 %v1724, %v1678
        %v1757 = vadd.f32 %v1725, %v1683
        %v1758 = vadd.f32 %v1726, %v1688
        %v1759 = vadd.f32 %v1727, %v1693
        %1760 = vst [vmem:[#allocation3] sm:$0xff] %v1728
        %1761 = vst [vmem:[#allocation3 + $0x8] sm:$0xff] %v1729
        %1762 = vst [vmem:[#allocation3 + $0x10] sm:$0xff] %v1730
        %1763 = vst [vmem:[#allocation3 + $0x18] sm:$0xff] %v1731
        %1764 = vst [vmem:[#allocation3 + $0x20] sm:$0xff] %v1732
        %1765 = vst [vmem:[#allocation3 + $0x28] sm:$0xff] %v1733
        %1766 = vst [vmem:[#allocation3 + $0x30] sm:$0xff] %v1734
        %1767 = vst [vmem:[#allocation3 + $0x38] sm:$0xff] %v1735
        %1768 = vst [vmem:[#allocation3 + $0x40] sm:$0xff] %v1736
        %1769 = vst [vmem:[#allocation3 + $0x48] sm:$0xff] %v1737
        %1770 = vst [vmem:[#allocation3 + $0x50] sm:$0xff] %v1738
        %1771 = vst [vmem:[#allocation3 + $0x58] sm:$0xff] %v1739
        %1772 = vst [vmem:[#allocation3 + $0x60] sm:$0xff] %v1740
        %1773 = vst [vmem:[#allocation3 + $0x68] sm:$0xff] %v1741
        %1774 = vst [vmem:[#allocation3 + $0x70] sm:$0xff] %v1742
        %1775 = vst [vmem:[#allocation3 + $0x78] sm:$0xff] %v1743
        %1776 = vst [vmem:[#allocation3 + $0x80] sm:$0xff] %v1744
        %1777 = vst [vmem:[#allocation3 + $0x88] sm:$0xff] %v1745
        %1778 = vst [vmem:[#allocation3 + $0x90] sm:$0xff] %v1746
        %1779 = vst [vmem:[#allocation3 + $0x98] sm:$0xff] %v1747
        %1780 = vst [vmem:[#allocation3 + $0xa0] sm:$0xff] %v1748
        %1781 = vst [vmem:[#allocation3 + $0xa8] sm:$0xff] %v1749
        %1782 = vst [vmem:[#allocation3 + $0xb0] sm:$0xff] %v1750
        %1783 = vst [vmem:[#allocation3 + $0xb8] sm:$0xff] %v1751
        %1784 = vst [vmem:[#allocation3 + $0xc0] sm:$0xff] %v1752
        %1785 = vst [vmem:[#allocation3 + $0xc8] sm:$0xff] %v1753
        %1786 = vst [vmem:[#allocation3 + $0xd0] sm:$0xff] %v1754
        %1787 = vst [vmem:[#allocation3 + $0xd8] sm:$0xff] %v1755
        %1788 = vst [vmem:[#allocation3 + $0xe0] sm:$0xff] %v1756
        %1789 = vst [vmem:[#allocation3 + $0xe8] sm:$0xff] %v1757
        %1790 = vst [vmem:[#allocation3 + $0xf0] sm:$0xff] %v1758
        %1791 = vst [vmem:[#allocation3 + $0xf8] sm:$0xff] %v1759
        %v1792 = vld [vmem:[%s1421 + $0x1] sm:$0xff]
        %v1793 = vld [vmem:[%s1421 + $0x9] sm:$0xff]
        %v1794 = vld [vmem:[%s1421 + $0x19] sm:$0xff]
        %v1795 = vld [vmem:[%s1421 + $0x21] sm:$0xff]
        %v1796 = vld [vmem:[%s1421 + $0x31] sm:$0xff]
        %v1797 = vld [vmem:[%s1421 + $0x39] sm:$0xff]
        %v1798 = vld [vmem:[%s1421 + $0x49] sm:$0xff]
        %v1799 = vld [vmem:[%s1421 + $0x51] sm:$0xff]
        %v1800 = vld [vmem:[%s1421 + $0x61] sm:$0xff]
        %v1801 = vld [vmem:[%s1421 + $0x69] sm:$0xff]
        %v1802 = vld [vmem:[%s1421 + $0x79] sm:$0xff]
        %v1803 = vld [vmem:[%s1421 + $0x81] sm:$0xff]
        %v1804 = vld [vmem:[%s1421 + $0x91] sm:$0xff]
        %v1805 = vld [vmem:[%s1421 + $0x99] sm:$0xff]
        %v1806 = vld [vmem:[%s1421 + $0xa9] sm:$0xff]
        %v1807 = vld [vmem:[%s1421 + $0xb1] sm:$0xff]
        %v1808 = vld [vmem:[%s1421 + $0xc1] sm:$0xff]
        %v1809 = vld [vmem:[%s1421 + $0xc9] sm:$0xff]
        %v1810 = vld [vmem:[%s1421 + $0xd9] sm:$0xff]
        %v1811 = vld [vmem:[%s1421 + $0xe1] sm:$0xff]
        %v1812 = vld [vmem:[%s1421 + $0xf1] sm:$0xff]
        %v1813 = vld [vmem:[%s1421 + $0xf9] sm:$0xff]
        %v1814 = vld [vmem:[%s1421 + $0x109] sm:$0xff]
        %v1815 = vld [vmem:[%s1421 + $0x111] sm:$0xff]
        %v1816 = vld [vmem:[%s1421 + $0x121] sm:$0xff]
        %v1817 = vld [vmem:[%s1421 + $0x129] sm:$0xff]
        %v1818 = vld [vmem:[%s1421 + $0x139] sm:$0xff]
        %v1819 = vld [vmem:[%s1421 + $0x141] sm:$0xff]
        %v1820 = vld [vmem:[%s1421 + $0x151] sm:$0xff]
        %v1821 = vld [vmem:[%s1421 + $0x159] sm:$0xff]
        %v1822 = vld [vmem:[%s1421 + $0x169] sm:$0xff]
        %v1823 = vld [vmem:[%s1421 + $0x171] sm:$0xff]
        %s1824 = scalar_lea.vmem [#allocation7], 512
        %v1825 = vld [vmem:[%s1824] sm:$0xff]
        %v1826 = vld [vmem:[%s1824 + $0x8] sm:$0xff]
        %v1827 = vld [vmem:[%s1824 + $0x10] sm:$0xff]
        %v1828 = vld [vmem:[%s1824 + $0x18] sm:$0xff]
        %v1829 = vld [vmem:[%s1824 + $0x20] sm:$0xff]
        %v1830 = vld [vmem:[%s1824 + $0x28] sm:$0xff]
        %v1831 = vld [vmem:[%s1824 + $0x30] sm:$0xff]
        %v1832 = vld [vmem:[%s1824 + $0x38] sm:$0xff]
        %v1833 = vld [vmem:[%s1824 + $0x40] sm:$0xff]
        %v1834 = vld [vmem:[%s1824 + $0x48] sm:$0xff]
        %v1835 = vld [vmem:[%s1824 + $0x50] sm:$0xff]
        %v1836 = vld [vmem:[%s1824 + $0x58] sm:$0xff]
        %v1837 = vld [vmem:[%s1824 + $0x60] sm:$0xff]
        %v1838 = vld [vmem:[%s1824 + $0x68] sm:$0xff]
        %v1839 = vld [vmem:[%s1824 + $0x70] sm:$0xff]
        %v1840 = vld [vmem:[%s1824 + $0x78] sm:$0xff]
        %1841 = vmatprep.subr.mxu0 0.0
        %1842 = vmatpush1.msra.mxu0 %v1825
        %1843 = vmatprep.subr.mxu0 0.0
        %1844 = vmatpush1.msra.mxu0 %v1826
        %1845 = vmatprep.subr.mxu0 0.0
        %1846 = vmatpush1.msra.mxu0 %v1827
        %1847 = vmatprep.subr.mxu0 0.0
        %1848 = vmatpush1.msra.mxu0 %v1828
        %1849 = vmatprep.subr.mxu0 0.0
        %1850 = vmatpush1.msra.mxu0 %v1829
        %1851 = vmatprep.subr.mxu0 0.0
        %1852 = vmatpush1.msra.mxu0 %v1830
        %1853 = vmatprep.subr.mxu0 0.0
        %1854 = vmatpush1.msra.mxu0 %v1831
        %1855 = vmatprep.subr.mxu0 0.0
        %1856 = vmatpush1.msra.mxu0 %v1832
        %1857 = vmatprep.subr.mxu0 0.0
        %1858 = vmatpush1.msra.mxu0 %v1833
        %1859 = vmatprep.subr.mxu0 0.0
        %1860 = vmatpush1.msra.mxu0 %v1834
        %1861 = vmatprep.subr.mxu0 0.0
        %1862 = vmatpush1.msra.mxu0 %v1835
        %1863 = vmatprep.subr.mxu0 0.0
        %1864 = vmatpush1.msra.mxu0 %v1836
        %1865 = vmatprep.subr.mxu0 0.0
        %1866 = vmatpush1.msra.mxu0 %v1837
        %1867 = vmatprep.subr.mxu0 0.0
        %1868 = vmatpush1.msra.mxu0 %v1838
        %1869 = vmatprep.subr.mxu0 0.0
        %1870 = vmatpush1.msra.mxu0 %v1839
        %1871 = vmatprep.subr.mxu0 0.0
        %1872 = vmatpush1.msra.mxu0 %v1840
        %1873 = vmatprep.subr.mxu0 0.0
        %1874 = vmatpush1.msra.mxu0 0.0
        %1875 = vmatprep.subr.mxu0 0.0
        %1876 = vmatpush1.msra.mxu0 0.0
        %1877 = vmatprep.subr.mxu0 0.0
        %1878 = vmatpush1.msra.mxu0 0.0
        %1879 = vmatprep.subr.mxu0 0.0
        %1880 = vmatpush1.msra.mxu0 0.0
        %1881 = vmatprep.subr.mxu0 0.0
        %1882 = vmatpush1.msra.mxu0 0.0
        %1883 = vmatprep.subr.mxu0 0.0
        %1884 = vmatpush1.msra.mxu0 0.0
        %1885 = vmatprep.subr.mxu0 0.0
        %1886 = vmatpush1.msra.mxu0 0.0
        %1887 = vmatprep.subr.mxu0 0.0
        %1888 = vmatpush1.msra.mxu0 0.0
        %1889 = vmatprep.subr.mxu0 0.0
        %1890 = vmatpush1.msra.mxu0 0.0
        %1891 = vmatprep.subr.mxu0 0.0
        %1892 = vmatpush1.msra.mxu0 0.0
        %1893 = vmatprep.subr.mxu0 0.0
        %1894 = vmatpush1.msra.mxu0 0.0
        %1895 = vmatprep.subr.mxu0 0.0
        %1896 = vmatpush1.msra.mxu0 0.0
        %1897 = vmatprep.subr.mxu0 0.0
        %1898 = vmatpush1.msra.mxu0 0.0
        %1899 = vmatprep.subr.mxu0 0.0
        %1900 = vmatpush1.msra.mxu0 0.0
        %1901 = vmatprep.subr.mxu0 0.0
        %1902 = vmatpush1.msra.mxu0 0.0
        %1903 = vmatprep.subr.mxu0 0.0
        %1904 = vmatpush1.msra.mxu0 0.0
        %1905 = vmatprep.mubr.f32.mxu0 0.0
        %1906 = vmatmul.mubr.f32.gmra.mrb[0].mxu0 %v1792
        %v1907 = vpop.f32.mrb[0].mxu0
        %v1908 = vadd.f32 0.0, %v1907
        %v1909 = vpop.f32.mrb[0].mxu0
        %1910 = vmatprep.mubr.f32.mxu0 0.0
        %1911 = vmatmul.mubr.f32.gmra.mrb[0].mxu0 %v1793
        %v1912 = vpop.f32.mrb[0].mxu0
        %v1913 = vadd.f32 0.0, %v1912
        %v1914 = vpop.f32.mrb[0].mxu0
        %1915 = vmatprep.mubr.f32.mxu0 0.0
        %1916 = vmatmul.mubr.f32.gmra.mrb[0].mxu0 %v1794
        %v1917 = vpop.f32.mrb[0].mxu0
        %v1918 = vadd.f32 0.0, %v1917
        %v1919 = vpop.f32.mrb[0].mxu0
        %1920 = vmatprep.mubr.f32.mxu0 0.0
        %1921 = vmatmul.mubr.f32.gmra.mrb[0].mxu0 %v1795
        %v1922 = vpop.f32.mrb[0].mxu0
        %v1923 = vadd.f32 0.0, %v1922
        %v1924 = vpop.f32.mrb[0].mxu0
        %1925 = vmatprep.mubr.f32.mxu0 0.0
        %1926 = vmatmul.mubr.f32.gmra.mrb[0].mxu0 %v1796
        %v1927 = vpop.f32.mrb[0].mxu0
        %v1928 = vadd.f32 0.0, %v1927
        %v1929 = vpop.f32.mrb[0].mxu0
        %1930 = vmatprep.mubr.f32.mxu0 0.0
        %1931 = vmatmul.mubr.f32.gmra.mrb[0].mxu0 %v1797
        %v1932 = vpop.f32.mrb[0].mxu0
        %v1933 = vadd.f32 0.0, %v1932
        %v1934 = vpop.f32.mrb[0].mxu0
        %1935 = vmatprep.mubr.f32.mxu0 0.0
        %1936 = vmatmul.mubr.f32.gmra.mrb[0].mxu0 %v1798
        %v1937 = vpop.f32.mrb[0].mxu0
        %v1938 = vadd.f32 0.0, %v1937
        %v1939 = vpop.f32.mrb[0].mxu0
        %1940 = vmatprep.mubr.f32.mxu0 0.0
        %1941 = vmatmul.mubr.f32.gmra.mrb[0].mxu0 %v1799
        %v1942 = vpop.f32.mrb[0].mxu0
        %v1943 = vadd.f32 0.0, %v1942
        %v1944 = vpop.f32.mrb[0].mxu0
        %1945 = vmatprep.mubr.f32.mxu0 0.0
        %1946 = vmatmul.mubr.f32.gmra.mrb[0].mxu0 %v1800
        %v1947 = vpop.f32.mrb[0].mxu0
        %v1948 = vadd.f32 0.0, %v1947
        %v1949 = vpop.f32.mrb[0].mxu0
        %1950 = vmatprep.mubr.f32.mxu0 0.0
        %1951 = vmatmul.mubr.f32.gmra.mrb[0].mxu0 %v1801
        %v1952 = vpop.f32.mrb[0].mxu0
        %v1953 = vadd.f32 0.0, %v1952
        %v1954 = vpop.f32.mrb[0].mxu0
        %1955 = vmatprep.mubr.f32.mxu0 0.0
        %1956 = vmatmul.mubr.f32.gmra.mrb[0].mxu0 %v1802
        %v1957 = vpop.f32.mrb[0].mxu0
        %v1958 = vadd.f32 0.0, %v1957
        %v1959 = vpop.f32.mrb[0].mxu0
        %1960 = vmatprep.mubr.f32.mxu0 0.0
        %1961 = vmatmul.mubr.f32.gmra.mrb[0].mxu0 %v1803
        %v1962 = vpop.f32.mrb[0].mxu0
        %v1963 = vadd.f32 0.0, %v1962
        %v1964 = vpop.f32.mrb[0].mxu0
        %1965 = vmatprep.mubr.f32.mxu0 0.0
        %1966 = vmatmul.mubr.f32.gmra.mrb[0].mxu0 %v1804
        %v1967 = vpop.f32.mrb[0].mxu0
        %v1968 = vadd.f32 0.0, %v1967
        %v1969 = vpop.f32.mrb[0].mxu0
        %1970 = vmatprep.mubr.f32.mxu0 0.0
        %1971 = vmatmul.mubr.f32.gmra.mrb[0].mxu0 %v1805
        %v1972 = vpop.f32.mrb[0].mxu0
        %v1973 = vadd.f32 0.0, %v1972
        %v1974 = vpop.f32.mrb[0].mxu0
        %1975 = vmatprep.mubr.f32.mxu0 0.0
        %1976 = vmatmul.mubr.f32.gmra.mrb[0].mxu0 %v1806
        %v1977 = vpop.f32.mrb[0].mxu0
        %v1978 = vadd.f32 0.0, %v1977
        %v1979 = vpop.f32.mrb[0].mxu0
        %1980 = vmatprep.mubr.f32.mxu0 0.0
        %1981 = vmatmul.mubr.f32.gmra.mrb[0].mxu0 %v1807
        %v1982 = vpop.f32.mrb[0].mxu0
        %v1983 = vadd.f32 0.0, %v1982
        %v1984 = vpop.f32.mrb[0].mxu0
        %1985 = vmatprep.mubr.f32.mxu0 0.0
        %1986 = vmatmul.mubr.f32.gmra.mrb[0].mxu0 %v1808
        %v1987 = vpop.f32.mrb[0].mxu0
        %v1988 = vadd.f32 0.0, %v1987
        %v1989 = vpop.f32.mrb[0].mxu0
        %1990 = vmatprep.mubr.f32.mxu0 0.0
        %1991 = vmatmul.mubr.f32.gmra.mrb[0].mxu0 %v1809
        %v1992 = vpop.f32.mrb[0].mxu0
        %v1993 = vadd.f32 0.0, %v1992
        %v1994 = vpop.f32.mrb[0].mxu0
        %1995 = vmatprep.mubr.f32.mxu0 0.0
        %1996 = vmatmul.mubr.f32.gmra.mrb[0].mxu0 %v1810
        %v1997 = vpop.f32.mrb[0].mxu0
        %v1998 = vadd.f32 0.0, %v1997
        %v1999 = vpop.f32.mrb[0].mxu0
        %2000 = vmatprep.mubr.f32.mxu0 0.0
        %2001 = vmatmul.mubr.f32.gmra.mrb[0].mxu0 %v1811
        %v2002 = vpop.f32.mrb[0].mxu0
        %v2003 = vadd.f32 0.0, %v2002
        %v2004 = vpop.f32.mrb[0].mxu0
        %2005 = vmatprep.mubr.f32.mxu0 0.0
        %2006 = vmatmul.mubr.f32.gmra.mrb[0].mxu0 %v1812
        %v2007 = vpop.f32.mrb[0].mxu0
        %v2008 = vadd.f32 0.0, %v2007
        %v2009 = vpop.f32.mrb[0].mxu0
        %2010 = vmatprep.mubr.f32.mxu0 0.0
        %2011 = vmatmul.mubr.f32.gmra.mrb[0].mxu0 %v1813
        %v2012 = vpop.f32.mrb[0].mxu0
        %v2013 = vadd.f32 0.0, %v2012
        %v2014 = vpop.f32.mrb[0].mxu0
        %2015 = vmatprep.mubr.f32.mxu0 0.0
        %2016 = vmatmul.mubr.f32.gmra.mrb[0].mxu0 %v1814
        %v2017 = vpop.f32.mrb[0].mxu0
        %v2018 = vadd.f32 0.0, %v2017
        %v2019 = vpop.f32.mrb[0].mxu0
        %2020 = vmatprep.mubr.f32.mxu0 0.0
        %2021 = vmatmul.mubr.f32.gmra.mrb[0].mxu0 %v1815
        %v2022 = vpop.f32.mrb[0].mxu0
        %v2023 = vadd.f32 0.0, %v2022
        %v2024 = vpop.f32.mrb[0].mxu0
        %2025 = vmatprep.mubr.f32.mxu0 0.0
        %2026 = vmatmul.mubr.f32.gmra.mrb[0].mxu0 %v1816
        %v2027 = vpop.f32.mrb[0].mxu0
        %v2028 = vadd.f32 0.0, %v2027
        %v2029 = vpop.f32.mrb[0].mxu0
        %2030 = vmatprep.mubr.f32.mxu0 0.0
        %2031 = vmatmul.mubr.f32.gmra.mrb[0].mxu0 %v1817
        %v2032 = vpop.f32.mrb[0].mxu0
        %v2033 = vadd.f32 0.0, %v2032
        %v2034 = vpop.f32.mrb[0].mxu0
        %2035 = vmatprep.mubr.f32.mxu0 0.0
        %2036 = vmatmul.mubr.f32.gmra.mrb[0].mxu0 %v1818
        %v2037 = vpop.f32.mrb[0].mxu0
        %v2038 = vadd.f32 0.0, %v2037
        %v2039 = vpop.f32.mrb[0].mxu0
        %2040 = vmatprep.mubr.f32.mxu0 0.0
        %2041 = vmatmul.mubr.f32.gmra.mrb[0].mxu0 %v1819
        %v2042 = vpop.f32.mrb[0].mxu0
        %v2043 = vadd.f32 0.0, %v2042
        %v2044 = vpop.f32.mrb[0].mxu0
        %2045 = vmatprep.mubr.f32.mxu0 0.0
        %2046 = vmatmul.mubr.f32.gmra.mrb[0].mxu0 %v1820
        %v2047 = vpop.f32.mrb[0].mxu0
        %v2048 = vadd.f32 0.0, %v2047
        %v2049 = vpop.f32.mrb[0].mxu0
        %2050 = vmatprep.mubr.f32.mxu0 0.0
        %2051 = vmatmul.mubr.f32.gmra.mrb[0].mxu0 %v1821
        %v2052 = vpop.f32.mrb[0].mxu0
        %v2053 = vadd.f32 0.0, %v2052
        %v2054 = vpop.f32.mrb[0].mxu0
        %2055 = vmatprep.mubr.f32.mxu0 0.0
        %2056 = vmatmul.mubr.f32.gmra.mrb[0].mxu0 %v1822
        %v2057 = vpop.f32.mrb[0].mxu0
        %v2058 = vadd.f32 0.0, %v2057
        %v2059 = vpop.f32.mrb[0].mxu0
        %2060 = vmatprep.mubr.f32.mxu0 0.0
        %2061 = vmatmul.mubr.f32.gmra.mrb[0].mxu0 %v1823
        %v2062 = vpop.f32.mrb[0].mxu0
        %v2063 = vadd.f32 0.0, %v2062
        %v2064 = vpop.f32.mrb[0].mxu0
        %2065 = vdwg.mxu0
        %v2066 = vld [vmem:[#allocation3] sm:$0xff]
        %v2067 = vld [vmem:[#allocation3 + $0x8] sm:$0xff]
        %v2068 = vld [vmem:[#allocation3 + $0x10] sm:$0xff]
        %v2069 = vld [vmem:[#allocation3 + $0x18] sm:$0xff]
        %v2070 = vld [vmem:[#allocation3 + $0x20] sm:$0xff]
        %v2071 = vld [vmem:[#allocation3 + $0x28] sm:$0xff]
        %v2072 = vld [vmem:[#allocation3 + $0x30] sm:$0xff]
        %v2073 = vld [vmem:[#allocation3 + $0x38] sm:$0xff]
        %v2074 = vld [vmem:[#allocation3 + $0x40] sm:$0xff]
        %v2075 = vld [vmem:[#allocation3 + $0x48] sm:$0xff]
        %v2076 = vld [vmem:[#allocation3 + $0x50] sm:$0xff]
        %v2077 = vld [vmem:[#allocation3 + $0x58] sm:$0xff]
        %v2078 = vld [vmem:[#allocation3 + $0x60] sm:$0xff]
        %v2079 = vld [vmem:[#allocation3 + $0x68] sm:$0xff]
        %v2080 = vld [vmem:[#allocation3 + $0x70] sm:$0xff]
        %v2081 = vld [vmem:[#allocation3 + $0x78] sm:$0xff]
        %v2082 = vld [vmem:[#allocation3 + $0x80] sm:$0xff]
        %v2083 = vld [vmem:[#allocation3 + $0x88] sm:$0xff]
        %v2084 = vld [vmem:[#allocation3 + $0x90] sm:$0xff]
        %v2085 = vld [vmem:[#allocation3 + $0x98] sm:$0xff]
        %v2086 = vld [vmem:[#allocation3 + $0xa0] sm:$0xff]
        %v2087 = vld [vmem:[#allocation3 + $0xa8] sm:$0xff]
        %v2088 = vld [vmem:[#allocation3 + $0xb0] sm:$0xff]
        %v2089 = vld [vmem:[#allocation3 + $0xb8] sm:$0xff]
        %v2090 = vld [vmem:[#allocation3 + $0xc0] sm:$0xff]
        %v2091 = vld [vmem:[#allocation3 + $0xc8] sm:$0xff]
        %v2092 = vld [vmem:[#allocation3 + $0xd0] sm:$0xff]
        %v2093 = vld [vmem:[#allocation3 + $0xd8] sm:$0xff]
        %v2094 = vld [vmem:[#allocation3 + $0xe0] sm:$0xff]
        %v2095 = vld [vmem:[#allocation3 + $0xe8] sm:$0xff]
        %v2096 = vld [vmem:[#allocation3 + $0xf0] sm:$0xff]
        %v2097 = vld [vmem:[#allocation3 + $0xf8] sm:$0xff]
        %v2098 = vadd.f32 %v2066, %v1908
        %v2099 = vadd.f32 %v2067, %v1913
        %v2100 = vadd.f32 %v2068, %v1918
        %v2101 = vadd.f32 %v2069, %v1923
        %v2102 = vadd.f32 %v2070, %v1928
        %v2103 = vadd.f32 %v2071, %v1933
        %v2104 = vadd.f32 %v2072, %v1938
        %v2105 = vadd.f32 %v2073, %v1943
        %v2106 = vadd.f32 %v2074, %v1948
        %v2107 = vadd.f32 %v2075, %v1953
        %v2108 = vadd.f32 %v2076, %v1958
        %v2109 = vadd.f32 %v2077, %v1963
        %v2110 = vadd.f32 %v2078, %v1968
        %v2111 = vadd.f32 %v2079, %v1973
        %v2112 = vadd.f32 %v2080, %v1978
        %v2113 = vadd.f32 %v2081, %v1983
        %v2114 = vadd.f32 %v2082, %v1988
        %v2115 = vadd.f32 %v2083, %v1993
        %v2116 = vadd.f32 %v2084, %v1998
        %v2117 = vadd.f32 %v2085, %v2003
        %v2118 = vadd.f32 %v2086, %v2008
        %v2119 = vadd.f32 %v2087, %v2013
        %v2120 = vadd.f32 %v2088, %v2018
        %v2121 = vadd.f32 %v2089, %v2023
        %v2122 = vadd.f32 %v2090, %v2028
        %v2123 = vadd.f32 %v2091, %v2033
        %v2124 = vadd.f32 %v2092, %v2038
        %v2125 = vadd.f32 %v2093, %v2043
        %v2126 = vadd.f32 %v2094, %v2048
        %v2127 = vadd.f32 %v2095, %v2053
        %v2128 = vadd.f32 %v2096, %v2058
        %v2129 = vadd.f32 %v2097, %v2063
        %2130 = vst [vmem:[#allocation3] sm:$0xff] %v2098
        %2131 = vst [vmem:[#allocation3 + $0x8] sm:$0xff] %v2099
        %2132 = vst [vmem:[#allocation3 + $0x10] sm:$0xff] %v2100
        %2133 = vst [vmem:[#allocation3 + $0x18] sm:$0xff] %v2101
        %2134 = vst [vmem:[#allocation3 + $0x20] sm:$0xff] %v2102
        %2135 = vst [vmem:[#allocation3 + $0x28] sm:$0xff] %v2103
        %2136 = vst [vmem:[#allocation3 + $0x30] sm:$0xff] %v2104
        %2137 = vst [vmem:[#allocation3 + $0x38] sm:$0xff] %v2105
        %2138 = vst [vmem:[#allocation3 + $0x40] sm:$0xff] %v2106
        %2139 = vst [vmem:[#allocation3 + $0x48] sm:$0xff] %v2107
        %2140 = vst [vmem:[#allocation3 + $0x50] sm:$0xff] %v2108
        %2141 = vst [vmem:[#allocation3 + $0x58] sm:$0xff] %v2109
        %2142 = vst [vmem:[#allocation3 + $0x60] sm:$0xff] %v2110
        %2143 = vst [vmem:[#allocation3 + $0x68] sm:$0xff] %v2111
        %2144 = vst [vmem:[#allocation3 + $0x70] sm:$0xff] %v2112
        %2145 = vst [vmem:[#allocation3 + $0x78] sm:$0xff] %v2113
        %2146 = vst [vmem:[#allocation3 + $0x80] sm:$0xff] %v2114
        %2147 = vst [vmem:[#allocation3 + $0x88] sm:$0xff] %v2115
        %2148 = vst [vmem:[#allocation3 + $0x90] sm:$0xff] %v2116
        %2149 = vst [vmem:[#allocation3 + $0x98] sm:$0xff] %v2117
        %2150 = vst [vmem:[#allocation3 + $0xa0] sm:$0xff] %v2118
        %2151 = vst [vmem:[#allocation3 + $0xa8] sm:$0xff] %v2119
        %2152 = vst [vmem:[#allocation3 + $0xb0] sm:$0xff] %v2120
        %2153 = vst [vmem:[#allocation3 + $0xb8] sm:$0xff] %v2121
        %2154 = vst [vmem:[#allocation3 + $0xc0] sm:$0xff] %v2122
        %2155 = vst [vmem:[#allocation3 + $0xc8] sm:$0xff] %v2123
        %2156 = vst [vmem:[#allocation3 + $0xd0] sm:$0xff] %v2124
        %2157 = vst [vmem:[#allocation3 + $0xd8] sm:$0xff] %v2125
        %2158 = vst [vmem:[#allocation3 + $0xe0] sm:$0xff] %v2126
        %2159 = vst [vmem:[#allocation3 + $0xe8] sm:$0xff] %v2127
        %2160 = vst [vmem:[#allocation3 + $0xf0] sm:$0xff] %v2128
        %2161 = vst [vmem:[#allocation3 + $0xf8] sm:$0xff] %v2129
        %v2162 = vld [vmem:[%s1421 + $0x2] sm:$0xff]
        %v2163 = vld [vmem:[%s1421 + $0xa] sm:$0xff]
        %v2164 = vld [vmem:[%s1421 + $0x1a] sm:$0xff]
        %v2165 = vld [vmem:[%s1421 + $0x22] sm:$0xff]
        %v2166 = vld [vmem:[%s1421 + $0x32] sm:$0xff]
        %v2167 = vld [vmem:[%s1421 + $0x3a] sm:$0xff]
        %v2168 = vld [vmem:[%s1421 + $0x4a] sm:$0xff]
        %v2169 = vld [vmem:[%s1421 + $0x52] sm:$0xff]
        %v2170 = vld [vmem:[%s1421 + $0x62] sm:$0xff]
        %v2171 = vld [vmem:[%s1421 + $0x6a] sm:$0xff]
        %v2172 = vld [vmem:[%s1421 + $0x7a] sm:$0xff]
        %v2173 = vld [vmem:[%s1421 + $0x82] sm:$0xff]
        %v2174 = vld [vmem:[%s1421 + $0x92] sm:$0xff]
        %v2175 = vld [vmem:[%s1421 + $0x9a] sm:$0xff]
        %v2176 = vld [vmem:[%s1421 + $0xaa] sm:$0xff]
        %v2177 = vld [vmem:[%s1421 + $0xb2] sm:$0xff]
        %v2178 = vld [vmem:[%s1421 + $0xc2] sm:$0xff]
        %v2179 = vld [vmem:[%s1421 + $0xca] sm:$0xff]
        %v2180 = vld [vmem:[%s1421 + $0xda] sm:$0xff]
        %v2181 = vld [vmem:[%s1421 + $0xe2] sm:$0xff]
        %v2182 = vld [vmem:[%s1421 + $0xf2] sm:$0xff]
        %v2183 = vld [vmem:[%s1421 + $0xfa] sm:$0xff]
        %v2184 = vld [vmem:[%s1421 + $0x10a] sm:$0xff]
        %v2185 = vld [vmem:[%s1421 + $0x112] sm:$0xff]
        %v2186 = vld [vmem:[%s1421 + $0x122] sm:$0xff]
        %v2187 = vld [vmem:[%s1421 + $0x12a] sm:$0xff]
        %v2188 = vld [vmem:[%s1421 + $0x13a] sm:$0xff]
        %v2189 = vld [vmem:[%s1421 + $0x142] sm:$0xff]
        %v2190 = vld [vmem:[%s1421 + $0x152] sm:$0xff]
        %v2191 = vld [vmem:[%s1421 + $0x15a] sm:$0xff]
        %v2192 = vld [vmem:[%s1421 + $0x16a] sm:$0xff]
        %v2193 = vld [vmem:[%s1421 + $0x172] sm:$0xff]
        %s2194 = scalar_lea.vmem [#allocation7], 640
        %v2195 = vld [vmem:[%s2194] sm:$0xff]
        %v2196 = vld [vmem:[%s2194 + $0x8] sm:$0xff]
        %v2197 = vld [vmem:[%s2194 + $0x10] sm:$0xff]
        %v2198 = vld [vmem:[%s2194 + $0x18] sm:$0xff]
        %v2199 = vld [vmem:[%s2194 + $0x20] sm:$0xff]
        %v2200 = vld [vmem:[%s2194 + $0x28] sm:$0xff]
        %v2201 = vld [vmem:[%s2194 + $0x30] sm:$0xff]
        %v2202 = vld [vmem:[%s2194 + $0x38] sm:$0xff]
        %v2203 = vld [vmem:[%s2194 + $0x40] sm:$0xff]
        %v2204 = vld [vmem:[%s2194 + $0x48] sm:$0xff]
        %v2205 = vld [vmem:[%s2194 + $0x50] sm:$0xff]
        %v2206 = vld [vmem:[%s2194 + $0x58] sm:$0xff]
        %v2207 = vld [vmem:[%s2194 + $0x60] sm:$0xff]
        %v2208 = vld [vmem:[%s2194 + $0x68] sm:$0xff]
        %v2209 = vld [vmem:[%s2194 + $0x70] sm:$0xff]
        %v2210 = vld [vmem:[%s2194 + $0x78] sm:$0xff]
        %2211 = vmatprep.subr.mxu0 0.0
        %2212 = vmatpush1.msra.mxu0 %v2195
        %2213 = vmatprep.subr.mxu0 0.0
        %2214 = vmatpush1.msra.mxu0 %v2196
        %2215 = vmatprep.subr.mxu0 0.0
        %2216 = vmatpush1.msra.mxu0 %v2197
        %2217 = vmatprep.subr.mxu0 0.0
        %2218 = vmatpush1.msra.mxu0 %v2198
        %2219 = vmatprep.subr.mxu0 0.0
        %2220 = vmatpush1.msra.mxu0 %v2199
        %2221 = vmatprep.subr.mxu0 0.0
        %2222 = vmatpush1.msra.mxu0 %v2200
        %2223 = vmatprep.subr.mxu0 0.0
        %2224 = vmatpush1.msra.mxu0 %v2201
        %2225 = vmatprep.subr.mxu0 0.0
        %2226 = vmatpush1.msra.mxu0 %v2202
        %2227 = vmatprep.subr.mxu0 0.0
        %2228 = vmatpush1.msra.mxu0 %v2203
        %2229 = vmatprep.subr.mxu0 0.0
        %2230 = vmatpush1.msra.mxu0 %v2204
        %2231 = vmatprep.subr.mxu0 0.0
        %2232 = vmatpush1.msra.mxu0 %v2205
        %2233 = vmatprep.subr.mxu0 0.0
        %2234 = vmatpush1.msra.mxu0 %v2206
        %2235 = vmatprep.subr.mxu0 0.0
        %2236 = vmatpush1.msra.mxu0 %v2207
        %2237 = vmatprep.subr.mxu0 0.0
        %2238 = vmatpush1.msra.mxu0 %v2208
        %2239 = vmatprep.subr.mxu0 0.0
        %2240 = vmatpush1.msra.mxu0 %v2209
        %2241 = vmatprep.subr.mxu0 0.0
        %2242 = vmatpush1.msra.mxu0 %v2210
        %2243 = vmatprep.subr.mxu0 0.0
        %2244 = vmatpush1.msra.mxu0 0.0
        %2245 = vmatprep.subr.mxu0 0.0
        %2246 = vmatpush1.msra.mxu0 0.0
        %2247 = vmatprep.subr.mxu0 0.0
        %2248 = vmatpush1.msra.mxu0 0.0
        %2249 = vmatprep.subr.mxu0 0.0
        %2250 = vmatpush1.msra.mxu0 0.0
        %2251 = vmatprep.subr.mxu0 0.0
        %2252 = vmatpush1.msra.mxu0 0.0
        %2253 = vmatprep.subr.mxu0 0.0
        %2254 = vmatpush1.msra.mxu0 0.0
        %2255 = vmatprep.subr.mxu0 0.0
        %2256 = vmatpush1.msra.mxu0 0.0
        %2257 = vmatprep.subr.mxu0 0.0
        %2258 = vmatpush1.msra.mxu0 0.0
        %2259 = vmatprep.subr.mxu0 0.0
        %2260 = vmatpush1.msra.mxu0 0.0
        %2261 = vmatprep.subr.mxu0 0.0
        %2262 = vmatpush1.msra.mxu0 0.0
        %2263 = vmatprep.subr.mxu0 0.0
        %2264 = vmatpush1.msra.mxu0 0.0
        %2265 = vmatprep.subr.mxu0 0.0
        %2266 = vmatpush1.msra.mxu0 0.0
        %2267 = vmatprep.subr.mxu0 0.0
        %2268 = vmatpush1.msra.mxu0 0.0
        %2269 = vmatprep.subr.mxu0 0.0
        %2270 = vmatpush1.msra.mxu0 0.0
        %2271 = vmatprep.subr.mxu0 0.0
        %2272 = vmatpush1.msra.mxu0 0.0
        %2273 = vmatprep.subr.mxu0 0.0
        %2274 = vmatpush1.msra.mxu0 0.0
        %2275 = vmatprep.mubr.f32.mxu0 0.0
        %2276 = vmatmul.mubr.f32.gmra.mrb[0].mxu0 %v2162
        %v2277 = vpop.f32.mrb[0].mxu0
        %v2278 = vadd.f32 0.0, %v2277
        %v2279 = vpop.f32.mrb[0].mxu0
        %2280 = vmatprep.mubr.f32.mxu0 0.0
        %2281 = vmatmul.mubr.f32.gmra.mrb[0].mxu0 %v2163
        %v2282 = vpop.f32.mrb[0].mxu0
        %v2283 = vadd.f32 0.0, %v2282
        %v2284 = vpop.f32.mrb[0].mxu0
        %2285 = vmatprep.mubr.f32.mxu0 0.0
        %2286 = vmatmul.mubr.f32.gmra.mrb[0].mxu0 %v2164
        %v2287 = vpop.f32.mrb[0].mxu0
        %v2288 = vadd.f32 0.0, %v2287
        %v2289 = vpop.f32.mrb[0].mxu0
        %2290 = vmatprep.mubr.f32.mxu0 0.0
        %2291 = vmatmul.mubr.f32.gmra.mrb[0].mxu0 %v2165
        %v2292 = vpop.f32.mrb[0].mxu0
        %v2293 = vadd.f32 0.0, %v2292
        %v2294 = vpop.f32.mrb[0].mxu0
        %2295 = vmatprep.mubr.f32.mxu0 0.0
        %2296 = vmatmul.mubr.f32.gmra.mrb[0].mxu0 %v2166
        %v2297 = vpop.f32.mrb[0].mxu0
        %v2298 = vadd.f32 0.0, %v2297
        %v2299 = vpop.f32.mrb[0].mxu0
        %2300 = vmatprep.mubr.f32.mxu0 0.0
        %2301 = vmatmul.mubr.f32.gmra.mrb[0].mxu0 %v2167
        %v2302 = vpop.f32.mrb[0].mxu0
        %v2303 = vadd.f32 0.0, %v2302
        %v2304 = vpop.f32.mrb[0].mxu0
        %2305 = vmatprep.mubr.f32.mxu0 0.0
        %2306 = vmatmul.mubr.f32.gmra.mrb[0].mxu0 %v2168
        %v2307 = vpop.f32.mrb[0].mxu0
        %v2308 = vadd.f32 0.0, %v2307
        %v2309 = vpop.f32.mrb[0].mxu0
        %2310 = vmatprep.mubr.f32.mxu0 0.0
        %2311 = vmatmul.mubr.f32.gmra.mrb[0].mxu0 %v2169
        %v2312 = vpop.f32.mrb[0].mxu0
        %v2313 = vadd.f32 0.0, %v2312
        %v2314 = vpop.f32.mrb[0].mxu0
        %2315 = vmatprep.mubr.f32.mxu0 0.0
        %2316 = vmatmul.mubr.f32.gmra.mrb[0].mxu0 %v2170
        %v2317 = vpop.f32.mrb[0].mxu0
        %v2318 = vadd.f32 0.0, %v2317
        %v2319 = vpop.f32.mrb[0].mxu0
        %2320 = vmatprep.mubr.f32.mxu0 0.0
        %2321 = vmatmul.mubr.f32.gmra.mrb[0].mxu0 %v2171
        %v2322 = vpop.f32.mrb[0].mxu0
        %v2323 = vadd.f32 0.0, %v2322
        %v2324 = vpop.f32.mrb[0].mxu0
        %2325 = vmatprep.mubr.f32.mxu0 0.0
        %2326 = vmatmul.mubr.f32.gmra.mrb[0].mxu0 %v2172
        %v2327 = vpop.f32.mrb[0].mxu0
        %v2328 = vadd.f32 0.0, %v2327
        %v2329 = vpop.f32.mrb[0].mxu0
        %2330 = vmatprep.mubr.f32.mxu0 0.0
        %2331 = vmatmul.mubr.f32.gmra.mrb[0].mxu0 %v2173
        %v2332 = vpop.f32.mrb[0].mxu0
        %v2333 = vadd.f32 0.0, %v2332
        %v2334 = vpop.f32.mrb[0].mxu0
        %2335 = vmatprep.mubr.f32.mxu0 0.0
        %2336 = vmatmul.mubr.f32.gmra.mrb[0].mxu0 %v2174
        %v2337 = vpop.f32.mrb[0].mxu0
        %v2338 = vadd.f32 0.0, %v2337
        %v2339 = vpop.f32.mrb[0].mxu0
        %2340 = vmatprep.mubr.f32.mxu0 0.0
        %2341 = vmatmul.mubr.f32.gmra.mrb[0].mxu0 %v2175
        %v2342 = vpop.f32.mrb[0].mxu0
        %v2343 = vadd.f32 0.0, %v2342
        %v2344 = vpop.f32.mrb[0].mxu0
        %2345 = vmatprep.mubr.f32.mxu0 0.0
        %2346 = vmatmul.mubr.f32.gmra.mrb[0].mxu0 %v2176
        %v2347 = vpop.f32.mrb[0].mxu0
        %v2348 = vadd.f32 0.0, %v2347
        %v2349 = vpop.f32.mrb[0].mxu0
        %2350 = vmatprep.mubr.f32.mxu0 0.0
        %2351 = vmatmul.mubr.f32.gmra.mrb[0].mxu0 %v2177
        %v2352 = vpop.f32.mrb[0].mxu0
        %v2353 = vadd.f32 0.0, %v2352
        %v2354 = vpop.f32.mrb[0].mxu0
        %2355 = vmatprep.mubr.f32.mxu0 0.0
        %2356 = vmatmul.mubr.f32.gmra.mrb[0].mxu0 %v2178
        %v2357 = vpop.f32.mrb[0].mxu0
        %v2358 = vadd.f32 0.0, %v2357
        %v2359 = vpop.f32.mrb[0].mxu0
        %2360 = vmatprep.mubr.f32.mxu0 0.0
        %2361 = vmatmul.mubr.f32.gmra.mrb[0].mxu0 %v2179
        %v2362 = vpop.f32.mrb[0].mxu0
        %v2363 = vadd.f32 0.0, %v2362
        %v2364 = vpop.f32.mrb[0].mxu0
        %2365 = vmatprep.mubr.f32.mxu0 0.0
        %2366 = vmatmul.mubr.f32.gmra.mrb[0].mxu0 %v2180
        %v2367 = vpop.f32.mrb[0].mxu0
        %v2368 = vadd.f32 0.0, %v2367
        %v2369 = vpop.f32.mrb[0].mxu0
        %2370 = vmatprep.mubr.f32.mxu0 0.0
        %2371 = vmatmul.mubr.f32.gmra.mrb[0].mxu0 %v2181
        %v2372 = vpop.f32.mrb[0].mxu0
        %v2373 = vadd.f32 0.0, %v2372
        %v2374 = vpop.f32.mrb[0].mxu0
        %2375 = vmatprep.mubr.f32.mxu0 0.0
        %2376 = vmatmul.mubr.f32.gmra.mrb[0].mxu0 %v2182
        %v2377 = vpop.f32.mrb[0].mxu0
        %v2378 = vadd.f32 0.0, %v2377
        %v2379 = vpop.f32.mrb[0].mxu0
        %2380 = vmatprep.mubr.f32.mxu0 0.0
        %2381 = vmatmul.mubr.f32.gmra.mrb[0].mxu0 %v2183
        %v2382 = vpop.f32.mrb[0].mxu0
        %v2383 = vadd.f32 0.0, %v2382
        %v2384 = vpop.f32.mrb[0].mxu0
        %2385 = vmatprep.mubr.f32.mxu0 0.0
        %2386 = vmatmul.mubr.f32.gmra.mrb[0].mxu0 %v2184
        %v2387 = vpop.f32.mrb[0].mxu0
        %v2388 = vadd.f32 0.0, %v2387
        %v2389 = vpop.f32.mrb[0].mxu0
        %2390 = vmatprep.mubr.f32.mxu0 0.0
        %2391 = vmatmul.mubr.f32.gmra.mrb[0].mxu0 %v2185
        %v2392 = vpop.f32.mrb[0].mxu0
        %v2393 = vadd.f32 0.0, %v2392
        %v2394 = vpop.f32.mrb[0].mxu0
        %2395 = vmatprep.mubr.f32.mxu0 0.0
        %2396 = vmatmul.mubr.f32.gmra.mrb[0].mxu0 %v2186
        %v2397 = vpop.f32.mrb[0].mxu0
        %v2398 = vadd.f32 0.0, %v2397
        %v2399 = vpop.f32.mrb[0].mxu0
        %2400 = vmatprep.mubr.f32.mxu0 0.0
        %2401 = vmatmul.mubr.f32.gmra.mrb[0].mxu0 %v2187
        %v2402 = vpop.f32.mrb[0].mxu0
        %v2403 = vadd.f32 0.0, %v2402
        %v2404 = vpop.f32.mrb[0].mxu0
        %2405 = vmatprep.mubr.f32.mxu0 0.0
        %2406 = vmatmul.mubr.f32.gmra.mrb[0].mxu0 %v2188
        %v2407 = vpop.f32.mrb[0].mxu0
        %v2408 = vadd.f32 0.0, %v2407
        %v2409 = vpop.f32.mrb[0].mxu0
        %2410 = vmatprep.mubr.f32.mxu0 0.0
        %2411 = vmatmul.mubr.f32.gmra.mrb[0].mxu0 %v2189
        %v2412 = vpop.f32.mrb[0].mxu0
        %v2413 = vadd.f32 0.0, %v2412
        %v2414 = vpop.f32.mrb[0].mxu0
        %2415 = vmatprep.mubr.f32.mxu0 0.0
        %2416 = vmatmul.mubr.f32.gmra.mrb[0].mxu0 %v2190
        %v2417 = vpop.f32.mrb[0].mxu0
        %v2418 = vadd.f32 0.0, %v2417
        %v2419 = vpop.f32.mrb[0].mxu0
        %2420 = vmatprep.mubr.f32.mxu0 0.0
        %2421 = vmatmul.mubr.f32.gmra.mrb[0].mxu0 %v2191
        %v2422 = vpop.f32.mrb[0].mxu0
        %v2423 = vadd.f32 0.0, %v2422
        %v2424 = vpop.f32.mrb[0].mxu0
        %2425 = vmatprep.mubr.f32.mxu0 0.0
        %2426 = vmatmul.mubr.f32.gmra.mrb[0].mxu0 %v2192
        %v2427 = vpop.f32.mrb[0].mxu0
        %v2428 = vadd.f32 0.0, %v2427
        %v2429 = vpop.f32.mrb[0].mxu0
        %2430 = vmatprep.mubr.f32.mxu0 0.0
        %2431 = vmatmul.mubr.f32.gmra.mrb[0].mxu0 %v2193
        %v2432 = vpop.f32.mrb[0].mxu0
        %v2433 = vadd.f32 0.0, %v2432
        %v2434 = vpop.f32.mrb[0].mxu0
        %2435 = vdwg.mxu0
        %v2436 = vld [vmem:[#allocation3] sm:$0xff]
        %v2437 = vld [vmem:[#allocation3 + $0x8] sm:$0xff]
        %v2438 = vld [vmem:[#allocation3 + $0x10] sm:$0xff]
        %v2439 = vld [vmem:[#allocation3 + $0x18] sm:$0xff]
        %v2440 = vld [vmem:[#allocation3 + $0x20] sm:$0xff]
        %v2441 = vld [vmem:[#allocation3 + $0x28] sm:$0xff]
        %v2442 = vld [vmem:[#allocation3 + $0x30] sm:$0xff]
        %v2443 = vld [vmem:[#allocation3 + $0x38] sm:$0xff]
        %v2444 = vld [vmem:[#allocation3 + $0x40] sm:$0xff]
        %v2445 = vld [vmem:[#allocation3 + $0x48] sm:$0xff]
        %v2446 = vld [vmem:[#allocation3 + $0x50] sm:$0xff]
        %v2447 = vld [vmem:[#allocation3 + $0x58] sm:$0xff]
        %v2448 = vld [vmem:[#allocation3 + $0x60] sm:$0xff]
        %v2449 = vld [vmem:[#allocation3 + $0x68] sm:$0xff]
        %v2450 = vld [vmem:[#allocation3 + $0x70] sm:$0xff]
        %v2451 = vld [vmem:[#allocation3 + $0x78] sm:$0xff]
        %v2452 = vld [vmem:[#allocation3 + $0x80] sm:$0xff]
        %v2453 = vld [vmem:[#allocation3 + $0x88] sm:$0xff]
        %v2454 = vld [vmem:[#allocation3 + $0x90] sm:$0xff]
        %v2455 = vld [vmem:[#allocation3 + $0x98] sm:$0xff]
        %v2456 = vld [vmem:[#allocation3 + $0xa0] sm:$0xff]
        %v2457 = vld [vmem:[#allocation3 + $0xa8] sm:$0xff]
        %v2458 = vld [vmem:[#allocation3 + $0xb0] sm:$0xff]
        %v2459 = vld [vmem:[#allocation3 + $0xb8] sm:$0xff]
        %v2460 = vld [vmem:[#allocation3 + $0xc0] sm:$0xff]
        %v2461 = vld [vmem:[#allocation3 + $0xc8] sm:$0xff]
        %v2462 = vld [vmem:[#allocation3 + $0xd0] sm:$0xff]
        %v2463 = vld [vmem:[#allocation3 + $0xd8] sm:$0xff]
        %v2464 = vld [vmem:[#allocation3 + $0xe0] sm:$0xff]
        %v2465 = vld [vmem:[#allocation3 + $0xe8] sm:$0xff]
        %v2466 = vld [vmem:[#allocation3 + $0xf0] sm:$0xff]
        %v2467 = vld [vmem:[#allocation3 + $0xf8] sm:$0xff]
        %v2468 = vadd.f32 %v2436, %v2278
        %v2469 = vadd.f32 %v2437, %v2283
        %v2470 = vadd.f32 %v2438, %v2288
        %v2471 = vadd.f32 %v2439, %v2293
        %v2472 = vadd.f32 %v2440, %v2298
        %v2473 = vadd.f32 %v2441, %v2303
        %v2474 = vadd.f32 %v2442, %v2308
        %v2475 = vadd.f32 %v2443, %v2313
        %v2476 = vadd.f32 %v2444, %v2318
        %v2477 = vadd.f32 %v2445, %v2323
        %v2478 = vadd.f32 %v2446, %v2328
        %v2479 = vadd.f32 %v2447, %v2333
        %v2480 = vadd.f32 %v2448, %v2338
        %v2481 = vadd.f32 %v2449, %v2343
        %v2482 = vadd.f32 %v2450, %v2348
        %v2483 = vadd.f32 %v2451, %v2353
        %v2484 = vadd.f32 %v2452, %v2358
        %v2485 = vadd.f32 %v2453, %v2363
        %v2486 = vadd.f32 %v2454, %v2368
        %v2487 = vadd.f32 %v2455, %v2373
        %v2488 = vadd.f32 %v2456, %v2378
        %v2489 = vadd.f32 %v2457, %v2383
        %v2490 = vadd.f32 %v2458, %v2388
        %v2491 = vadd.f32 %v2459, %v2393
        %v2492 = vadd.f32 %v2460, %v2398
        %v2493 = vadd.f32 %v2461, %v2403
        %v2494 = vadd.f32 %v2462, %v2408
        %v2495 = vadd.f32 %v2463, %v2413
        %v2496 = vadd.f32 %v2464, %v2418
        %v2497 = vadd.f32 %v2465, %v2423
        %v2498 = vadd.f32 %v2466, %v2428
        %v2499 = vadd.f32 %v2467, %v2433
        %2500 = vst [vmem:[#allocation3] sm:$0xff] %v2468
        %2501 = vst [vmem:[#allocation3 + $0x8] sm:$0xff] %v2469
        %2502 = vst [vmem:[#allocation3 + $0x10] sm:$0xff] %v2470
        %2503 = vst [vmem:[#allocation3 + $0x18] sm:$0xff] %v2471
        %2504 = vst [vmem:[#allocation3 + $0x20] sm:$0xff] %v2472
        %2505 = vst [vmem:[#allocation3 + $0x28] sm:$0xff] %v2473
        %2506 = vst [vmem:[#allocation3 + $0x30] sm:$0xff] %v2474
        %2507 = vst [vmem:[#allocation3 + $0x38] sm:$0xff] %v2475
        %2508 = vst [vmem:[#allocation3 + $0x40] sm:$0xff] %v2476
        %2509 = vst [vmem:[#allocation3 + $0x48] sm:$0xff] %v2477
        %2510 = vst [vmem:[#allocation3 + $0x50] sm:$0xff] %v2478
        %2511 = vst [vmem:[#allocation3 + $0x58] sm:$0xff] %v2479
        %2512 = vst [vmem:[#allocation3 + $0x60] sm:$0xff] %v2480
        %2513 = vst [vmem:[#allocation3 + $0x68] sm:$0xff] %v2481
        %2514 = vst [vmem:[#allocation3 + $0x70] sm:$0xff] %v2482
        %2515 = vst [vmem:[#allocation3 + $0x78] sm:$0xff] %v2483
        %2516 = vst [vmem:[#allocation3 + $0x80] sm:$0xff] %v2484
        %2517 = vst [vmem:[#allocation3 + $0x88] sm:$0xff] %v2485
        %2518 = vst [vmem:[#allocation3 + $0x90] sm:$0xff] %v2486
        %2519 = vst [vmem:[#allocation3 + $0x98] sm:$0xff] %v2487
        %2520 = vst [vmem:[#allocation3 + $0xa0] sm:$0xff] %v2488
        %2521 = vst [vmem:[#allocation3 + $0xa8] sm:$0xff] %v2489
        %2522 = vst [vmem:[#allocation3 + $0xb0] sm:$0xff] %v2490
        %2523 = vst [vmem:[#allocation3 + $0xb8] sm:$0xff] %v2491
        %2524 = vst [vmem:[#allocation3 + $0xc0] sm:$0xff] %v2492
        %2525 = vst [vmem:[#allocation3 + $0xc8] sm:$0xff] %v2493
        %2526 = vst [vmem:[#allocation3 + $0xd0] sm:$0xff] %v2494
        %2527 = vst [vmem:[#allocation3 + $0xd8] sm:$0xff] %v2495
        %2528 = vst [vmem:[#allocation3 + $0xe0] sm:$0xff] %v2496
        %2529 = vst [vmem:[#allocation3 + $0xe8] sm:$0xff] %v2497
        %2530 = vst [vmem:[#allocation3 + $0xf0] sm:$0xff] %v2498
        %2531 = vst [vmem:[#allocation3 + $0xf8] sm:$0xff] %v2499
        %s2532 = scalar_lea.vmem %s321, 48 [#allocation4]
        %v2533 = vld [vmem:[%s2532] sm:$0xff]
        %v2534 = vld [vmem:[%s2532 + $0x8] sm:$0xff]
        %v2535 = vld [vmem:[%s2532 + $0x18] sm:$0xff]
        %v2536 = vld [vmem:[%s2532 + $0x20] sm:$0xff]
        %v2537 = vld [vmem:[%s2532 + $0x30] sm:$0xff]
        %v2538 = vld [vmem:[%s2532 + $0x38] sm:$0xff]
        %v2539 = vld [vmem:[%s2532 + $0x48] sm:$0xff]
        %v2540 = vld [vmem:[%s2532 + $0x50] sm:$0xff]
        %v2541 = vld [vmem:[%s2532 + $0x60] sm:$0xff]
        %v2542 = vld [vmem:[%s2532 + $0x68] sm:$0xff]
        %v2543 = vld [vmem:[%s2532 + $0x78] sm:$0xff]
        %v2544 = vld [vmem:[%s2532 + $0x80] sm:$0xff]
        %v2545 = vld [vmem:[%s2532 + $0x90] sm:$0xff]
        %v2546 = vld [vmem:[%s2532 + $0x98] sm:$0xff]
        %v2547 = vld [vmem:[%s2532 + $0xa8] sm:$0xff]
        %v2548 = vld [vmem:[%s2532 + $0xb0] sm:$0xff]
        %v2549 = vld [vmem:[%s2532 + $0xc0] sm:$0xff]
        %v2550 = vld [vmem:[%s2532 + $0xc8] sm:$0xff]
        %v2551 = vld [vmem:[%s2532 + $0xd8] sm:$0xff]
        %v2552 = vld [vmem:[%s2532 + $0xe0] sm:$0xff]
        %v2553 = vld [vmem:[%s2532 + $0xf0] sm:$0xff]
        %v2554 = vld [vmem:[%s2532 + $0xf8] sm:$0xff]
        %v2555 = vld [vmem:[%s2532 + $0x108] sm:$0xff]
        %v2556 = vld [vmem:[%s2532 + $0x110] sm:$0xff]
        %v2557 = vld [vmem:[%s2532 + $0x120] sm:$0xff]
        %v2558 = vld [vmem:[%s2532 + $0x128] sm:$0xff]
        %v2559 = vld [vmem:[%s2532 + $0x138] sm:$0xff]
        %v2560 = vld [vmem:[%s2532 + $0x140] sm:$0xff]
        %v2561 = vld [vmem:[%s2532 + $0x150] sm:$0xff]
        %v2562 = vld [vmem:[%s2532 + $0x158] sm:$0xff]
        %v2563 = vld [vmem:[%s2532 + $0x168] sm:$0xff]
        %v2564 = vld [vmem:[%s2532 + $0x170] sm:$0xff]
        %s2565 = scalar_lea.vmem [#allocation7], 768
        %v2566 = vld [vmem:[%s2565] sm:$0xff]
        %v2567 = vld [vmem:[%s2565 + $0x8] sm:$0xff]
        %v2568 = vld [vmem:[%s2565 + $0x10] sm:$0xff]
        %v2569 = vld [vmem:[%s2565 + $0x18] sm:$0xff]
        %v2570 = vld [vmem:[%s2565 + $0x20] sm:$0xff]
        %v2571 = vld [vmem:[%s2565 + $0x28] sm:$0xff]
        %v2572 = vld [vmem:[%s2565 + $0x30] sm:$0xff]
        %v2573 = vld [vmem:[%s2565 + $0x38] sm:$0xff]
        %v2574 = vld [vmem:[%s2565 + $0x40] sm:$0xff]
        %v2575 = vld [vmem:[%s2565 + $0x48] sm:$0xff]
        %v2576 = vld [vmem:[%s2565 + $0x50] sm:$0xff]
        %v2577 = vld [vmem:[%s2565 + $0x58] sm:$0xff]
        %v2578 = vld [vmem:[%s2565 + $0x60] sm:$0xff]
        %v2579 = vld [vmem:[%s2565 + $0x68] sm:$0xff]
        %v2580 = vld [vmem:[%s2565 + $0x70] sm:$0xff]
        %v2581 = vld [vmem:[%s2565 + $0x78] sm:$0xff]
        %2582 = vmatprep.subr.mxu0 0.0
        %2583 = vmatpush1.msra.mxu0 %v2566
        %2584 = vmatprep.subr.mxu0 0.0
        %2585 = vmatpush1.msra.mxu0 %v2567
        %2586 = vmatprep.subr.mxu0 0.0
        %2587 = vmatpush1.msra.mxu0 %v2568
        %2588 = vmatprep.subr.mxu0 0.0
        %2589 = vmatpush1.msra.mxu0 %v2569
        %2590 = vmatprep.subr.mxu0 0.0
        %2591 = vmatpush1.msra.mxu0 %v2570
        %2592 = vmatprep.subr.mxu0 0.0
        %2593 = vmatpush1.msra.mxu0 %v2571
        %2594 = vmatprep.subr.mxu0 0.0
        %2595 = vmatpush1.msra.mxu0 %v2572
        %2596 = vmatprep.subr.mxu0 0.0
        %2597 = vmatpush1.msra.mxu0 %v2573
        %2598 = vmatprep.subr.mxu0 0.0
        %2599 = vmatpush1.msra.mxu0 %v2574
        %2600 = vmatprep.subr.mxu0 0.0
        %2601 = vmatpush1.msra.mxu0 %v2575
        %2602 = vmatprep.subr.mxu0 0.0
        %2603 = vmatpush1.msra.mxu0 %v2576
        %2604 = vmatprep.subr.mxu0 0.0
        %2605 = vmatpush1.msra.mxu0 %v2577
        %2606 = vmatprep.subr.mxu0 0.0
        %2607 = vmatpush1.msra.mxu0 %v2578
        %2608 = vmatprep.subr.mxu0 0.0
        %2609 = vmatpush1.msra.mxu0 %v2579
        %2610 = vmatprep.subr.mxu0 0.0
        %2611 = vmatpush1.msra.mxu0 %v2580
        %2612 = vmatprep.subr.mxu0 0.0
        %2613 = vmatpush1.msra.mxu0 %v2581
        %2614 = vmatprep.subr.mxu0 0.0
        %2615 = vmatpush1.msra.mxu0 0.0
        %2616 = vmatprep.subr.mxu0 0.0
        %2617 = vmatpush1.msra.mxu0 0.0
        %2618 = vmatprep.subr.mxu0 0.0
        %2619 = vmatpush1.msra.mxu0 0.0
        %2620 = vmatprep.subr.mxu0 0.0
        %2621 = vmatpush1.msra.mxu0 0.0
        %2622 = vmatprep.subr.mxu0 0.0
        %2623 = vmatpush1.msra.mxu0 0.0
        %2624 = vmatprep.subr.mxu0 0.0
        %2625 = vmatpush1.msra.mxu0 0.0
        %2626 = vmatprep.subr.mxu0 0.0
        %2627 = vmatpush1.msra.mxu0 0.0
        %2628 = vmatprep.subr.mxu0 0.0
        %2629 = vmatpush1.msra.mxu0 0.0
        %2630 = vmatprep.subr.mxu0 0.0
        %2631 = vmatpush1.msra.mxu0 0.0
        %2632 = vmatprep.subr.mxu0 0.0
        %2633 = vmatpush1.msra.mxu0 0.0
        %2634 = vmatprep.subr.mxu0 0.0
        %2635 = vmatpush1.msra.mxu0 0.0
        %2636 = vmatprep.subr.mxu0 0.0
        %2637 = vmatpush1.msra.mxu0 0.0
        %2638 = vmatprep.subr.mxu0 0.0
        %2639 = vmatpush1.msra.mxu0 0.0
        %2640 = vmatprep.subr.mxu0 0.0
        %2641 = vmatpush1.msra.mxu0 0.0
        %2642 = vmatprep.subr.mxu0 0.0
        %2643 = vmatpush1.msra.mxu0 0.0
        %2644 = vmatprep.subr.mxu0 0.0
        %2645 = vmatpush1.msra.mxu0 0.0
        %2646 = vmatprep.mubr.f32.mxu0 0.0
        %2647 = vmatmul.mubr.f32.gmra.mrb[0].mxu0 %v2533
        %v2648 = vpop.f32.mrb[0].mxu0
        %v2649 = vadd.f32 0.0, %v2648
        %v2650 = vpop.f32.mrb[0].mxu0
        %2651 = vmatprep.mubr.f32.mxu0 0.0
        %2652 = vmatmul.mubr.f32.gmra.mrb[0].mxu0 %v2534
        %v2653 = vpop.f32.mrb[0].mxu0
        %v2654 = vadd.f32 0.0, %v2653
        %v2655 = vpop.f32.mrb[0].mxu0
        %2656 = vmatprep.mubr.f32.mxu0 0.0
        %2657 = vmatmul.mubr.f32.gmra.mrb[0].mxu0 %v2535
        %v2658 = vpop.f32.mrb[0].mxu0
        %v2659 = vadd.f32 0.0, %v2658
        %v2660 = vpop.f32.mrb[0].mxu0
        %2661 = vmatprep.mubr.f32.mxu0 0.0
        %2662 = vmatmul.mubr.f32.gmra.mrb[0].mxu0 %v2536
        %v2663 = vpop.f32.mrb[0].mxu0
        %v2664 = vadd.f32 0.0, %v2663
        %v2665 = vpop.f32.mrb[0].mxu0
        %2666 = vmatprep.mubr.f32.mxu0 0.0
        %2667 = vmatmul.mubr.f32.gmra.mrb[0].mxu0 %v2537
        %v2668 = vpop.f32.mrb[0].mxu0
        %v2669 = vadd.f32 0.0, %v2668
        %v2670 = vpop.f32.mrb[0].mxu0
        %2671 = vmatprep.mubr.f32.mxu0 0.0
        %2672 = vmatmul.mubr.f32.gmra.mrb[0].mxu0 %v2538
        %v2673 = vpop.f32.mrb[0].mxu0
        %v2674 = vadd.f32 0.0, %v2673
        %v2675 = vpop.f32.mrb[0].mxu0
        %2676 = vmatprep.mubr.f32.mxu0 0.0
        %2677 = vmatmul.mubr.f32.gmra.mrb[0].mxu0 %v2539
        %v2678 = vpop.f32.mrb[0].mxu0
        %v2679 = vadd.f32 0.0, %v2678
        %v2680 = vpop.f32.mrb[0].mxu0
        %2681 = vmatprep.mubr.f32.mxu0 0.0
        %2682 = vmatmul.mubr.f32.gmra.mrb[0].mxu0 %v2540
        %v2683 = vpop.f32.mrb[0].mxu0
        %v2684 = vadd.f32 0.0, %v2683
        %v2685 = vpop.f32.mrb[0].mxu0
        %2686 = vmatprep.mubr.f32.mxu0 0.0
        %2687 = vmatmul.mubr.f32.gmra.mrb[0].mxu0 %v2541
        %v2688 = vpop.f32.mrb[0].mxu0
        %v2689 = vadd.f32 0.0, %v2688
        %v2690 = vpop.f32.mrb[0].mxu0
        %2691 = vmatprep.mubr.f32.mxu0 0.0
        %2692 = vmatmul.mubr.f32.gmra.mrb[0].mxu0 %v2542
        %v2693 = vpop.f32.mrb[0].mxu0
        %v2694 = vadd.f32 0.0, %v2693
        %v2695 = vpop.f32.mrb[0].mxu0
        %2696 = vmatprep.mubr.f32.mxu0 0.0
        %2697 = vmatmul.mubr.f32.gmra.mrb[0].mxu0 %v2543
        %v2698 = vpop.f32.mrb[0].mxu0
        %v2699 = vadd.f32 0.0, %v2698
        %v2700 = vpop.f32.mrb[0].mxu0
        %2701 = vmatprep.mubr.f32.mxu0 0.0
        %2702 = vmatmul.mubr.f32.gmra.mrb[0].mxu0 %v2544
        %v2703 = vpop.f32.mrb[0].mxu0
        %v2704 = vadd.f32 0.0, %v2703
        %v2705 = vpop.f32.mrb[0].mxu0
        %2706 = vmatprep.mubr.f32.mxu0 0.0
        %2707 = vmatmul.mubr.f32.gmra.mrb[0].mxu0 %v2545
        %v2708 = vpop.f32.mrb[0].mxu0
        %v2709 = vadd.f32 0.0, %v2708
        %v2710 = vpop.f32.mrb[0].mxu0
        %2711 = vmatprep.mubr.f32.mxu0 0.0
        %2712 = vmatmul.mubr.f32.gmra.mrb[0].mxu0 %v2546
        %v2713 = vpop.f32.mrb[0].mxu0
        %v2714 = vadd.f32 0.0, %v2713
        %v2715 = vpop.f32.mrb[0].mxu0
        %2716 = vmatprep.mubr.f32.mxu0 0.0
        %2717 = vmatmul.mubr.f32.gmra.mrb[0].mxu0 %v2547
        %v2718 = vpop.f32.mrb[0].mxu0
        %v2719 = vadd.f32 0.0, %v2718
        %v2720 = vpop.f32.mrb[0].mxu0
        %2721 = vmatprep.mubr.f32.mxu0 0.0
        %2722 = vmatmul.mubr.f32.gmra.mrb[0].mxu0 %v2548
        %v2723 = vpop.f32.mrb[0].mxu0
        %v2724 = vadd.f32 0.0, %v2723
        %v2725 = vpop.f32.mrb[0].mxu0
        %2726 = vmatprep.mubr.f32.mxu0 0.0
        %2727 = vmatmul.mubr.f32.gmra.mrb[0].mxu0 %v2549
        %v2728 = vpop.f32.mrb[0].mxu0
        %v2729 = vadd.f32 0.0, %v2728
        %v2730 = vpop.f32.mrb[0].mxu0
        %2731 = vmatprep.mubr.f32.mxu0 0.0
        %2732 = vmatmul.mubr.f32.gmra.mrb[0].mxu0 %v2550
        %v2733 = vpop.f32.mrb[0].mxu0
        %v2734 = vadd.f32 0.0, %v2733
        %v2735 = vpop.f32.mrb[0].mxu0
        %2736 = vmatprep.mubr.f32.mxu0 0.0
        %2737 = vmatmul.mubr.f32.gmra.mrb[0].mxu0 %v2551
        %v2738 = vpop.f32.mrb[0].mxu0
        %v2739 = vadd.f32 0.0, %v2738
        %v2740 = vpop.f32.mrb[0].mxu0
        %2741 = vmatprep.mubr.f32.mxu0 0.0
        %2742 = vmatmul.mubr.f32.gmra.mrb[0].mxu0 %v2552
        %v2743 = vpop.f32.mrb[0].mxu0
        %v2744 = vadd.f32 0.0, %v2743
        %v2745 = vpop.f32.mrb[0].mxu0
        %2746 = vmatprep.mubr.f32.mxu0 0.0
        %2747 = vmatmul.mubr.f32.gmra.mrb[0].mxu0 %v2553
        %v2748 = vpop.f32.mrb[0].mxu0
        %v2749 = vadd.f32 0.0, %v2748
        %v2750 = vpop.f32.mrb[0].mxu0
        %2751 = vmatprep.mubr.f32.mxu0 0.0
        %2752 = vmatmul.mubr.f32.gmra.mrb[0].mxu0 %v2554
        %v2753 = vpop.f32.mrb[0].mxu0
        %v2754 = vadd.f32 0.0, %v2753
        %v2755 = vpop.f32.mrb[0].mxu0
        %2756 = vmatprep.mubr.f32.mxu0 0.0
        %2757 = vmatmul.mubr.f32.gmra.mrb[0].mxu0 %v2555
        %v2758 = vpop.f32.mrb[0].mxu0
        %v2759 = vadd.f32 0.0, %v2758
        %v2760 = vpop.f32.mrb[0].mxu0
        %2761 = vmatprep.mubr.f32.mxu0 0.0
        %2762 = vmatmul.mubr.f32.gmra.mrb[0].mxu0 %v2556
        %v2763 = vpop.f32.mrb[0].mxu0
        %v2764 = vadd.f32 0.0, %v2763
        %v2765 = vpop.f32.mrb[0].mxu0
        %2766 = vmatprep.mubr.f32.mxu0 0.0
        %2767 = vmatmul.mubr.f32.gmra.mrb[0].mxu0 %v2557
        %v2768 = vpop.f32.mrb[0].mxu0
        %v2769 = vadd.f32 0.0, %v2768
        %v2770 = vpop.f32.mrb[0].mxu0
        %2771 = vmatprep.mubr.f32.mxu0 0.0
        %2772 = vmatmul.mubr.f32.gmra.mrb[0].mxu0 %v2558
        %v2773 = vpop.f32.mrb[0].mxu0
        %v2774 = vadd.f32 0.0, %v2773
        %v2775 = vpop.f32.mrb[0].mxu0
        %2776 = vmatprep.mubr.f32.mxu0 0.0
        %2777 = vmatmul.mubr.f32.gmra.mrb[0].mxu0 %v2559
        %v2778 = vpop.f32.mrb[0].mxu0
        %v2779 = vadd.f32 0.0, %v2778
        %v2780 = vpop.f32.mrb[0].mxu0
        %2781 = vmatprep.mubr.f32.mxu0 0.0
        %2782 = vmatmul.mubr.f32.gmra.mrb[0].mxu0 %v2560
        %v2783 = vpop.f32.mrb[0].mxu0
        %v2784 = vadd.f32 0.0, %v2783
        %v2785 = vpop.f32.mrb[0].mxu0
        %2786 = vmatprep.mubr.f32.mxu0 0.0
        %2787 = vmatmul.mubr.f32.gmra.mrb[0].mxu0 %v2561
        %v2788 = vpop.f32.mrb[0].mxu0
        %v2789 = vadd.f32 0.0, %v2788
        %v2790 = vpop.f32.mrb[0].mxu0
        %2791 = vmatprep.mubr.f32.mxu0 0.0
        %2792 = vmatmul.mubr.f32.gmra.mrb[0].mxu0 %v2562
        %v2793 = vpop.f32.mrb[0].mxu0
        %v2794 = vadd.f32 0.0, %v2793
        %v2795 = vpop.f32.mrb[0].mxu0
        %2796 = vmatprep.mubr.f32.mxu0 0.0
        %2797 = vmatmul.mubr.f32.gmra.mrb[0].mxu0 %v2563
        %v2798 = vpop.f32.mrb[0].mxu0
        %v2799 = vadd.f32 0.0, %v2798
        %v2800 = vpop.f32.mrb[0].mxu0
        %2801 = vmatprep.mubr.f32.mxu0 0.0
        %2802 = vmatmul.mubr.f32.gmra.mrb[0].mxu0 %v2564
        %v2803 = vpop.f32.mrb[0].mxu0
        %v2804 = vadd.f32 0.0, %v2803
        %v2805 = vpop.f32.mrb[0].mxu0
        %2806 = vdwg.mxu0
        %v2807 = vld [vmem:[#allocation3] sm:$0xff]
        %v2808 = vld [vmem:[#allocation3 + $0x8] sm:$0xff]
        %v2809 = vld [vmem:[#allocation3 + $0x10] sm:$0xff]
        %v2810 = vld [vmem:[#allocation3 + $0x18] sm:$0xff]
        %v2811 = vld [vmem:[#allocation3 + $0x20] sm:$0xff]
        %v2812 = vld [vmem:[#allocation3 + $0x28] sm:$0xff]
        %v2813 = vld [vmem:[#allocation3 + $0x30] sm:$0xff]
        %v2814 = vld [vmem:[#allocation3 + $0x38] sm:$0xff]
        %v2815 = vld [vmem:[#allocation3 + $0x40] sm:$0xff]
        %v2816 = vld [vmem:[#allocation3 + $0x48] sm:$0xff]
        %v2817 = vld [vmem:[#allocation3 + $0x50] sm:$0xff]
        %v2818 = vld [vmem:[#allocation3 + $0x58] sm:$0xff]
        %v2819 = vld [vmem:[#allocation3 + $0x60] sm:$0xff]
        %v2820 = vld [vmem:[#allocation3 + $0x68] sm:$0xff]
        %v2821 = vld [vmem:[#allocation3 + $0x70] sm:$0xff]
        %v2822 = vld [vmem:[#allocation3 + $0x78] sm:$0xff]
        %v2823 = vld [vmem:[#allocation3 + $0x80] sm:$0xff]
        %v2824 = vld [vmem:[#allocation3 + $0x88] sm:$0xff]
        %v2825 = vld [vmem:[#allocation3 + $0x90] sm:$0xff]
        %v2826 = vld [vmem:[#allocation3 + $0x98] sm:$0xff]
        %v2827 = vld [vmem:[#allocation3 + $0xa0] sm:$0xff]
        %v2828 = vld [vmem:[#allocation3 + $0xa8] sm:$0xff]
        %v2829 = vld [vmem:[#allocation3 + $0xb0] sm:$0xff]
        %v2830 = vld [vmem:[#allocation3 + $0xb8] sm:$0xff]
        %v2831 = vld [vmem:[#allocation3 + $0xc0] sm:$0xff]
        %v2832 = vld [vmem:[#allocation3 + $0xc8] sm:$0xff]
        %v2833 = vld [vmem:[#allocation3 + $0xd0] sm:$0xff]
        %v2834 = vld [vmem:[#allocation3 + $0xd8] sm:$0xff]
        %v2835 = vld [vmem:[#allocation3 + $0xe0] sm:$0xff]
        %v2836 = vld [vmem:[#allocation3 + $0xe8] sm:$0xff]
        %v2837 = vld [vmem:[#allocation3 + $0xf0] sm:$0xff]
        %v2838 = vld [vmem:[#allocation3 + $0xf8] sm:$0xff]
        %v2839 = vadd.f32 %v2807, %v2649
        %v2840 = vadd.f32 %v2808, %v2654
        %v2841 = vadd.f32 %v2809, %v2659
        %v2842 = vadd.f32 %v2810, %v2664
        %v2843 = vadd.f32 %v2811, %v2669
        %v2844 = vadd.f32 %v2812, %v2674
        %v2845 = vadd.f32 %v2813, %v2679
        %v2846 = vadd.f32 %v2814, %v2684
        %v2847 = vadd.f32 %v2815, %v2689
        %v2848 = vadd.f32 %v2816, %v2694
        %v2849 = vadd.f32 %v2817, %v2699
        %v2850 = vadd.f32 %v2818, %v2704
        %v2851 = vadd.f32 %v2819, %v2709
        %v2852 = vadd.f32 %v2820, %v2714
        %v2853 = vadd.f32 %v2821, %v2719
        %v2854 = vadd.f32 %v2822, %v2724
        %v2855 = vadd.f32 %v2823, %v2729
        %v2856 = vadd.f32 %v2824, %v2734
        %v2857 = vadd.f32 %v2825, %v2739
        %v2858 = vadd.f32 %v2826, %v2744
        %v2859 = vadd.f32 %v2827, %v2749
        %v2860 = vadd.f32 %v2828, %v2754
        %v2861 = vadd.f32 %v2829, %v2759
        %v2862 = vadd.f32 %v2830, %v2764
        %v2863 = vadd.f32 %v2831, %v2769
        %v2864 = vadd.f32 %v2832, %v2774
        %v2865 = vadd.f32 %v2833, %v2779
        %v2866 = vadd.f32 %v2834, %v2784
        %v2867 = vadd.f32 %v2835, %v2789
        %v2868 = vadd.f32 %v2836, %v2794
        %v2869 = vadd.f32 %v2837, %v2799
        %v2870 = vadd.f32 %v2838, %v2804
        %2871 = vst [vmem:[#allocation3] sm:$0xff] %v2839
        %2872 = vst [vmem:[#allocation3 + $0x8] sm:$0xff] %v2840
        %2873 = vst [vmem:[#allocation3 + $0x10] sm:$0xff] %v2841
        %2874 = vst [vmem:[#allocation3 + $0x18] sm:$0xff] %v2842
        %2875 = vst [vmem:[#allocation3 + $0x20] sm:$0xff] %v2843
        %2876 = vst [vmem:[#allocation3 + $0x28] sm:$0xff] %v2844
        %2877 = vst [vmem:[#allocation3 + $0x30] sm:$0xff] %v2845
        %2878 = vst [vmem:[#allocation3 + $0x38] sm:$0xff] %v2846
        %2879 = vst [vmem:[#allocation3 + $0x40] sm:$0xff] %v2847
        %2880 = vst [vmem:[#allocation3 + $0x48] sm:$0xff] %v2848
        %2881 = vst [vmem:[#allocation3 + $0x50] sm:$0xff] %v2849
        %2882 = vst [vmem:[#allocation3 + $0x58] sm:$0xff] %v2850
        %2883 = vst [vmem:[#allocation3 + $0x60] sm:$0xff] %v2851
        %2884 = vst [vmem:[#allocation3 + $0x68] sm:$0xff] %v2852
        %2885 = vst [vmem:[#allocation3 + $0x70] sm:$0xff] %v2853
        %2886 = vst [vmem:[#allocation3 + $0x78] sm:$0xff] %v2854
        %2887 = vst [vmem:[#allocation3 + $0x80] sm:$0xff] %v2855
        %2888 = vst [vmem:[#allocation3 + $0x88] sm:$0xff] %v2856
        %2889 = vst [vmem:[#allocation3 + $0x90] sm:$0xff] %v2857
        %2890 = vst [vmem:[#allocation3 + $0x98] sm:$0xff] %v2858
        %2891 = vst [vmem:[#allocation3 + $0xa0] sm:$0xff] %v2859
        %2892 = vst [vmem:[#allocation3 + $0xa8] sm:$0xff] %v2860
        %2893 = vst [vmem:[#allocation3 + $0xb0] sm:$0xff] %v2861
        %2894 = vst [vmem:[#allocation3 + $0xb8] sm:$0xff] %v2862
        %2895 = vst [vmem:[#allocation3 + $0xc0] sm:$0xff] %v2863
        %2896 = vst [vmem:[#allocation3 + $0xc8] sm:$0xff] %v2864
        %2897 = vst [vmem:[#allocation3 + $0xd0] sm:$0xff] %v2865
        %2898 = vst [vmem:[#allocation3 + $0xd8] sm:$0xff] %v2866
        %2899 = vst [vmem:[#allocation3 + $0xe0] sm:$0xff] %v2867
        %2900 = vst [vmem:[#allocation3 + $0xe8] sm:$0xff] %v2868
        %2901 = vst [vmem:[#allocation3 + $0xf0] sm:$0xff] %v2869
        %2902 = vst [vmem:[#allocation3 + $0xf8] sm:$0xff] %v2870
        %v2903 = vld [vmem:[%s2532 + $0x1] sm:$0xff]
        %v2904 = vld [vmem:[%s2532 + $0x9] sm:$0xff]
        %v2905 = vld [vmem:[%s2532 + $0x19] sm:$0xff]
        %v2906 = vld [vmem:[%s2532 + $0x21] sm:$0xff]
        %v2907 = vld [vmem:[%s2532 + $0x31] sm:$0xff]
        %v2908 = vld [vmem:[%s2532 + $0x39] sm:$0xff]
        %v2909 = vld [vmem:[%s2532 + $0x49] sm:$0xff]
        %v2910 = vld [vmem:[%s2532 + $0x51] sm:$0xff]
        %v2911 = vld [vmem:[%s2532 + $0x61] sm:$0xff]
        %v2912 = vld [vmem:[%s2532 + $0x69] sm:$0xff]
        %v2913 = vld [vmem:[%s2532 + $0x79] sm:$0xff]
        %v2914 = vld [vmem:[%s2532 + $0x81] sm:$0xff]
        %v2915 = vld [vmem:[%s2532 + $0x91] sm:$0xff]
        %v2916 = vld [vmem:[%s2532 + $0x99] sm:$0xff]
        %v2917 = vld [vmem:[%s2532 + $0xa9] sm:$0xff]
        %v2918 = vld [vmem:[%s2532 + $0xb1] sm:$0xff]
        %v2919 = vld [vmem:[%s2532 + $0xc1] sm:$0xff]
        %v2920 = vld [vmem:[%s2532 + $0xc9] sm:$0xff]
        %v2921 = vld [vmem:[%s2532 + $0xd9] sm:$0xff]
        %v2922 = vld [vmem:[%s2532 + $0xe1] sm:$0xff]
        %v2923 = vld [vmem:[%s2532 + $0xf1] sm:$0xff]
        %v2924 = vld [vmem:[%s2532 + $0xf9] sm:$0xff]
        %v2925 = vld [vmem:[%s2532 + $0x109] sm:$0xff]
        %v2926 = vld [vmem:[%s2532 + $0x111] sm:$0xff]
        %v2927 = vld [vmem:[%s2532 + $0x121] sm:$0xff]
        %v2928 = vld [vmem:[%s2532 + $0x129] sm:$0xff]
        %v2929 = vld [vmem:[%s2532 + $0x139] sm:$0xff]
        %v2930 = vld [vmem:[%s2532 + $0x141] sm:$0xff]
        %v2931 = vld [vmem:[%s2532 + $0x151] sm:$0xff]
        %v2932 = vld [vmem:[%s2532 + $0x159] sm:$0xff]
        %v2933 = vld [vmem:[%s2532 + $0x169] sm:$0xff]
        %v2934 = vld [vmem:[%s2532 + $0x171] sm:$0xff]
        %s2935 = scalar_lea.vmem [#allocation7], 896
        %v2936 = vld [vmem:[%s2935] sm:$0xff]
        %v2937 = vld [vmem:[%s2935 + $0x8] sm:$0xff]
        %v2938 = vld [vmem:[%s2935 + $0x10] sm:$0xff]
        %v2939 = vld [vmem:[%s2935 + $0x18] sm:$0xff]
        %v2940 = vld [vmem:[%s2935 + $0x20] sm:$0xff]
        %v2941 = vld [vmem:[%s2935 + $0x28] sm:$0xff]
        %v2942 = vld [vmem:[%s2935 + $0x30] sm:$0xff]
        %v2943 = vld [vmem:[%s2935 + $0x38] sm:$0xff]
        %v2944 = vld [vmem:[%s2935 + $0x40] sm:$0xff]
        %v2945 = vld [vmem:[%s2935 + $0x48] sm:$0xff]
        %v2946 = vld [vmem:[%s2935 + $0x50] sm:$0xff]
        %v2947 = vld [vmem:[%s2935 + $0x58] sm:$0xff]
        %v2948 = vld [vmem:[%s2935 + $0x60] sm:$0xff]
        %v2949 = vld [vmem:[%s2935 + $0x68] sm:$0xff]
        %v2950 = vld [vmem:[%s2935 + $0x70] sm:$0xff]
        %v2951 = vld [vmem:[%s2935 + $0x78] sm:$0xff]
        %2952 = vmatprep.subr.mxu0 0.0
        %2953 = vmatpush1.msra.mxu0 %v2936
        %2954 = vmatprep.subr.mxu0 0.0
        %2955 = vmatpush1.msra.mxu0 %v2937
        %2956 = vmatprep.subr.mxu0 0.0
        %2957 = vmatpush1.msra.mxu0 %v2938
        %2958 = vmatprep.subr.mxu0 0.0
        %2959 = vmatpush1.msra.mxu0 %v2939
        %2960 = vmatprep.subr.mxu0 0.0
        %2961 = vmatpush1.msra.mxu0 %v2940
        %2962 = vmatprep.subr.mxu0 0.0
        %2963 = vmatpush1.msra.mxu0 %v2941
        %2964 = vmatprep.subr.mxu0 0.0
        %2965 = vmatpush1.msra.mxu0 %v2942
        %2966 = vmatprep.subr.mxu0 0.0
        %2967 = vmatpush1.msra.mxu0 %v2943
        %2968 = vmatprep.subr.mxu0 0.0
        %2969 = vmatpush1.msra.mxu0 %v2944
        %2970 = vmatprep.subr.mxu0 0.0
        %2971 = vmatpush1.msra.mxu0 %v2945
        %2972 = vmatprep.subr.mxu0 0.0
        %2973 = vmatpush1.msra.mxu0 %v2946
        %2974 = vmatprep.subr.mxu0 0.0
        %2975 = vmatpush1.msra.mxu0 %v2947
        %2976 = vmatprep.subr.mxu0 0.0
        %2977 = vmatpush1.msra.mxu0 %v2948
        %2978 = vmatprep.subr.mxu0 0.0
        %2979 = vmatpush1.msra.mxu0 %v2949
        %2980 = vmatprep.subr.mxu0 0.0
        %2981 = vmatpush1.msra.mxu0 %v2950
        %2982 = vmatprep.subr.mxu0 0.0
        %2983 = vmatpush1.msra.mxu0 %v2951
        %2984 = vmatprep.subr.mxu0 0.0
        %2985 = vmatpush1.msra.mxu0 0.0
        %2986 = vmatprep.subr.mxu0 0.0
        %2987 = vmatpush1.msra.mxu0 0.0
        %2988 = vmatprep.subr.mxu0 0.0
        %2989 = vmatpush1.msra.mxu0 0.0
        %2990 = vmatprep.subr.mxu0 0.0
        %2991 = vmatpush1.msra.mxu0 0.0
        %2992 = vmatprep.subr.mxu0 0.0
        %2993 = vmatpush1.msra.mxu0 0.0
        %2994 = vmatprep.subr.mxu0 0.0
        %2995 = vmatpush1.msra.mxu0 0.0
        %2996 = vmatprep.subr.mxu0 0.0
        %2997 = vmatpush1.msra.mxu0 0.0
        %2998 = vmatprep.subr.mxu0 0.0
        %2999 = vmatpush1.msra.mxu0 0.0
        %3000 = vmatprep.subr.mxu0 0.0
        %3001 = vmatpush1.msra.mxu0 0.0
        %3002 = vmatprep.subr.mxu0 0.0
        %3003 = vmatpush1.msra.mxu0 0.0
        %3004 = vmatprep.subr.mxu0 0.0
        %3005 = vmatpush1.msra.mxu0 0.0
        %3006 = vmatprep.subr.mxu0 0.0
        %3007 = vmatpush1.msra.mxu0 0.0
        %3008 = vmatprep.subr.mxu0 0.0
        %3009 = vmatpush1.msra.mxu0 0.0
        %3010 = vmatprep.subr.mxu0 0.0
        %3011 = vmatpush1.msra.mxu0 0.0
        %3012 = vmatprep.subr.mxu0 0.0
        %3013 = vmatpush1.msra.mxu0 0.0
        %3014 = vmatprep.subr.mxu0 0.0
        %3015 = vmatpush1.msra.mxu0 0.0
        %3016 = vmatprep.mubr.f32.mxu0 0.0
        %3017 = vmatmul.mubr.f32.gmra.mrb[0].mxu0 %v2903
        %v3018 = vpop.f32.mrb[0].mxu0
        %v3019 = vadd.f32 0.0, %v3018
        %v3020 = vpop.f32.mrb[0].mxu0
        %3021 = vmatprep.mubr.f32.mxu0 0.0
        %3022 = vmatmul.mubr.f32.gmra.mrb[0].mxu0 %v2904
        %v3023 = vpop.f32.mrb[0].mxu0
        %v3024 = vadd.f32 0.0, %v3023
        %v3025 = vpop.f32.mrb[0].mxu0
        %3026 = vmatprep.mubr.f32.mxu0 0.0
        %3027 = vmatmul.mubr.f32.gmra.mrb[0].mxu0 %v2905
        %v3028 = vpop.f32.mrb[0].mxu0
        %v3029 = vadd.f32 0.0, %v3028
        %v3030 = vpop.f32.mrb[0].mxu0
        %3031 = vmatprep.mubr.f32.mxu0 0.0
        %3032 = vmatmul.mubr.f32.gmra.mrb[0].mxu0 %v2906
        %v3033 = vpop.f32.mrb[0].mxu0
        %v3034 = vadd.f32 0.0, %v3033
        %v3035 = vpop.f32.mrb[0].mxu0
        %3036 = vmatprep.mubr.f32.mxu0 0.0
        %3037 = vmatmul.mubr.f32.gmra.mrb[0].mxu0 %v2907
        %v3038 = vpop.f32.mrb[0].mxu0
        %v3039 = vadd.f32 0.0, %v3038
        %v3040 = vpop.f32.mrb[0].mxu0
        %3041 = vmatprep.mubr.f32.mxu0 0.0
        %3042 = vmatmul.mubr.f32.gmra.mrb[0].mxu0 %v2908
        %v3043 = vpop.f32.mrb[0].mxu0
        %v3044 = vadd.f32 0.0, %v3043
        %v3045 = vpop.f32.mrb[0].mxu0
        %3046 = vmatprep.mubr.f32.mxu0 0.0
        %3047 = vmatmul.mubr.f32.gmra.mrb[0].mxu0 %v2909
        %v3048 = vpop.f32.mrb[0].mxu0
        %v3049 = vadd.f32 0.0, %v3048
        %v3050 = vpop.f32.mrb[0].mxu0
        %3051 = vmatprep.mubr.f32.mxu0 0.0
        %3052 = vmatmul.mubr.f32.gmra.mrb[0].mxu0 %v2910
        %v3053 = vpop.f32.mrb[0].mxu0
        %v3054 = vadd.f32 0.0, %v3053
        %v3055 = vpop.f32.mrb[0].mxu0
        %3056 = vmatprep.mubr.f32.mxu0 0.0
        %3057 = vmatmul.mubr.f32.gmra.mrb[0].mxu0 %v2911
        %v3058 = vpop.f32.mrb[0].mxu0
        %v3059 = vadd.f32 0.0, %v3058
        %v3060 = vpop.f32.mrb[0].mxu0
        %3061 = vmatprep.mubr.f32.mxu0 0.0
        %3062 = vmatmul.mubr.f32.gmra.mrb[0].mxu0 %v2912
        %v3063 = vpop.f32.mrb[0].mxu0
        %v3064 = vadd.f32 0.0, %v3063
        %v3065 = vpop.f32.mrb[0].mxu0
        %3066 = vmatprep.mubr.f32.mxu0 0.0
        %3067 = vmatmul.mubr.f32.gmra.mrb[0].mxu0 %v2913
        %v3068 = vpop.f32.mrb[0].mxu0
        %v3069 = vadd.f32 0.0, %v3068
        %v3070 = vpop.f32.mrb[0].mxu0
        %3071 = vmatprep.mubr.f32.mxu0 0.0
        %3072 = vmatmul.mubr.f32.gmra.mrb[0].mxu0 %v2914
        %v3073 = vpop.f32.mrb[0].mxu0
        %v3074 = vadd.f32 0.0, %v3073
        %v3075 = vpop.f32.mrb[0].mxu0
        %3076 = vmatprep.mubr.f32.mxu0 0.0
        %3077 = vmatmul.mubr.f32.gmra.mrb[0].mxu0 %v2915
        %v3078 = vpop.f32.mrb[0].mxu0
        %v3079 = vadd.f32 0.0, %v3078
        %v3080 = vpop.f32.mrb[0].mxu0
        %3081 = vmatprep.mubr.f32.mxu0 0.0
        %3082 = vmatmul.mubr.f32.gmra.mrb[0].mxu0 %v2916
        %v3083 = vpop.f32.mrb[0].mxu0
        %v3084 = vadd.f32 0.0, %v3083
        %v3085 = vpop.f32.mrb[0].mxu0
        %3086 = vmatprep.mubr.f32.mxu0 0.0
        %3087 = vmatmul.mubr.f32.gmra.mrb[0].mxu0 %v2917
        %v3088 = vpop.f32.mrb[0].mxu0
        %v3089 = vadd.f32 0.0, %v3088
        %v3090 = vpop.f32.mrb[0].mxu0
        %3091 = vmatprep.mubr.f32.mxu0 0.0
        %3092 = vmatmul.mubr.f32.gmra.mrb[0].mxu0 %v2918
        %v3093 = vpop.f32.mrb[0].mxu0
        %v3094 = vadd.f32 0.0, %v3093
        %v3095 = vpop.f32.mrb[0].mxu0
        %3096 = vmatprep.mubr.f32.mxu0 0.0
        %3097 = vmatmul.mubr.f32.gmra.mrb[0].mxu0 %v2919
        %v3098 = vpop.f32.mrb[0].mxu0
        %v3099 = vadd.f32 0.0, %v3098
        %v3100 = vpop.f32.mrb[0].mxu0
        %3101 = vmatprep.mubr.f32.mxu0 0.0
        %3102 = vmatmul.mubr.f32.gmra.mrb[0].mxu0 %v2920
        %v3103 = vpop.f32.mrb[0].mxu0
        %v3104 = vadd.f32 0.0, %v3103
        %v3105 = vpop.f32.mrb[0].mxu0
        %3106 = vmatprep.mubr.f32.mxu0 0.0
        %3107 = vmatmul.mubr.f32.gmra.mrb[0].mxu0 %v2921
        %v3108 = vpop.f32.mrb[0].mxu0
        %v3109 = vadd.f32 0.0, %v3108
        %v3110 = vpop.f32.mrb[0].mxu0
        %3111 = vmatprep.mubr.f32.mxu0 0.0
        %3112 = vmatmul.mubr.f32.gmra.mrb[0].mxu0 %v2922
        %v3113 = vpop.f32.mrb[0].mxu0
        %v3114 = vadd.f32 0.0, %v3113
        %v3115 = vpop.f32.mrb[0].mxu0
        %3116 = vmatprep.mubr.f32.mxu0 0.0
        %3117 = vmatmul.mubr.f32.gmra.mrb[0].mxu0 %v2923
        %v3118 = vpop.f32.mrb[0].mxu0
        %v3119 = vadd.f32 0.0, %v3118
        %v3120 = vpop.f32.mrb[0].mxu0
        %3121 = vmatprep.mubr.f32.mxu0 0.0
        %3122 = vmatmul.mubr.f32.gmra.mrb[0].mxu0 %v2924
        %v3123 = vpop.f32.mrb[0].mxu0
        %v3124 = vadd.f32 0.0, %v3123
        %v3125 = vpop.f32.mrb[0].mxu0
        %3126 = vmatprep.mubr.f32.mxu0 0.0
        %3127 = vmatmul.mubr.f32.gmra.mrb[0].mxu0 %v2925
        %v3128 = vpop.f32.mrb[0].mxu0
        %v3129 = vadd.f32 0.0, %v3128
        %v3130 = vpop.f32.mrb[0].mxu0
        %3131 = vmatprep.mubr.f32.mxu0 0.0
        %3132 = vmatmul.mubr.f32.gmra.mrb[0].mxu0 %v2926
        %v3133 = vpop.f32.mrb[0].mxu0
        %v3134 = vadd.f32 0.0, %v3133
        %v3135 = vpop.f32.mrb[0].mxu0
        %3136 = vmatprep.mubr.f32.mxu0 0.0
        %3137 = vmatmul.mubr.f32.gmra.mrb[0].mxu0 %v2927
        %v3138 = vpop.f32.mrb[0].mxu0
        %v3139 = vadd.f32 0.0, %v3138
        %v3140 = vpop.f32.mrb[0].mxu0
        %3141 = vmatprep.mubr.f32.mxu0 0.0
        %3142 = vmatmul.mubr.f32.gmra.mrb[0].mxu0 %v2928
        %v3143 = vpop.f32.mrb[0].mxu0
        %v3144 = vadd.f32 0.0, %v3143
        %v3145 = vpop.f32.mrb[0].mxu0
        %3146 = vmatprep.mubr.f32.mxu0 0.0
        %3147 = vmatmul.mubr.f32.gmra.mrb[0].mxu0 %v2929
        %v3148 = vpop.f32.mrb[0].mxu0
        %v3149 = vadd.f32 0.0, %v3148
        %v3150 = vpop.f32.mrb[0].mxu0
        %3151 = vmatprep.mubr.f32.mxu0 0.0
        %3152 = vmatmul.mubr.f32.gmra.mrb[0].mxu0 %v2930
        %v3153 = vpop.f32.mrb[0].mxu0
        %v3154 = vadd.f32 0.0, %v3153
        %v3155 = vpop.f32.mrb[0].mxu0
        %3156 = vmatprep.mubr.f32.mxu0 0.0
        %3157 = vmatmul.mubr.f32.gmra.mrb[0].mxu0 %v2931
        %v3158 = vpop.f32.mrb[0].mxu0
        %v3159 = vadd.f32 0.0, %v3158
        %v3160 = vpop.f32.mrb[0].mxu0
        %3161 = vmatprep.mubr.f32.mxu0 0.0
        %3162 = vmatmul.mubr.f32.gmra.mrb[0].mxu0 %v2932
        %v3163 = vpop.f32.mrb[0].mxu0
        %v3164 = vadd.f32 0.0, %v3163
        %v3165 = vpop.f32.mrb[0].mxu0
        %3166 = vmatprep.mubr.f32.mxu0 0.0
        %3167 = vmatmul.mubr.f32.gmra.mrb[0].mxu0 %v2933
        %v3168 = vpop.f32.mrb[0].mxu0
        %v3169 = vadd.f32 0.0, %v3168
        %v3170 = vpop.f32.mrb[0].mxu0
        %3171 = vmatprep.mubr.f32.mxu0 0.0
        %3172 = vmatmul.mubr.f32.gmra.mrb[0].mxu0 %v2934
        %v3173 = vpop.f32.mrb[0].mxu0
        %v3174 = vadd.f32 0.0, %v3173
        %v3175 = vpop.f32.mrb[0].mxu0
        %3176 = vdwg.mxu0
        %v3177 = vld [vmem:[#allocation3] sm:$0xff]
        %v3178 = vld [vmem:[#allocation3 + $0x8] sm:$0xff]
        %v3179 = vld [vmem:[#allocation3 + $0x10] sm:$0xff]
        %v3180 = vld [vmem:[#allocation3 + $0x18] sm:$0xff]
        %v3181 = vld [vmem:[#allocation3 + $0x20] sm:$0xff]
        %v3182 = vld [vmem:[#allocation3 + $0x28] sm:$0xff]
        %v3183 = vld [vmem:[#allocation3 + $0x30] sm:$0xff]
        %v3184 = vld [vmem:[#allocation3 + $0x38] sm:$0xff]
        %v3185 = vld [vmem:[#allocation3 + $0x40] sm:$0xff]
        %v3186 = vld [vmem:[#allocation3 + $0x48] sm:$0xff]
        %v3187 = vld [vmem:[#allocation3 + $0x50] sm:$0xff]
        %v3188 = vld [vmem:[#allocation3 + $0x58] sm:$0xff]
        %v3189 = vld [vmem:[#allocation3 + $0x60] sm:$0xff]
        %v3190 = vld [vmem:[#allocation3 + $0x68] sm:$0xff]
        %v3191 = vld [vmem:[#allocation3 + $0x70] sm:$0xff]
        %v3192 = vld [vmem:[#allocation3 + $0x78] sm:$0xff]
        %v3193 = vld [vmem:[#allocation3 + $0x80] sm:$0xff]
        %v3194 = vld [vmem:[#allocation3 + $0x88] sm:$0xff]
        %v3195 = vld [vmem:[#allocation3 + $0x90] sm:$0xff]
        %v3196 = vld [vmem:[#allocation3 + $0x98] sm:$0xff]
        %v3197 = vld [vmem:[#allocation3 + $0xa0] sm:$0xff]
        %v3198 = vld [vmem:[#allocation3 + $0xa8] sm:$0xff]
        %v3199 = vld [vmem:[#allocation3 + $0xb0] sm:$0xff]
        %v3200 = vld [vmem:[#allocation3 + $0xb8] sm:$0xff]
        %v3201 = vld [vmem:[#allocation3 + $0xc0] sm:$0xff]
        %v3202 = vld [vmem:[#allocation3 + $0xc8] sm:$0xff]
        %v3203 = vld [vmem:[#allocation3 + $0xd0] sm:$0xff]
        %v3204 = vld [vmem:[#allocation3 + $0xd8] sm:$0xff]
        %v3205 = vld [vmem:[#allocation3 + $0xe0] sm:$0xff]
        %v3206 = vld [vmem:[#allocation3 + $0xe8] sm:$0xff]
        %v3207 = vld [vmem:[#allocation3 + $0xf0] sm:$0xff]
        %v3208 = vld [vmem:[#allocation3 + $0xf8] sm:$0xff]
        %v3209 = vadd.f32 %v3177, %v3019
        %v3210 = vadd.f32 %v3178, %v3024
        %v3211 = vadd.f32 %v3179, %v3029
        %v3212 = vadd.f32 %v3180, %v3034
        %v3213 = vadd.f32 %v3181, %v3039
        %v3214 = vadd.f32 %v3182, %v3044
        %v3215 = vadd.f32 %v3183, %v3049
        %v3216 = vadd.f32 %v3184, %v3054
        %v3217 = vadd.f32 %v3185, %v3059
        %v3218 = vadd.f32 %v3186, %v3064
        %v3219 = vadd.f32 %v3187, %v3069
        %v3220 = vadd.f32 %v3188, %v3074
        %v3221 = vadd.f32 %v3189, %v3079
        %v3222 = vadd.f32 %v3190, %v3084
        %v3223 = vadd.f32 %v3191, %v3089
        %v3224 = vadd.f32 %v3192, %v3094
        %v3225 = vadd.f32 %v3193, %v3099
        %v3226 = vadd.f32 %v3194, %v3104
        %v3227 = vadd.f32 %v3195, %v3109
        %v3228 = vadd.f32 %v3196, %v3114
        %v3229 = vadd.f32 %v3197, %v3119
        %v3230 = vadd.f32 %v3198, %v3124
        %v3231 = vadd.f32 %v3199, %v3129
        %v3232 = vadd.f32 %v3200, %v3134
        %v3233 = vadd.f32 %v3201, %v3139
        %v3234 = vadd.f32 %v3202, %v3144
        %v3235 = vadd.f32 %v3203, %v3149
        %v3236 = vadd.f32 %v3204, %v3154
        %v3237 = vadd.f32 %v3205, %v3159
        %v3238 = vadd.f32 %v3206, %v3164
        %v3239 = vadd.f32 %v3207, %v3169
        %v3240 = vadd.f32 %v3208, %v3174
        %3241 = vst [vmem:[#allocation3] sm:$0xff] %v3209
        %3242 = vst [vmem:[#allocation3 + $0x8] sm:$0xff] %v3210
        %3243 = vst [vmem:[#allocation3 + $0x10] sm:$0xff] %v3211
        %3244 = vst [vmem:[#allocation3 + $0x18] sm:$0xff] %v3212
        %3245 = vst [vmem:[#allocation3 + $0x20] sm:$0xff] %v3213
        %3246 = vst [vmem:[#allocation3 + $0x28] sm:$0xff] %v3214
        %3247 = vst [vmem:[#allocation3 + $0x30] sm:$0xff] %v3215
        %3248 = vst [vmem:[#allocation3 + $0x38] sm:$0xff] %v3216
        %3249 = vst [vmem:[#allocation3 + $0x40] sm:$0xff] %v3217
        %3250 = vst [vmem:[#allocation3 + $0x48] sm:$0xff] %v3218
        %3251 = vst [vmem:[#allocation3 + $0x50] sm:$0xff] %v3219
        %3252 = vst [vmem:[#allocation3 + $0x58] sm:$0xff] %v3220
        %3253 = vst [vmem:[#allocation3 + $0x60] sm:$0xff] %v3221
        %3254 = vst [vmem:[#allocation3 + $0x68] sm:$0xff] %v3222
        %3255 = vst [vmem:[#allocation3 + $0x70] sm:$0xff] %v3223
        %3256 = vst [vmem:[#allocation3 + $0x78] sm:$0xff] %v3224
        %3257 = vst [vmem:[#allocation3 + $0x80] sm:$0xff] %v3225
        %3258 = vst [vmem:[#allocation3 + $0x88] sm:$0xff] %v3226
        %3259 = vst [vmem:[#allocation3 + $0x90] sm:$0xff] %v3227
        %3260 = vst [vmem:[#allocation3 + $0x98] sm:$0xff] %v3228
        %3261 = vst [vmem:[#allocation3 + $0xa0] sm:$0xff] %v3229
        %3262 = vst [vmem:[#allocation3 + $0xa8] sm:$0xff] %v3230
        %3263 = vst [vmem:[#allocation3 + $0xb0] sm:$0xff] %v3231
        %3264 = vst [vmem:[#allocation3 + $0xb8] sm:$0xff] %v3232
        %3265 = vst [vmem:[#allocation3 + $0xc0] sm:$0xff] %v3233
        %3266 = vst [vmem:[#allocation3 + $0xc8] sm:$0xff] %v3234
        %3267 = vst [vmem:[#allocation3 + $0xd0] sm:$0xff] %v3235
        %3268 = vst [vmem:[#allocation3 + $0xd8] sm:$0xff] %v3236
        %3269 = vst [vmem:[#allocation3 + $0xe0] sm:$0xff] %v3237
        %3270 = vst [vmem:[#allocation3 + $0xe8] sm:$0xff] %v3238
        %3271 = vst [vmem:[#allocation3 + $0xf0] sm:$0xff] %v3239
        %3272 = vst [vmem:[#allocation3 + $0xf8] sm:$0xff] %v3240
        %v3273 = vld [vmem:[%s2532 + $0x2] sm:$0xff]
        %v3274 = vld [vmem:[%s2532 + $0xa] sm:$0xff]
        %v3275 = vld [vmem:[%s2532 + $0x1a] sm:$0xff]
        %v3276 = vld [vmem:[%s2532 + $0x22] sm:$0xff]
        %v3277 = vld [vmem:[%s2532 + $0x32] sm:$0xff]
        %v3278 = vld [vmem:[%s2532 + $0x3a] sm:$0xff]
        %v3279 = vld [vmem:[%s2532 + $0x4a] sm:$0xff]
        %v3280 = vld [vmem:[%s2532 + $0x52] sm:$0xff]
        %v3281 = vld [vmem:[%s2532 + $0x62] sm:$0xff]
        %v3282 = vld [vmem:[%s2532 + $0x6a] sm:$0xff]
        %v3283 = vld [vmem:[%s2532 + $0x7a] sm:$0xff]
        %v3284 = vld [vmem:[%s2532 + $0x82] sm:$0xff]
        %v3285 = vld [vmem:[%s2532 + $0x92] sm:$0xff]
        %v3286 = vld [vmem:[%s2532 + $0x9a] sm:$0xff]
        %v3287 = vld [vmem:[%s2532 + $0xaa] sm:$0xff]
        %v3288 = vld [vmem:[%s2532 + $0xb2] sm:$0xff]
        %v3289 = vld [vmem:[%s2532 + $0xc2] sm:$0xff]
        %v3290 = vld [vmem:[%s2532 + $0xca] sm:$0xff]
        %v3291 = vld [vmem:[%s2532 + $0xda] sm:$0xff]
        %v3292 = vld [vmem:[%s2532 + $0xe2] sm:$0xff]
        %v3293 = vld [vmem:[%s2532 + $0xf2] sm:$0xff]
        %v3294 = vld [vmem:[%s2532 + $0xfa] sm:$0xff]
        %v3295 = vld [vmem:[%s2532 + $0x10a] sm:$0xff]
        %v3296 = vld [vmem:[%s2532 + $0x112] sm:$0xff]
        %v3297 = vld [vmem:[%s2532 + $0x122] sm:$0xff]
        %v3298 = vld [vmem:[%s2532 + $0x12a] sm:$0xff]
        %v3299 = vld [vmem:[%s2532 + $0x13a] sm:$0xff]
        %v3300 = vld [vmem:[%s2532 + $0x142] sm:$0xff]
        %v3301 = vld [vmem:[%s2532 + $0x152] sm:$0xff]
        %v3302 = vld [vmem:[%s2532 + $0x15a] sm:$0xff]
        %v3303 = vld [vmem:[%s2532 + $0x16a] sm:$0xff]
        %v3304 = vld [vmem:[%s2532 + $0x172] sm:$0xff]
        %s3305 = scalar_lea.vmem [#allocation7], 1024
        %v3306 = vld [vmem:[%s3305] sm:$0xff]
        %v3307 = vld [vmem:[%s3305 + $0x8] sm:$0xff]
        %v3308 = vld [vmem:[%s3305 + $0x10] sm:$0xff]
        %v3309 = vld [vmem:[%s3305 + $0x18] sm:$0xff]
        %v3310 = vld [vmem:[%s3305 + $0x20] sm:$0xff]
        %v3311 = vld [vmem:[%s3305 + $0x28] sm:$0xff]
        %v3312 = vld [vmem:[%s3305 + $0x30] sm:$0xff]
        %v3313 = vld [vmem:[%s3305 + $0x38] sm:$0xff]
        %v3314 = vld [vmem:[%s3305 + $0x40] sm:$0xff]
        %v3315 = vld [vmem:[%s3305 + $0x48] sm:$0xff]
        %v3316 = vld [vmem:[%s3305 + $0x50] sm:$0xff]
        %v3317 = vld [vmem:[%s3305 + $0x58] sm:$0xff]
        %v3318 = vld [vmem:[%s3305 + $0x60] sm:$0xff]
        %v3319 = vld [vmem:[%s3305 + $0x68] sm:$0xff]
        %v3320 = vld [vmem:[%s3305 + $0x70] sm:$0xff]
        %v3321 = vld [vmem:[%s3305 + $0x78] sm:$0xff]
        %3322 = vmatprep.subr.mxu0 0.0
        %3323 = vmatpush1.msra.mxu0 %v3306
        %3324 = vmatprep.subr.mxu0 0.0
        %3325 = vmatpush1.msra.mxu0 %v3307
        %3326 = vmatprep.subr.mxu0 0.0
        %3327 = vmatpush1.msra.mxu0 %v3308
        %3328 = vmatprep.subr.mxu0 0.0
        %3329 = vmatpush1.msra.mxu0 %v3309
        %3330 = vmatprep.subr.mxu0 0.0
        %3331 = vmatpush1.msra.mxu0 %v3310
        %3332 = vmatprep.subr.mxu0 0.0
        %3333 = vmatpush1.msra.mxu0 %v3311
        %3334 = vmatprep.subr.mxu0 0.0
        %3335 = vmatpush1.msra.mxu0 %v3312
        %3336 = vmatprep.subr.mxu0 0.0
        %3337 = vmatpush1.msra.mxu0 %v3313
        %3338 = vmatprep.subr.mxu0 0.0
        %3339 = vmatpush1.msra.mxu0 %v3314
        %3340 = vmatprep.subr.mxu0 0.0
        %3341 = vmatpush1.msra.mxu0 %v3315
        %3342 = vmatprep.subr.mxu0 0.0
        %3343 = vmatpush1.msra.mxu0 %v3316
        %3344 = vmatprep.subr.mxu0 0.0
        %3345 = vmatpush1.msra.mxu0 %v3317
        %3346 = vmatprep.subr.mxu0 0.0
        %3347 = vmatpush1.msra.mxu0 %v3318
        %3348 = vmatprep.subr.mxu0 0.0
        %3349 = vmatpush1.msra.mxu0 %v3319
        %3350 = vmatprep.subr.mxu0 0.0
        %3351 = vmatpush1.msra.mxu0 %v3320
        %3352 = vmatprep.subr.mxu0 0.0
        %3353 = vmatpush1.msra.mxu0 %v3321
        %3354 = vmatprep.subr.mxu0 0.0
        %3355 = vmatpush1.msra.mxu0 0.0
        %3356 = vmatprep.subr.mxu0 0.0
        %3357 = vmatpush1.msra.mxu0 0.0
        %3358 = vmatprep.subr.mxu0 0.0
        %3359 = vmatpush1.msra.mxu0 0.0
        %3360 = vmatprep.subr.mxu0 0.0
        %3361 = vmatpush1.msra.mxu0 0.0
        %3362 = vmatprep.subr.mxu0 0.0
        %3363 = vmatpush1.msra.mxu0 0.0
        %3364 = vmatprep.subr.mxu0 0.0
        %3365 = vmatpush1.msra.mxu0 0.0
        %3366 = vmatprep.subr.mxu0 0.0
        %3367 = vmatpush1.msra.mxu0 0.0
        %3368 = vmatprep.subr.mxu0 0.0
        %3369 = vmatpush1.msra.mxu0 0.0
        %3370 = vmatprep.subr.mxu0 0.0
        %3371 = vmatpush1.msra.mxu0 0.0
        %3372 = vmatprep.subr.mxu0 0.0
        %3373 = vmatpush1.msra.mxu0 0.0
        %3374 = vmatprep.subr.mxu0 0.0
        %3375 = vmatpush1.msra.mxu0 0.0
        %3376 = vmatprep.subr.mxu0 0.0
        %3377 = vmatpush1.msra.mxu0 0.0
        %3378 = vmatprep.subr.mxu0 0.0
        %3379 = vmatpush1.msra.mxu0 0.0
        %3380 = vmatprep.subr.mxu0 0.0
        %3381 = vmatpush1.msra.mxu0 0.0
        %3382 = vmatprep.subr.mxu0 0.0
        %3383 = vmatpush1.msra.mxu0 0.0
        %3384 = vmatprep.subr.mxu0 0.0
        %3385 = vmatpush1.msra.mxu0 0.0
        %3386 = vmatprep.mubr.f32.mxu0 0.0
        %3387 = vmatmul.mubr.f32.gmra.mrb[0].mxu0 %v3273
        %v3388 = vpop.f32.mrb[0].mxu0
        %v3389 = vadd.f32 0.0, %v3388
        %v3390 = vpop.f32.mrb[0].mxu0
        %3391 = vmatprep.mubr.f32.mxu0 0.0
        %3392 = vmatmul.mubr.f32.gmra.mrb[0].mxu0 %v3274
        %v3393 = vpop.f32.mrb[0].mxu0
        %v3394 = vadd.f32 0.0, %v3393
        %v3395 = vpop.f32.mrb[0].mxu0
        %3396 = vmatprep.mubr.f32.mxu0 0.0
        %3397 = vmatmul.mubr.f32.gmra.mrb[0].mxu0 %v3275
        %v3398 = vpop.f32.mrb[0].mxu0
        %v3399 = vadd.f32 0.0, %v3398
        %v3400 = vpop.f32.mrb[0].mxu0
        %3401 = vmatprep.mubr.f32.mxu0 0.0
        %3402 = vmatmul.mubr.f32.gmra.mrb[0].mxu0 %v3276
        %v3403 = vpop.f32.mrb[0].mxu0
        %v3404 = vadd.f32 0.0, %v3403
        %v3405 = vpop.f32.mrb[0].mxu0
        %3406 = vmatprep.mubr.f32.mxu0 0.0
        %3407 = vmatmul.mubr.f32.gmra.mrb[0].mxu0 %v3277
        %v3408 = vpop.f32.mrb[0].mxu0
        %v3409 = vadd.f32 0.0, %v3408
        %v3410 = vpop.f32.mrb[0].mxu0
        %3411 = vmatprep.mubr.f32.mxu0 0.0
        %3412 = vmatmul.mubr.f32.gmra.mrb[0].mxu0 %v3278
        %v3413 = vpop.f32.mrb[0].mxu0
        %v3414 = vadd.f32 0.0, %v3413
        %v3415 = vpop.f32.mrb[0].mxu0
        %3416 = vmatprep.mubr.f32.mxu0 0.0
        %3417 = vmatmul.mubr.f32.gmra.mrb[0].mxu0 %v3279
        %v3418 = vpop.f32.mrb[0].mxu0
        %v3419 = vadd.f32 0.0, %v3418
        %v3420 = vpop.f32.mrb[0].mxu0
        %3421 = vmatprep.mubr.f32.mxu0 0.0
        %3422 = vmatmul.mubr.f32.gmra.mrb[0].mxu0 %v3280
        %v3423 = vpop.f32.mrb[0].mxu0
        %v3424 = vadd.f32 0.0, %v3423
        %v3425 = vpop.f32.mrb[0].mxu0
        %3426 = vmatprep.mubr.f32.mxu0 0.0
        %3427 = vmatmul.mubr.f32.gmra.mrb[0].mxu0 %v3281
        %v3428 = vpop.f32.mrb[0].mxu0
        %v3429 = vadd.f32 0.0, %v3428
        %v3430 = vpop.f32.mrb[0].mxu0
        %3431 = vmatprep.mubr.f32.mxu0 0.0
        %3432 = vmatmul.mubr.f32.gmra.mrb[0].mxu0 %v3282
        %v3433 = vpop.f32.mrb[0].mxu0
        %v3434 = vadd.f32 0.0, %v3433
        %v3435 = vpop.f32.mrb[0].mxu0
        %3436 = vmatprep.mubr.f32.mxu0 0.0
        %3437 = vmatmul.mubr.f32.gmra.mrb[0].mxu0 %v3283
        %v3438 = vpop.f32.mrb[0].mxu0
        %v3439 = vadd.f32 0.0, %v3438
        %v3440 = vpop.f32.mrb[0].mxu0
        %3441 = vmatprep.mubr.f32.mxu0 0.0
        %3442 = vmatmul.mubr.f32.gmra.mrb[0].mxu0 %v3284
        %v3443 = vpop.f32.mrb[0].mxu0
        %v3444 = vadd.f32 0.0, %v3443
        %v3445 = vpop.f32.mrb[0].mxu0
        %3446 = vmatprep.mubr.f32.mxu0 0.0
        %3447 = vmatmul.mubr.f32.gmra.mrb[0].mxu0 %v3285
        %v3448 = vpop.f32.mrb[0].mxu0
        %v3449 = vadd.f32 0.0, %v3448
        %v3450 = vpop.f32.mrb[0].mxu0
        %3451 = vmatprep.mubr.f32.mxu0 0.0
        %3452 = vmatmul.mubr.f32.gmra.mrb[0].mxu0 %v3286
        %v3453 = vpop.f32.mrb[0].mxu0
        %v3454 = vadd.f32 0.0, %v3453
        %v3455 = vpop.f32.mrb[0].mxu0
        %3456 = vmatprep.mubr.f32.mxu0 0.0
        %3457 = vmatmul.mubr.f32.gmra.mrb[0].mxu0 %v3287
        %v3458 = vpop.f32.mrb[0].mxu0
        %v3459 = vadd.f32 0.0, %v3458
        %v3460 = vpop.f32.mrb[0].mxu0
        %3461 = vmatprep.mubr.f32.mxu0 0.0
        %3462 = vmatmul.mubr.f32.gmra.mrb[0].mxu0 %v3288
        %v3463 = vpop.f32.mrb[0].mxu0
        %v3464 = vadd.f32 0.0, %v3463
        %v3465 = vpop.f32.mrb[0].mxu0
        %3466 = vmatprep.mubr.f32.mxu0 0.0
        %3467 = vmatmul.mubr.f32.gmra.mrb[0].mxu0 %v3289
        %v3468 = vpop.f32.mrb[0].mxu0
        %v3469 = vadd.f32 0.0, %v3468
        %v3470 = vpop.f32.mrb[0].mxu0
        %3471 = vmatprep.mubr.f32.mxu0 0.0
        %3472 = vmatmul.mubr.f32.gmra.mrb[0].mxu0 %v3290
        %v3473 = vpop.f32.mrb[0].mxu0
        %v3474 = vadd.f32 0.0, %v3473
        %v3475 = vpop.f32.mrb[0].mxu0
        %3476 = vmatprep.mubr.f32.mxu0 0.0
        %3477 = vmatmul.mubr.f32.gmra.mrb[0].mxu0 %v3291
        %v3478 = vpop.f32.mrb[0].mxu0
        %v3479 = vadd.f32 0.0, %v3478
        %v3480 = vpop.f32.mrb[0].mxu0
        %3481 = vmatprep.mubr.f32.mxu0 0.0
        %3482 = vmatmul.mubr.f32.gmra.mrb[0].mxu0 %v3292
        %v3483 = vpop.f32.mrb[0].mxu0
        %v3484 = vadd.f32 0.0, %v3483
        %v3485 = vpop.f32.mrb[0].mxu0
        %3486 = vmatprep.mubr.f32.mxu0 0.0
        %3487 = vmatmul.mubr.f32.gmra.mrb[0].mxu0 %v3293
        %v3488 = vpop.f32.mrb[0].mxu0
        %v3489 = vadd.f32 0.0, %v3488
        %v3490 = vpop.f32.mrb[0].mxu0
        %3491 = vmatprep.mubr.f32.mxu0 0.0
        %3492 = vmatmul.mubr.f32.gmra.mrb[0].mxu0 %v3294
        %v3493 = vpop.f32.mrb[0].mxu0
        %v3494 = vadd.f32 0.0, %v3493
        %v3495 = vpop.f32.mrb[0].mxu0
        %3496 = vmatprep.mubr.f32.mxu0 0.0
        %3497 = vmatmul.mubr.f32.gmra.mrb[0].mxu0 %v3295
        %v3498 = vpop.f32.mrb[0].mxu0
        %v3499 = vadd.f32 0.0, %v3498
        %v3500 = vpop.f32.mrb[0].mxu0
        %3501 = vmatprep.mubr.f32.mxu0 0.0
        %3502 = vmatmul.mubr.f32.gmra.mrb[0].mxu0 %v3296
        %v3503 = vpop.f32.mrb[0].mxu0
        %v3504 = vadd.f32 0.0, %v3503
        %v3505 = vpop.f32.mrb[0].mxu0
        %3506 = vmatprep.mubr.f32.mxu0 0.0
        %3507 = vmatmul.mubr.f32.gmra.mrb[0].mxu0 %v3297
        %v3508 = vpop.f32.mrb[0].mxu0
        %v3509 = vadd.f32 0.0, %v3508
        %v3510 = vpop.f32.mrb[0].mxu0
        %3511 = vmatprep.mubr.f32.mxu0 0.0
        %3512 = vmatmul.mubr.f32.gmra.mrb[0].mxu0 %v3298
        %v3513 = vpop.f32.mrb[0].mxu0
        %v3514 = vadd.f32 0.0, %v3513
        %v3515 = vpop.f32.mrb[0].mxu0
        %3516 = vmatprep.mubr.f32.mxu0 0.0
        %3517 = vmatmul.mubr.f32.gmra.mrb[0].mxu0 %v3299
        %v3518 = vpop.f32.mrb[0].mxu0
        %v3519 = vadd.f32 0.0, %v3518
        %v3520 = vpop.f32.mrb[0].mxu0
        %3521 = vmatprep.mubr.f32.mxu0 0.0
        %3522 = vmatmul.mubr.f32.gmra.mrb[0].mxu0 %v3300
        %v3523 = vpop.f32.mrb[0].mxu0
        %v3524 = vadd.f32 0.0, %v3523
        %v3525 = vpop.f32.mrb[0].mxu0
        %3526 = vmatprep.mubr.f32.mxu0 0.0
        %3527 = vmatmul.mubr.f32.gmra.mrb[0].mxu0 %v3301
        %v3528 = vpop.f32.mrb[0].mxu0
        %v3529 = vadd.f32 0.0, %v3528
        %v3530 = vpop.f32.mrb[0].mxu0
        %3531 = vmatprep.mubr.f32.mxu0 0.0
        %3532 = vmatmul.mubr.f32.gmra.mrb[0].mxu0 %v3302
        %v3533 = vpop.f32.mrb[0].mxu0
        %v3534 = vadd.f32 0.0, %v3533
        %v3535 = vpop.f32.mrb[0].mxu0
        %3536 = vmatprep.mubr.f32.mxu0 0.0
        %3537 = vmatmul.mubr.f32.gmra.mrb[0].mxu0 %v3303
        %v3538 = vpop.f32.mrb[0].mxu0
        %v3539 = vadd.f32 0.0, %v3538
        %v3540 = vpop.f32.mrb[0].mxu0
        %3541 = vmatprep.mubr.f32.mxu0 0.0
        %3542 = vmatmul.mubr.f32.gmra.mrb[0].mxu0 %v3304
        %v3543 = vpop.f32.mrb[0].mxu0
        %v3544 = vadd.f32 0.0, %v3543
        %v3545 = vpop.f32.mrb[0].mxu0
        %3546 = vdwg.mxu0
        %v3547 = vld [vmem:[#allocation3] sm:$0xff]
        %v3548 = vld [vmem:[#allocation3 + $0x8] sm:$0xff]
        %v3549 = vld [vmem:[#allocation3 + $0x10] sm:$0xff]
        %v3550 = vld [vmem:[#allocation3 + $0x18] sm:$0xff]
        %v3551 = vld [vmem:[#allocation3 + $0x20] sm:$0xff]
        %v3552 = vld [vmem:[#allocation3 + $0x28] sm:$0xff]
        %v3553 = vld [vmem:[#allocation3 + $0x30] sm:$0xff]
        %v3554 = vld [vmem:[#allocation3 + $0x38] sm:$0xff]
        %v3555 = vld [vmem:[#allocation3 + $0x40] sm:$0xff]
        %v3556 = vld [vmem:[#allocation3 + $0x48] sm:$0xff]
        %v3557 = vld [vmem:[#allocation3 + $0x50] sm:$0xff]
        %v3558 = vld [vmem:[#allocation3 + $0x58] sm:$0xff]
        %v3559 = vld [vmem:[#allocation3 + $0x60] sm:$0xff]
        %v3560 = vld [vmem:[#allocation3 + $0x68] sm:$0xff]
        %v3561 = vld [vmem:[#allocation3 + $0x70] sm:$0xff]
        %v3562 = vld [vmem:[#allocation3 + $0x78] sm:$0xff]
        %v3563 = vld [vmem:[#allocation3 + $0x80] sm:$0xff]
        %v3564 = vld [vmem:[#allocation3 + $0x88] sm:$0xff]
        %v3565 = vld [vmem:[#allocation3 + $0x90] sm:$0xff]
        %v3566 = vld [vmem:[#allocation3 + $0x98] sm:$0xff]
        %v3567 = vld [vmem:[#allocation3 + $0xa0] sm:$0xff]
        %v3568 = vld [vmem:[#allocation3 + $0xa8] sm:$0xff]
        %v3569 = vld [vmem:[#allocation3 + $0xb0] sm:$0xff]
        %v3570 = vld [vmem:[#allocation3 + $0xb8] sm:$0xff]
        %v3571 = vld [vmem:[#allocation3 + $0xc0] sm:$0xff]
        %v3572 = vld [vmem:[#allocation3 + $0xc8] sm:$0xff]
        %v3573 = vld [vmem:[#allocation3 + $0xd0] sm:$0xff]
        %v3574 = vld [vmem:[#allocation3 + $0xd8] sm:$0xff]
        %v3575 = vld [vmem:[#allocation3 + $0xe0] sm:$0xff]
        %v3576 = vld [vmem:[#allocation3 + $0xe8] sm:$0xff]
        %v3577 = vld [vmem:[#allocation3 + $0xf0] sm:$0xff]
        %v3578 = vld [vmem:[#allocation3 + $0xf8] sm:$0xff]
        %v3579 = vadd.f32 %v3547, %v3389
        %v3580 = vadd.f32 %v3548, %v3394
        %v3581 = vadd.f32 %v3549, %v3399
        %v3582 = vadd.f32 %v3550, %v3404
        %v3583 = vadd.f32 %v3551, %v3409
        %v3584 = vadd.f32 %v3552, %v3414
        %v3585 = vadd.f32 %v3553, %v3419
        %v3586 = vadd.f32 %v3554, %v3424
        %v3587 = vadd.f32 %v3555, %v3429
        %v3588 = vadd.f32 %v3556, %v3434
        %v3589 = vadd.f32 %v3557, %v3439
        %v3590 = vadd.f32 %v3558, %v3444
        %v3591 = vadd.f32 %v3559, %v3449
        %v3592 = vadd.f32 %v3560, %v3454
        %v3593 = vadd.f32 %v3561, %v3459
        %v3594 = vadd.f32 %v3562, %v3464
        %v3595 = vadd.f32 %v3563, %v3469
        %v3596 = vadd.f32 %v3564, %v3474
        %v3597 = vadd.f32 %v3565, %v3479
        %v3598 = vadd.f32 %v3566, %v3484
        %v3599 = vadd.f32 %v3567, %v3489
        %v3600 = vadd.f32 %v3568, %v3494
        %v3601 = vadd.f32 %v3569, %v3499
        %v3602 = vadd.f32 %v3570, %v3504
        %v3603 = vadd.f32 %v3571, %v3509
        %v3604 = vadd.f32 %v3572, %v3514
        %v3605 = vadd.f32 %v3573, %v3519
        %v3606 = vadd.f32 %v3574, %v3524
        %v3607 = vadd.f32 %v3575, %v3529
        %v3608 = vadd.f32 %v3576, %v3534
        %v3609 = vadd.f32 %v3577, %v3539
        %v3610 = vadd.f32 %v3578, %v3544
        %3611 = vst [vmem:[#allocation3] sm:$0xff] %v3579
        %3612 = vst [vmem:[#allocation3 + $0x8] sm:$0xff] %v3580
        %3613 = vst [vmem:[#allocation3 + $0x10] sm:$0xff] %v3581
        %3614 = vst [vmem:[#allocation3 + $0x18] sm:$0xff] %v3582
        %3615 = vst [vmem:[#allocation3 + $0x20] sm:$0xff] %v3583
        %3616 = vst [vmem:[#allocation3 + $0x28] sm:$0xff] %v3584
        %3617 = vst [vmem:[#allocation3 + $0x30] sm:$0xff] %v3585
        %3618 = vst [vmem:[#allocation3 + $0x38] sm:$0xff] %v3586
        %3619 = vst [vmem:[#allocation3 + $0x40] sm:$0xff] %v3587
        %3620 = vst [vmem:[#allocation3 + $0x48] sm:$0xff] %v3588
        %3621 = vst [vmem:[#allocation3 + $0x50] sm:$0xff] %v3589
        %3622 = vst [vmem:[#allocation3 + $0x58] sm:$0xff] %v3590
        %3623 = vst [vmem:[#allocation3 + $0x60] sm:$0xff] %v3591
        %3624 = vst [vmem:[#allocation3 + $0x68] sm:$0xff] %v3592
        %3625 = vst [vmem:[#allocation3 + $0x70] sm:$0xff] %v3593
        %3626 = vst [vmem:[#allocation3 + $0x78] sm:$0xff] %v3594
        %3627 = vst [vmem:[#allocation3 + $0x80] sm:$0xff] %v3595
        %3628 = vst [vmem:[#allocation3 + $0x88] sm:$0xff] %v3596
        %3629 = vst [vmem:[#allocation3 + $0x90] sm:$0xff] %v3597
        %3630 = vst [vmem:[#allocation3 + $0x98] sm:$0xff] %v3598
        %3631 = vst [vmem:[#allocation3 + $0xa0] sm:$0xff] %v3599
        %3632 = vst [vmem:[#allocation3 + $0xa8] sm:$0xff] %v3600
        %3633 = vst [vmem:[#allocation3 + $0xb0] sm:$0xff] %v3601
        %3634 = vst [vmem:[#allocation3 + $0xb8] sm:$0xff] %v3602
        %3635 = vst [vmem:[#allocation3 + $0xc0] sm:$0xff] %v3603
        %3636 = vst [vmem:[#allocation3 + $0xc8] sm:$0xff] %v3604
        %3637 = vst [vmem:[#allocation3 + $0xd0] sm:$0xff] %v3605
        %3638 = vst [vmem:[#allocation3 + $0xd8] sm:$0xff] %v3606
        %3639 = vst [vmem:[#allocation3 + $0xe0] sm:$0xff] %v3607
        %3640 = vst [vmem:[#allocation3 + $0xe8] sm:$0xff] %v3608
        %3641 = vst [vmem:[#allocation3 + $0xf0] sm:$0xff] %v3609
        %3642 = vst [vmem:[#allocation3 + $0xf8] sm:$0xff] %v3610
        %v3643 = vld [vmem:[#allocation3] sm:$0xff]
        %v3644 = vld [vmem:[#allocation3 + $0x8] sm:$0xff]
        %v3645 = vld [vmem:[#allocation3 + $0x10] sm:$0xff]
        %v3646 = vld [vmem:[#allocation3 + $0x18] sm:$0xff]
        %v3647 = vld [vmem:[#allocation3 + $0x20] sm:$0xff]
        %v3648 = vld [vmem:[#allocation3 + $0x28] sm:$0xff]
        %v3649 = vld [vmem:[#allocation3 + $0x30] sm:$0xff]
        %v3650 = vld [vmem:[#allocation3 + $0x38] sm:$0xff]
        %v3651 = vld [vmem:[#allocation3 + $0x40] sm:$0xff]
        %v3652 = vld [vmem:[#allocation3 + $0x48] sm:$0xff]
        %v3653 = vld [vmem:[#allocation3 + $0x50] sm:$0xff]
        %v3654 = vld [vmem:[#allocation3 + $0x58] sm:$0xff]
        %v3655 = vld [vmem:[#allocation3 + $0x60] sm:$0xff]
        %v3656 = vld [vmem:[#allocation3 + $0x68] sm:$0xff]
        %v3657 = vld [vmem:[#allocation3 + $0x70] sm:$0xff]
        %v3658 = vld [vmem:[#allocation3 + $0x78] sm:$0xff]
        %v3659 = vld [vmem:[#allocation3 + $0x80] sm:$0xff]
        %v3660 = vld [vmem:[#allocation3 + $0x88] sm:$0xff]
        %v3661 = vld [vmem:[#allocation3 + $0x90] sm:$0xff]
        %v3662 = vld [vmem:[#allocation3 + $0x98] sm:$0xff]
        %v3663 = vld [vmem:[#allocation3 + $0xa0] sm:$0xff]
        %v3664 = vld [vmem:[#allocation3 + $0xa8] sm:$0xff]
        %v3665 = vld [vmem:[#allocation3 + $0xb0] sm:$0xff]
        %v3666 = vld [vmem:[#allocation3 + $0xb8] sm:$0xff]
        %v3667 = vld [vmem:[#allocation3 + $0xc0] sm:$0xff]
        %v3668 = vld [vmem:[#allocation3 + $0xc8] sm:$0xff]
        %v3669 = vld [vmem:[#allocation3 + $0xd0] sm:$0xff]
        %v3670 = vld [vmem:[#allocation3 + $0xd8] sm:$0xff]
        %v3671 = vld [vmem:[#allocation3 + $0xe0] sm:$0xff]
        %v3672 = vld [vmem:[#allocation3 + $0xe8] sm:$0xff]
        %v3673 = vld [vmem:[#allocation3 + $0xf0] sm:$0xff]
        %v3674 = vld [vmem:[#allocation3 + $0xf8] sm:$0xff]
        %v3675 = vld [vmem:[#allocation9] sm:$0x1]
        %v3677 = vlaneseq
        %v3678 = vshrl.u32 %v3677, 7
        %v3679 = vsub.s32 0, %v3678
        %v3680 = vrot.slane %v3675, %v3679
        %v3682 = vmul.f32 %v3643, %v3680
        %v3683 = vmul.f32 %v3644, %v3680
        %v3684 = vmul.f32 %v3645, %v3680
        %v3685 = vmul.f32 %v3646, %v3680
        %v3686 = vmul.f32 %v3647, %v3680
        %v3687 = vmul.f32 %v3648, %v3680
        %v3688 = vmul.f32 %v3649, %v3680
        %v3689 = vmul.f32 %v3650, %v3680
        %v3690 = vmul.f32 %v3651, %v3680
        %v3691 = vmul.f32 %v3652, %v3680
        %v3692 = vmul.f32 %v3653, %v3680
        %v3693 = vmul.f32 %v3654, %v3680
        %v3694 = vmul.f32 %v3655, %v3680
        %v3695 = vmul.f32 %v3656, %v3680
        %v3696 = vmul.f32 %v3657, %v3680
        %v3697 = vmul.f32 %v3658, %v3680
        %v3698 = vmul.f32 %v3659, %v3680
        %v3699 = vmul.f32 %v3660, %v3680
        %v3700 = vmul.f32 %v3661, %v3680
        %v3701 = vmul.f32 %v3662, %v3680
        %v3702 = vmul.f32 %v3663, %v3680
        %v3703 = vmul.f32 %v3664, %v3680
        %v3704 = vmul.f32 %v3665, %v3680
        %v3705 = vmul.f32 %v3666, %v3680
        %v3706 = vmul.f32 %v3667, %v3680
        %v3707 = vmul.f32 %v3668, %v3680
        %v3708 = vmul.f32 %v3669, %v3680
        %v3709 = vmul.f32 %v3670, %v3680
        %v3710 = vmul.f32 %v3671, %v3680
        %v3711 = vmul.f32 %v3672, %v3680
        %v3712 = vmul.f32 %v3673, %v3680
        %v3713 = vmul.f32 %v3674, %v3680
        %v3714 = vld [vmem:[#allocation10] sm:$0x1]
        %v3716 = vlaneseq
        %v3717 = vshrl.u32 %v3716, 7
        %v3718 = vsub.s32 0, %v3717
        %v3719 = vrot.slane %v3714, %v3718
        %v3721 = vadd.f32 %v3682, %v3719
        %v3722 = vadd.f32 %v3683, %v3719
        %v3723 = vadd.f32 %v3684, %v3719
        %v3724 = vadd.f32 %v3685, %v3719
        %v3725 = vadd.f32 %v3686, %v3719
        %v3726 = vadd.f32 %v3687, %v3719
        %v3727 = vadd.f32 %v3688, %v3719
        %v3728 = vadd.f32 %v3689, %v3719
        %v3729 = vadd.f32 %v3690, %v3719
        %v3730 = vadd.f32 %v3691, %v3719
        %v3731 = vadd.f32 %v3692, %v3719
        %v3732 = vadd.f32 %v3693, %v3719
        %v3733 = vadd.f32 %v3694, %v3719
        %v3734 = vadd.f32 %v3695, %v3719
        %v3735 = vadd.f32 %v3696, %v3719
        %v3736 = vadd.f32 %v3697, %v3719
        %v3737 = vadd.f32 %v3698, %v3719
        %v3738 = vadd.f32 %v3699, %v3719
        %v3739 = vadd.f32 %v3700, %v3719
        %v3740 = vadd.f32 %v3701, %v3719
        %v3741 = vadd.f32 %v3702, %v3719
        %v3742 = vadd.f32 %v3703, %v3719
        %v3743 = vadd.f32 %v3704, %v3719
        %v3744 = vadd.f32 %v3705, %v3719
        %v3745 = vadd.f32 %v3706, %v3719
        %v3746 = vadd.f32 %v3707, %v3719
        %v3747 = vadd.f32 %v3708, %v3719
        %v3748 = vadd.f32 %v3709, %v3719
        %v3749 = vadd.f32 %v3710, %v3719
        %v3750 = vadd.f32 %v3711, %v3719
        %v3751 = vadd.f32 %v3712, %v3719
        %v3752 = vadd.f32 %v3713, %v3719
        %v3753 = vmax.f32 %v3721, 0.0
        %v3754 = vmax.f32 %v3722, 0.0
        %v3755 = vmax.f32 %v3723, 0.0
        %v3756 = vmax.f32 %v3724, 0.0
        %v3757 = vmax.f32 %v3725, 0.0
        %v3758 = vmax.f32 %v3726, 0.0
        %v3759 = vmax.f32 %v3727, 0.0
        %v3760 = vmax.f32 %v3728, 0.0
        %v3761 = vmax.f32 %v3729, 0.0
        %v3762 = vmax.f32 %v3730, 0.0
        %v3763 = vmax.f32 %v3731, 0.0
        %v3764 = vmax.f32 %v3732, 0.0
        %v3765 = vmax.f32 %v3733, 0.0
        %v3766 = vmax.f32 %v3734, 0.0
        %v3767 = vmax.f32 %v3735, 0.0
        %v3768 = vmax.f32 %v3736, 0.0
        %v3769 = vmax.f32 %v3737, 0.0
        %v3770 = vmax.f32 %v3738, 0.0
        %v3771 = vmax.f32 %v3739, 0.0
        %v3772 = vmax.f32 %v3740, 0.0
        %v3773 = vmax.f32 %v3741, 0.0
        %v3774 = vmax.f32 %v3742, 0.0
        %v3775 = vmax.f32 %v3743, 0.0
        %v3776 = vmax.f32 %v3744, 0.0
        %v3777 = vmax.f32 %v3745, 0.0
        %v3778 = vmax.f32 %v3746, 0.0
        %v3779 = vmax.f32 %v3747, 0.0
        %v3780 = vmax.f32 %v3748, 0.0
        %v3781 = vmax.f32 %v3749, 0.0
        %v3782 = vmax.f32 %v3750, 0.0
        %v3783 = vmax.f32 %v3751, 0.0
        %v3784 = vmax.f32 %v3752, 0.0
        %3785 = vst [vmem:[#allocation2] sm:$0xff] 0.0
        %3786 = vst [vmem:[#allocation2 + $0x8] sm:$0xff] 0.0
        %3787 = vst [vmem:[#allocation2 + $0x10] sm:$0xff] 0.0
        %3788 = vst [vmem:[#allocation2 + $0x18] sm:$0xff] 0.0
        %3789 = vst [vmem:[#allocation2 + $0x20] sm:$0xff] 0.0
        %3790 = vst [vmem:[#allocation2 + $0x28] sm:$0xff] 0.0
        %3791 = vst [vmem:[#allocation2 + $0x30] sm:$0xff] 0.0
        %3792 = vst [vmem:[#allocation2 + $0x38] sm:$0xff] 0.0
        %3793 = vst [vmem:[#allocation2 + $0x40] sm:$0xff] 0.0
        %3794 = vst [vmem:[#allocation2 + $0x48] sm:$0xff] 0.0
        %3795 = vst [vmem:[#allocation2 + $0x50] sm:$0xff] 0.0
        %3796 = vst [vmem:[#allocation2 + $0x58] sm:$0xff] 0.0
        %3797 = vst [vmem:[#allocation2 + $0x60] sm:$0xff] 0.0
        %3798 = vst [vmem:[#allocation2 + $0x68] sm:$0xff] 0.0
        %3799 = vst [vmem:[#allocation2 + $0x70] sm:$0xff] 0.0
        %3800 = vst [vmem:[#allocation2 + $0x78] sm:$0xff] 0.0
        %3801 = vst [vmem:[#allocation2 + $0x80] sm:$0xff] 0.0
        %3802 = vst [vmem:[#allocation2 + $0x88] sm:$0xff] 0.0
        %3803 = vst [vmem:[#allocation2 + $0x90] sm:$0xff] 0.0
        %3804 = vst [vmem:[#allocation2 + $0x98] sm:$0xff] 0.0
        %3805 = vst [vmem:[#allocation2 + $0xa0] sm:$0xff] 0.0
        %3806 = vst [vmem:[#allocation2 + $0xa8] sm:$0xff] 0.0
        %3807 = vst [vmem:[#allocation2 + $0xb0] sm:$0xff] 0.0
        %3808 = vst [vmem:[#allocation2 + $0xb8] sm:$0xff] 0.0
        %3809 = vst [vmem:[#allocation2 + $0xc0] sm:$0xff] 0.0
        %3810 = vst [vmem:[#allocation2 + $0xc8] sm:$0xff] 0.0
        %3811 = vst [vmem:[#allocation2 + $0xd0] sm:$0xff] 0.0
        %3812 = vst [vmem:[#allocation2 + $0xd8] sm:$0xff] 0.0
        %3813 = vst [vmem:[#allocation2 + $0xe0] sm:$0xff] 0.0
        %3814 = vst [vmem:[#allocation2 + $0xe8] sm:$0xff] 0.0
        %3815 = vst [vmem:[#allocation2 + $0xf0] sm:$0xff] 0.0
        %3816 = vst [vmem:[#allocation2 + $0xf8] sm:$0xff] 0.0
        %3817 = vst [vmem:[#allocation2 + $0x100] sm:$0xff] 0.0
        %3818 = vst [vmem:[#allocation2 + $0x108] sm:$0xff] 0.0
        %3819 = vst [vmem:[#allocation2 + $0x110] sm:$0xff] 0.0
        %3820 = vst [vmem:[#allocation2 + $0x118] sm:$0xff] 0.0
        %3821 = vst [vmem:[#allocation2 + $0x120] sm:$0xff] 0.0
        %3822 = vst [vmem:[#allocation2 + $0x128] sm:$0xff] 0.0
        %3823 = vst [vmem:[#allocation2 + $0x130] sm:$0xff] 0.0
        %3824 = vst [vmem:[#allocation2 + $0x138] sm:$0xff] 0.0
        %3825 = vst [vmem:[#allocation2 + $0x140] sm:$0xff] 0.0
        %3826 = vst [vmem:[#allocation2 + $0x148] sm:$0xff] 0.0
        %3827 = vst [vmem:[#allocation2 + $0x150] sm:$0xff] 0.0
        %3828 = vst [vmem:[#allocation2 + $0x158] sm:$0xff] 0.0
        %3829 = vst [vmem:[#allocation2 + $0x160] sm:$0xff] 0.0
        %3830 = vst [vmem:[#allocation2 + $0x168] sm:$0xff] 0.0
        %3831 = vst [vmem:[#allocation2 + $0x170] sm:$0xff] 0.0
        %3832 = vst [vmem:[#allocation2 + $0x178] sm:$0xff] 0.0
        %3833 = vst [vmem:[#allocation2 + $0x180] sm:$0xff] 0.0
        %3834 = vst [vmem:[#allocation2 + $0x188] sm:$0xff] 0.0
        %3835 = vst [vmem:[#allocation2 + $0x190] sm:$0xff] 0.0
        %3836 = vst [vmem:[#allocation2 + $0x198] sm:$0xff] 0.0
        %3837 = vst [vmem:[#allocation2 + $0x1a0] sm:$0xff] 0.0
        %3838 = vst [vmem:[#allocation2 + $0x1a8] sm:$0xff] 0.0
        %3839 = vst [vmem:[#allocation2 + $0x1b0] sm:$0xff] 0.0
        %3840 = vst [vmem:[#allocation2 + $0x1b8] sm:$0xff] 0.0
        %3841 = vst [vmem:[#allocation2 + $0x1c0] sm:$0xff] 0.0
        %3842 = vst [vmem:[#allocation2 + $0x1c8] sm:$0xff] 0.0
        %3843 = vst [vmem:[#allocation2 + $0x1d0] sm:$0xff] 0.0
        %3844 = vst [vmem:[#allocation2 + $0x1d8] sm:$0xff] 0.0
        %3845 = vst [vmem:[#allocation2 + $0x1e0] sm:$0xff] 0.0
        %3846 = vst [vmem:[#allocation2 + $0x1e8] sm:$0xff] 0.0
        %3847 = vst [vmem:[#allocation2 + $0x1f0] sm:$0xff] 0.0
        %3848 = vst [vmem:[#allocation2 + $0x1f8] sm:$0xff] 0.0
        %3849 = vst [vmem:[#allocation2 + $0x200] sm:$0xff] 0.0
        %3850 = vst [vmem:[#allocation2 + $0x208] sm:$0xff] 0.0
        %3851 = vst [vmem:[#allocation2 + $0x210] sm:$0xff] 0.0
        %3852 = vst [vmem:[#allocation2 + $0x218] sm:$0xff] 0.0
        %3853 = vst [vmem:[#allocation2 + $0x220] sm:$0xff] 0.0
        %3854 = vst [vmem:[#allocation2 + $0x228] sm:$0xff] 0.0
        %3855 = vst [vmem:[#allocation2 + $0x230] sm:$0xff] 0.0
        %3856 = vst [vmem:[#allocation2 + $0x238] sm:$0xff] 0.0
        %s3857 = scalar_lea.vmem [#allocation2], 32
        %3858 = vst [vmem:[%s3857 + $0x8] sm:$0xff] %v3753
        %3859 = vst [vmem:[%s3857 + $0x10] sm:$0xff] %v3754
        %3860 = vst [vmem:[%s3857 + $0x28] sm:$0xff] %v3755
        %3861 = vst [vmem:[%s3857 + $0x30] sm:$0xff] %v3756
        %3862 = vst [vmem:[%s3857 + $0x48] sm:$0xff] %v3757
        %3863 = vst [vmem:[%s3857 + $0x50] sm:$0xff] %v3758
        %3864 = vst [vmem:[%s3857 + $0x68] sm:$0xff] %v3759
        %3865 = vst [vmem:[%s3857 + $0x70] sm:$0xff] %v3760
        %3866 = vst [vmem:[%s3857 + $0x88] sm:$0xff] %v3761
        %3867 = vst [vmem:[%s3857 + $0x90] sm:$0xff] %v3762
        %3868 = vst [vmem:[%s3857 + $0xa8] sm:$0xff] %v3763
        %3869 = vst [vmem:[%s3857 + $0xb0] sm:$0xff] %v3764
        %3870 = vst [vmem:[%s3857 + $0xc8] sm:$0xff] %v3765
        %3871 = vst [vmem:[%s3857 + $0xd0] sm:$0xff] %v3766
        %3872 = vst [vmem:[%s3857 + $0xe8] sm:$0xff] %v3767
        %3873 = vst [vmem:[%s3857 + $0xf0] sm:$0xff] %v3768
        %3874 = vst [vmem:[%s3857 + $0x108] sm:$0xff] %v3769
        %3875 = vst [vmem:[%s3857 + $0x110] sm:$0xff] %v3770
        %3876 = vst [vmem:[%s3857 + $0x128] sm:$0xff] %v3771
        %3877 = vst [vmem:[%s3857 + $0x130] sm:$0xff] %v3772
        %3878 = vst [vmem:[%s3857 + $0x148] sm:$0xff] %v3773
        %3879 = vst [vmem:[%s3857 + $0x150] sm:$0xff] %v3774
        %3880 = vst [vmem:[%s3857 + $0x168] sm:$0xff] %v3775
        %3881 = vst [vmem:[%s3857 + $0x170] sm:$0xff] %v3776
        %3882 = vst [vmem:[%s3857 + $0x188] sm:$0xff] %v3777
        %3883 = vst [vmem:[%s3857 + $0x190] sm:$0xff] %v3778
        %3884 = vst [vmem:[%s3857 + $0x1a8] sm:$0xff] %v3779
        %3885 = vst [vmem:[%s3857 + $0x1b0] sm:$0xff] %v3780
        %3886 = vst [vmem:[%s3857 + $0x1c8] sm:$0xff] %v3781
        %3887 = vst [vmem:[%s3857 + $0x1d0] sm:$0xff] %v3782
        %3888 = vst [vmem:[%s3857 + $0x1e8] sm:$0xff] %v3783
        %3889 = vst [vmem:[%s3857 + $0x1f0] sm:$0xff] %v3784
        %v3890 = vld [vmem:[#allocation2 + $0x7] sm:$0xff]
        %v3891 = vld [vmem:[#allocation2 + $0xf] sm:$0xff]
        %v3892 = vld [vmem:[#allocation2 + $0x27] sm:$0xff]
        %v3893 = vld [vmem:[#allocation2 + $0x2f] sm:$0xff]
        %v3894 = vld [vmem:[#allocation2 + $0x47] sm:$0xff]
        %v3895 = vld [vmem:[#allocation2 + $0x4f] sm:$0xff]
        %v3896 = vld [vmem:[#allocation2 + $0x67] sm:$0xff]
        %v3897 = vld [vmem:[#allocation2 + $0x6f] sm:$0xff]
        %v3898 = vld [vmem:[#allocation2 + $0x87] sm:$0xff]
        %v3899 = vld [vmem:[#allocation2 + $0x8f] sm:$0xff]
        %v3900 = vld [vmem:[#allocation2 + $0xa7] sm:$0xff]
        %v3901 = vld [vmem:[#allocation2 + $0xaf] sm:$0xff]
        %v3902 = vld [vmem:[#allocation2 + $0xc7] sm:$0xff]
        %v3903 = vld [vmem:[#allocation2 + $0xcf] sm:$0xff]
        %v3904 = vld [vmem:[#allocation2 + $0xe7] sm:$0xff]
        %v3905 = vld [vmem:[#allocation2 + $0xef] sm:$0xff]
        %v3906 = vld [vmem:[#allocation2 + $0x107] sm:$0xff]
        %v3907 = vld [vmem:[#allocation2 + $0x10f] sm:$0xff]
        %v3908 = vld [vmem:[#allocation2 + $0x127] sm:$0xff]
        %v3909 = vld [vmem:[#allocation2 + $0x12f] sm:$0xff]
        %v3910 = vld [vmem:[#allocation2 + $0x147] sm:$0xff]
        %v3911 = vld [vmem:[#allocation2 + $0x14f] sm:$0xff]
        %v3912 = vld [vmem:[#allocation2 + $0x167] sm:$0xff]
        %v3913 = vld [vmem:[#allocation2 + $0x16f] sm:$0xff]
        %v3914 = vld [vmem:[#allocation2 + $0x187] sm:$0xff]
        %v3915 = vld [vmem:[#allocation2 + $0x18f] sm:$0xff]
        %v3916 = vld [vmem:[#allocation2 + $0x1a7] sm:$0xff]
        %v3917 = vld [vmem:[#allocation2 + $0x1af] sm:$0xff]
        %v3918 = vld [vmem:[#allocation2 + $0x1c7] sm:$0xff]
        %v3919 = vld [vmem:[#allocation2 + $0x1cf] sm:$0xff]
        %v3920 = vld [vmem:[#allocation2 + $0x1e7] sm:$0xff]
        %v3921 = vld [vmem:[#allocation2 + $0x1ef] sm:$0xff]
        %v3922 = vld [vmem:[#allocation12] sm:$0xff]
        %v3923 = vld [vmem:[#allocation12 + $0x8] sm:$0xff]
        %v3924 = vld [vmem:[#allocation12 + $0x10] sm:$0xff]
        %v3925 = vld [vmem:[#allocation12 + $0x18] sm:$0xff]
        %v3926 = vld [vmem:[#allocation12 + $0x20] sm:$0xff]
        %v3927 = vld [vmem:[#allocation12 + $0x28] sm:$0xff]
        %v3928 = vld [vmem:[#allocation12 + $0x30] sm:$0xff]
        %v3929 = vld [vmem:[#allocation12 + $0x38] sm:$0xff]
        %v3930 = vld [vmem:[#allocation12 + $0x40] sm:$0xff]
        %v3931 = vld [vmem:[#allocation12 + $0x48] sm:$0xff]
        %v3932 = vld [vmem:[#allocation12 + $0x50] sm:$0xff]
        %v3933 = vld [vmem:[#allocation12 + $0x58] sm:$0xff]
        %v3934 = vld [vmem:[#allocation12 + $0x60] sm:$0xff]
        %v3935 = vld [vmem:[#allocation12 + $0x68] sm:$0xff]
        %v3936 = vld [vmem:[#allocation12 + $0x70] sm:$0xff]
        %v3937 = vld [vmem:[#allocation12 + $0x78] sm:$0xff]
        %3938 = vmatprep.subr.mxu0 0.0
        %3939 = vmatpush1.msra.mxu0 %v3922
        %3940 = vmatprep.subr.mxu0 0.0
        %3941 = vmatpush1.msra.mxu0 %v3923
        %3942 = vmatprep.subr.mxu0 0.0
        %3943 = vmatpush1.msra.mxu0 %v3924
        %3944 = vmatprep.subr.mxu0 0.0
        %3945 = vmatpush1.msra.mxu0 %v3925
        %3946 = vmatprep.subr.mxu0 0.0
        %3947 = vmatpush1.msra.mxu0 %v3926
        %3948 = vmatprep.subr.mxu0 0.0
        %3949 = vmatpush1.msra.mxu0 %v3927
        %3950 = vmatprep.subr.mxu0 0.0
        %3951 = vmatpush1.msra.mxu0 %v3928
        %3952 = vmatprep.subr.mxu0 0.0
        %3953 = vmatpush1.msra.mxu0 %v3929
        %3954 = vmatprep.subr.mxu0 0.0
        %3955 = vmatpush1.msra.mxu0 %v3930
        %3956 = vmatprep.subr.mxu0 0.0
        %3957 = vmatpush1.msra.mxu0 %v3931
        %3958 = vmatprep.subr.mxu0 0.0
        %3959 = vmatpush1.msra.mxu0 %v3932
        %3960 = vmatprep.subr.mxu0 0.0
        %3961 = vmatpush1.msra.mxu0 %v3933
        %3962 = vmatprep.subr.mxu0 0.0
        %3963 = vmatpush1.msra.mxu0 %v3934
        %3964 = vmatprep.subr.mxu0 0.0
        %3965 = vmatpush1.msra.mxu0 %v3935
        %3966 = vmatprep.subr.mxu0 0.0
        %3967 = vmatpush1.msra.mxu0 %v3936
        %3968 = vmatprep.subr.mxu0 0.0
        %3969 = vmatpush1.msra.mxu0 %v3937
        %3970 = vmatprep.subr.mxu0 0.0
        %3971 = vmatpush1.msra.mxu0 0.0
        %3972 = vmatprep.subr.mxu0 0.0
        %3973 = vmatpush1.msra.mxu0 0.0
        %3974 = vmatprep.subr.mxu0 0.0
        %3975 = vmatpush1.msra.mxu0 0.0
        %3976 = vmatprep.subr.mxu0 0.0
        %3977 = vmatpush1.msra.mxu0 0.0
        %3978 = vmatprep.subr.mxu0 0.0
        %3979 = vmatpush1.msra.mxu0 0.0
        %3980 = vmatprep.subr.mxu0 0.0
        %3981 = vmatpush1.msra.mxu0 0.0
        %3982 = vmatprep.subr.mxu0 0.0
        %3983 = vmatpush1.msra.mxu0 0.0
        %3984 = vmatprep.subr.mxu0 0.0
        %3985 = vmatpush1.msra.mxu0 0.0
        %3986 = vmatprep.subr.mxu0 0.0
        %3987 = vmatpush1.msra.mxu0 0.0
        %3988 = vmatprep.subr.mxu0 0.0
        %3989 = vmatpush1.msra.mxu0 0.0
        %3990 = vmatprep.subr.mxu0 0.0
        %3991 = vmatpush1.msra.mxu0 0.0
        %3992 = vmatprep.subr.mxu0 0.0
        %3993 = vmatpush1.msra.mxu0 0.0
        %3994 = vmatprep.subr.mxu0 0.0
        %3995 = vmatpush1.msra.mxu0 0.0
        %3996 = vmatprep.subr.mxu0 0.0
        %3997 = vmatpush1.msra.mxu0 0.0
        %3998 = vmatprep.subr.mxu0 0.0
        %3999 = vmatpush1.msra.mxu0 0.0
        %4000 = vmatprep.subr.mxu0 0.0
        %4001 = vmatpush1.msra.mxu0 0.0
        %4002 = vmatprep.mubr.f32.mxu0 0.0
        %4003 = vmatmul.mubr.f32.gmra.mrb[0].mxu0 %v3890
        %v4004 = vpop.f32.mrb[0].mxu0
        %v4005 = vadd.f32 0.0, %v4004
        %v4006 = vpop.f32.mrb[0].mxu0
        %4007 = vmatprep.mubr.f32.mxu0 0.0
        %4008 = vmatmul.mubr.f32.gmra.mrb[0].mxu0 %v3891
        %v4009 = vpop.f32.mrb[0].mxu0
        %v4010 = vadd.f32 0.0, %v4009
        %v4011 = vpop.f32.mrb[0].mxu0
        %4012 = vmatprep.mubr.f32.mxu0 0.0
        %4013 = vmatmul.mubr.f32.gmra.mrb[0].mxu0 %v3892
        %v4014 = vpop.f32.mrb[0].mxu0
        %v4015 = vadd.f32 0.0, %v4014
        %v4016 = vpop.f32.mrb[0].mxu0
        %4017 = vmatprep.mubr.f32.mxu0 0.0
        %4018 = vmatmul.mubr.f32.gmra.mrb[0].mxu0 %v3893
        %v4019 = vpop.f32.mrb[0].mxu0
        %v4020 = vadd.f32 0.0, %v4019
        %v4021 = vpop.f32.mrb[0].mxu0
        %4022 = vmatprep.mubr.f32.mxu0 0.0
        %4023 = vmatmul.mubr.f32.gmra.mrb[0].mxu0 %v3894
        %v4024 = vpop.f32.mrb[0].mxu0
        %v4025 = vadd.f32 0.0, %v4024
        %v4026 = vpop.f32.mrb[0].mxu0
        %4027 = vmatprep.mubr.f32.mxu0 0.0
        %4028 = vmatmul.mubr.f32.gmra.mrb[0].mxu0 %v3895
        %v4029 = vpop.f32.mrb[0].mxu0
        %v4030 = vadd.f32 0.0, %v4029
        %v4031 = vpop.f32.mrb[0].mxu0
        %4032 = vmatprep.mubr.f32.mxu0 0.0
        %4033 = vmatmul.mubr.f32.gmra.mrb[0].mxu0 %v3896
        %v4034 = vpop.f32.mrb[0].mxu0
        %v4035 = vadd.f32 0.0, %v4034
        %v4036 = vpop.f32.mrb[0].mxu0
        %4037 = vmatprep.mubr.f32.mxu0 0.0
        %4038 = vmatmul.mubr.f32.gmra.mrb[0].mxu0 %v3897
        %v4039 = vpop.f32.mrb[0].mxu0
        %v4040 = vadd.f32 0.0, %v4039
        %v4041 = vpop.f32.mrb[0].mxu0
        %4042 = vmatprep.mubr.f32.mxu0 0.0
        %4043 = vmatmul.mubr.f32.gmra.mrb[0].mxu0 %v3898
        %v4044 = vpop.f32.mrb[0].mxu0
        %v4045 = vadd.f32 0.0, %v4044
        %v4046 = vpop.f32.mrb[0].mxu0
        %4047 = vmatprep.mubr.f32.mxu0 0.0
        %4048 = vmatmul.mubr.f32.gmra.mrb[0].mxu0 %v3899
        %v4049 = vpop.f32.mrb[0].mxu0
        %v4050 = vadd.f32 0.0, %v4049
        %v4051 = vpop.f32.mrb[0].mxu0
        %4052 = vmatprep.mubr.f32.mxu0 0.0
        %4053 = vmatmul.mubr.f32.gmra.mrb[0].mxu0 %v3900
        %v4054 = vpop.f32.mrb[0].mxu0
        %v4055 = vadd.f32 0.0, %v4054
        %v4056 = vpop.f32.mrb[0].mxu0
        %4057 = vmatprep.mubr.f32.mxu0 0.0
        %4058 = vmatmul.mubr.f32.gmra.mrb[0].mxu0 %v3901
        %v4059 = vpop.f32.mrb[0].mxu0
        %v4060 = vadd.f32 0.0, %v4059
        %v4061 = vpop.f32.mrb[0].mxu0
        %4062 = vmatprep.mubr.f32.mxu0 0.0
        %4063 = vmatmul.mubr.f32.gmra.mrb[0].mxu0 %v3902
        %v4064 = vpop.f32.mrb[0].mxu0
        %v4065 = vadd.f32 0.0, %v4064
        %v4066 = vpop.f32.mrb[0].mxu0
        %4067 = vmatprep.mubr.f32.mxu0 0.0
        %4068 = vmatmul.mubr.f32.gmra.mrb[0].mxu0 %v3903
        %v4069 = vpop.f32.mrb[0].mxu0
        %v4070 = vadd.f32 0.0, %v4069
        %v4071 = vpop.f32.mrb[0].mxu0
        %4072 = vmatprep.mubr.f32.mxu0 0.0
        %4073 = vmatmul.mubr.f32.gmra.mrb[0].mxu0 %v3904
        %v4074 = vpop.f32.mrb[0].mxu0
        %v4075 = vadd.f32 0.0, %v4074
        %v4076 = vpop.f32.mrb[0].mxu0
        %4077 = vmatprep.mubr.f32.mxu0 0.0
        %4078 = vmatmul.mubr.f32.gmra.mrb[0].mxu0 %v3905
        %v4079 = vpop.f32.mrb[0].mxu0
        %v4080 = vadd.f32 0.0, %v4079
        %v4081 = vpop.f32.mrb[0].mxu0
        %4082 = vmatprep.mubr.f32.mxu0 0.0
        %4083 = vmatmul.mubr.f32.gmra.mrb[0].mxu0 %v3906
        %v4084 = vpop.f32.mrb[0].mxu0
        %v4085 = vadd.f32 0.0, %v4084
        %v4086 = vpop.f32.mrb[0].mxu0
        %4087 = vmatprep.mubr.f32.mxu0 0.0
        %4088 = vmatmul.mubr.f32.gmra.mrb[0].mxu0 %v3907
        %v4089 = vpop.f32.mrb[0].mxu0
        %v4090 = vadd.f32 0.0, %v4089
        %v4091 = vpop.f32.mrb[0].mxu0
        %4092 = vmatprep.mubr.f32.mxu0 0.0
        %4093 = vmatmul.mubr.f32.gmra.mrb[0].mxu0 %v3908
        %v4094 = vpop.f32.mrb[0].mxu0
        %v4095 = vadd.f32 0.0, %v4094
        %v4096 = vpop.f32.mrb[0].mxu0
        %4097 = vmatprep.mubr.f32.mxu0 0.0
        %4098 = vmatmul.mubr.f32.gmra.mrb[0].mxu0 %v3909
        %v4099 = vpop.f32.mrb[0].mxu0
        %v4100 = vadd.f32 0.0, %v4099
        %v4101 = vpop.f32.mrb[0].mxu0
        %4102 = vmatprep.mubr.f32.mxu0 0.0
        %4103 = vmatmul.mubr.f32.gmra.mrb[0].mxu0 %v3910
        %v4104 = vpop.f32.mrb[0].mxu0
        %v4105 = vadd.f32 0.0, %v4104
        %v4106 = vpop.f32.mrb[0].mxu0
        %4107 = vmatprep.mubr.f32.mxu0 0.0
        %4108 = vmatmul.mubr.f32.gmra.mrb[0].mxu0 %v3911
        %v4109 = vpop.f32.mrb[0].mxu0
        %v4110 = vadd.f32 0.0, %v4109
        %v4111 = vpop.f32.mrb[0].mxu0
        %4112 = vmatprep.mubr.f32.mxu0 0.0
        %4113 = vmatmul.mubr.f32.gmra.mrb[0].mxu0 %v3912
        %v4114 = vpop.f32.mrb[0].mxu0
        %v4115 = vadd.f32 0.0, %v4114
        %v4116 = vpop.f32.mrb[0].mxu0
        %4117 = vmatprep.mubr.f32.mxu0 0.0
        %4118 = vmatmul.mubr.f32.gmra.mrb[0].mxu0 %v3913
        %v4119 = vpop.f32.mrb[0].mxu0
        %v4120 = vadd.f32 0.0, %v4119
        %v4121 = vpop.f32.mrb[0].mxu0
        %4122 = vmatprep.mubr.f32.mxu0 0.0
        %4123 = vmatmul.mubr.f32.gmra.mrb[0].mxu0 %v3914
        %v4124 = vpop.f32.mrb[0].mxu0
        %v4125 = vadd.f32 0.0, %v4124
        %v4126 = vpop.f32.mrb[0].mxu0
        %4127 = vmatprep.mubr.f32.mxu0 0.0
        %4128 = vmatmul.mubr.f32.gmra.mrb[0].mxu0 %v3915
        %v4129 = vpop.f32.mrb[0].mxu0
        %v4130 = vadd.f32 0.0, %v4129
        %v4131 = vpop.f32.mrb[0].mxu0
        %4132 = vmatprep.mubr.f32.mxu0 0.0
        %4133 = vmatmul.mubr.f32.gmra.mrb[0].mxu0 %v3916
        %v4134 = vpop.f32.mrb[0].mxu0
        %v4135 = vadd.f32 0.0, %v4134
        %v4136 = vpop.f32.mrb[0].mxu0
        %4137 = vmatprep.mubr.f32.mxu0 0.0
        %4138 = vmatmul.mubr.f32.gmra.mrb[0].mxu0 %v3917
        %v4139 = vpop.f32.mrb[0].mxu0
        %v4140 = vadd.f32 0.0, %v4139
        %v4141 = vpop.f32.mrb[0].mxu0
        %4142 = vmatprep.mubr.f32.mxu0 0.0
        %4143 = vmatmul.mubr.f32.gmra.mrb[0].mxu0 %v3918
        %v4144 = vpop.f32.mrb[0].mxu0
        %v4145 = vadd.f32 0.0, %v4144
        %v4146 = vpop.f32.mrb[0].mxu0
        %4147 = vmatprep.mubr.f32.mxu0 0.0
        %4148 = vmatmul.mubr.f32.gmra.mrb[0].mxu0 %v3919
        %v4149 = vpop.f32.mrb[0].mxu0
        %v4150 = vadd.f32 0.0, %v4149
        %v4151 = vpop.f32.mrb[0].mxu0
        %4152 = vmatprep.mubr.f32.mxu0 0.0
        %4153 = vmatmul.mubr.f32.gmra.mrb[0].mxu0 %v3920
        %v4154 = vpop.f32.mrb[0].mxu0
        %v4155 = vadd.f32 0.0, %v4154
        %v4156 = vpop.f32.mrb[0].mxu0
        %4157 = vmatprep.mubr.f32.mxu0 0.0
        %4158 = vmatmul.mubr.f32.gmra.mrb[0].mxu0 %v3921
        %v4159 = vpop.f32.mrb[0].mxu0
        %v4160 = vadd.f32 0.0, %v4159
        %v4161 = vpop.f32.mrb[0].mxu0
        %4162 = vdwg.mxu0
        %4163 = vst [vmem:[#allocation3] sm:$0xff] %v4005
        %4164 = vst [vmem:[#allocation3 + $0x8] sm:$0xff] %v4010
        %4165 = vst [vmem:[#allocation3 + $0x10] sm:$0xff] %v4015
        %4166 = vst [vmem:[#allocation3 + $0x18] sm:$0xff] %v4020
        %4167 = vst [vmem:[#allocation3 + $0x20] sm:$0xff] %v4025
        %4168 = vst [vmem:[#allocation3 + $0x28] sm:$0xff] %v4030
        %4169 = vst [vmem:[#allocation3 + $0x30] sm:$0xff] %v4035
        %4170 = vst [vmem:[#allocation3 + $0x38] sm:$0xff] %v4040
        %4171 = vst [vmem:[#allocation3 + $0x40] sm:$0xff] %v4045
        %4172 = vst [vmem:[#allocation3 + $0x48] sm:$0xff] %v4050
        %4173 = vst [vmem:[#allocation3 + $0x50] sm:$0xff] %v4055
        %4174 = vst [vmem:[#allocation3 + $0x58] sm:$0xff] %v4060
        %4175 = vst [vmem:[#allocation3 + $0x60] sm:$0xff] %v4065
        %4176 = vst [vmem:[#allocation3 + $0x68] sm:$0xff] %v4070
        %4177 = vst [vmem:[#allocation3 + $0x70] sm:$0xff] %v4075
        %4178 = vst [vmem:[#allocation3 + $0x78] sm:$0xff] %v4080
        %4179 = vst [vmem:[#allocation3 + $0x80] sm:$0xff] %v4085
        %4180 = vst [vmem:[#allocation3 + $0x88] sm:$0xff] %v4090
        %4181 = vst [vmem:[#allocation3 + $0x90] sm:$0xff] %v4095
        %4182 = vst [vmem:[#allocation3 + $0x98] sm:$0xff] %v4100
        %4183 = vst [vmem:[#allocation3 + $0xa0] sm:$0xff] %v4105
        %4184 = vst [vmem:[#allocation3 + $0xa8] sm:$0xff] %v4110
        %4185 = vst [vmem:[#allocation3 + $0xb0] sm:$0xff] %v4115
        %4186 = vst [vmem:[#allocation3 + $0xb8] sm:$0xff] %v4120
        %4187 = vst [vmem:[#allocation3 + $0xc0] sm:$0xff] %v4125
        %4188 = vst [vmem:[#allocation3 + $0xc8] sm:$0xff] %v4130
        %4189 = vst [vmem:[#allocation3 + $0xd0] sm:$0xff] %v4135
        %4190 = vst [vmem:[#allocation3 + $0xd8] sm:$0xff] %v4140
        %4191 = vst [vmem:[#allocation3 + $0xe0] sm:$0xff] %v4145
        %4192 = vst [vmem:[#allocation3 + $0xe8] sm:$0xff] %v4150
        %4193 = vst [vmem:[#allocation3 + $0xf0] sm:$0xff] %v4155
        %4194 = vst [vmem:[#allocation3 + $0xf8] sm:$0xff] %v4160
        %v4195 = vld [vmem:[#allocation2 + $0x8] sm:$0xff]
        %v4196 = vld [vmem:[#allocation2 + $0x10] sm:$0xff]
        %v4197 = vld [vmem:[#allocation2 + $0x28] sm:$0xff]
        %v4198 = vld [vmem:[#allocation2 + $0x30] sm:$0xff]
        %v4199 = vld [vmem:[#allocation2 + $0x48] sm:$0xff]
        %v4200 = vld [vmem:[#allocation2 + $0x50] sm:$0xff]
        %v4201 = vld [vmem:[#allocation2 + $0x68] sm:$0xff]
        %v4202 = vld [vmem:[#allocation2 + $0x70] sm:$0xff]
        %v4203 = vld [vmem:[#allocation2 + $0x88] sm:$0xff]
        %v4204 = vld [vmem:[#allocation2 + $0x90] sm:$0xff]
        %v4205 = vld [vmem:[#allocation2 + $0xa8] sm:$0xff]
        %v4206 = vld [vmem:[#allocation2 + $0xb0] sm:$0xff]
        %v4207 = vld [vmem:[#allocation2 + $0xc8] sm:$0xff]
        %v4208 = vld [vmem:[#allocation2 + $0xd0] sm:$0xff]
        %v4209 = vld [vmem:[#allocation2 + $0xe8] sm:$0xff]
        %v4210 = vld [vmem:[#allocation2 + $0xf0] sm:$0xff]
        %v4211 = vld [vmem:[#allocation2 + $0x108] sm:$0xff]
        %v4212 = vld [vmem:[#allocation2 + $0x110] sm:$0xff]
        %v4213 = vld [vmem:[#allocation2 + $0x128] sm:$0xff]
        %v4214 = vld [vmem:[#allocation2 + $0x130] sm:$0xff]
        %v4215 = vld [vmem:[#allocation2 + $0x148] sm:$0xff]
        %v4216 = vld [vmem:[#allocation2 + $0x150] sm:$0xff]
        %v4217 = vld [vmem:[#allocation2 + $0x168] sm:$0xff]
        %v4218 = vld [vmem:[#allocation2 + $0x170] sm:$0xff]
        %v4219 = vld [vmem:[#allocation2 + $0x188] sm:$0xff]
        %v4220 = vld [vmem:[#allocation2 + $0x190] sm:$0xff]
        %v4221 = vld [vmem:[#allocation2 + $0x1a8] sm:$0xff]
        %v4222 = vld [vmem:[#allocation2 + $0x1b0] sm:$0xff]
        %v4223 = vld [vmem:[#allocation2 + $0x1c8] sm:$0xff]
        %v4224 = vld [vmem:[#allocation2 + $0x1d0] sm:$0xff]
        %v4225 = vld [vmem:[#allocation2 + $0x1e8] sm:$0xff]
        %v4226 = vld [vmem:[#allocation2 + $0x1f0] sm:$0xff]
        %s4227 = scalar_lea.vmem [#allocation12], 128
        %v4228 = vld [vmem:[%s4227] sm:$0xff]
        %v4229 = vld [vmem:[%s4227 + $0x8] sm:$0xff]
        %v4230 = vld [vmem:[%s4227 + $0x10] sm:$0xff]
        %v4231 = vld [vmem:[%s4227 + $0x18] sm:$0xff]
        %v4232 = vld [vmem:[%s4227 + $0x20] sm:$0xff]
        %v4233 = vld [vmem:[%s4227 + $0x28] sm:$0xff]
        %v4234 = vld [vmem:[%s4227 + $0x30] sm:$0xff]
        %v4235 = vld [vmem:[%s4227 + $0x38] sm:$0xff]
        %v4236 = vld [vmem:[%s4227 + $0x40] sm:$0xff]
        %v4237 = vld [vmem:[%s4227 + $0x48] sm:$0xff]
        %v4238 = vld [vmem:[%s4227 + $0x50] sm:$0xff]
        %v4239 = vld [vmem:[%s4227 + $0x58] sm:$0xff]
        %v4240 = vld [vmem:[%s4227 + $0x60] sm:$0xff]
        %v4241 = vld [vmem:[%s4227 + $0x68] sm:$0xff]
        %v4242 = vld [vmem:[%s4227 + $0x70] sm:$0xff]
        %v4243 = vld [vmem:[%s4227 + $0x78] sm:$0xff]
        %4244 = vmatprep.subr.mxu0 0.0
        %4245 = vmatpush1.msra.mxu0 %v4228
        %4246 = vmatprep.subr.mxu0 0.0
        %4247 = vmatpush1.msra.mxu0 %v4229
        %4248 = vmatprep.subr.mxu0 0.0
        %4249 = vmatpush1.msra.mxu0 %v4230
        %4250 = vmatprep.subr.mxu0 0.0
        %4251 = vmatpush1.msra.mxu0 %v4231
        %4252 = vmatprep.subr.mxu0 0.0
        %4253 = vmatpush1.msra.mxu0 %v4232
        %4254 = vmatprep.subr.mxu0 0.0
        %4255 = vmatpush1.msra.mxu0 %v4233
        %4256 = vmatprep.subr.mxu0 0.0
        %4257 = vmatpush1.msra.mxu0 %v4234
        %4258 = vmatprep.subr.mxu0 0.0
        %4259 = vmatpush1.msra.mxu0 %v4235
        %4260 = vmatprep.subr.mxu0 0.0
        %4261 = vmatpush1.msra.mxu0 %v4236
        %4262 = vmatprep.subr.mxu0 0.0
        %4263 = vmatpush1.msra.mxu0 %v4237
        %4264 = vmatprep.subr.mxu0 0.0
        %4265 = vmatpush1.msra.mxu0 %v4238
        %4266 = vmatprep.subr.mxu0 0.0
        %4267 = vmatpush1.msra.mxu0 %v4239
        %4268 = vmatprep.subr.mxu0 0.0
        %4269 = vmatpush1.msra.mxu0 %v4240
        %4270 = vmatprep.subr.mxu0 0.0
        %4271 = vmatpush1.msra.mxu0 %v4241
        %4272 = vmatprep.subr.mxu0 0.0
        %4273 = vmatpush1.msra.mxu0 %v4242
        %4274 = vmatprep.subr.mxu0 0.0
        %4275 = vmatpush1.msra.mxu0 %v4243
        %4276 = vmatprep.subr.mxu0 0.0
        %4277 = vmatpush1.msra.mxu0 0.0
        %4278 = vmatprep.subr.mxu0 0.0
        %4279 = vmatpush1.msra.mxu0 0.0
        %4280 = vmatprep.subr.mxu0 0.0
        %4281 = vmatpush1.msra.mxu0 0.0
        %4282 = vmatprep.subr.mxu0 0.0
        %4283 = vmatpush1.msra.mxu0 0.0
        %4284 = vmatprep.subr.mxu0 0.0
        %4285 = vmatpush1.msra.mxu0 0.0
        %4286 = vmatprep.subr.mxu0 0.0
        %4287 = vmatpush1.msra.mxu0 0.0
        %4288 = vmatprep.subr.mxu0 0.0
        %4289 = vmatpush1.msra.mxu0 0.0
        %4290 = vmatprep.subr.mxu0 0.0
        %4291 = vmatpush1.msra.mxu0 0.0
        %4292 = vmatprep.subr.mxu0 0.0
        %4293 = vmatpush1.msra.mxu0 0.0
        %4294 = vmatprep.subr.mxu0 0.0
        %4295 = vmatpush1.msra.mxu0 0.0
        %4296 = vmatprep.subr.mxu0 0.0
        %4297 = vmatpush1.msra.mxu0 0.0
        %4298 = vmatprep.subr.mxu0 0.0
        %4299 = vmatpush1.msra.mxu0 0.0
        %4300 = vmatprep.subr.mxu0 0.0
        %4301 = vmatpush1.msra.mxu0 0.0
        %4302 = vmatprep.subr.mxu0 0.0
        %4303 = vmatpush1.msra.mxu0 0.0
        %4304 = vmatprep.subr.mxu0 0.0
        %4305 = vmatpush1.msra.mxu0 0.0
        %4306 = vmatprep.subr.mxu0 0.0
        %4307 = vmatpush1.msra.mxu0 0.0
        %4308 = vmatprep.mubr.f32.mxu0 0.0
        %4309 = vmatmul.mubr.f32.gmra.mrb[0].mxu0 %v4195
        %v4310 = vpop.f32.mrb[0].mxu0
        %v4311 = vadd.f32 0.0, %v4310
        %v4312 = vpop.f32.mrb[0].mxu0
        %4313 = vmatprep.mubr.f32.mxu0 0.0
        %4314 = vmatmul.mubr.f32.gmra.mrb[0].mxu0 %v4196
        %v4315 = vpop.f32.mrb[0].mxu0
        %v4316 = vadd.f32 0.0, %v4315
        %v4317 = vpop.f32.mrb[0].mxu0
        %4318 = vmatprep.mubr.f32.mxu0 0.0
        %4319 = vmatmul.mubr.f32.gmra.mrb[0].mxu0 %v4197
        %v4320 = vpop.f32.mrb[0].mxu0
        %v4321 = vadd.f32 0.0, %v4320
        %v4322 = vpop.f32.mrb[0].mxu0
        %4323 = vmatprep.mubr.f32.mxu0 0.0
        %4324 = vmatmul.mubr.f32.gmra.mrb[0].mxu0 %v4198
        %v4325 = vpop.f32.mrb[0].mxu0
        %v4326 = vadd.f32 0.0, %v4325
        %v4327 = vpop.f32.mrb[0].mxu0
        %4328 = vmatprep.mubr.f32.mxu0 0.0
        %4329 = vmatmul.mubr.f32.gmra.mrb[0].mxu0 %v4199
        %v4330 = vpop.f32.mrb[0].mxu0
        %v4331 = vadd.f32 0.0, %v4330
        %v4332 = vpop.f32.mrb[0].mxu0
        %4333 = vmatprep.mubr.f32.mxu0 0.0
        %4334 = vmatmul.mubr.f32.gmra.mrb[0].mxu0 %v4200
        %v4335 = vpop.f32.mrb[0].mxu0
        %v4336 = vadd.f32 0.0, %v4335
        %v4337 = vpop.f32.mrb[0].mxu0
        %4338 = vmatprep.mubr.f32.mxu0 0.0
        %4339 = vmatmul.mubr.f32.gmra.mrb[0].mxu0 %v4201
        %v4340 = vpop.f32.mrb[0].mxu0
        %v4341 = vadd.f32 0.0, %v4340
        %v4342 = vpop.f32.mrb[0].mxu0
        %4343 = vmatprep.mubr.f32.mxu0 0.0
        %4344 = vmatmul.mubr.f32.gmra.mrb[0].mxu0 %v4202
        %v4345 = vpop.f32.mrb[0].mxu0
        %v4346 = vadd.f32 0.0, %v4345
        %v4347 = vpop.f32.mrb[0].mxu0
        %4348 = vmatprep.mubr.f32.mxu0 0.0
        %4349 = vmatmul.mubr.f32.gmra.mrb[0].mxu0 %v4203
        %v4350 = vpop.f32.mrb[0].mxu0
        %v4351 = vadd.f32 0.0, %v4350
        %v4352 = vpop.f32.mrb[0].mxu0
        %4353 = vmatprep.mubr.f32.mxu0 0.0
        %4354 = vmatmul.mubr.f32.gmra.mrb[0].mxu0 %v4204
        %v4355 = vpop.f32.mrb[0].mxu0
        %v4356 = vadd.f32 0.0, %v4355
        %v4357 = vpop.f32.mrb[0].mxu0
        %4358 = vmatprep.mubr.f32.mxu0 0.0
        %4359 = vmatmul.mubr.f32.gmra.mrb[0].mxu0 %v4205
        %v4360 = vpop.f32.mrb[0].mxu0
        %v4361 = vadd.f32 0.0, %v4360
        %v4362 = vpop.f32.mrb[0].mxu0
        %4363 = vmatprep.mubr.f32.mxu0 0.0
        %4364 = vmatmul.mubr.f32.gmra.mrb[0].mxu0 %v4206
        %v4365 = vpop.f32.mrb[0].mxu0
        %v4366 = vadd.f32 0.0, %v4365
        %v4367 = vpop.f32.mrb[0].mxu0
        %4368 = vmatprep.mubr.f32.mxu0 0.0
        %4369 = vmatmul.mubr.f32.gmra.mrb[0].mxu0 %v4207
        %v4370 = vpop.f32.mrb[0].mxu0
        %v4371 = vadd.f32 0.0, %v4370
        %v4372 = vpop.f32.mrb[0].mxu0
        %4373 = vmatprep.mubr.f32.mxu0 0.0
        %4374 = vmatmul.mubr.f32.gmra.mrb[0].mxu0 %v4208
        %v4375 = vpop.f32.mrb[0].mxu0
        %v4376 = vadd.f32 0.0, %v4375
        %v4377 = vpop.f32.mrb[0].mxu0
        %4378 = vmatprep.mubr.f32.mxu0 0.0
        %4379 = vmatmul.mubr.f32.gmra.mrb[0].mxu0 %v4209
        %v4380 = vpop.f32.mrb[0].mxu0
        %v4381 = vadd.f32 0.0, %v4380
        %v4382 = vpop.f32.mrb[0].mxu0
        %4383 = vmatprep.mubr.f32.mxu0 0.0
        %4384 = vmatmul.mubr.f32.gmra.mrb[0].mxu0 %v4210
        %v4385 = vpop.f32.mrb[0].mxu0
        %v4386 = vadd.f32 0.0, %v4385
        %v4387 = vpop.f32.mrb[0].mxu0
        %4388 = vmatprep.mubr.f32.mxu0 0.0
        %4389 = vmatmul.mubr.f32.gmra.mrb[0].mxu0 %v4211
        %v4390 = vpop.f32.mrb[0].mxu0
        %v4391 = vadd.f32 0.0, %v4390
        %v4392 = vpop.f32.mrb[0].mxu0
        %4393 = vmatprep.mubr.f32.mxu0 0.0
        %4394 = vmatmul.mubr.f32.gmra.mrb[0].mxu0 %v4212
        %v4395 = vpop.f32.mrb[0].mxu0
        %v4396 = vadd.f32 0.0, %v4395
        %v4397 = vpop.f32.mrb[0].mxu0
        %4398 = vmatprep.mubr.f32.mxu0 0.0
        %4399 = vmatmul.mubr.f32.gmra.mrb[0].mxu0 %v4213
        %v4400 = vpop.f32.mrb[0].mxu0
        %v4401 = vadd.f32 0.0, %v4400
        %v4402 = vpop.f32.mrb[0].mxu0
        %4403 = vmatprep.mubr.f32.mxu0 0.0
        %4404 = vmatmul.mubr.f32.gmra.mrb[0].mxu0 %v4214
        %v4405 = vpop.f32.mrb[0].mxu0
        %v4406 = vadd.f32 0.0, %v4405
        %v4407 = vpop.f32.mrb[0].mxu0
        %4408 = vmatprep.mubr.f32.mxu0 0.0
        %4409 = vmatmul.mubr.f32.gmra.mrb[0].mxu0 %v4215
        %v4410 = vpop.f32.mrb[0].mxu0
        %v4411 = vadd.f32 0.0, %v4410
        %v4412 = vpop.f32.mrb[0].mxu0
        %4413 = vmatprep.mubr.f32.mxu0 0.0
        %4414 = vmatmul.mubr.f32.gmra.mrb[0].mxu0 %v4216
        %v4415 = vpop.f32.mrb[0].mxu0
        %v4416 = vadd.f32 0.0, %v4415
        %v4417 = vpop.f32.mrb[0].mxu0
        %4418 = vmatprep.mubr.f32.mxu0 0.0
        %4419 = vmatmul.mubr.f32.gmra.mrb[0].mxu0 %v4217
        %v4420 = vpop.f32.mrb[0].mxu0
        %v4421 = vadd.f32 0.0, %v4420
        %v4422 = vpop.f32.mrb[0].mxu0
        %4423 = vmatprep.mubr.f32.mxu0 0.0
        %4424 = vmatmul.mubr.f32.gmra.mrb[0].mxu0 %v4218
        %v4425 = vpop.f32.mrb[0].mxu0
        %v4426 = vadd.f32 0.0, %v4425
        %v4427 = vpop.f32.mrb[0].mxu0
        %4428 = vmatprep.mubr.f32.mxu0 0.0
        %4429 = vmatmul.mubr.f32.gmra.mrb[0].mxu0 %v4219
        %v4430 = vpop.f32.mrb[0].mxu0
        %v4431 = vadd.f32 0.0, %v4430
        %v4432 = vpop.f32.mrb[0].mxu0
        %4433 = vmatprep.mubr.f32.mxu0 0.0
        %4434 = vmatmul.mubr.f32.gmra.mrb[0].mxu0 %v4220
        %v4435 = vpop.f32.mrb[0].mxu0
        %v4436 = vadd.f32 0.0, %v4435
        %v4437 = vpop.f32.mrb[0].mxu0
        %4438 = vmatprep.mubr.f32.mxu0 0.0
        %4439 = vmatmul.mubr.f32.gmra.mrb[0].mxu0 %v4221
        %v4440 = vpop.f32.mrb[0].mxu0
        %v4441 = vadd.f32 0.0, %v4440
        %v4442 = vpop.f32.mrb[0].mxu0
        %4443 = vmatprep.mubr.f32.mxu0 0.0
        %4444 = vmatmul.mubr.f32.gmra.mrb[0].mxu0 %v4222
        %v4445 = vpop.f32.mrb[0].mxu0
        %v4446 = vadd.f32 0.0, %v4445
        %v4447 = vpop.f32.mrb[0].mxu0
        %4448 = vmatprep.mubr.f32.mxu0 0.0
        %4449 = vmatmul.mubr.f32.gmra.mrb[0].mxu0 %v4223
        %v4450 = vpop.f32.mrb[0].mxu0
        %v4451 = vadd.f32 0.0, %v4450
        %v4452 = vpop.f32.mrb[0].mxu0
        %4453 = vmatprep.mubr.f32.mxu0 0.0
        %4454 = vmatmul.mubr.f32.gmra.mrb[0].mxu0 %v4224
        %v4455 = vpop.f32.mrb[0].mxu0
        %v4456 = vadd.f32 0.0, %v4455
        %v4457 = vpop.f32.mrb[0].mxu0
        %4458 = vmatprep.mubr.f32.mxu0 0.0
        %4459 = vmatmul.mubr.f32.gmra.mrb[0].mxu0 %v4225
        %v4460 = vpop.f32.mrb[0].mxu0
        %v4461 = vadd.f32 0.0, %v4460
        %v4462 = vpop.f32.mrb[0].mxu0
        %4463 = vmatprep.mubr.f32.mxu0 0.0
        %4464 = vmatmul.mubr.f32.gmra.mrb[0].mxu0 %v4226
        %v4465 = vpop.f32.mrb[0].mxu0
        %v4466 = vadd.f32 0.0, %v4465
        %v4467 = vpop.f32.mrb[0].mxu0
        %4468 = vdwg.mxu0
        %v4469 = vld [vmem:[#allocation3] sm:$0xff]
        %v4470 = vld [vmem:[#allocation3 + $0x8] sm:$0xff]
        %v4471 = vld [vmem:[#allocation3 + $0x10] sm:$0xff]
        %v4472 = vld [vmem:[#allocation3 + $0x18] sm:$0xff]
        %v4473 = vld [vmem:[#allocation3 + $0x20] sm:$0xff]
        %v4474 = vld [vmem:[#allocation3 + $0x28] sm:$0xff]
        %v4475 = vld [vmem:[#allocation3 + $0x30] sm:$0xff]
        %v4476 = vld [vmem:[#allocation3 + $0x38] sm:$0xff]
        %v4477 = vld [vmem:[#allocation3 + $0x40] sm:$0xff]
        %v4478 = vld [vmem:[#allocation3 + $0x48] sm:$0xff]
        %v4479 = vld [vmem:[#allocation3 + $0x50] sm:$0xff]
        %v4480 = vld [vmem:[#allocation3 + $0x58] sm:$0xff]
        %v4481 = vld [vmem:[#allocation3 + $0x60] sm:$0xff]
        %v4482 = vld [vmem:[#allocation3 + $0x68] sm:$0xff]
        %v4483 = vld [vmem:[#allocation3 + $0x70] sm:$0xff]
        %v4484 = vld [vmem:[#allocation3 + $0x78] sm:$0xff]
        %v4485 = vld [vmem:[#allocation3 + $0x80] sm:$0xff]
        %v4486 = vld [vmem:[#allocation3 + $0x88] sm:$0xff]
        %v4487 = vld [vmem:[#allocation3 + $0x90] sm:$0xff]
        %v4488 = vld [vmem:[#allocation3 + $0x98] sm:$0xff]
        %v4489 = vld [vmem:[#allocation3 + $0xa0] sm:$0xff]
        %v4490 = vld [vmem:[#allocation3 + $0xa8] sm:$0xff]
        %v4491 = vld [vmem:[#allocation3 + $0xb0] sm:$0xff]
        %v4492 = vld [vmem:[#allocation3 + $0xb8] sm:$0xff]
        %v4493 = vld [vmem:[#allocation3 + $0xc0] sm:$0xff]
        %v4494 = vld [vmem:[#allocation3 + $0xc8] sm:$0xff]
        %v4495 = vld [vmem:[#allocation3 + $0xd0] sm:$0xff]
        %v4496 = vld [vmem:[#allocation3 + $0xd8] sm:$0xff]
        %v4497 = vld [vmem:[#allocation3 + $0xe0] sm:$0xff]
        %v4498 = vld [vmem:[#allocation3 + $0xe8] sm:$0xff]
        %v4499 = vld [vmem:[#allocation3 + $0xf0] sm:$0xff]
        %v4500 = vld [vmem:[#allocation3 + $0xf8] sm:$0xff]
        %v4501 = vadd.f32 %v4469, %v4311
        %v4502 = vadd.f32 %v4470, %v4316
        %v4503 = vadd.f32 %v4471, %v4321
        %v4504 = vadd.f32 %v4472, %v4326
        %v4505 = vadd.f32 %v4473, %v4331
        %v4506 = vadd.f32 %v4474, %v4336
        %v4507 = vadd.f32 %v4475, %v4341
        %v4508 = vadd.f32 %v4476, %v4346
        %v4509 = vadd.f32 %v4477, %v4351
        %v4510 = vadd.f32 %v4478, %v4356
        %v4511 = vadd.f32 %v4479, %v4361
        %v4512 = vadd.f32 %v4480, %v4366
        %v4513 = vadd.f32 %v4481, %v4371
        %v4514 = vadd.f32 %v4482, %v4376
        %v4515 = vadd.f32 %v4483, %v4381
        %v4516 = vadd.f32 %v4484, %v4386
        %v4517 = vadd.f32 %v4485, %v4391
        %v4518 = vadd.f32 %v4486, %v4396
        %v4519 = vadd.f32 %v4487, %v4401
        %v4520 = vadd.f32 %v4488, %v4406
        %v4521 = vadd.f32 %v4489, %v4411
        %v4522 = vadd.f32 %v4490, %v4416
        %v4523 = vadd.f32 %v4491, %v4421
        %v4524 = vadd.f32 %v4492, %v4426
        %v4525 = vadd.f32 %v4493, %v4431
        %v4526 = vadd.f32 %v4494, %v4436
        %v4527 = vadd.f32 %v4495, %v4441
        %v4528 = vadd.f32 %v4496, %v4446
        %v4529 = vadd.f32 %v4497, %v4451
        %v4530 = vadd.f32 %v4498, %v4456
        %v4531 = vadd.f32 %v4499, %v4461
        %v4532 = vadd.f32 %v4500, %v4466
        %4533 = vst [vmem:[#allocation3] sm:$0xff] %v4501
        %4534 = vst [vmem:[#allocation3 + $0x8] sm:$0xff] %v4502
        %4535 = vst [vmem:[#allocation3 + $0x10] sm:$0xff] %v4503
        %4536 = vst [vmem:[#allocation3 + $0x18] sm:$0xff] %v4504
        %4537 = vst [vmem:[#allocation3 + $0x20] sm:$0xff] %v4505
        %4538 = vst [vmem:[#allocation3 + $0x28] sm:$0xff] %v4506
        %4539 = vst [vmem:[#allocation3 + $0x30] sm:$0xff] %v4507
        %4540 = vst [vmem:[#allocation3 + $0x38] sm:$0xff] %v4508
        %4541 = vst [vmem:[#allocation3 + $0x40] sm:$0xff] %v4509
        %4542 = vst [vmem:[#allocation3 + $0x48] sm:$0xff] %v4510
        %4543 = vst [vmem:[#allocation3 + $0x50] sm:$0xff] %v4511
        %4544 = vst [vmem:[#allocation3 + $0x58] sm:$0xff] %v4512
        %4545 = vst [vmem:[#allocation3 + $0x60] sm:$0xff] %v4513
        %4546 = vst [vmem:[#allocation3 + $0x68] sm:$0xff] %v4514
        %4547 = vst [vmem:[#allocation3 + $0x70] sm:$0xff] %v4515
        %4548 = vst [vmem:[#allocation3 + $0x78] sm:$0xff] %v4516
        %4549 = vst [vmem:[#allocation3 + $0x80] sm:$0xff] %v4517
        %4550 = vst [vmem:[#allocation3 + $0x88] sm:$0xff] %v4518
        %4551 = vst [vmem:[#allocation3 + $0x90] sm:$0xff] %v4519
        %4552 = vst [vmem:[#allocation3 + $0x98] sm:$0xff] %v4520
        %4553 = vst [vmem:[#allocation3 + $0xa0] sm:$0xff] %v4521
        %4554 = vst [vmem:[#allocation3 + $0xa8] sm:$0xff] %v4522
        %4555 = vst [vmem:[#allocation3 + $0xb0] sm:$0xff] %v4523
        %4556 = vst [vmem:[#allocation3 + $0xb8] sm:$0xff] %v4524
        %4557 = vst [vmem:[#allocation3 + $0xc0] sm:$0xff] %v4525
        %4558 = vst [vmem:[#allocation3 + $0xc8] sm:$0xff] %v4526
        %4559 = vst [vmem:[#allocation3 + $0xd0] sm:$0xff] %v4527
        %4560 = vst [vmem:[#allocation3 + $0xd8] sm:$0xff] %v4528
        %4561 = vst [vmem:[#allocation3 + $0xe0] sm:$0xff] %v4529
        %4562 = vst [vmem:[#allocation3 + $0xe8] sm:$0xff] %v4530
        %4563 = vst [vmem:[#allocation3 + $0xf0] sm:$0xff] %v4531
        %4564 = vst [vmem:[#allocation3 + $0xf8] sm:$0xff] %v4532
        %v4565 = vld [vmem:[#allocation2 + $0x9] sm:$0xff]
        %v4566 = vld [vmem:[#allocation2 + $0x11] sm:$0xff]
        %v4567 = vld [vmem:[#allocation2 + $0x29] sm:$0xff]
        %v4568 = vld [vmem:[#allocation2 + $0x31] sm:$0xff]
        %v4569 = vld [vmem:[#allocation2 + $0x49] sm:$0xff]
        %v4570 = vld [vmem:[#allocation2 + $0x51] sm:$0xff]
        %v4571 = vld [vmem:[#allocation2 + $0x69] sm:$0xff]
        %v4572 = vld [vmem:[#allocation2 + $0x71] sm:$0xff]
        %v4573 = vld [vmem:[#allocation2 + $0x89] sm:$0xff]
        %v4574 = vld [vmem:[#allocation2 + $0x91] sm:$0xff]
        %v4575 = vld [vmem:[#allocation2 + $0xa9] sm:$0xff]
        %v4576 = vld [vmem:[#allocation2 + $0xb1] sm:$0xff]
        %v4577 = vld [vmem:[#allocation2 + $0xc9] sm:$0xff]
        %v4578 = vld [vmem:[#allocation2 + $0xd1] sm:$0xff]
        %v4579 = vld [vmem:[#allocation2 + $0xe9] sm:$0xff]
        %v4580 = vld [vmem:[#allocation2 + $0xf1] sm:$0xff]
        %v4581 = vld [vmem:[#allocation2 + $0x109] sm:$0xff]
        %v4582 = vld [vmem:[#allocation2 + $0x111] sm:$0xff]
        %v4583 = vld [vmem:[#allocation2 + $0x129] sm:$0xff]
        %v4584 = vld [vmem:[#allocation2 + $0x131] sm:$0xff]
        %v4585 = vld [vmem:[#allocation2 + $0x149] sm:$0xff]
        %v4586 = vld [vmem:[#allocation2 + $0x151] sm:$0xff]
        %v4587 = vld [vmem:[#allocation2 + $0x169] sm:$0xff]
        %v4588 = vld [vmem:[#allocation2 + $0x171] sm:$0xff]
        %v4589 = vld [vmem:[#allocation2 + $0x189] sm:$0xff]
        %v4590 = vld [vmem:[#allocation2 + $0x191] sm:$0xff]
        %v4591 = vld [vmem:[#allocation2 + $0x1a9] sm:$0xff]
        %v4592 = vld [vmem:[#allocation2 + $0x1b1] sm:$0xff]
        %v4593 = vld [vmem:[#allocation2 + $0x1c9] sm:$0xff]
        %v4594 = vld [vmem:[#allocation2 + $0x1d1] sm:$0xff]
        %v4595 = vld [vmem:[#allocation2 + $0x1e9] sm:$0xff]
        %v4596 = vld [vmem:[#allocation2 + $0x1f1] sm:$0xff]
        %s4597 = scalar_lea.vmem [#allocation12], 256
        %v4598 = vld [vmem:[%s4597] sm:$0xff]
        %v4599 = vld [vmem:[%s4597 + $0x8] sm:$0xff]
        %v4600 = vld [vmem:[%s4597 + $0x10] sm:$0xff]
        %v4601 = vld [vmem:[%s4597 + $0x18] sm:$0xff]
        %v4602 = vld [vmem:[%s4597 + $0x20] sm:$0xff]
        %v4603 = vld [vmem:[%s4597 + $0x28] sm:$0xff]
        %v4604 = vld [vmem:[%s4597 + $0x30] sm:$0xff]
        %v4605 = vld [vmem:[%s4597 + $0x38] sm:$0xff]
        %v4606 = vld [vmem:[%s4597 + $0x40] sm:$0xff]
        %v4607 = vld [vmem:[%s4597 + $0x48] sm:$0xff]
        %v4608 = vld [vmem:[%s4597 + $0x50] sm:$0xff]
        %v4609 = vld [vmem:[%s4597 + $0x58] sm:$0xff]
        %v4610 = vld [vmem:[%s4597 + $0x60] sm:$0xff]
        %v4611 = vld [vmem:[%s4597 + $0x68] sm:$0xff]
        %v4612 = vld [vmem:[%s4597 + $0x70] sm:$0xff]
        %v4613 = vld [vmem:[%s4597 + $0x78] sm:$0xff]
        %4614 = vmatprep.subr.mxu0 0.0
        %4615 = vmatpush1.msra.mxu0 %v4598
        %4616 = vmatprep.subr.mxu0 0.0
        %4617 = vmatpush1.msra.mxu0 %v4599
        %4618 = vmatprep.subr.mxu0 0.0
        %4619 = vmatpush1.msra.mxu0 %v4600
        %4620 = vmatprep.subr.mxu0 0.0
        %4621 = vmatpush1.msra.mxu0 %v4601
        %4622 = vmatprep.subr.mxu0 0.0
        %4623 = vmatpush1.msra.mxu0 %v4602
        %4624 = vmatprep.subr.mxu0 0.0
        %4625 = vmatpush1.msra.mxu0 %v4603
        %4626 = vmatprep.subr.mxu0 0.0
        %4627 = vmatpush1.msra.mxu0 %v4604
        %4628 = vmatprep.subr.mxu0 0.0
        %4629 = vmatpush1.msra.mxu0 %v4605
        %4630 = vmatprep.subr.mxu0 0.0
        %4631 = vmatpush1.msra.mxu0 %v4606
        %4632 = vmatprep.subr.mxu0 0.0
        %4633 = vmatpush1.msra.mxu0 %v4607
        %4634 = vmatprep.subr.mxu0 0.0
        %4635 = vmatpush1.msra.mxu0 %v4608
        %4636 = vmatprep.subr.mxu0 0.0
        %4637 = vmatpush1.msra.mxu0 %v4609
        %4638 = vmatprep.subr.mxu0 0.0
        %4639 = vmatpush1.msra.mxu0 %v4610
        %4640 = vmatprep.subr.mxu0 0.0
        %4641 = vmatpush1.msra.mxu0 %v4611
        %4642 = vmatprep.subr.mxu0 0.0
        %4643 = vmatpush1.msra.mxu0 %v4612
        %4644 = vmatprep.subr.mxu0 0.0
        %4645 = vmatpush1.msra.mxu0 %v4613
        %4646 = vmatprep.subr.mxu0 0.0
        %4647 = vmatpush1.msra.mxu0 0.0
        %4648 = vmatprep.subr.mxu0 0.0
        %4649 = vmatpush1.msra.mxu0 0.0
        %4650 = vmatprep.subr.mxu0 0.0
        %4651 = vmatpush1.msra.mxu0 0.0
        %4652 = vmatprep.subr.mxu0 0.0
        %4653 = vmatpush1.msra.mxu0 0.0
        %4654 = vmatprep.subr.mxu0 0.0
        %4655 = vmatpush1.msra.mxu0 0.0
        %4656 = vmatprep.subr.mxu0 0.0
        %4657 = vmatpush1.msra.mxu0 0.0
        %4658 = vmatprep.subr.mxu0 0.0
        %4659 = vmatpush1.msra.mxu0 0.0
        %4660 = vmatprep.subr.mxu0 0.0
        %4661 = vmatpush1.msra.mxu0 0.0
        %4662 = vmatprep.subr.mxu0 0.0
        %4663 = vmatpush1.msra.mxu0 0.0
        %4664 = vmatprep.subr.mxu0 0.0
        %4665 = vmatpush1.msra.mxu0 0.0
        %4666 = vmatprep.subr.mxu0 0.0
        %4667 = vmatpush1.msra.mxu0 0.0
        %4668 = vmatprep.subr.mxu0 0.0
        %4669 = vmatpush1.msra.mxu0 0.0
        %4670 = vmatprep.subr.mxu0 0.0
        %4671 = vmatpush1.msra.mxu0 0.0
        %4672 = vmatprep.subr.mxu0 0.0
        %4673 = vmatpush1.msra.mxu0 0.0
        %4674 = vmatprep.subr.mxu0 0.0
        %4675 = vmatpush1.msra.mxu0 0.0
        %4676 = vmatprep.subr.mxu0 0.0
        %4677 = vmatpush1.msra.mxu0 0.0
        %4678 = vmatprep.mubr.f32.mxu0 0.0
        %4679 = vmatmul.mubr.f32.gmra.mrb[0].mxu0 %v4565
        %v4680 = vpop.f32.mrb[0].mxu0
        %v4681 = vadd.f32 0.0, %v4680
        %v4682 = vpop.f32.mrb[0].mxu0
        %4683 = vmatprep.mubr.f32.mxu0 0.0
        %4684 = vmatmul.mubr.f32.gmra.mrb[0].mxu0 %v4566
        %v4685 = vpop.f32.mrb[0].mxu0
        %v4686 = vadd.f32 0.0, %v4685
        %v4687 = vpop.f32.mrb[0].mxu0
        %4688 = vmatprep.mubr.f32.mxu0 0.0
        %4689 = vmatmul.mubr.f32.gmra.mrb[0].mxu0 %v4567
        %v4690 = vpop.f32.mrb[0].mxu0
        %v4691 = vadd.f32 0.0, %v4690
        %v4692 = vpop.f32.mrb[0].mxu0
        %4693 = vmatprep.mubr.f32.mxu0 0.0
        %4694 = vmatmul.mubr.f32.gmra.mrb[0].mxu0 %v4568
        %v4695 = vpop.f32.mrb[0].mxu0
        %v4696 = vadd.f32 0.0, %v4695
        %v4697 = vpop.f32.mrb[0].mxu0
        %4698 = vmatprep.mubr.f32.mxu0 0.0
        %4699 = vmatmul.mubr.f32.gmra.mrb[0].mxu0 %v4569
        %v4700 = vpop.f32.mrb[0].mxu0
        %v4701 = vadd.f32 0.0, %v4700
        %v4702 = vpop.f32.mrb[0].mxu0
        %4703 = vmatprep.mubr.f32.mxu0 0.0
        %4704 = vmatmul.mubr.f32.gmra.mrb[0].mxu0 %v4570
        %v4705 = vpop.f32.mrb[0].mxu0
        %v4706 = vadd.f32 0.0, %v4705
        %v4707 = vpop.f32.mrb[0].mxu0
        %4708 = vmatprep.mubr.f32.mxu0 0.0
        %4709 = vmatmul.mubr.f32.gmra.mrb[0].mxu0 %v4571
        %v4710 = vpop.f32.mrb[0].mxu0
        %v4711 = vadd.f32 0.0, %v4710
        %v4712 = vpop.f32.mrb[0].mxu0
        %4713 = vmatprep.mubr.f32.mxu0 0.0
        %4714 = vmatmul.mubr.f32.gmra.mrb[0].mxu0 %v4572
        %v4715 = vpop.f32.mrb[0].mxu0
        %v4716 = vadd.f32 0.0, %v4715
        %v4717 = vpop.f32.mrb[0].mxu0
        %4718 = vmatprep.mubr.f32.mxu0 0.0
        %4719 = vmatmul.mubr.f32.gmra.mrb[0].mxu0 %v4573
        %v4720 = vpop.f32.mrb[0].mxu0
        %v4721 = vadd.f32 0.0, %v4720
        %v4722 = vpop.f32.mrb[0].mxu0
        %4723 = vmatprep.mubr.f32.mxu0 0.0
        %4724 = vmatmul.mubr.f32.gmra.mrb[0].mxu0 %v4574
        %v4725 = vpop.f32.mrb[0].mxu0
        %v4726 = vadd.f32 0.0, %v4725
        %v4727 = vpop.f32.mrb[0].mxu0
        %4728 = vmatprep.mubr.f32.mxu0 0.0
        %4729 = vmatmul.mubr.f32.gmra.mrb[0].mxu0 %v4575
        %v4730 = vpop.f32.mrb[0].mxu0
        %v4731 = vadd.f32 0.0, %v4730
        %v4732 = vpop.f32.mrb[0].mxu0
        %4733 = vmatprep.mubr.f32.mxu0 0.0
        %4734 = vmatmul.mubr.f32.gmra.mrb[0].mxu0 %v4576
        %v4735 = vpop.f32.mrb[0].mxu0
        %v4736 = vadd.f32 0.0, %v4735
        %v4737 = vpop.f32.mrb[0].mxu0
        %4738 = vmatprep.mubr.f32.mxu0 0.0
        %4739 = vmatmul.mubr.f32.gmra.mrb[0].mxu0 %v4577
        %v4740 = vpop.f32.mrb[0].mxu0
        %v4741 = vadd.f32 0.0, %v4740
        %v4742 = vpop.f32.mrb[0].mxu0
        %4743 = vmatprep.mubr.f32.mxu0 0.0
        %4744 = vmatmul.mubr.f32.gmra.mrb[0].mxu0 %v4578
        %v4745 = vpop.f32.mrb[0].mxu0
        %v4746 = vadd.f32 0.0, %v4745
        %v4747 = vpop.f32.mrb[0].mxu0
        %4748 = vmatprep.mubr.f32.mxu0 0.0
        %4749 = vmatmul.mubr.f32.gmra.mrb[0].mxu0 %v4579
        %v4750 = vpop.f32.mrb[0].mxu0
        %v4751 = vadd.f32 0.0, %v4750
        %v4752 = vpop.f32.mrb[0].mxu0
        %4753 = vmatprep.mubr.f32.mxu0 0.0
        %4754 = vmatmul.mubr.f32.gmra.mrb[0].mxu0 %v4580
        %v4755 = vpop.f32.mrb[0].mxu0
        %v4756 = vadd.f32 0.0, %v4755
        %v4757 = vpop.f32.mrb[0].mxu0
        %4758 = vmatprep.mubr.f32.mxu0 0.0
        %4759 = vmatmul.mubr.f32.gmra.mrb[0].mxu0 %v4581
        %v4760 = vpop.f32.mrb[0].mxu0
        %v4761 = vadd.f32 0.0, %v4760
        %v4762 = vpop.f32.mrb[0].mxu0
        %4763 = vmatprep.mubr.f32.mxu0 0.0
        %4764 = vmatmul.mubr.f32.gmra.mrb[0].mxu0 %v4582
        %v4765 = vpop.f32.mrb[0].mxu0
        %v4766 = vadd.f32 0.0, %v4765
        %v4767 = vpop.f32.mrb[0].mxu0
        %4768 = vmatprep.mubr.f32.mxu0 0.0
        %4769 = vmatmul.mubr.f32.gmra.mrb[0].mxu0 %v4583
        %v4770 = vpop.f32.mrb[0].mxu0
        %v4771 = vadd.f32 0.0, %v4770
        %v4772 = vpop.f32.mrb[0].mxu0
        %4773 = vmatprep.mubr.f32.mxu0 0.0
        %4774 = vmatmul.mubr.f32.gmra.mrb[0].mxu0 %v4584
        %v4775 = vpop.f32.mrb[0].mxu0
        %v4776 = vadd.f32 0.0, %v4775
        %v4777 = vpop.f32.mrb[0].mxu0
        %4778 = vmatprep.mubr.f32.mxu0 0.0
        %4779 = vmatmul.mubr.f32.gmra.mrb[0].mxu0 %v4585
        %v4780 = vpop.f32.mrb[0].mxu0
        %v4781 = vadd.f32 0.0, %v4780
        %v4782 = vpop.f32.mrb[0].mxu0
        %4783 = vmatprep.mubr.f32.mxu0 0.0
        %4784 = vmatmul.mubr.f32.gmra.mrb[0].mxu0 %v4586
        %v4785 = vpop.f32.mrb[0].mxu0
        %v4786 = vadd.f32 0.0, %v4785
        %v4787 = vpop.f32.mrb[0].mxu0
        %4788 = vmatprep.mubr.f32.mxu0 0.0
        %4789 = vmatmul.mubr.f32.gmra.mrb[0].mxu0 %v4587
        %v4790 = vpop.f32.mrb[0].mxu0
        %v4791 = vadd.f32 0.0, %v4790
        %v4792 = vpop.f32.mrb[0].mxu0
        %4793 = vmatprep.mubr.f32.mxu0 0.0
        %4794 = vmatmul.mubr.f32.gmra.mrb[0].mxu0 %v4588
        %v4795 = vpop.f32.mrb[0].mxu0
        %v4796 = vadd.f32 0.0, %v4795
        %v4797 = vpop.f32.mrb[0].mxu0
        %4798 = vmatprep.mubr.f32.mxu0 0.0
        %4799 = vmatmul.mubr.f32.gmra.mrb[0].mxu0 %v4589
        %v4800 = vpop.f32.mrb[0].mxu0
        %v4801 = vadd.f32 0.0, %v4800
        %v4802 = vpop.f32.mrb[0].mxu0
        %4803 = vmatprep.mubr.f32.mxu0 0.0
        %4804 = vmatmul.mubr.f32.gmra.mrb[0].mxu0 %v4590
        %v4805 = vpop.f32.mrb[0].mxu0
        %v4806 = vadd.f32 0.0, %v4805
        %v4807 = vpop.f32.mrb[0].mxu0
        %4808 = vmatprep.mubr.f32.mxu0 0.0
        %4809 = vmatmul.mubr.f32.gmra.mrb[0].mxu0 %v4591
        %v4810 = vpop.f32.mrb[0].mxu0
        %v4811 = vadd.f32 0.0, %v4810
        %v4812 = vpop.f32.mrb[0].mxu0
        %4813 = vmatprep.mubr.f32.mxu0 0.0
        %4814 = vmatmul.mubr.f32.gmra.mrb[0].mxu0 %v4592
        %v4815 = vpop.f32.mrb[0].mxu0
        %v4816 = vadd.f32 0.0, %v4815
        %v4817 = vpop.f32.mrb[0].mxu0
        %4818 = vmatprep.mubr.f32.mxu0 0.0
        %4819 = vmatmul.mubr.f32.gmra.mrb[0].mxu0 %v4593
        %v4820 = vpop.f32.mrb[0].mxu0
        %v4821 = vadd.f32 0.0, %v4820
        %v4822 = vpop.f32.mrb[0].mxu0
        %4823 = vmatprep.mubr.f32.mxu0 0.0
        %4824 = vmatmul.mubr.f32.gmra.mrb[0].mxu0 %v4594
        %v4825 = vpop.f32.mrb[0].mxu0
        %v4826 = vadd.f32 0.0, %v4825
        %v4827 = vpop.f32.mrb[0].mxu0
        %4828 = vmatprep.mubr.f32.mxu0 0.0
        %4829 = vmatmul.mubr.f32.gmra.mrb[0].mxu0 %v4595
        %v4830 = vpop.f32.mrb[0].mxu0
        %v4831 = vadd.f32 0.0, %v4830
        %v4832 = vpop.f32.mrb[0].mxu0
        %4833 = vmatprep.mubr.f32.mxu0 0.0
        %4834 = vmatmul.mubr.f32.gmra.mrb[0].mxu0 %v4596
        %v4835 = vpop.f32.mrb[0].mxu0
        %v4836 = vadd.f32 0.0, %v4835
        %v4837 = vpop.f32.mrb[0].mxu0
        %4838 = vdwg.mxu0
        %v4839 = vld [vmem:[#allocation3] sm:$0xff]
        %v4840 = vld [vmem:[#allocation3 + $0x8] sm:$0xff]
        %v4841 = vld [vmem:[#allocation3 + $0x10] sm:$0xff]
        %v4842 = vld [vmem:[#allocation3 + $0x18] sm:$0xff]
        %v4843 = vld [vmem:[#allocation3 + $0x20] sm:$0xff]
        %v4844 = vld [vmem:[#allocation3 + $0x28] sm:$0xff]
        %v4845 = vld [vmem:[#allocation3 + $0x30] sm:$0xff]
        %v4846 = vld [vmem:[#allocation3 + $0x38] sm:$0xff]
        %v4847 = vld [vmem:[#allocation3 + $0x40] sm:$0xff]
        %v4848 = vld [vmem:[#allocation3 + $0x48] sm:$0xff]
        %v4849 = vld [vmem:[#allocation3 + $0x50] sm:$0xff]
        %v4850 = vld [vmem:[#allocation3 + $0x58] sm:$0xff]
        %v4851 = vld [vmem:[#allocation3 + $0x60] sm:$0xff]
        %v4852 = vld [vmem:[#allocation3 + $0x68] sm:$0xff]
        %v4853 = vld [vmem:[#allocation3 + $0x70] sm:$0xff]
        %v4854 = vld [vmem:[#allocation3 + $0x78] sm:$0xff]
        %v4855 = vld [vmem:[#allocation3 + $0x80] sm:$0xff]
        %v4856 = vld [vmem:[#allocation3 + $0x88] sm:$0xff]
        %v4857 = vld [vmem:[#allocation3 + $0x90] sm:$0xff]
        %v4858 = vld [vmem:[#allocation3 + $0x98] sm:$0xff]
        %v4859 = vld [vmem:[#allocation3 + $0xa0] sm:$0xff]
        %v4860 = vld [vmem:[#allocation3 + $0xa8] sm:$0xff]
        %v4861 = vld [vmem:[#allocation3 + $0xb0] sm:$0xff]
        %v4862 = vld [vmem:[#allocation3 + $0xb8] sm:$0xff]
        %v4863 = vld [vmem:[#allocation3 + $0xc0] sm:$0xff]
        %v4864 = vld [vmem:[#allocation3 + $0xc8] sm:$0xff]
        %v4865 = vld [vmem:[#allocation3 + $0xd0] sm:$0xff]
        %v4866 = vld [vmem:[#allocation3 + $0xd8] sm:$0xff]
        %v4867 = vld [vmem:[#allocation3 + $0xe0] sm:$0xff]
        %v4868 = vld [vmem:[#allocation3 + $0xe8] sm:$0xff]
        %v4869 = vld [vmem:[#allocation3 + $0xf0] sm:$0xff]
        %v4870 = vld [vmem:[#allocation3 + $0xf8] sm:$0xff]
        %v4871 = vadd.f32 %v4839, %v4681
        %v4872 = vadd.f32 %v4840, %v4686
        %v4873 = vadd.f32 %v4841, %v4691
        %v4874 = vadd.f32 %v4842, %v4696
        %v4875 = vadd.f32 %v4843, %v4701
        %v4876 = vadd.f32 %v4844, %v4706
        %v4877 = vadd.f32 %v4845, %v4711
        %v4878 = vadd.f32 %v4846, %v4716
        %v4879 = vadd.f32 %v4847, %v4721
        %v4880 = vadd.f32 %v4848, %v4726
        %v4881 = vadd.f32 %v4849, %v4731
        %v4882 = vadd.f32 %v4850, %v4736
        %v4883 = vadd.f32 %v4851, %v4741
        %v4884 = vadd.f32 %v4852, %v4746
        %v4885 = vadd.f32 %v4853, %v4751
        %v4886 = vadd.f32 %v4854, %v4756
        %v4887 = vadd.f32 %v4855, %v4761
        %v4888 = vadd.f32 %v4856, %v4766
        %v4889 = vadd.f32 %v4857, %v4771
        %v4890 = vadd.f32 %v4858, %v4776
        %v4891 = vadd.f32 %v4859, %v4781
        %v4892 = vadd.f32 %v4860, %v4786
        %v4893 = vadd.f32 %v4861, %v4791
        %v4894 = vadd.f32 %v4862, %v4796
        %v4895 = vadd.f32 %v4863, %v4801
        %v4896 = vadd.f32 %v4864, %v4806
        %v4897 = vadd.f32 %v4865, %v4811
        %v4898 = vadd.f32 %v4866, %v4816
        %v4899 = vadd.f32 %v4867, %v4821
        %v4900 = vadd.f32 %v4868, %v4826
        %v4901 = vadd.f32 %v4869, %v4831
        %v4902 = vadd.f32 %v4870, %v4836
        %4903 = vst [vmem:[#allocation3] sm:$0xff] %v4871
        %4904 = vst [vmem:[#allocation3 + $0x8] sm:$0xff] %v4872
        %4905 = vst [vmem:[#allocation3 + $0x10] sm:$0xff] %v4873
        %4906 = vst [vmem:[#allocation3 + $0x18] sm:$0xff] %v4874
        %4907 = vst [vmem:[#allocation3 + $0x20] sm:$0xff] %v4875
        %4908 = vst [vmem:[#allocation3 + $0x28] sm:$0xff] %v4876
        %4909 = vst [vmem:[#allocation3 + $0x30] sm:$0xff] %v4877
        %4910 = vst [vmem:[#allocation3 + $0x38] sm:$0xff] %v4878
        %4911 = vst [vmem:[#allocation3 + $0x40] sm:$0xff] %v4879
        %4912 = vst [vmem:[#allocation3 + $0x48] sm:$0xff] %v4880
        %4913 = vst [vmem:[#allocation3 + $0x50] sm:$0xff] %v4881
        %4914 = vst [vmem:[#allocation3 + $0x58] sm:$0xff] %v4882
        %4915 = vst [vmem:[#allocation3 + $0x60] sm:$0xff] %v4883
        %4916 = vst [vmem:[#allocation3 + $0x68] sm:$0xff] %v4884
        %4917 = vst [vmem:[#allocation3 + $0x70] sm:$0xff] %v4885
        %4918 = vst [vmem:[#allocation3 + $0x78] sm:$0xff] %v4886
        %4919 = vst [vmem:[#allocation3 + $0x80] sm:$0xff] %v4887
        %4920 = vst [vmem:[#allocation3 + $0x88] sm:$0xff] %v4888
        %4921 = vst [vmem:[#allocation3 + $0x90] sm:$0xff] %v4889
        %4922 = vst [vmem:[#allocation3 + $0x98] sm:$0xff] %v4890
        %4923 = vst [vmem:[#allocation3 + $0xa0] sm:$0xff] %v4891
        %4924 = vst [vmem:[#allocation3 + $0xa8] sm:$0xff] %v4892
        %4925 = vst [vmem:[#allocation3 + $0xb0] sm:$0xff] %v4893
        %4926 = vst [vmem:[#allocation3 + $0xb8] sm:$0xff] %v4894
        %4927 = vst [vmem:[#allocation3 + $0xc0] sm:$0xff] %v4895
        %4928 = vst [vmem:[#allocation3 + $0xc8] sm:$0xff] %v4896
        %4929 = vst [vmem:[#allocation3 + $0xd0] sm:$0xff] %v4897
        %4930 = vst [vmem:[#allocation3 + $0xd8] sm:$0xff] %v4898
        %4931 = vst [vmem:[#allocation3 + $0xe0] sm:$0xff] %v4899
        %4932 = vst [vmem:[#allocation3 + $0xe8] sm:$0xff] %v4900
        %4933 = vst [vmem:[#allocation3 + $0xf0] sm:$0xff] %v4901
        %4934 = vst [vmem:[#allocation3 + $0xf8] sm:$0xff] %v4902
        %v4935 = vld [vmem:[%s3857 + $0x7] sm:$0xff]
        %v4936 = vld [vmem:[%s3857 + $0xf] sm:$0xff]
        %v4937 = vld [vmem:[%s3857 + $0x27] sm:$0xff]
        %v4938 = vld [vmem:[%s3857 + $0x2f] sm:$0xff]
        %v4939 = vld [vmem:[%s3857 + $0x47] sm:$0xff]
        %v4940 = vld [vmem:[%s3857 + $0x4f] sm:$0xff]
        %v4941 = vld [vmem:[%s3857 + $0x67] sm:$0xff]
        %v4942 = vld [vmem:[%s3857 + $0x6f] sm:$0xff]
        %v4943 = vld [vmem:[%s3857 + $0x87] sm:$0xff]
        %v4944 = vld [vmem:[%s3857 + $0x8f] sm:$0xff]
        %v4945 = vld [vmem:[%s3857 + $0xa7] sm:$0xff]
        %v4946 = vld [vmem:[%s3857 + $0xaf] sm:$0xff]
        %v4947 = vld [vmem:[%s3857 + $0xc7] sm:$0xff]
        %v4948 = vld [vmem:[%s3857 + $0xcf] sm:$0xff]
        %v4949 = vld [vmem:[%s3857 + $0xe7] sm:$0xff]
        %v4950 = vld [vmem:[%s3857 + $0xef] sm:$0xff]
        %v4951 = vld [vmem:[%s3857 + $0x107] sm:$0xff]
        %v4952 = vld [vmem:[%s3857 + $0x10f] sm:$0xff]
        %v4953 = vld [vmem:[%s3857 + $0x127] sm:$0xff]
        %v4954 = vld [vmem:[%s3857 + $0x12f] sm:$0xff]
        %v4955 = vld [vmem:[%s3857 + $0x147] sm:$0xff]
        %v4956 = vld [vmem:[%s3857 + $0x14f] sm:$0xff]
        %v4957 = vld [vmem:[%s3857 + $0x167] sm:$0xff]
        %v4958 = vld [vmem:[%s3857 + $0x16f] sm:$0xff]
        %v4959 = vld [vmem:[%s3857 + $0x187] sm:$0xff]
        %v4960 = vld [vmem:[%s3857 + $0x18f] sm:$0xff]
        %v4961 = vld [vmem:[%s3857 + $0x1a7] sm:$0xff]
        %v4962 = vld [vmem:[%s3857 + $0x1af] sm:$0xff]
        %v4963 = vld [vmem:[%s3857 + $0x1c7] sm:$0xff]
        %v4964 = vld [vmem:[%s3857 + $0x1cf] sm:$0xff]
        %v4965 = vld [vmem:[%s3857 + $0x1e7] sm:$0xff]
        %v4966 = vld [vmem:[%s3857 + $0x1ef] sm:$0xff]
        %s4967 = scalar_lea.vmem [#allocation12], 384
        %v4968 = vld [vmem:[%s4967] sm:$0xff]
        %v4969 = vld [vmem:[%s4967 + $0x8] sm:$0xff]
        %v4970 = vld [vmem:[%s4967 + $0x10] sm:$0xff]
        %v4971 = vld [vmem:[%s4967 + $0x18] sm:$0xff]
        %v4972 = vld [vmem:[%s4967 + $0x20] sm:$0xff]
        %v4973 = vld [vmem:[%s4967 + $0x28] sm:$0xff]
        %v4974 = vld [vmem:[%s4967 + $0x30] sm:$0xff]
        %v4975 = vld [vmem:[%s4967 + $0x38] sm:$0xff]
        %v4976 = vld [vmem:[%s4967 + $0x40] sm:$0xff]
        %v4977 = vld [vmem:[%s4967 + $0x48] sm:$0xff]
        %v4978 = vld [vmem:[%s4967 + $0x50] sm:$0xff]
        %v4979 = vld [vmem:[%s4967 + $0x58] sm:$0xff]
        %v4980 = vld [vmem:[%s4967 + $0x60] sm:$0xff]
        %v4981 = vld [vmem:[%s4967 + $0x68] sm:$0xff]
        %v4982 = vld [vmem:[%s4967 + $0x70] sm:$0xff]
        %v4983 = vld [vmem:[%s4967 + $0x78] sm:$0xff]
        %4984 = vmatprep.subr.mxu0 0.0
        %4985 = vmatpush1.msra.mxu0 %v4968
        %4986 = vmatprep.subr.mxu0 0.0
        %4987 = vmatpush1.msra.mxu0 %v4969
        %4988 = vmatprep.subr.mxu0 0.0
        %4989 = vmatpush1.msra.mxu0 %v4970
        %4990 = vmatprep.subr.mxu0 0.0
        %4991 = vmatpush1.msra.mxu0 %v4971
        %4992 = vmatprep.subr.mxu0 0.0
        %4993 = vmatpush1.msra.mxu0 %v4972
        %4994 = vmatprep.subr.mxu0 0.0
        %4995 = vmatpush1.msra.mxu0 %v4973
        %4996 = vmatprep.subr.mxu0 0.0
        %4997 = vmatpush1.msra.mxu0 %v4974
        %4998 = vmatprep.subr.mxu0 0.0
        %4999 = vmatpush1.msra.mxu0 %v4975
        %5000 = vmatprep.subr.mxu0 0.0
        %5001 = vmatpush1.msra.mxu0 %v4976
        %5002 = vmatprep.subr.mxu0 0.0
        %5003 = vmatpush1.msra.mxu0 %v4977
        %5004 = vmatprep.subr.mxu0 0.0
        %5005 = vmatpush1.msra.mxu0 %v4978
        %5006 = vmatprep.subr.mxu0 0.0
        %5007 = vmatpush1.msra.mxu0 %v4979
        %5008 = vmatprep.subr.mxu0 0.0
        %5009 = vmatpush1.msra.mxu0 %v4980
        %5010 = vmatprep.subr.mxu0 0.0
        %5011 = vmatpush1.msra.mxu0 %v4981
        %5012 = vmatprep.subr.mxu0 0.0
        %5013 = vmatpush1.msra.mxu0 %v4982
        %5014 = vmatprep.subr.mxu0 0.0
        %5015 = vmatpush1.msra.mxu0 %v4983
        %5016 = vmatprep.subr.mxu0 0.0
        %5017 = vmatpush1.msra.mxu0 0.0
        %5018 = vmatprep.subr.mxu0 0.0
        %5019 = vmatpush1.msra.mxu0 0.0
        %5020 = vmatprep.subr.mxu0 0.0
        %5021 = vmatpush1.msra.mxu0 0.0
        %5022 = vmatprep.subr.mxu0 0.0
        %5023 = vmatpush1.msra.mxu0 0.0
        %5024 = vmatprep.subr.mxu0 0.0
        %5025 = vmatpush1.msra.mxu0 0.0
        %5026 = vmatprep.subr.mxu0 0.0
        %5027 = vmatpush1.msra.mxu0 0.0
        %5028 = vmatprep.subr.mxu0 0.0
        %5029 = vmatpush1.msra.mxu0 0.0
        %5030 = vmatprep.subr.mxu0 0.0
        %5031 = vmatpush1.msra.mxu0 0.0
        %5032 = vmatprep.subr.mxu0 0.0
        %5033 = vmatpush1.msra.mxu0 0.0
        %5034 = vmatprep.subr.mxu0 0.0
        %5035 = vmatpush1.msra.mxu0 0.0
        %5036 = vmatprep.subr.mxu0 0.0
        %5037 = vmatpush1.msra.mxu0 0.0
        %5038 = vmatprep.subr.mxu0 0.0
        %5039 = vmatpush1.msra.mxu0 0.0
        %5040 = vmatprep.subr.mxu0 0.0
        %5041 = vmatpush1.msra.mxu0 0.0
        %5042 = vmatprep.subr.mxu0 0.0
        %5043 = vmatpush1.msra.mxu0 0.0
        %5044 = vmatprep.subr.mxu0 0.0
        %5045 = vmatpush1.msra.mxu0 0.0
        %5046 = vmatprep.subr.mxu0 0.0
        %5047 = vmatpush1.msra.mxu0 0.0
        %5048 = vmatprep.mubr.f32.mxu0 0.0
        %5049 = vmatmul.mubr.f32.gmra.mrb[0].mxu0 %v4935
        %v5050 = vpop.f32.mrb[0].mxu0
        %v5051 = vadd.f32 0.0, %v5050
        %v5052 = vpop.f32.mrb[0].mxu0
        %5053 = vmatprep.mubr.f32.mxu0 0.0
        %5054 = vmatmul.mubr.f32.gmra.mrb[0].mxu0 %v4936
        %v5055 = vpop.f32.mrb[0].mxu0
        %v5056 = vadd.f32 0.0, %v5055
        %v5057 = vpop.f32.mrb[0].mxu0
        %5058 = vmatprep.mubr.f32.mxu0 0.0
        %5059 = vmatmul.mubr.f32.gmra.mrb[0].mxu0 %v4937
        %v5060 = vpop.f32.mrb[0].mxu0
        %v5061 = vadd.f32 0.0, %v5060
        %v5062 = vpop.f32.mrb[0].mxu0
        %5063 = vmatprep.mubr.f32.mxu0 0.0
        %5064 = vmatmul.mubr.f32.gmra.mrb[0].mxu0 %v4938
        %v5065 = vpop.f32.mrb[0].mxu0
        %v5066 = vadd.f32 0.0, %v5065
        %v5067 = vpop.f32.mrb[0].mxu0
        %5068 = vmatprep.mubr.f32.mxu0 0.0
        %5069 = vmatmul.mubr.f32.gmra.mrb[0].mxu0 %v4939
        %v5070 = vpop.f32.mrb[0].mxu0
        %v5071 = vadd.f32 0.0, %v5070
        %v5072 = vpop.f32.mrb[0].mxu0
        %5073 = vmatprep.mubr.f32.mxu0 0.0
        %5074 = vmatmul.mubr.f32.gmra.mrb[0].mxu0 %v4940
        %v5075 = vpop.f32.mrb[0].mxu0
        %v5076 = vadd.f32 0.0, %v5075
        %v5077 = vpop.f32.mrb[0].mxu0
        %5078 = vmatprep.mubr.f32.mxu0 0.0
        %5079 = vmatmul.mubr.f32.gmra.mrb[0].mxu0 %v4941
        %v5080 = vpop.f32.mrb[0].mxu0
        %v5081 = vadd.f32 0.0, %v5080
        %v5082 = vpop.f32.mrb[0].mxu0
        %5083 = vmatprep.mubr.f32.mxu0 0.0
        %5084 = vmatmul.mubr.f32.gmra.mrb[0].mxu0 %v4942
        %v5085 = vpop.f32.mrb[0].mxu0
        %v5086 = vadd.f32 0.0, %v5085
        %v5087 = vpop.f32.mrb[0].mxu0
        %5088 = vmatprep.mubr.f32.mxu0 0.0
        %5089 = vmatmul.mubr.f32.gmra.mrb[0].mxu0 %v4943
        %v5090 = vpop.f32.mrb[0].mxu0
        %v5091 = vadd.f32 0.0, %v5090
        %v5092 = vpop.f32.mrb[0].mxu0
        %5093 = vmatprep.mubr.f32.mxu0 0.0
        %5094 = vmatmul.mubr.f32.gmra.mrb[0].mxu0 %v4944
        %v5095 = vpop.f32.mrb[0].mxu0
        %v5096 = vadd.f32 0.0, %v5095
        %v5097 = vpop.f32.mrb[0].mxu0
        %5098 = vmatprep.mubr.f32.mxu0 0.0
        %5099 = vmatmul.mubr.f32.gmra.mrb[0].mxu0 %v4945
        %v5100 = vpop.f32.mrb[0].mxu0
        %v5101 = vadd.f32 0.0, %v5100
        %v5102 = vpop.f32.mrb[0].mxu0
        %5103 = vmatprep.mubr.f32.mxu0 0.0
        %5104 = vmatmul.mubr.f32.gmra.mrb[0].mxu0 %v4946
        %v5105 = vpop.f32.mrb[0].mxu0
        %v5106 = vadd.f32 0.0, %v5105
        %v5107 = vpop.f32.mrb[0].mxu0
        %5108 = vmatprep.mubr.f32.mxu0 0.0
        %5109 = vmatmul.mubr.f32.gmra.mrb[0].mxu0 %v4947
        %v5110 = vpop.f32.mrb[0].mxu0
        %v5111 = vadd.f32 0.0, %v5110
        %v5112 = vpop.f32.mrb[0].mxu0
        %5113 = vmatprep.mubr.f32.mxu0 0.0
        %5114 = vmatmul.mubr.f32.gmra.mrb[0].mxu0 %v4948
        %v5115 = vpop.f32.mrb[0].mxu0
        %v5116 = vadd.f32 0.0, %v5115
        %v5117 = vpop.f32.mrb[0].mxu0
        %5118 = vmatprep.mubr.f32.mxu0 0.0
        %5119 = vmatmul.mubr.f32.gmra.mrb[0].mxu0 %v4949
        %v5120 = vpop.f32.mrb[0].mxu0
        %v5121 = vadd.f32 0.0, %v5120
        %v5122 = vpop.f32.mrb[0].mxu0
        %5123 = vmatprep.mubr.f32.mxu0 0.0
        %5124 = vmatmul.mubr.f32.gmra.mrb[0].mxu0 %v4950
        %v5125 = vpop.f32.mrb[0].mxu0
        %v5126 = vadd.f32 0.0, %v5125
        %v5127 = vpop.f32.mrb[0].mxu0
        %5128 = vmatprep.mubr.f32.mxu0 0.0
        %5129 = vmatmul.mubr.f32.gmra.mrb[0].mxu0 %v4951
        %v5130 = vpop.f32.mrb[0].mxu0
        %v5131 = vadd.f32 0.0, %v5130
        %v5132 = vpop.f32.mrb[0].mxu0
        %5133 = vmatprep.mubr.f32.mxu0 0.0
        %5134 = vmatmul.mubr.f32.gmra.mrb[0].mxu0 %v4952
        %v5135 = vpop.f32.mrb[0].mxu0
        %v5136 = vadd.f32 0.0, %v5135
        %v5137 = vpop.f32.mrb[0].mxu0
        %5138 = vmatprep.mubr.f32.mxu0 0.0
        %5139 = vmatmul.mubr.f32.gmra.mrb[0].mxu0 %v4953
        %v5140 = vpop.f32.mrb[0].mxu0
        %v5141 = vadd.f32 0.0, %v5140
        %v5142 = vpop.f32.mrb[0].mxu0
        %5143 = vmatprep.mubr.f32.mxu0 0.0
        %5144 = vmatmul.mubr.f32.gmra.mrb[0].mxu0 %v4954
        %v5145 = vpop.f32.mrb[0].mxu0
        %v5146 = vadd.f32 0.0, %v5145
        %v5147 = vpop.f32.mrb[0].mxu0
        %5148 = vmatprep.mubr.f32.mxu0 0.0
        %5149 = vmatmul.mubr.f32.gmra.mrb[0].mxu0 %v4955
        %v5150 = vpop.f32.mrb[0].mxu0
        %v5151 = vadd.f32 0.0, %v5150
        %v5152 = vpop.f32.mrb[0].mxu0
        %5153 = vmatprep.mubr.f32.mxu0 0.0
        %5154 = vmatmul.mubr.f32.gmra.mrb[0].mxu0 %v4956
        %v5155 = vpop.f32.mrb[0].mxu0
        %v5156 = vadd.f32 0.0, %v5155
        %v5157 = vpop.f32.mrb[0].mxu0
        %5158 = vmatprep.mubr.f32.mxu0 0.0
        %5159 = vmatmul.mubr.f32.gmra.mrb[0].mxu0 %v4957
        %v5160 = vpop.f32.mrb[0].mxu0
        %v5161 = vadd.f32 0.0, %v5160
        %v5162 = vpop.f32.mrb[0].mxu0
        %5163 = vmatprep.mubr.f32.mxu0 0.0
        %5164 = vmatmul.mubr.f32.gmra.mrb[0].mxu0 %v4958
        %v5165 = vpop.f32.mrb[0].mxu0
        %v5166 = vadd.f32 0.0, %v5165
        %v5167 = vpop.f32.mrb[0].mxu0
        %5168 = vmatprep.mubr.f32.mxu0 0.0
        %5169 = vmatmul.mubr.f32.gmra.mrb[0].mxu0 %v4959
        %v5170 = vpop.f32.mrb[0].mxu0
        %v5171 = vadd.f32 0.0, %v5170
        %v5172 = vpop.f32.mrb[0].mxu0
        %5173 = vmatprep.mubr.f32.mxu0 0.0
        %5174 = vmatmul.mubr.f32.gmra.mrb[0].mxu0 %v4960
        %v5175 = vpop.f32.mrb[0].mxu0
        %v5176 = vadd.f32 0.0, %v5175
        %v5177 = vpop.f32.mrb[0].mxu0
        %5178 = vmatprep.mubr.f32.mxu0 0.0
        %5179 = vmatmul.mubr.f32.gmra.mrb[0].mxu0 %v4961
        %v5180 = vpop.f32.mrb[0].mxu0
        %v5181 = vadd.f32 0.0, %v5180
        %v5182 = vpop.f32.mrb[0].mxu0
        %5183 = vmatprep.mubr.f32.mxu0 0.0
        %5184 = vmatmul.mubr.f32.gmra.mrb[0].mxu0 %v4962
        %v5185 = vpop.f32.mrb[0].mxu0
        %v5186 = vadd.f32 0.0, %v5185
        %v5187 = vpop.f32.mrb[0].mxu0
        %5188 = vmatprep.mubr.f32.mxu0 0.0
        %5189 = vmatmul.mubr.f32.gmra.mrb[0].mxu0 %v4963
        %v5190 = vpop.f32.mrb[0].mxu0
        %v5191 = vadd.f32 0.0, %v5190
        %v5192 = vpop.f32.mrb[0].mxu0
        %5193 = vmatprep.mubr.f32.mxu0 0.0
        %5194 = vmatmul.mubr.f32.gmra.mrb[0].mxu0 %v4964
        %v5195 = vpop.f32.mrb[0].mxu0
        %v5196 = vadd.f32 0.0, %v5195
        %v5197 = vpop.f32.mrb[0].mxu0
        %5198 = vmatprep.mubr.f32.mxu0 0.0
        %5199 = vmatmul.mubr.f32.gmra.mrb[0].mxu0 %v4965
        %v5200 = vpop.f32.mrb[0].mxu0
        %v5201 = vadd.f32 0.0, %v5200
        %v5202 = vpop.f32.mrb[0].mxu0
        %5203 = vmatprep.mubr.f32.mxu0 0.0
        %5204 = vmatmul.mubr.f32.gmra.mrb[0].mxu0 %v4966
        %v5205 = vpop.f32.mrb[0].mxu0
        %v5206 = vadd.f32 0.0, %v5205
        %v5207 = vpop.f32.mrb[0].mxu0
        %5208 = vdwg.mxu0
        %v5209 = vld [vmem:[#allocation3] sm:$0xff]
        %v5210 = vld [vmem:[#allocation3 + $0x8] sm:$0xff]
        %v5211 = vld [vmem:[#allocation3 + $0x10] sm:$0xff]
        %v5212 = vld [vmem:[#allocation3 + $0x18] sm:$0xff]
        %v5213 = vld [vmem:[#allocation3 + $0x20] sm:$0xff]
        %v5214 = vld [vmem:[#allocation3 + $0x28] sm:$0xff]
        %v5215 = vld [vmem:[#allocation3 + $0x30] sm:$0xff]
        %v5216 = vld [vmem:[#allocation3 + $0x38] sm:$0xff]
        %v5217 = vld [vmem:[#allocation3 + $0x40] sm:$0xff]
        %v5218 = vld [vmem:[#allocation3 + $0x48] sm:$0xff]
        %v5219 = vld [vmem:[#allocation3 + $0x50] sm:$0xff]
        %v5220 = vld [vmem:[#allocation3 + $0x58] sm:$0xff]
        %v5221 = vld [vmem:[#allocation3 + $0x60] sm:$0xff]
        %v5222 = vld [vmem:[#allocation3 + $0x68] sm:$0xff]
        %v5223 = vld [vmem:[#allocation3 + $0x70] sm:$0xff]
        %v5224 = vld [vmem:[#allocation3 + $0x78] sm:$0xff]
        %v5225 = vld [vmem:[#allocation3 + $0x80] sm:$0xff]
        %v5226 = vld [vmem:[#allocation3 + $0x88] sm:$0xff]
        %v5227 = vld [vmem:[#allocation3 + $0x90] sm:$0xff]
        %v5228 = vld [vmem:[#allocation3 + $0x98] sm:$0xff]
        %v5229 = vld [vmem:[#allocation3 + $0xa0] sm:$0xff]
        %v5230 = vld [vmem:[#allocation3 + $0xa8] sm:$0xff]
        %v5231 = vld [vmem:[#allocation3 + $0xb0] sm:$0xff]
        %v5232 = vld [vmem:[#allocation3 + $0xb8] sm:$0xff]
        %v5233 = vld [vmem:[#allocation3 + $0xc0] sm:$0xff]
        %v5234 = vld [vmem:[#allocation3 + $0xc8] sm:$0xff]
        %v5235 = vld [vmem:[#allocation3 + $0xd0] sm:$0xff]
        %v5236 = vld [vmem:[#allocation3 + $0xd8] sm:$0xff]
        %v5237 = vld [vmem:[#allocation3 + $0xe0] sm:$0xff]
        %v5238 = vld [vmem:[#allocation3 + $0xe8] sm:$0xff]
        %v5239 = vld [vmem:[#allocation3 + $0xf0] sm:$0xff]
        %v5240 = vld [vmem:[#allocation3 + $0xf8] sm:$0xff]
        %v5241 = vadd.f32 %v5209, %v5051
        %v5242 = vadd.f32 %v5210, %v5056
        %v5243 = vadd.f32 %v5211, %v5061
        %v5244 = vadd.f32 %v5212, %v5066
        %v5245 = vadd.f32 %v5213, %v5071
        %v5246 = vadd.f32 %v5214, %v5076
        %v5247 = vadd.f32 %v5215, %v5081
        %v5248 = vadd.f32 %v5216, %v5086
        %v5249 = vadd.f32 %v5217, %v5091
        %v5250 = vadd.f32 %v5218, %v5096
        %v5251 = vadd.f32 %v5219, %v5101
        %v5252 = vadd.f32 %v5220, %v5106
        %v5253 = vadd.f32 %v5221, %v5111
        %v5254 = vadd.f32 %v5222, %v5116
        %v5255 = vadd.f32 %v5223, %v5121
        %v5256 = vadd.f32 %v5224, %v5126
        %v5257 = vadd.f32 %v5225, %v5131
        %v5258 = vadd.f32 %v5226, %v5136
        %v5259 = vadd.f32 %v5227, %v5141
        %v5260 = vadd.f32 %v5228, %v5146
        %v5261 = vadd.f32 %v5229, %v5151
        %v5262 = vadd.f32 %v5230, %v5156
        %v5263 = vadd.f32 %v5231, %v5161
        %v5264 = vadd.f32 %v5232, %v5166
        %v5265 = vadd.f32 %v5233, %v5171
        %v5266 = vadd.f32 %v5234, %v5176
        %v5267 = vadd.f32 %v5235, %v5181
        %v5268 = vadd.f32 %v5236, %v5186
        %v5269 = vadd.f32 %v5237, %v5191
        %v5270 = vadd.f32 %v5238, %v5196
        %v5271 = vadd.f32 %v5239, %v5201
        %v5272 = vadd.f32 %v5240, %v5206
        %5273 = vst [vmem:[#allocation3] sm:$0xff] %v5241
        %5274 = vst [vmem:[#allocation3 + $0x8] sm:$0xff] %v5242
        %5275 = vst [vmem:[#allocation3 + $0x10] sm:$0xff] %v5243
        %5276 = vst [vmem:[#allocation3 + $0x18] sm:$0xff] %v5244
        %5277 = vst [vmem:[#allocation3 + $0x20] sm:$0xff] %v5245
        %5278 = vst [vmem:[#allocation3 + $0x28] sm:$0xff] %v5246
        %5279 = vst [vmem:[#allocation3 + $0x30] sm:$0xff] %v5247
        %5280 = vst [vmem:[#allocation3 + $0x38] sm:$0xff] %v5248
        %5281 = vst [vmem:[#allocation3 + $0x40] sm:$0xff] %v5249
        %5282 = vst [vmem:[#allocation3 + $0x48] sm:$0xff] %v5250
        %5283 = vst [vmem:[#allocation3 + $0x50] sm:$0xff] %v5251
        %5284 = vst [vmem:[#allocation3 + $0x58] sm:$0xff] %v5252
        %5285 = vst [vmem:[#allocation3 + $0x60] sm:$0xff] %v5253
        %5286 = vst [vmem:[#allocation3 + $0x68] sm:$0xff] %v5254
        %5287 = vst [vmem:[#allocation3 + $0x70] sm:$0xff] %v5255
        %5288 = vst [vmem:[#allocation3 + $0x78] sm:$0xff] %v5256
        %5289 = vst [vmem:[#allocation3 + $0x80] sm:$0xff] %v5257
        %5290 = vst [vmem:[#allocation3 + $0x88] sm:$0xff] %v5258
        %5291 = vst [vmem:[#allocation3 + $0x90] sm:$0xff] %v5259
        %5292 = vst [vmem:[#allocation3 + $0x98] sm:$0xff] %v5260
        %5293 = vst [vmem:[#allocation3 + $0xa0] sm:$0xff] %v5261
        %5294 = vst [vmem:[#allocation3 + $0xa8] sm:$0xff] %v5262
        %5295 = vst [vmem:[#allocation3 + $0xb0] sm:$0xff] %v5263
        %5296 = vst [vmem:[#allocation3 + $0xb8] sm:$0xff] %v5264
        %5297 = vst [vmem:[#allocation3 + $0xc0] sm:$0xff] %v5265
        %5298 = vst [vmem:[#allocation3 + $0xc8] sm:$0xff] %v5266
        %5299 = vst [vmem:[#allocation3 + $0xd0] sm:$0xff] %v5267
        %5300 = vst [vmem:[#allocation3 + $0xd8] sm:$0xff] %v5268
        %5301 = vst [vmem:[#allocation3 + $0xe0] sm:$0xff] %v5269
        %5302 = vst [vmem:[#allocation3 + $0xe8] sm:$0xff] %v5270
        %5303 = vst [vmem:[#allocation3 + $0xf0] sm:$0xff] %v5271
        %5304 = vst [vmem:[#allocation3 + $0xf8] sm:$0xff] %v5272
        %v5305 = vld [vmem:[%s3857 + $0x8] sm:$0xff]
        %v5306 = vld [vmem:[%s3857 + $0x10] sm:$0xff]
        %v5307 = vld [vmem:[%s3857 + $0x28] sm:$0xff]
        %v5308 = vld [vmem:[%s3857 + $0x30] sm:$0xff]
        %v5309 = vld [vmem:[%s3857 + $0x48] sm:$0xff]
        %v5310 = vld [vmem:[%s3857 + $0x50] sm:$0xff]
        %v5311 = vld [vmem:[%s3857 + $0x68] sm:$0xff]
        %v5312 = vld [vmem:[%s3857 + $0x70] sm:$0xff]
        %v5313 = vld [vmem:[%s3857 + $0x88] sm:$0xff]
        %v5314 = vld [vmem:[%s3857 + $0x90] sm:$0xff]
        %v5315 = vld [vmem:[%s3857 + $0xa8] sm:$0xff]
        %v5316 = vld [vmem:[%s3857 + $0xb0] sm:$0xff]
        %v5317 = vld [vmem:[%s3857 + $0xc8] sm:$0xff]
        %v5318 = vld [vmem:[%s3857 + $0xd0] sm:$0xff]
        %v5319 = vld [vmem:[%s3857 + $0xe8] sm:$0xff]
        %v5320 = vld [vmem:[%s3857 + $0xf0] sm:$0xff]
        %v5321 = vld [vmem:[%s3857 + $0x108] sm:$0xff]
        %v5322 = vld [vmem:[%s3857 + $0x110] sm:$0xff]
        %v5323 = vld [vmem:[%s3857 + $0x128] sm:$0xff]
        %v5324 = vld [vmem:[%s3857 + $0x130] sm:$0xff]
        %v5325 = vld [vmem:[%s3857 + $0x148] sm:$0xff]
        %v5326 = vld [vmem:[%s3857 + $0x150] sm:$0xff]
        %v5327 = vld [vmem:[%s3857 + $0x168] sm:$0xff]
        %v5328 = vld [vmem:[%s3857 + $0x170] sm:$0xff]
        %v5329 = vld [vmem:[%s3857 + $0x188] sm:$0xff]
        %v5330 = vld [vmem:[%s3857 + $0x190] sm:$0xff]
        %v5331 = vld [vmem:[%s3857 + $0x1a8] sm:$0xff]
        %v5332 = vld [vmem:[%s3857 + $0x1b0] sm:$0xff]
        %v5333 = vld [vmem:[%s3857 + $0x1c8] sm:$0xff]
        %v5334 = vld [vmem:[%s3857 + $0x1d0] sm:$0xff]
        %v5335 = vld [vmem:[%s3857 + $0x1e8] sm:$0xff]
        %v5336 = vld [vmem:[%s3857 + $0x1f0] sm:$0xff]
        %s5337 = scalar_lea.vmem [#allocation12], 512
        %v5338 = vld [vmem:[%s5337] sm:$0xff]
        %v5339 = vld [vmem:[%s5337 + $0x8] sm:$0xff]
        %v5340 = vld [vmem:[%s5337 + $0x10] sm:$0xff]
        %v5341 = vld [vmem:[%s5337 + $0x18] sm:$0xff]
        %v5342 = vld [vmem:[%s5337 + $0x20] sm:$0xff]
        %v5343 = vld [vmem:[%s5337 + $0x28] sm:$0xff]
        %v5344 = vld [vmem:[%s5337 + $0x30] sm:$0xff]
        %v5345 = vld [vmem:[%s5337 + $0x38] sm:$0xff]
        %v5346 = vld [vmem:[%s5337 + $0x40] sm:$0xff]
        %v5347 = vld [vmem:[%s5337 + $0x48] sm:$0xff]
        %v5348 = vld [vmem:[%s5337 + $0x50] sm:$0xff]
        %v5349 = vld [vmem:[%s5337 + $0x58] sm:$0xff]
        %v5350 = vld [vmem:[%s5337 + $0x60] sm:$0xff]
        %v5351 = vld [vmem:[%s5337 + $0x68] sm:$0xff]
        %v5352 = vld [vmem:[%s5337 + $0x70] sm:$0xff]
        %v5353 = vld [vmem:[%s5337 + $0x78] sm:$0xff]
        %5354 = vmatprep.subr.mxu0 0.0
        %5355 = vmatpush1.msra.mxu0 %v5338
        %5356 = vmatprep.subr.mxu0 0.0
        %5357 = vmatpush1.msra.mxu0 %v5339
        %5358 = vmatprep.subr.mxu0 0.0
        %5359 = vmatpush1.msra.mxu0 %v5340
        %5360 = vmatprep.subr.mxu0 0.0
        %5361 = vmatpush1.msra.mxu0 %v5341
        %5362 = vmatprep.subr.mxu0 0.0
        %5363 = vmatpush1.msra.mxu0 %v5342
        %5364 = vmatprep.subr.mxu0 0.0
        %5365 = vmatpush1.msra.mxu0 %v5343
        %5366 = vmatprep.subr.mxu0 0.0
        %5367 = vmatpush1.msra.mxu0 %v5344
        %5368 = vmatprep.subr.mxu0 0.0
        %5369 = vmatpush1.msra.mxu0 %v5345
        %5370 = vmatprep.subr.mxu0 0.0
        %5371 = vmatpush1.msra.mxu0 %v5346
        %5372 = vmatprep.subr.mxu0 0.0
        %5373 = vmatpush1.msra.mxu0 %v5347
        %5374 = vmatprep.subr.mxu0 0.0
        %5375 = vmatpush1.msra.mxu0 %v5348
        %5376 = vmatprep.subr.mxu0 0.0
        %5377 = vmatpush1.msra.mxu0 %v5349
        %5378 = vmatprep.subr.mxu0 0.0
        %5379 = vmatpush1.msra.mxu0 %v5350
        %5380 = vmatprep.subr.mxu0 0.0
        %5381 = vmatpush1.msra.mxu0 %v5351
        %5382 = vmatprep.subr.mxu0 0.0
        %5383 = vmatpush1.msra.mxu0 %v5352
        %5384 = vmatprep.subr.mxu0 0.0
        %5385 = vmatpush1.msra.mxu0 %v5353
        %5386 = vmatprep.subr.mxu0 0.0
        %5387 = vmatpush1.msra.mxu0 0.0
        %5388 = vmatprep.subr.mxu0 0.0
        %5389 = vmatpush1.msra.mxu0 0.0
        %5390 = vmatprep.subr.mxu0 0.0
        %5391 = vmatpush1.msra.mxu0 0.0
        %5392 = vmatprep.subr.mxu0 0.0
        %5393 = vmatpush1.msra.mxu0 0.0
        %5394 = vmatprep.subr.mxu0 0.0
        %5395 = vmatpush1.msra.mxu0 0.0
        %5396 = vmatprep.subr.mxu0 0.0
        %5397 = vmatpush1.msra.mxu0 0.0
        %5398 = vmatprep.subr.mxu0 0.0
        %5399 = vmatpush1.msra.mxu0 0.0
        %5400 = vmatprep.subr.mxu0 0.0
        %5401 = vmatpush1.msra.mxu0 0.0
        %5402 = vmatprep.subr.mxu0 0.0
        %5403 = vmatpush1.msra.mxu0 0.0
        %5404 = vmatprep.subr.mxu0 0.0
        %5405 = vmatpush1.msra.mxu0 0.0
        %5406 = vmatprep.subr.mxu0 0.0
        %5407 = vmatpush1.msra.mxu0 0.0
        %5408 = vmatprep.subr.mxu0 0.0
        %5409 = vmatpush1.msra.mxu0 0.0
        %5410 = vmatprep.subr.mxu0 0.0
        %5411 = vmatpush1.msra.mxu0 0.0
        %5412 = vmatprep.subr.mxu0 0.0
        %5413 = vmatpush1.msra.mxu0 0.0
        %5414 = vmatprep.subr.mxu0 0.0
        %5415 = vmatpush1.msra.mxu0 0.0
        %5416 = vmatprep.subr.mxu0 0.0
        %5417 = vmatpush1.msra.mxu0 0.0
        %5418 = vmatprep.mubr.f32.mxu0 0.0
        %5419 = vmatmul.mubr.f32.gmra.mrb[0].mxu0 %v5305
        %v5420 = vpop.f32.mrb[0].mxu0
        %v5421 = vadd.f32 0.0, %v5420
        %v5422 = vpop.f32.mrb[0].mxu0
        %5423 = vmatprep.mubr.f32.mxu0 0.0
        %5424 = vmatmul.mubr.f32.gmra.mrb[0].mxu0 %v5306
        %v5425 = vpop.f32.mrb[0].mxu0
        %v5426 = vadd.f32 0.0, %v5425
        %v5427 = vpop.f32.mrb[0].mxu0
        %5428 = vmatprep.mubr.f32.mxu0 0.0
        %5429 = vmatmul.mubr.f32.gmra.mrb[0].mxu0 %v5307
        %v5430 = vpop.f32.mrb[0].mxu0
        %v5431 = vadd.f32 0.0, %v5430
        %v5432 = vpop.f32.mrb[0].mxu0
        %5433 = vmatprep.mubr.f32.mxu0 0.0
        %5434 = vmatmul.mubr.f32.gmra.mrb[0].mxu0 %v5308
        %v5435 = vpop.f32.mrb[0].mxu0
        %v5436 = vadd.f32 0.0, %v5435
        %v5437 = vpop.f32.mrb[0].mxu0
        %5438 = vmatprep.mubr.f32.mxu0 0.0
        %5439 = vmatmul.mubr.f32.gmra.mrb[0].mxu0 %v5309
        %v5440 = vpop.f32.mrb[0].mxu0
        %v5441 = vadd.f32 0.0, %v5440
        %v5442 = vpop.f32.mrb[0].mxu0
        %5443 = vmatprep.mubr.f32.mxu0 0.0
        %5444 = vmatmul.mubr.f32.gmra.mrb[0].mxu0 %v5310
        %v5445 = vpop.f32.mrb[0].mxu0
        %v5446 = vadd.f32 0.0, %v5445
        %v5447 = vpop.f32.mrb[0].mxu0
        %5448 = vmatprep.mubr.f32.mxu0 0.0
        %5449 = vmatmul.mubr.f32.gmra.mrb[0].mxu0 %v5311
        %v5450 = vpop.f32.mrb[0].mxu0
        %v5451 = vadd.f32 0.0, %v5450
        %v5452 = vpop.f32.mrb[0].mxu0
        %5453 = vmatprep.mubr.f32.mxu0 0.0
        %5454 = vmatmul.mubr.f32.gmra.mrb[0].mxu0 %v5312
        %v5455 = vpop.f32.mrb[0].mxu0
        %v5456 = vadd.f32 0.0, %v5455
        %v5457 = vpop.f32.mrb[0].mxu0
        %5458 = vmatprep.mubr.f32.mxu0 0.0
        %5459 = vmatmul.mubr.f32.gmra.mrb[0].mxu0 %v5313
        %v5460 = vpop.f32.mrb[0].mxu0
        %v5461 = vadd.f32 0.0, %v5460
        %v5462 = vpop.f32.mrb[0].mxu0
        %5463 = vmatprep.mubr.f32.mxu0 0.0
        %5464 = vmatmul.mubr.f32.gmra.mrb[0].mxu0 %v5314
        %v5465 = vpop.f32.mrb[0].mxu0
        %v5466 = vadd.f32 0.0, %v5465
        %v5467 = vpop.f32.mrb[0].mxu0
        %5468 = vmatprep.mubr.f32.mxu0 0.0
        %5469 = vmatmul.mubr.f32.gmra.mrb[0].mxu0 %v5315
        %v5470 = vpop.f32.mrb[0].mxu0
        %v5471 = vadd.f32 0.0, %v5470
        %v5472 = vpop.f32.mrb[0].mxu0
        %5473 = vmatprep.mubr.f32.mxu0 0.0
        %5474 = vmatmul.mubr.f32.gmra.mrb[0].mxu0 %v5316
        %v5475 = vpop.f32.mrb[0].mxu0
        %v5476 = vadd.f32 0.0, %v5475
        %v5477 = vpop.f32.mrb[0].mxu0
        %5478 = vmatprep.mubr.f32.mxu0 0.0
        %5479 = vmatmul.mubr.f32.gmra.mrb[0].mxu0 %v5317
        %v5480 = vpop.f32.mrb[0].mxu0
        %v5481 = vadd.f32 0.0, %v5480
        %v5482 = vpop.f32.mrb[0].mxu0
        %5483 = vmatprep.mubr.f32.mxu0 0.0
        %5484 = vmatmul.mubr.f32.gmra.mrb[0].mxu0 %v5318
        %v5485 = vpop.f32.mrb[0].mxu0
        %v5486 = vadd.f32 0.0, %v5485
        %v5487 = vpop.f32.mrb[0].mxu0
        %5488 = vmatprep.mubr.f32.mxu0 0.0
        %5489 = vmatmul.mubr.f32.gmra.mrb[0].mxu0 %v5319
        %v5490 = vpop.f32.mrb[0].mxu0
        %v5491 = vadd.f32 0.0, %v5490
        %v5492 = vpop.f32.mrb[0].mxu0
        %5493 = vmatprep.mubr.f32.mxu0 0.0
        %5494 = vmatmul.mubr.f32.gmra.mrb[0].mxu0 %v5320
        %v5495 = vpop.f32.mrb[0].mxu0
        %v5496 = vadd.f32 0.0, %v5495
        %v5497 = vpop.f32.mrb[0].mxu0
        %5498 = vmatprep.mubr.f32.mxu0 0.0
        %5499 = vmatmul.mubr.f32.gmra.mrb[0].mxu0 %v5321
        %v5500 = vpop.f32.mrb[0].mxu0
        %v5501 = vadd.f32 0.0, %v5500
        %v5502 = vpop.f32.mrb[0].mxu0
        %5503 = vmatprep.mubr.f32.mxu0 0.0
        %5504 = vmatmul.mubr.f32.gmra.mrb[0].mxu0 %v5322
        %v5505 = vpop.f32.mrb[0].mxu0
        %v5506 = vadd.f32 0.0, %v5505
        %v5507 = vpop.f32.mrb[0].mxu0
        %5508 = vmatprep.mubr.f32.mxu0 0.0
        %5509 = vmatmul.mubr.f32.gmra.mrb[0].mxu0 %v5323
        %v5510 = vpop.f32.mrb[0].mxu0
        %v5511 = vadd.f32 0.0, %v5510
        %v5512 = vpop.f32.mrb[0].mxu0
        %5513 = vmatprep.mubr.f32.mxu0 0.0
        %5514 = vmatmul.mubr.f32.gmra.mrb[0].mxu0 %v5324
        %v5515 = vpop.f32.mrb[0].mxu0
        %v5516 = vadd.f32 0.0, %v5515
        %v5517 = vpop.f32.mrb[0].mxu0
        %5518 = vmatprep.mubr.f32.mxu0 0.0
        %5519 = vmatmul.mubr.f32.gmra.mrb[0].mxu0 %v5325
        %v5520 = vpop.f32.mrb[0].mxu0
        %v5521 = vadd.f32 0.0, %v5520
        %v5522 = vpop.f32.mrb[0].mxu0
        %5523 = vmatprep.mubr.f32.mxu0 0.0
        %5524 = vmatmul.mubr.f32.gmra.mrb[0].mxu0 %v5326
        %v5525 = vpop.f32.mrb[0].mxu0
        %v5526 = vadd.f32 0.0, %v5525
        %v5527 = vpop.f32.mrb[0].mxu0
        %5528 = vmatprep.mubr.f32.mxu0 0.0
        %5529 = vmatmul.mubr.f32.gmra.mrb[0].mxu0 %v5327
        %v5530 = vpop.f32.mrb[0].mxu0
        %v5531 = vadd.f32 0.0, %v5530
        %v5532 = vpop.f32.mrb[0].mxu0
        %5533 = vmatprep.mubr.f32.mxu0 0.0
        %5534 = vmatmul.mubr.f32.gmra.mrb[0].mxu0 %v5328
        %v5535 = vpop.f32.mrb[0].mxu0
        %v5536 = vadd.f32 0.0, %v5535
        %v5537 = vpop.f32.mrb[0].mxu0
        %5538 = vmatprep.mubr.f32.mxu0 0.0
        %5539 = vmatmul.mubr.f32.gmra.mrb[0].mxu0 %v5329
        %v5540 = vpop.f32.mrb[0].mxu0
        %v5541 = vadd.f32 0.0, %v5540
        %v5542 = vpop.f32.mrb[0].mxu0
        %5543 = vmatprep.mubr.f32.mxu0 0.0
        %5544 = vmatmul.mubr.f32.gmra.mrb[0].mxu0 %v5330
        %v5545 = vpop.f32.mrb[0].mxu0
        %v5546 = vadd.f32 0.0, %v5545
        %v5547 = vpop.f32.mrb[0].mxu0
        %5548 = vmatprep.mubr.f32.mxu0 0.0
        %5549 = vmatmul.mubr.f32.gmra.mrb[0].mxu0 %v5331
        %v5550 = vpop.f32.mrb[0].mxu0
        %v5551 = vadd.f32 0.0, %v5550
        %v5552 = vpop.f32.mrb[0].mxu0
        %5553 = vmatprep.mubr.f32.mxu0 0.0
        %5554 = vmatmul.mubr.f32.gmra.mrb[0].mxu0 %v5332
        %v5555 = vpop.f32.mrb[0].mxu0
        %v5556 = vadd.f32 0.0, %v5555
        %v5557 = vpop.f32.mrb[0].mxu0
        %5558 = vmatprep.mubr.f32.mxu0 0.0
        %5559 = vmatmul.mubr.f32.gmra.mrb[0].mxu0 %v5333
        %v5560 = vpop.f32.mrb[0].mxu0
        %v5561 = vadd.f32 0.0, %v5560
        %v5562 = vpop.f32.mrb[0].mxu0
        %5563 = vmatprep.mubr.f32.mxu0 0.0
        %5564 = vmatmul.mubr.f32.gmra.mrb[0].mxu0 %v5334
        %v5565 = vpop.f32.mrb[0].mxu0
        %v5566 = vadd.f32 0.0, %v5565
        %v5567 = vpop.f32.mrb[0].mxu0
        %5568 = vmatprep.mubr.f32.mxu0 0.0
        %5569 = vmatmul.mubr.f32.gmra.mrb[0].mxu0 %v5335
        %v5570 = vpop.f32.mrb[0].mxu0
        %v5571 = vadd.f32 0.0, %v5570
        %v5572 = vpop.f32.mrb[0].mxu0
        %5573 = vmatprep.mubr.f32.mxu0 0.0
        %5574 = vmatmul.mubr.f32.gmra.mrb[0].mxu0 %v5336
        %v5575 = vpop.f32.mrb[0].mxu0
        %v5576 = vadd.f32 0.0, %v5575
        %v5577 = vpop.f32.mrb[0].mxu0
        %5578 = vdwg.mxu0
        %v5579 = vld [vmem:[#allocation3] sm:$0xff]
        %v5580 = vld [vmem:[#allocation3 + $0x8] sm:$0xff]
        %v5581 = vld [vmem:[#allocation3 + $0x10] sm:$0xff]
        %v5582 = vld [vmem:[#allocation3 + $0x18] sm:$0xff]
        %v5583 = vld [vmem:[#allocation3 + $0x20] sm:$0xff]
        %v5584 = vld [vmem:[#allocation3 + $0x28] sm:$0xff]
        %v5585 = vld [vmem:[#allocation3 + $0x30] sm:$0xff]
        %v5586 = vld [vmem:[#allocation3 + $0x38] sm:$0xff]
        %v5587 = vld [vmem:[#allocation3 + $0x40] sm:$0xff]
        %v5588 = vld [vmem:[#allocation3 + $0x48] sm:$0xff]
        %v5589 = vld [vmem:[#allocation3 + $0x50] sm:$0xff]
        %v5590 = vld [vmem:[#allocation3 + $0x58] sm:$0xff]
        %v5591 = vld [vmem:[#allocation3 + $0x60] sm:$0xff]
        %v5592 = vld [vmem:[#allocation3 + $0x68] sm:$0xff]
        %v5593 = vld [vmem:[#allocation3 + $0x70] sm:$0xff]
        %v5594 = vld [vmem:[#allocation3 + $0x78] sm:$0xff]
        %v5595 = vld [vmem:[#allocation3 + $0x80] sm:$0xff]
        %v5596 = vld [vmem:[#allocation3 + $0x88] sm:$0xff]
        %v5597 = vld [vmem:[#allocation3 + $0x90] sm:$0xff]
        %v5598 = vld [vmem:[#allocation3 + $0x98] sm:$0xff]
        %v5599 = vld [vmem:[#allocation3 + $0xa0] sm:$0xff]
        %v5600 = vld [vmem:[#allocation3 + $0xa8] sm:$0xff]
        %v5601 = vld [vmem:[#allocation3 + $0xb0] sm:$0xff]
        %v5602 = vld [vmem:[#allocation3 + $0xb8] sm:$0xff]
        %v5603 = vld [vmem:[#allocation3 + $0xc0] sm:$0xff]
        %v5604 = vld [vmem:[#allocation3 + $0xc8] sm:$0xff]
        %v5605 = vld [vmem:[#allocation3 + $0xd0] sm:$0xff]
        %v5606 = vld [vmem:[#allocation3 + $0xd8] sm:$0xff]
        %v5607 = vld [vmem:[#allocation3 + $0xe0] sm:$0xff]
        %v5608 = vld [vmem:[#allocation3 + $0xe8] sm:$0xff]
        %v5609 = vld [vmem:[#allocation3 + $0xf0] sm:$0xff]
        %v5610 = vld [vmem:[#allocation3 + $0xf8] sm:$0xff]
        %v5611 = vadd.f32 %v5579, %v5421
        %v5612 = vadd.f32 %v5580, %v5426
        %v5613 = vadd.f32 %v5581, %v5431
        %v5614 = vadd.f32 %v5582, %v5436
        %v5615 = vadd.f32 %v5583, %v5441
        %v5616 = vadd.f32 %v5584, %v5446
        %v5617 = vadd.f32 %v5585, %v5451
        %v5618 = vadd.f32 %v5586, %v5456
        %v5619 = vadd.f32 %v5587, %v5461
        %v5620 = vadd.f32 %v5588, %v5466
        %v5621 = vadd.f32 %v5589, %v5471
        %v5622 = vadd.f32 %v5590, %v5476
        %v5623 = vadd.f32 %v5591, %v5481
        %v5624 = vadd.f32 %v5592, %v5486
        %v5625 = vadd.f32 %v5593, %v5491
        %v5626 = vadd.f32 %v5594, %v5496
        %v5627 = vadd.f32 %v5595, %v5501
        %v5628 = vadd.f32 %v5596, %v5506
        %v5629 = vadd.f32 %v5597, %v5511
        %v5630 = vadd.f32 %v5598, %v5516
        %v5631 = vadd.f32 %v5599, %v5521
        %v5632 = vadd.f32 %v5600, %v5526
        %v5633 = vadd.f32 %v5601, %v5531
        %v5634 = vadd.f32 %v5602, %v5536
        %v5635 = vadd.f32 %v5603, %v5541
        %v5636 = vadd.f32 %v5604, %v5546
        %v5637 = vadd.f32 %v5605, %v5551
        %v5638 = vadd.f32 %v5606, %v5556
        %v5639 = vadd.f32 %v5607, %v5561
        %v5640 = vadd.f32 %v5608, %v5566
        %v5641 = vadd.f32 %v5609, %v5571
        %v5642 = vadd.f32 %v5610, %v5576
        %5643 = vst [vmem:[#allocation3] sm:$0xff] %v5611
        %5644 = vst [vmem:[#allocation3 + $0x8] sm:$0xff] %v5612
        %5645 = vst [vmem:[#allocation3 + $0x10] sm:$0xff] %v5613
        %5646 = vst [vmem:[#allocation3 + $0x18] sm:$0xff] %v5614
        %5647 = vst [vmem:[#allocation3 + $0x20] sm:$0xff] %v5615
        %5648 = vst [vmem:[#allocation3 + $0x28] sm:$0xff] %v5616
        %5649 = vst [vmem:[#allocation3 + $0x30] sm:$0xff] %v5617
        %5650 = vst [vmem:[#allocation3 + $0x38] sm:$0xff] %v5618
        %5651 = vst [vmem:[#allocation3 + $0x40] sm:$0xff] %v5619
        %5652 = vst [vmem:[#allocation3 + $0x48] sm:$0xff] %v5620
        %5653 = vst [vmem:[#allocation3 + $0x50] sm:$0xff] %v5621
        %5654 = vst [vmem:[#allocation3 + $0x58] sm:$0xff] %v5622
        %5655 = vst [vmem:[#allocation3 + $0x60] sm:$0xff] %v5623
        %5656 = vst [vmem:[#allocation3 + $0x68] sm:$0xff] %v5624
        %5657 = vst [vmem:[#allocation3 + $0x70] sm:$0xff] %v5625
        %5658 = vst [vmem:[#allocation3 + $0x78] sm:$0xff] %v5626
        %5659 = vst [vmem:[#allocation3 + $0x80] sm:$0xff] %v5627
        %5660 = vst [vmem:[#allocation3 + $0x88] sm:$0xff] %v5628
        %5661 = vst [vmem:[#allocation3 + $0x90] sm:$0xff] %v5629
        %5662 = vst [vmem:[#allocation3 + $0x98] sm:$0xff] %v5630
        %5663 = vst [vmem:[#allocation3 + $0xa0] sm:$0xff] %v5631
        %5664 = vst [vmem:[#allocation3 + $0xa8] sm:$0xff] %v5632
        %5665 = vst [vmem:[#allocation3 + $0xb0] sm:$0xff] %v5633
        %5666 = vst [vmem:[#allocation3 + $0xb8] sm:$0xff] %v5634
        %5667 = vst [vmem:[#allocation3 + $0xc0] sm:$0xff] %v5635
        %5668 = vst [vmem:[#allocation3 + $0xc8] sm:$0xff] %v5636
        %5669 = vst [vmem:[#allocation3 + $0xd0] sm:$0xff] %v5637
        %5670 = vst [vmem:[#allocation3 + $0xd8] sm:$0xff] %v5638
        %5671 = vst [vmem:[#allocation3 + $0xe0] sm:$0xff] %v5639
        %5672 = vst [vmem:[#allocation3 + $0xe8] sm:$0xff] %v5640
        %5673 = vst [vmem:[#allocation3 + $0xf0] sm:$0xff] %v5641
        %5674 = vst [vmem:[#allocation3 + $0xf8] sm:$0xff] %v5642
        %v5675 = vld [vmem:[%s3857 + $0x9] sm:$0xff]
        %v5676 = vld [vmem:[%s3857 + $0x11] sm:$0xff]
        %v5677 = vld [vmem:[%s3857 + $0x29] sm:$0xff]
        %v5678 = vld [vmem:[%s3857 + $0x31] sm:$0xff]
        %v5679 = vld [vmem:[%s3857 + $0x49] sm:$0xff]
        %v5680 = vld [vmem:[%s3857 + $0x51] sm:$0xff]
        %v5681 = vld [vmem:[%s3857 + $0x69] sm:$0xff]
        %v5682 = vld [vmem:[%s3857 + $0x71] sm:$0xff]
        %v5683 = vld [vmem:[%s3857 + $0x89] sm:$0xff]
        %v5684 = vld [vmem:[%s3857 + $0x91] sm:$0xff]
        %v5685 = vld [vmem:[%s3857 + $0xa9] sm:$0xff]
        %v5686 = vld [vmem:[%s3857 + $0xb1] sm:$0xff]
        %v5687 = vld [vmem:[%s3857 + $0xc9] sm:$0xff]
        %v5688 = vld [vmem:[%s3857 + $0xd1] sm:$0xff]
        %v5689 = vld [vmem:[%s3857 + $0xe9] sm:$0xff]
        %v5690 = vld [vmem:[%s3857 + $0xf1] sm:$0xff]
        %v5691 = vld [vmem:[%s3857 + $0x109] sm:$0xff]
        %v5692 = vld [vmem:[%s3857 + $0x111] sm:$0xff]
        %v5693 = vld [vmem:[%s3857 + $0x129] sm:$0xff]
        %v5694 = vld [vmem:[%s3857 + $0x131] sm:$0xff]
        %v5695 = vld [vmem:[%s3857 + $0x149] sm:$0xff]
        %v5696 = vld [vmem:[%s3857 + $0x151] sm:$0xff]
        %v5697 = vld [vmem:[%s3857 + $0x169] sm:$0xff]
        %v5698 = vld [vmem:[%s3857 + $0x171] sm:$0xff]
        %v5699 = vld [vmem:[%s3857 + $0x189] sm:$0xff]
        %v5700 = vld [vmem:[%s3857 + $0x191] sm:$0xff]
        %v5701 = vld [vmem:[%s3857 + $0x1a9] sm:$0xff]
        %v5702 = vld [vmem:[%s3857 + $0x1b1] sm:$0xff]
        %v5703 = vld [vmem:[%s3857 + $0x1c9] sm:$0xff]
        %v5704 = vld [vmem:[%s3857 + $0x1d1] sm:$0xff]
        %v5705 = vld [vmem:[%s3857 + $0x1e9] sm:$0xff]
        %v5706 = vld [vmem:[%s3857 + $0x1f1] sm:$0xff]
        %s5707 = scalar_lea.vmem [#allocation12], 640
        %v5708 = vld [vmem:[%s5707] sm:$0xff]
        %v5709 = vld [vmem:[%s5707 + $0x8] sm:$0xff]
        %v5710 = vld [vmem:[%s5707 + $0x10] sm:$0xff]
        %v5711 = vld [vmem:[%s5707 + $0x18] sm:$0xff]
        %v5712 = vld [vmem:[%s5707 + $0x20] sm:$0xff]
        %v5713 = vld [vmem:[%s5707 + $0x28] sm:$0xff]
        %v5714 = vld [vmem:[%s5707 + $0x30] sm:$0xff]
        %v5715 = vld [vmem:[%s5707 + $0x38] sm:$0xff]
        %v5716 = vld [vmem:[%s5707 + $0x40] sm:$0xff]
        %v5717 = vld [vmem:[%s5707 + $0x48] sm:$0xff]
        %v5718 = vld [vmem:[%s5707 + $0x50] sm:$0xff]
        %v5719 = vld [vmem:[%s5707 + $0x58] sm:$0xff]
        %v5720 = vld [vmem:[%s5707 + $0x60] sm:$0xff]
        %v5721 = vld [vmem:[%s5707 + $0x68] sm:$0xff]
        %v5722 = vld [vmem:[%s5707 + $0x70] sm:$0xff]
        %v5723 = vld [vmem:[%s5707 + $0x78] sm:$0xff]
        %5724 = vmatprep.subr.mxu0 0.0
        %5725 = vmatpush1.msra.mxu0 %v5708
        %5726 = vmatprep.subr.mxu0 0.0
        %5727 = vmatpush1.msra.mxu0 %v5709
        %5728 = vmatprep.subr.mxu0 0.0
        %5729 = vmatpush1.msra.mxu0 %v5710
        %5730 = vmatprep.subr.mxu0 0.0
        %5731 = vmatpush1.msra.mxu0 %v5711
        %5732 = vmatprep.subr.mxu0 0.0
        %5733 = vmatpush1.msra.mxu0 %v5712
        %5734 = vmatprep.subr.mxu0 0.0
        %5735 = vmatpush1.msra.mxu0 %v5713
        %5736 = vmatprep.subr.mxu0 0.0
        %5737 = vmatpush1.msra.mxu0 %v5714
        %5738 = vmatprep.subr.mxu0 0.0
        %5739 = vmatpush1.msra.mxu0 %v5715
        %5740 = vmatprep.subr.mxu0 0.0
        %5741 = vmatpush1.msra.mxu0 %v5716
        %5742 = vmatprep.subr.mxu0 0.0
        %5743 = vmatpush1.msra.mxu0 %v5717
        %5744 = vmatprep.subr.mxu0 0.0
        %5745 = vmatpush1.msra.mxu0 %v5718
        %5746 = vmatprep.subr.mxu0 0.0
        %5747 = vmatpush1.msra.mxu0 %v5719
        %5748 = vmatprep.subr.mxu0 0.0
        %5749 = vmatpush1.msra.mxu0 %v5720
        %5750 = vmatprep.subr.mxu0 0.0
        %5751 = vmatpush1.msra.mxu0 %v5721
        %5752 = vmatprep.subr.mxu0 0.0
        %5753 = vmatpush1.msra.mxu0 %v5722
        %5754 = vmatprep.subr.mxu0 0.0
        %5755 = vmatpush1.msra.mxu0 %v5723
        %5756 = vmatprep.subr.mxu0 0.0
        %5757 = vmatpush1.msra.mxu0 0.0
        %5758 = vmatprep.subr.mxu0 0.0
        %5759 = vmatpush1.msra.mxu0 0.0
        %5760 = vmatprep.subr.mxu0 0.0
        %5761 = vmatpush1.msra.mxu0 0.0
        %5762 = vmatprep.subr.mxu0 0.0
        %5763 = vmatpush1.msra.mxu0 0.0
        %5764 = vmatprep.subr.mxu0 0.0
        %5765 = vmatpush1.msra.mxu0 0.0
        %5766 = vmatprep.subr.mxu0 0.0
        %5767 = vmatpush1.msra.mxu0 0.0
        %5768 = vmatprep.subr.mxu0 0.0
        %5769 = vmatpush1.msra.mxu0 0.0
        %5770 = vmatprep.subr.mxu0 0.0
        %5771 = vmatpush1.msra.mxu0 0.0
        %5772 = vmatprep.subr.mxu0 0.0
        %5773 = vmatpush1.msra.mxu0 0.0
        %5774 = vmatprep.subr.mxu0 0.0
        %5775 = vmatpush1.msra.mxu0 0.0
        %5776 = vmatprep.subr.mxu0 0.0
        %5777 = vmatpush1.msra.mxu0 0.0
        %5778 = vmatprep.subr.mxu0 0.0
        %5779 = vmatpush1.msra.mxu0 0.0
        %5780 = vmatprep.subr.mxu0 0.0
        %5781 = vmatpush1.msra.mxu0 0.0
        %5782 = vmatprep.subr.mxu0 0.0
        %5783 = vmatpush1.msra.mxu0 0.0
        %5784 = vmatprep.subr.mxu0 0.0
        %5785 = vmatpush1.msra.mxu0 0.0
        %5786 = vmatprep.subr.mxu0 0.0
        %5787 = vmatpush1.msra.mxu0 0.0
        %5788 = vmatprep.mubr.f32.mxu0 0.0
        %5789 = vmatmul.mubr.f32.gmra.mrb[0].mxu0 %v5675
        %v5790 = vpop.f32.mrb[0].mxu0
        %v5791 = vadd.f32 0.0, %v5790
        %v5792 = vpop.f32.mrb[0].mxu0
        %5793 = vmatprep.mubr.f32.mxu0 0.0
        %5794 = vmatmul.mubr.f32.gmra.mrb[0].mxu0 %v5676
        %v5795 = vpop.f32.mrb[0].mxu0
        %v5796 = vadd.f32 0.0, %v5795
        %v5797 = vpop.f32.mrb[0].mxu0
        %5798 = vmatprep.mubr.f32.mxu0 0.0
        %5799 = vmatmul.mubr.f32.gmra.mrb[0].mxu0 %v5677
        %v5800 = vpop.f32.mrb[0].mxu0
        %v5801 = vadd.f32 0.0, %v5800
        %v5802 = vpop.f32.mrb[0].mxu0
        %5803 = vmatprep.mubr.f32.mxu0 0.0
        %5804 = vmatmul.mubr.f32.gmra.mrb[0].mxu0 %v5678
        %v5805 = vpop.f32.mrb[0].mxu0
        %v5806 = vadd.f32 0.0, %v5805
        %v5807 = vpop.f32.mrb[0].mxu0
        %5808 = vmatprep.mubr.f32.mxu0 0.0
        %5809 = vmatmul.mubr.f32.gmra.mrb[0].mxu0 %v5679
        %v5810 = vpop.f32.mrb[0].mxu0
        %v5811 = vadd.f32 0.0, %v5810
        %v5812 = vpop.f32.mrb[0].mxu0
        %5813 = vmatprep.mubr.f32.mxu0 0.0
        %5814 = vmatmul.mubr.f32.gmra.mrb[0].mxu0 %v5680
        %v5815 = vpop.f32.mrb[0].mxu0
        %v5816 = vadd.f32 0.0, %v5815
        %v5817 = vpop.f32.mrb[0].mxu0
        %5818 = vmatprep.mubr.f32.mxu0 0.0
        %5819 = vmatmul.mubr.f32.gmra.mrb[0].mxu0 %v5681
        %v5820 = vpop.f32.mrb[0].mxu0
        %v5821 = vadd.f32 0.0, %v5820
        %v5822 = vpop.f32.mrb[0].mxu0
        %5823 = vmatprep.mubr.f32.mxu0 0.0
        %5824 = vmatmul.mubr.f32.gmra.mrb[0].mxu0 %v5682
        %v5825 = vpop.f32.mrb[0].mxu0
        %v5826 = vadd.f32 0.0, %v5825
        %v5827 = vpop.f32.mrb[0].mxu0
        %5828 = vmatprep.mubr.f32.mxu0 0.0
        %5829 = vmatmul.mubr.f32.gmra.mrb[0].mxu0 %v5683
        %v5830 = vpop.f32.mrb[0].mxu0
        %v5831 = vadd.f32 0.0, %v5830
        %v5832 = vpop.f32.mrb[0].mxu0
        %5833 = vmatprep.mubr.f32.mxu0 0.0
        %5834 = vmatmul.mubr.f32.gmra.mrb[0].mxu0 %v5684
        %v5835 = vpop.f32.mrb[0].mxu0
        %v5836 = vadd.f32 0.0, %v5835
        %v5837 = vpop.f32.mrb[0].mxu0
        %5838 = vmatprep.mubr.f32.mxu0 0.0
        %5839 = vmatmul.mubr.f32.gmra.mrb[0].mxu0 %v5685
        %v5840 = vpop.f32.mrb[0].mxu0
        %v5841 = vadd.f32 0.0, %v5840
        %v5842 = vpop.f32.mrb[0].mxu0
        %5843 = vmatprep.mubr.f32.mxu0 0.0
        %5844 = vmatmul.mubr.f32.gmra.mrb[0].mxu0 %v5686
        %v5845 = vpop.f32.mrb[0].mxu0
        %v5846 = vadd.f32 0.0, %v5845
        %v5847 = vpop.f32.mrb[0].mxu0
        %5848 = vmatprep.mubr.f32.mxu0 0.0
        %5849 = vmatmul.mubr.f32.gmra.mrb[0].mxu0 %v5687
        %v5850 = vpop.f32.mrb[0].mxu0
        %v5851 = vadd.f32 0.0, %v5850
        %v5852 = vpop.f32.mrb[0].mxu0
        %5853 = vmatprep.mubr.f32.mxu0 0.0
        %5854 = vmatmul.mubr.f32.gmra.mrb[0].mxu0 %v5688
        %v5855 = vpop.f32.mrb[0].mxu0
        %v5856 = vadd.f32 0.0, %v5855
        %v5857 = vpop.f32.mrb[0].mxu0
        %5858 = vmatprep.mubr.f32.mxu0 0.0
        %5859 = vmatmul.mubr.f32.gmra.mrb[0].mxu0 %v5689
        %v5860 = vpop.f32.mrb[0].mxu0
        %v5861 = vadd.f32 0.0, %v5860
        %v5862 = vpop.f32.mrb[0].mxu0
        %5863 = vmatprep.mubr.f32.mxu0 0.0
        %5864 = vmatmul.mubr.f32.gmra.mrb[0].mxu0 %v5690
        %v5865 = vpop.f32.mrb[0].mxu0
        %v5866 = vadd.f32 0.0, %v5865
        %v5867 = vpop.f32.mrb[0].mxu0
        %5868 = vmatprep.mubr.f32.mxu0 0.0
        %5869 = vmatmul.mubr.f32.gmra.mrb[0].mxu0 %v5691
        %v5870 = vpop.f32.mrb[0].mxu0
        %v5871 = vadd.f32 0.0, %v5870
        %v5872 = vpop.f32.mrb[0].mxu0
        %5873 = vmatprep.mubr.f32.mxu0 0.0
        %5874 = vmatmul.mubr.f32.gmra.mrb[0].mxu0 %v5692
        %v5875 = vpop.f32.mrb[0].mxu0
        %v5876 = vadd.f32 0.0, %v5875
        %v5877 = vpop.f32.mrb[0].mxu0
        %5878 = vmatprep.mubr.f32.mxu0 0.0
        %5879 = vmatmul.mubr.f32.gmra.mrb[0].mxu0 %v5693
        %v5880 = vpop.f32.mrb[0].mxu0
        %v5881 = vadd.f32 0.0, %v5880
        %v5882 = vpop.f32.mrb[0].mxu0
        %5883 = vmatprep.mubr.f32.mxu0 0.0
        %5884 = vmatmul.mubr.f32.gmra.mrb[0].mxu0 %v5694
        %v5885 = vpop.f32.mrb[0].mxu0
        %v5886 = vadd.f32 0.0, %v5885
        %v5887 = vpop.f32.mrb[0].mxu0
        %5888 = vmatprep.mubr.f32.mxu0 0.0
        %5889 = vmatmul.mubr.f32.gmra.mrb[0].mxu0 %v5695
        %v5890 = vpop.f32.mrb[0].mxu0
        %v5891 = vadd.f32 0.0, %v5890
        %v5892 = vpop.f32.mrb[0].mxu0
        %5893 = vmatprep.mubr.f32.mxu0 0.0
        %5894 = vmatmul.mubr.f32.gmra.mrb[0].mxu0 %v5696
        %v5895 = vpop.f32.mrb[0].mxu0
        %v5896 = vadd.f32 0.0, %v5895
        %v5897 = vpop.f32.mrb[0].mxu0
        %5898 = vmatprep.mubr.f32.mxu0 0.0
        %5899 = vmatmul.mubr.f32.gmra.mrb[0].mxu0 %v5697
        %v5900 = vpop.f32.mrb[0].mxu0
        %v5901 = vadd.f32 0.0, %v5900
        %v5902 = vpop.f32.mrb[0].mxu0
        %5903 = vmatprep.mubr.f32.mxu0 0.0
        %5904 = vmatmul.mubr.f32.gmra.mrb[0].mxu0 %v5698
        %v5905 = vpop.f32.mrb[0].mxu0
        %v5906 = vadd.f32 0.0, %v5905
        %v5907 = vpop.f32.mrb[0].mxu0
        %5908 = vmatprep.mubr.f32.mxu0 0.0
        %5909 = vmatmul.mubr.f32.gmra.mrb[0].mxu0 %v5699
        %v5910 = vpop.f32.mrb[0].mxu0
        %v5911 = vadd.f32 0.0, %v5910
        %v5912 = vpop.f32.mrb[0].mxu0
        %5913 = vmatprep.mubr.f32.mxu0 0.0
        %5914 = vmatmul.mubr.f32.gmra.mrb[0].mxu0 %v5700
        %v5915 = vpop.f32.mrb[0].mxu0
        %v5916 = vadd.f32 0.0, %v5915
        %v5917 = vpop.f32.mrb[0].mxu0
        %5918 = vmatprep.mubr.f32.mxu0 0.0
        %5919 = vmatmul.mubr.f32.gmra.mrb[0].mxu0 %v5701
        %v5920 = vpop.f32.mrb[0].mxu0
        %v5921 = vadd.f32 0.0, %v5920
        %v5922 = vpop.f32.mrb[0].mxu0
        %5923 = vmatprep.mubr.f32.mxu0 0.0
        %5924 = vmatmul.mubr.f32.gmra.mrb[0].mxu0 %v5702
        %v5925 = vpop.f32.mrb[0].mxu0
        %v5926 = vadd.f32 0.0, %v5925
        %v5927 = vpop.f32.mrb[0].mxu0
        %5928 = vmatprep.mubr.f32.mxu0 0.0
        %5929 = vmatmul.mubr.f32.gmra.mrb[0].mxu0 %v5703
        %v5930 = vpop.f32.mrb[0].mxu0
        %v5931 = vadd.f32 0.0, %v5930
        %v5932 = vpop.f32.mrb[0].mxu0
        %5933 = vmatprep.mubr.f32.mxu0 0.0
        %5934 = vmatmul.mubr.f32.gmra.mrb[0].mxu0 %v5704
        %v5935 = vpop.f32.mrb[0].mxu0
        %v5936 = vadd.f32 0.0, %v5935
        %v5937 = vpop.f32.mrb[0].mxu0
        %5938 = vmatprep.mubr.f32.mxu0 0.0
        %5939 = vmatmul.mubr.f32.gmra.mrb[0].mxu0 %v5705
        %v5940 = vpop.f32.mrb[0].mxu0
        %v5941 = vadd.f32 0.0, %v5940
        %v5942 = vpop.f32.mrb[0].mxu0
        %5943 = vmatprep.mubr.f32.mxu0 0.0
        %5944 = vmatmul.mubr.f32.gmra.mrb[0].mxu0 %v5706
        %v5945 = vpop.f32.mrb[0].mxu0
        %v5946 = vadd.f32 0.0, %v5945
        %v5947 = vpop.f32.mrb[0].mxu0
        %5948 = vdwg.mxu0
        %v5949 = vld [vmem:[#allocation3] sm:$0xff]
        %v5950 = vld [vmem:[#allocation3 + $0x8] sm:$0xff]
        %v5951 = vld [vmem:[#allocation3 + $0x10] sm:$0xff]
        %v5952 = vld [vmem:[#allocation3 + $0x18] sm:$0xff]
        %v5953 = vld [vmem:[#allocation3 + $0x20] sm:$0xff]
        %v5954 = vld [vmem:[#allocation3 + $0x28] sm:$0xff]
        %v5955 = vld [vmem:[#allocation3 + $0x30] sm:$0xff]
        %v5956 = vld [vmem:[#allocation3 + $0x38] sm:$0xff]
        %v5957 = vld [vmem:[#allocation3 + $0x40] sm:$0xff]
        %v5958 = vld [vmem:[#allocation3 + $0x48] sm:$0xff]
        %v5959 = vld [vmem:[#allocation3 + $0x50] sm:$0xff]
        %v5960 = vld [vmem:[#allocation3 + $0x58] sm:$0xff]
        %v5961 = vld [vmem:[#allocation3 + $0x60] sm:$0xff]
        %v5962 = vld [vmem:[#allocation3 + $0x68] sm:$0xff]
        %v5963 = vld [vmem:[#allocation3 + $0x70] sm:$0xff]
        %v5964 = vld [vmem:[#allocation3 + $0x78] sm:$0xff]
        %v5965 = vld [vmem:[#allocation3 + $0x80] sm:$0xff]
        %v5966 = vld [vmem:[#allocation3 + $0x88] sm:$0xff]
        %v5967 = vld [vmem:[#allocation3 + $0x90] sm:$0xff]
        %v5968 = vld [vmem:[#allocation3 + $0x98] sm:$0xff]
        %v5969 = vld [vmem:[#allocation3 + $0xa0] sm:$0xff]
        %v5970 = vld [vmem:[#allocation3 + $0xa8] sm:$0xff]
        %v5971 = vld [vmem:[#allocation3 + $0xb0] sm:$0xff]
        %v5972 = vld [vmem:[#allocation3 + $0xb8] sm:$0xff]
        %v5973 = vld [vmem:[#allocation3 + $0xc0] sm:$0xff]
        %v5974 = vld [vmem:[#allocation3 + $0xc8] sm:$0xff]
        %v5975 = vld [vmem:[#allocation3 + $0xd0] sm:$0xff]
        %v5976 = vld [vmem:[#allocation3 + $0xd8] sm:$0xff]
        %v5977 = vld [vmem:[#allocation3 + $0xe0] sm:$0xff]
        %v5978 = vld [vmem:[#allocation3 + $0xe8] sm:$0xff]
        %v5979 = vld [vmem:[#allocation3 + $0xf0] sm:$0xff]
        %v5980 = vld [vmem:[#allocation3 + $0xf8] sm:$0xff]
        %v5981 = vadd.f32 %v5949, %v5791
        %v5982 = vadd.f32 %v5950, %v5796
        %v5983 = vadd.f32 %v5951, %v5801
        %v5984 = vadd.f32 %v5952, %v5806
        %v5985 = vadd.f32 %v5953, %v5811
        %v5986 = vadd.f32 %v5954, %v5816
        %v5987 = vadd.f32 %v5955, %v5821
        %v5988 = vadd.f32 %v5956, %v5826
        %v5989 = vadd.f32 %v5957, %v5831
        %v5990 = vadd.f32 %v5958, %v5836
        %v5991 = vadd.f32 %v5959, %v5841
        %v5992 = vadd.f32 %v5960, %v5846
        %v5993 = vadd.f32 %v5961, %v5851
        %v5994 = vadd.f32 %v5962, %v5856
        %v5995 = vadd.f32 %v5963, %v5861
        %v5996 = vadd.f32 %v5964, %v5866
        %v5997 = vadd.f32 %v5965, %v5871
        %v5998 = vadd.f32 %v5966, %v5876
        %v5999 = vadd.f32 %v5967, %v5881
        %v6000 = vadd.f32 %v5968, %v5886
        %v6001 = vadd.f32 %v5969, %v5891
        %v6002 = vadd.f32 %v5970, %v5896
        %v6003 = vadd.f32 %v5971, %v5901
        %v6004 = vadd.f32 %v5972, %v5906
        %v6005 = vadd.f32 %v5973, %v5911
        %v6006 = vadd.f32 %v5974, %v5916
        %v6007 = vadd.f32 %v5975, %v5921
        %v6008 = vadd.f32 %v5976, %v5926
        %v6009 = vadd.f32 %v5977, %v5931
        %v6010 = vadd.f32 %v5978, %v5936
        %v6011 = vadd.f32 %v5979, %v5941
        %v6012 = vadd.f32 %v5980, %v5946
        %6013 = vst [vmem:[#allocation3] sm:$0xff] %v5981
        %6014 = vst [vmem:[#allocation3 + $0x8] sm:$0xff] %v5982
        %6015 = vst [vmem:[#allocation3 + $0x10] sm:$0xff] %v5983
        %6016 = vst [vmem:[#allocation3 + $0x18] sm:$0xff] %v5984
        %6017 = vst [vmem:[#allocation3 + $0x20] sm:$0xff] %v5985
        %6018 = vst [vmem:[#allocation3 + $0x28] sm:$0xff] %v5986
        %6019 = vst [vmem:[#allocation3 + $0x30] sm:$0xff] %v5987
        %6020 = vst [vmem:[#allocation3 + $0x38] sm:$0xff] %v5988
        %6021 = vst [vmem:[#allocation3 + $0x40] sm:$0xff] %v5989
        %6022 = vst [vmem:[#allocation3 + $0x48] sm:$0xff] %v5990
        %6023 = vst [vmem:[#allocation3 + $0x50] sm:$0xff] %v5991
        %6024 = vst [vmem:[#allocation3 + $0x58] sm:$0xff] %v5992
        %6025 = vst [vmem:[#allocation3 + $0x60] sm:$0xff] %v5993
        %6026 = vst [vmem:[#allocation3 + $0x68] sm:$0xff] %v5994
        %6027 = vst [vmem:[#allocation3 + $0x70] sm:$0xff] %v5995
        %6028 = vst [vmem:[#allocation3 + $0x78] sm:$0xff] %v5996
        %6029 = vst [vmem:[#allocation3 + $0x80] sm:$0xff] %v5997
        %6030 = vst [vmem:[#allocation3 + $0x88] sm:$0xff] %v5998
        %6031 = vst [vmem:[#allocation3 + $0x90] sm:$0xff] %v5999
        %6032 = vst [vmem:[#allocation3 + $0x98] sm:$0xff] %v6000
        %6033 = vst [vmem:[#allocation3 + $0xa0] sm:$0xff] %v6001
        %6034 = vst [vmem:[#allocation3 + $0xa8] sm:$0xff] %v6002
        %6035 = vst [vmem:[#allocation3 + $0xb0] sm:$0xff] %v6003
        %6036 = vst [vmem:[#allocation3 + $0xb8] sm:$0xff] %v6004
        %6037 = vst [vmem:[#allocation3 + $0xc0] sm:$0xff] %v6005
        %6038 = vst [vmem:[#allocation3 + $0xc8] sm:$0xff] %v6006
        %6039 = vst [vmem:[#allocation3 + $0xd0] sm:$0xff] %v6007
        %6040 = vst [vmem:[#allocation3 + $0xd8] sm:$0xff] %v6008
        %6041 = vst [vmem:[#allocation3 + $0xe0] sm:$0xff] %v6009
        %6042 = vst [vmem:[#allocation3 + $0xe8] sm:$0xff] %v6010
        %6043 = vst [vmem:[#allocation3 + $0xf0] sm:$0xff] %v6011
        %6044 = vst [vmem:[#allocation3 + $0xf8] sm:$0xff] %v6012
        %s6045 = scalar_lea.vmem [#allocation2], 64
        %v6046 = vld [vmem:[%s6045 + $0x7] sm:$0xff]
        %v6047 = vld [vmem:[%s6045 + $0xf] sm:$0xff]
        %v6048 = vld [vmem:[%s6045 + $0x27] sm:$0xff]
        %v6049 = vld [vmem:[%s6045 + $0x2f] sm:$0xff]
        %v6050 = vld [vmem:[%s6045 + $0x47] sm:$0xff]
        %v6051 = vld [vmem:[%s6045 + $0x4f] sm:$0xff]
        %v6052 = vld [vmem:[%s6045 + $0x67] sm:$0xff]
        %v6053 = vld [vmem:[%s6045 + $0x6f] sm:$0xff]
        %v6054 = vld [vmem:[%s6045 + $0x87] sm:$0xff]
        %v6055 = vld [vmem:[%s6045 + $0x8f] sm:$0xff]
        %v6056 = vld [vmem:[%s6045 + $0xa7] sm:$0xff]
        %v6057 = vld [vmem:[%s6045 + $0xaf] sm:$0xff]
        %v6058 = vld [vmem:[%s6045 + $0xc7] sm:$0xff]
        %v6059 = vld [vmem:[%s6045 + $0xcf] sm:$0xff]
        %v6060 = vld [vmem:[%s6045 + $0xe7] sm:$0xff]
        %v6061 = vld [vmem:[%s6045 + $0xef] sm:$0xff]
        %v6062 = vld [vmem:[%s6045 + $0x107] sm:$0xff]
        %v6063 = vld [vmem:[%s6045 + $0x10f] sm:$0xff]
        %v6064 = vld [vmem:[%s6045 + $0x127] sm:$0xff]
        %v6065 = vld [vmem:[%s6045 + $0x12f] sm:$0xff]
        %v6066 = vld [vmem:[%s6045 + $0x147] sm:$0xff]
        %v6067 = vld [vmem:[%s6045 + $0x14f] sm:$0xff]
        %v6068 = vld [vmem:[%s6045 + $0x167] sm:$0xff]
        %v6069 = vld [vmem:[%s6045 + $0x16f] sm:$0xff]
        %v6070 = vld [vmem:[%s6045 + $0x187] sm:$0xff]
        %v6071 = vld [vmem:[%s6045 + $0x18f] sm:$0xff]
        %v6072 = vld [vmem:[%s6045 + $0x1a7] sm:$0xff]
        %v6073 = vld [vmem:[%s6045 + $0x1af] sm:$0xff]
        %v6074 = vld [vmem:[%s6045 + $0x1c7] sm:$0xff]
        %v6075 = vld [vmem:[%s6045 + $0x1cf] sm:$0xff]
        %v6076 = vld [vmem:[%s6045 + $0x1e7] sm:$0xff]
        %v6077 = vld [vmem:[%s6045 + $0x1ef] sm:$0xff]
        %s6078 = scalar_lea.vmem [#allocation12], 768
        %v6079 = vld [vmem:[%s6078] sm:$0xff]
        %v6080 = vld [vmem:[%s6078 + $0x8] sm:$0xff]
        %v6081 = vld [vmem:[%s6078 + $0x10] sm:$0xff]
        %v6082 = vld [vmem:[%s6078 + $0x18] sm:$0xff]
        %v6083 = vld [vmem:[%s6078 + $0x20] sm:$0xff]
        %v6084 = vld [vmem:[%s6078 + $0x28] sm:$0xff]
        %v6085 = vld [vmem:[%s6078 + $0x30] sm:$0xff]
        %v6086 = vld [vmem:[%s6078 + $0x38] sm:$0xff]
        %v6087 = vld [vmem:[%s6078 + $0x40] sm:$0xff]
        %v6088 = vld [vmem:[%s6078 + $0x48] sm:$0xff]
        %v6089 = vld [vmem:[%s6078 + $0x50] sm:$0xff]
        %v6090 = vld [vmem:[%s6078 + $0x58] sm:$0xff]
        %v6091 = vld [vmem:[%s6078 + $0x60] sm:$0xff]
        %v6092 = vld [vmem:[%s6078 + $0x68] sm:$0xff]
        %v6093 = vld [vmem:[%s6078 + $0x70] sm:$0xff]
        %v6094 = vld [vmem:[%s6078 + $0x78] sm:$0xff]
        %6095 = vmatprep.subr.mxu0 0.0
        %6096 = vmatpush1.msra.mxu0 %v6079
        %6097 = vmatprep.subr.mxu0 0.0
        %6098 = vmatpush1.msra.mxu0 %v6080
        %6099 = vmatprep.subr.mxu0 0.0
        %6100 = vmatpush1.msra.mxu0 %v6081
        %6101 = vmatprep.subr.mxu0 0.0
        %6102 = vmatpush1.msra.mxu0 %v6082
        %6103 = vmatprep.subr.mxu0 0.0
        %6104 = vmatpush1.msra.mxu0 %v6083
        %6105 = vmatprep.subr.mxu0 0.0
        %6106 = vmatpush1.msra.mxu0 %v6084
        %6107 = vmatprep.subr.mxu0 0.0
        %6108 = vmatpush1.msra.mxu0 %v6085
        %6109 = vmatprep.subr.mxu0 0.0
        %6110 = vmatpush1.msra.mxu0 %v6086
        %6111 = vmatprep.subr.mxu0 0.0
        %6112 = vmatpush1.msra.mxu0 %v6087
        %6113 = vmatprep.subr.mxu0 0.0
        %6114 = vmatpush1.msra.mxu0 %v6088
        %6115 = vmatprep.subr.mxu0 0.0
        %6116 = vmatpush1.msra.mxu0 %v6089
        %6117 = vmatprep.subr.mxu0 0.0
        %6118 = vmatpush1.msra.mxu0 %v6090
        %6119 = vmatprep.subr.mxu0 0.0
        %6120 = vmatpush1.msra.mxu0 %v6091
        %6121 = vmatprep.subr.mxu0 0.0
        %6122 = vmatpush1.msra.mxu0 %v6092
        %6123 = vmatprep.subr.mxu0 0.0
        %6124 = vmatpush1.msra.mxu0 %v6093
        %6125 = vmatprep.subr.mxu0 0.0
        %6126 = vmatpush1.msra.mxu0 %v6094
        %6127 = vmatprep.subr.mxu0 0.0
        %6128 = vmatpush1.msra.mxu0 0.0
        %6129 = vmatprep.subr.mxu0 0.0
        %6130 = vmatpush1.msra.mxu0 0.0
        %6131 = vmatprep.subr.mxu0 0.0
        %6132 = vmatpush1.msra.mxu0 0.0
        %6133 = vmatprep.subr.mxu0 0.0
        %6134 = vmatpush1.msra.mxu0 0.0
        %6135 = vmatprep.subr.mxu0 0.0
        %6136 = vmatpush1.msra.mxu0 0.0
        %6137 = vmatprep.subr.mxu0 0.0
        %6138 = vmatpush1.msra.mxu0 0.0
        %6139 = vmatprep.subr.mxu0 0.0
        %6140 = vmatpush1.msra.mxu0 0.0
        %6141 = vmatprep.subr.mxu0 0.0
        %6142 = vmatpush1.msra.mxu0 0.0
        %6143 = vmatprep.subr.mxu0 0.0
        %6144 = vmatpush1.msra.mxu0 0.0
        %6145 = vmatprep.subr.mxu0 0.0
        %6146 = vmatpush1.msra.mxu0 0.0
        %6147 = vmatprep.subr.mxu0 0.0
        %6148 = vmatpush1.msra.mxu0 0.0
        %6149 = vmatprep.subr.mxu0 0.0
        %6150 = vmatpush1.msra.mxu0 0.0
        %6151 = vmatprep.subr.mxu0 0.0
        %6152 = vmatpush1.msra.mxu0 0.0
        %6153 = vmatprep.subr.mxu0 0.0
        %6154 = vmatpush1.msra.mxu0 0.0
        %6155 = vmatprep.subr.mxu0 0.0
        %6156 = vmatpush1.msra.mxu0 0.0
        %6157 = vmatprep.subr.mxu0 0.0
        %6158 = vmatpush1.msra.mxu0 0.0
        %6159 = vmatprep.mubr.f32.mxu0 0.0
        %6160 = vmatmul.mubr.f32.gmra.mrb[0].mxu0 %v6046
        %v6161 = vpop.f32.mrb[0].mxu0
        %v6162 = vadd.f32 0.0, %v6161
        %v6163 = vpop.f32.mrb[0].mxu0
        %6164 = vmatprep.mubr.f32.mxu0 0.0
        %6165 = vmatmul.mubr.f32.gmra.mrb[0].mxu0 %v6047
        %v6166 = vpop.f32.mrb[0].mxu0
        %v6167 = vadd.f32 0.0, %v6166
        %v6168 = vpop.f32.mrb[0].mxu0
        %6169 = vmatprep.mubr.f32.mxu0 0.0
        %6170 = vmatmul.mubr.f32.gmra.mrb[0].mxu0 %v6048
        %v6171 = vpop.f32.mrb[0].mxu0
        %v6172 = vadd.f32 0.0, %v6171
        %v6173 = vpop.f32.mrb[0].mxu0
        %6174 = vmatprep.mubr.f32.mxu0 0.0
        %6175 = vmatmul.mubr.f32.gmra.mrb[0].mxu0 %v6049
        %v6176 = vpop.f32.mrb[0].mxu0
        %v6177 = vadd.f32 0.0, %v6176
        %v6178 = vpop.f32.mrb[0].mxu0
        %6179 = vmatprep.mubr.f32.mxu0 0.0
        %6180 = vmatmul.mubr.f32.gmra.mrb[0].mxu0 %v6050
        %v6181 = vpop.f32.mrb[0].mxu0
        %v6182 = vadd.f32 0.0, %v6181
        %v6183 = vpop.f32.mrb[0].mxu0
        %6184 = vmatprep.mubr.f32.mxu0 0.0
        %6185 = vmatmul.mubr.f32.gmra.mrb[0].mxu0 %v6051
        %v6186 = vpop.f32.mrb[0].mxu0
        %v6187 = vadd.f32 0.0, %v6186
        %v6188 = vpop.f32.mrb[0].mxu0
        %6189 = vmatprep.mubr.f32.mxu0 0.0
        %6190 = vmatmul.mubr.f32.gmra.mrb[0].mxu0 %v6052
        %v6191 = vpop.f32.mrb[0].mxu0
        %v6192 = vadd.f32 0.0, %v6191
        %v6193 = vpop.f32.mrb[0].mxu0
        %6194 = vmatprep.mubr.f32.mxu0 0.0
        %6195 = vmatmul.mubr.f32.gmra.mrb[0].mxu0 %v6053
        %v6196 = vpop.f32.mrb[0].mxu0
        %v6197 = vadd.f32 0.0, %v6196
        %v6198 = vpop.f32.mrb[0].mxu0
        %6199 = vmatprep.mubr.f32.mxu0 0.0
        %6200 = vmatmul.mubr.f32.gmra.mrb[0].mxu0 %v6054
        %v6201 = vpop.f32.mrb[0].mxu0
        %v6202 = vadd.f32 0.0, %v6201
        %v6203 = vpop.f32.mrb[0].mxu0
        %6204 = vmatprep.mubr.f32.mxu0 0.0
        %6205 = vmatmul.mubr.f32.gmra.mrb[0].mxu0 %v6055
        %v6206 = vpop.f32.mrb[0].mxu0
        %v6207 = vadd.f32 0.0, %v6206
        %v6208 = vpop.f32.mrb[0].mxu0
        %6209 = vmatprep.mubr.f32.mxu0 0.0
        %6210 = vmatmul.mubr.f32.gmra.mrb[0].mxu0 %v6056
        %v6211 = vpop.f32.mrb[0].mxu0
        %v6212 = vadd.f32 0.0, %v6211
        %v6213 = vpop.f32.mrb[0].mxu0
        %6214 = vmatprep.mubr.f32.mxu0 0.0
        %6215 = vmatmul.mubr.f32.gmra.mrb[0].mxu0 %v6057
        %v6216 = vpop.f32.mrb[0].mxu0
        %v6217 = vadd.f32 0.0, %v6216
        %v6218 = vpop.f32.mrb[0].mxu0
        %6219 = vmatprep.mubr.f32.mxu0 0.0
        %6220 = vmatmul.mubr.f32.gmra.mrb[0].mxu0 %v6058
        %v6221 = vpop.f32.mrb[0].mxu0
        %v6222 = vadd.f32 0.0, %v6221
        %v6223 = vpop.f32.mrb[0].mxu0
        %6224 = vmatprep.mubr.f32.mxu0 0.0
        %6225 = vmatmul.mubr.f32.gmra.mrb[0].mxu0 %v6059
        %v6226 = vpop.f32.mrb[0].mxu0
        %v6227 = vadd.f32 0.0, %v6226
        %v6228 = vpop.f32.mrb[0].mxu0
        %6229 = vmatprep.mubr.f32.mxu0 0.0
        %6230 = vmatmul.mubr.f32.gmra.mrb[0].mxu0 %v6060
        %v6231 = vpop.f32.mrb[0].mxu0
        %v6232 = vadd.f32 0.0, %v6231
        %v6233 = vpop.f32.mrb[0].mxu0
        %6234 = vmatprep.mubr.f32.mxu0 0.0
        %6235 = vmatmul.mubr.f32.gmra.mrb[0].mxu0 %v6061
        %v6236 = vpop.f32.mrb[0].mxu0
        %v6237 = vadd.f32 0.0, %v6236
        %v6238 = vpop.f32.mrb[0].mxu0
        %6239 = vmatprep.mubr.f32.mxu0 0.0
        %6240 = vmatmul.mubr.f32.gmra.mrb[0].mxu0 %v6062
        %v6241 = vpop.f32.mrb[0].mxu0
        %v6242 = vadd.f32 0.0, %v6241
        %v6243 = vpop.f32.mrb[0].mxu0
        %6244 = vmatprep.mubr.f32.mxu0 0.0
        %6245 = vmatmul.mubr.f32.gmra.mrb[0].mxu0 %v6063
        %v6246 = vpop.f32.mrb[0].mxu0
        %v6247 = vadd.f32 0.0, %v6246
        %v6248 = vpop.f32.mrb[0].mxu0
        %6249 = vmatprep.mubr.f32.mxu0 0.0
        %6250 = vmatmul.mubr.f32.gmra.mrb[0].mxu0 %v6064
        %v6251 = vpop.f32.mrb[0].mxu0
        %v6252 = vadd.f32 0.0, %v6251
        %v6253 = vpop.f32.mrb[0].mxu0
        %6254 = vmatprep.mubr.f32.mxu0 0.0
        %6255 = vmatmul.mubr.f32.gmra.mrb[0].mxu0 %v6065
        %v6256 = vpop.f32.mrb[0].mxu0
        %v6257 = vadd.f32 0.0, %v6256
        %v6258 = vpop.f32.mrb[0].mxu0
        %6259 = vmatprep.mubr.f32.mxu0 0.0
        %6260 = vmatmul.mubr.f32.gmra.mrb[0].mxu0 %v6066
        %v6261 = vpop.f32.mrb[0].mxu0
        %v6262 = vadd.f32 0.0, %v6261
        %v6263 = vpop.f32.mrb[0].mxu0
        %6264 = vmatprep.mubr.f32.mxu0 0.0
        %6265 = vmatmul.mubr.f32.gmra.mrb[0].mxu0 %v6067
        %v6266 = vpop.f32.mrb[0].mxu0
        %v6267 = vadd.f32 0.0, %v6266
        %v6268 = vpop.f32.mrb[0].mxu0
        %6269 = vmatprep.mubr.f32.mxu0 0.0
        %6270 = vmatmul.mubr.f32.gmra.mrb[0].mxu0 %v6068
        %v6271 = vpop.f32.mrb[0].mxu0
        %v6272 = vadd.f32 0.0, %v6271
        %v6273 = vpop.f32.mrb[0].mxu0
        %6274 = vmatprep.mubr.f32.mxu0 0.0
        %6275 = vmatmul.mubr.f32.gmra.mrb[0].mxu0 %v6069
        %v6276 = vpop.f32.mrb[0].mxu0
        %v6277 = vadd.f32 0.0, %v6276
        %v6278 = vpop.f32.mrb[0].mxu0
        %6279 = vmatprep.mubr.f32.mxu0 0.0
        %6280 = vmatmul.mubr.f32.gmra.mrb[0].mxu0 %v6070
        %v6281 = vpop.f32.mrb[0].mxu0
        %v6282 = vadd.f32 0.0, %v6281
        %v6283 = vpop.f32.mrb[0].mxu0
        %6284 = vmatprep.mubr.f32.mxu0 0.0
        %6285 = vmatmul.mubr.f32.gmra.mrb[0].mxu0 %v6071
        %v6286 = vpop.f32.mrb[0].mxu0
        %v6287 = vadd.f32 0.0, %v6286
        %v6288 = vpop.f32.mrb[0].mxu0
        %6289 = vmatprep.mubr.f32.mxu0 0.0
        %6290 = vmatmul.mubr.f32.gmra.mrb[0].mxu0 %v6072
        %v6291 = vpop.f32.mrb[0].mxu0
        %v6292 = vadd.f32 0.0, %v6291
        %v6293 = vpop.f32.mrb[0].mxu0
        %6294 = vmatprep.mubr.f32.mxu0 0.0
        %6295 = vmatmul.mubr.f32.gmra.mrb[0].mxu0 %v6073
        %v6296 = vpop.f32.mrb[0].mxu0
        %v6297 = vadd.f32 0.0, %v6296
        %v6298 = vpop.f32.mrb[0].mxu0
        %6299 = vmatprep.mubr.f32.mxu0 0.0
        %6300 = vmatmul.mubr.f32.gmra.mrb[0].mxu0 %v6074
        %v6301 = vpop.f32.mrb[0].mxu0
        %v6302 = vadd.f32 0.0, %v6301
        %v6303 = vpop.f32.mrb[0].mxu0
        %6304 = vmatprep.mubr.f32.mxu0 0.0
        %6305 = vmatmul.mubr.f32.gmra.mrb[0].mxu0 %v6075
        %v6306 = vpop.f32.mrb[0].mxu0
        %v6307 = vadd.f32 0.0, %v6306
        %v6308 = vpop.f32.mrb[0].mxu0
        %6309 = vmatprep.mubr.f32.mxu0 0.0
        %6310 = vmatmul.mubr.f32.gmra.mrb[0].mxu0 %v6076
        %v6311 = vpop.f32.mrb[0].mxu0
        %v6312 = vadd.f32 0.0, %v6311
        %v6313 = vpop.f32.mrb[0].mxu0
        %6314 = vmatprep.mubr.f32.mxu0 0.0
        %6315 = vmatmul.mubr.f32.gmra.mrb[0].mxu0 %v6077
        %v6316 = vpop.f32.mrb[0].mxu0
        %v6317 = vadd.f32 0.0, %v6316
        %v6318 = vpop.f32.mrb[0].mxu0
        %6319 = vdwg.mxu0
        %v6320 = vld [vmem:[#allocation3] sm:$0xff]
        %v6321 = vld [vmem:[#allocation3 + $0x8] sm:$0xff]
        %v6322 = vld [vmem:[#allocation3 + $0x10] sm:$0xff]
        %v6323 = vld [vmem:[#allocation3 + $0x18] sm:$0xff]
        %v6324 = vld [vmem:[#allocation3 + $0x20] sm:$0xff]
        %v6325 = vld [vmem:[#allocation3 + $0x28] sm:$0xff]
        %v6326 = vld [vmem:[#allocation3 + $0x30] sm:$0xff]
        %v6327 = vld [vmem:[#allocation3 + $0x38] sm:$0xff]
        %v6328 = vld [vmem:[#allocation3 + $0x40] sm:$0xff]
        %v6329 = vld [vmem:[#allocation3 + $0x48] sm:$0xff]
        %v6330 = vld [vmem:[#allocation3 + $0x50] sm:$0xff]
        %v6331 = vld [vmem:[#allocation3 + $0x58] sm:$0xff]
        %v6332 = vld [vmem:[#allocation3 + $0x60] sm:$0xff]
        %v6333 = vld [vmem:[#allocation3 + $0x68] sm:$0xff]
        %v6334 = vld [vmem:[#allocation3 + $0x70] sm:$0xff]
        %v6335 = vld [vmem:[#allocation3 + $0x78] sm:$0xff]
        %v6336 = vld [vmem:[#allocation3 + $0x80] sm:$0xff]
        %v6337 = vld [vmem:[#allocation3 + $0x88] sm:$0xff]
        %v6338 = vld [vmem:[#allocation3 + $0x90] sm:$0xff]
        %v6339 = vld [vmem:[#allocation3 + $0x98] sm:$0xff]
        %v6340 = vld [vmem:[#allocation3 + $0xa0] sm:$0xff]
        %v6341 = vld [vmem:[#allocation3 + $0xa8] sm:$0xff]
        %v6342 = vld [vmem:[#allocation3 + $0xb0] sm:$0xff]
        %v6343 = vld [vmem:[#allocation3 + $0xb8] sm:$0xff]
        %v6344 = vld [vmem:[#allocation3 + $0xc0] sm:$0xff]
        %v6345 = vld [vmem:[#allocation3 + $0xc8] sm:$0xff]
        %v6346 = vld [vmem:[#allocation3 + $0xd0] sm:$0xff]
        %v6347 = vld [vmem:[#allocation3 + $0xd8] sm:$0xff]
        %v6348 = vld [vmem:[#allocation3 + $0xe0] sm:$0xff]
        %v6349 = vld [vmem:[#allocation3 + $0xe8] sm:$0xff]
        %v6350 = vld [vmem:[#allocation3 + $0xf0] sm:$0xff]
        %v6351 = vld [vmem:[#allocation3 + $0xf8] sm:$0xff]
        %v6352 = vadd.f32 %v6320, %v6162
        %v6353 = vadd.f32 %v6321, %v6167
        %v6354 = vadd.f32 %v6322, %v6172
        %v6355 = vadd.f32 %v6323, %v6177
        %v6356 = vadd.f32 %v6324, %v6182
        %v6357 = vadd.f32 %v6325, %v6187
        %v6358 = vadd.f32 %v6326, %v6192
        %v6359 = vadd.f32 %v6327, %v6197
        %v6360 = vadd.f32 %v6328, %v6202
        %v6361 = vadd.f32 %v6329, %v6207
        %v6362 = vadd.f32 %v6330, %v6212
        %v6363 = vadd.f32 %v6331, %v6217
        %v6364 = vadd.f32 %v6332, %v6222
        %v6365 = vadd.f32 %v6333, %v6227
        %v6366 = vadd.f32 %v6334, %v6232
        %v6367 = vadd.f32 %v6335, %v6237
        %v6368 = vadd.f32 %v6336, %v6242
        %v6369 = vadd.f32 %v6337, %v6247
        %v6370 = vadd.f32 %v6338, %v6252
        %v6371 = vadd.f32 %v6339, %v6257
        %v6372 = vadd.f32 %v6340, %v6262
        %v6373 = vadd.f32 %v6341, %v6267
        %v6374 = vadd.f32 %v6342, %v6272
        %v6375 = vadd.f32 %v6343, %v6277
        %v6376 = vadd.f32 %v6344, %v6282
        %v6377 = vadd.f32 %v6345, %v6287
        %v6378 = vadd.f32 %v6346, %v6292
        %v6379 = vadd.f32 %v6347, %v6297
        %v6380 = vadd.f32 %v6348, %v6302
        %v6381 = vadd.f32 %v6349, %v6307
        %v6382 = vadd.f32 %v6350, %v6312
        %v6383 = vadd.f32 %v6351, %v6317
        %6384 = vst [vmem:[#allocation3] sm:$0xff] %v6352
        %6385 = vst [vmem:[#allocation3 + $0x8] sm:$0xff] %v6353
        %6386 = vst [vmem:[#allocation3 + $0x10] sm:$0xff] %v6354
        %6387 = vst [vmem:[#allocation3 + $0x18] sm:$0xff] %v6355
        %6388 = vst [vmem:[#allocation3 + $0x20] sm:$0xff] %v6356
        %6389 = vst [vmem:[#allocation3 + $0x28] sm:$0xff] %v6357
        %6390 = vst [vmem:[#allocation3 + $0x30] sm:$0xff] %v6358
        %6391 = vst [vmem:[#allocation3 + $0x38] sm:$0xff] %v6359
        %6392 = vst [vmem:[#allocation3 + $0x40] sm:$0xff] %v6360
        %6393 = vst [vmem:[#allocation3 + $0x48] sm:$0xff] %v6361
        %6394 = vst [vmem:[#allocation3 + $0x50] sm:$0xff] %v6362
        %6395 = vst [vmem:[#allocation3 + $0x58] sm:$0xff] %v6363
        %6396 = vst [vmem:[#allocation3 + $0x60] sm:$0xff] %v6364
        %6397 = vst [vmem:[#allocation3 + $0x68] sm:$0xff] %v6365
        %6398 = vst [vmem:[#allocation3 + $0x70] sm:$0xff] %v6366
        %6399 = vst [vmem:[#allocation3 + $0x78] sm:$0xff] %v6367
        %6400 = vst [vmem:[#allocation3 + $0x80] sm:$0xff] %v6368
        %6401 = vst [vmem:[#allocation3 + $0x88] sm:$0xff] %v6369
        %6402 = vst [vmem:[#allocation3 + $0x90] sm:$0xff] %v6370
        %6403 = vst [vmem:[#allocation3 + $0x98] sm:$0xff] %v6371
        %6404 = vst [vmem:[#allocation3 + $0xa0] sm:$0xff] %v6372
        %6405 = vst [vmem:[#allocation3 + $0xa8] sm:$0xff] %v6373
        %6406 = vst [vmem:[#allocation3 + $0xb0] sm:$0xff] %v6374
        %6407 = vst [vmem:[#allocation3 + $0xb8] sm:$0xff] %v6375
        %6408 = vst [vmem:[#allocation3 + $0xc0] sm:$0xff] %v6376
        %6409 = vst [vmem:[#allocation3 + $0xc8] sm:$0xff] %v6377
        %6410 = vst [vmem:[#allocation3 + $0xd0] sm:$0xff] %v6378
        %6411 = vst [vmem:[#allocation3 + $0xd8] sm:$0xff] %v6379
        %6412 = vst [vmem:[#allocation3 + $0xe0] sm:$0xff] %v6380
        %6413 = vst [vmem:[#allocation3 + $0xe8] sm:$0xff] %v6381
        %6414 = vst [vmem:[#allocation3 + $0xf0] sm:$0xff] %v6382
        %6415 = vst [vmem:[#allocation3 + $0xf8] sm:$0xff] %v6383
        %v6416 = vld [vmem:[%s6045 + $0x8] sm:$0xff]
        %v6417 = vld [vmem:[%s6045 + $0x10] sm:$0xff]
        %v6418 = vld [vmem:[%s6045 + $0x28] sm:$0xff]
        %v6419 = vld [vmem:[%s6045 + $0x30] sm:$0xff]
        %v6420 = vld [vmem:[%s6045 + $0x48] sm:$0xff]
        %v6421 = vld [vmem:[%s6045 + $0x50] sm:$0xff]
        %v6422 = vld [vmem:[%s6045 + $0x68] sm:$0xff]
        %v6423 = vld [vmem:[%s6045 + $0x70] sm:$0xff]
        %v6424 = vld [vmem:[%s6045 + $0x88] sm:$0xff]
        %v6425 = vld [vmem:[%s6045 + $0x90] sm:$0xff]
        %v6426 = vld [vmem:[%s6045 + $0xa8] sm:$0xff]
        %v6427 = vld [vmem:[%s6045 + $0xb0] sm:$0xff]
        %v6428 = vld [vmem:[%s6045 + $0xc8] sm:$0xff]
        %v6429 = vld [vmem:[%s6045 + $0xd0] sm:$0xff]
        %v6430 = vld [vmem:[%s6045 + $0xe8] sm:$0xff]
        %v6431 = vld [vmem:[%s6045 + $0xf0] sm:$0xff]
        %v6432 = vld [vmem:[%s6045 + $0x108] sm:$0xff]
        %v6433 = vld [vmem:[%s6045 + $0x110] sm:$0xff]
        %v6434 = vld [vmem:[%s6045 + $0x128] sm:$0xff]
        %v6435 = vld [vmem:[%s6045 + $0x130] sm:$0xff]
        %v6436 = vld [vmem:[%s6045 + $0x148] sm:$0xff]
        %v6437 = vld [vmem:[%s6045 + $0x150] sm:$0xff]
        %v6438 = vld [vmem:[%s6045 + $0x168] sm:$0xff]
        %v6439 = vld [vmem:[%s6045 + $0x170] sm:$0xff]
        %v6440 = vld [vmem:[%s6045 + $0x188] sm:$0xff]
        %v6441 = vld [vmem:[%s6045 + $0x190] sm:$0xff]
        %v6442 = vld [vmem:[%s6045 + $0x1a8] sm:$0xff]
        %v6443 = vld [vmem:[%s6045 + $0x1b0] sm:$0xff]
        %v6444 = vld [vmem:[%s6045 + $0x1c8] sm:$0xff]
        %v6445 = vld [vmem:[%s6045 + $0x1d0] sm:$0xff]
        %v6446 = vld [vmem:[%s6045 + $0x1e8] sm:$0xff]
        %v6447 = vld [vmem:[%s6045 + $0x1f0] sm:$0xff]
        %s6448 = scalar_lea.vmem [#allocation12], 896
        %v6449 = vld [vmem:[%s6448] sm:$0xff]
        %v6450 = vld [vmem:[%s6448 + $0x8] sm:$0xff]
        %v6451 = vld [vmem:[%s6448 + $0x10] sm:$0xff]
        %v6452 = vld [vmem:[%s6448 + $0x18] sm:$0xff]
        %v6453 = vld [vmem:[%s6448 + $0x20] sm:$0xff]
        %v6454 = vld [vmem:[%s6448 + $0x28] sm:$0xff]
        %v6455 = vld [vmem:[%s6448 + $0x30] sm:$0xff]
        %v6456 = vld [vmem:[%s6448 + $0x38] sm:$0xff]
        %v6457 = vld [vmem:[%s6448 + $0x40] sm:$0xff]
        %v6458 = vld [vmem:[%s6448 + $0x48] sm:$0xff]
        %v6459 = vld [vmem:[%s6448 + $0x50] sm:$0xff]
        %v6460 = vld [vmem:[%s6448 + $0x58] sm:$0xff]
        %v6461 = vld [vmem:[%s6448 + $0x60] sm:$0xff]
        %v6462 = vld [vmem:[%s6448 + $0x68] sm:$0xff]
        %v6463 = vld [vmem:[%s6448 + $0x70] sm:$0xff]
        %v6464 = vld [vmem:[%s6448 + $0x78] sm:$0xff]
        %6465 = vmatprep.subr.mxu0 0.0
        %6466 = vmatpush1.msra.mxu0 %v6449
        %6467 = vmatprep.subr.mxu0 0.0
        %6468 = vmatpush1.msra.mxu0 %v6450
        %6469 = vmatprep.subr.mxu0 0.0
        %6470 = vmatpush1.msra.mxu0 %v6451
        %6471 = vmatprep.subr.mxu0 0.0
        %6472 = vmatpush1.msra.mxu0 %v6452
        %6473 = vmatprep.subr.mxu0 0.0
        %6474 = vmatpush1.msra.mxu0 %v6453
        %6475 = vmatprep.subr.mxu0 0.0
        %6476 = vmatpush1.msra.mxu0 %v6454
        %6477 = vmatprep.subr.mxu0 0.0
        %6478 = vmatpush1.msra.mxu0 %v6455
        %6479 = vmatprep.subr.mxu0 0.0
        %6480 = vmatpush1.msra.mxu0 %v6456
        %6481 = vmatprep.subr.mxu0 0.0
        %6482 = vmatpush1.msra.mxu0 %v6457
        %6483 = vmatprep.subr.mxu0 0.0
        %6484 = vmatpush1.msra.mxu0 %v6458
        %6485 = vmatprep.subr.mxu0 0.0
        %6486 = vmatpush1.msra.mxu0 %v6459
        %6487 = vmatprep.subr.mxu0 0.0
        %6488 = vmatpush1.msra.mxu0 %v6460
        %6489 = vmatprep.subr.mxu0 0.0
        %6490 = vmatpush1.msra.mxu0 %v6461
        %6491 = vmatprep.subr.mxu0 0.0
        %6492 = vmatpush1.msra.mxu0 %v6462
        %6493 = vmatprep.subr.mxu0 0.0
        %6494 = vmatpush1.msra.mxu0 %v6463
        %6495 = vmatprep.subr.mxu0 0.0
        %6496 = vmatpush1.msra.mxu0 %v6464
        %6497 = vmatprep.subr.mxu0 0.0
        %6498 = vmatpush1.msra.mxu0 0.0
        %6499 = vmatprep.subr.mxu0 0.0
        %6500 = vmatpush1.msra.mxu0 0.0
        %6501 = vmatprep.subr.mxu0 0.0
        %6502 = vmatpush1.msra.mxu0 0.0
        %6503 = vmatprep.subr.mxu0 0.0
        %6504 = vmatpush1.msra.mxu0 0.0
        %6505 = vmatprep.subr.mxu0 0.0
        %6506 = vmatpush1.msra.mxu0 0.0
        %6507 = vmatprep.subr.mxu0 0.0
        %6508 = vmatpush1.msra.mxu0 0.0
        %6509 = vmatprep.subr.mxu0 0.0
        %6510 = vmatpush1.msra.mxu0 0.0
        %6511 = vmatprep.subr.mxu0 0.0
        %6512 = vmatpush1.msra.mxu0 0.0
        %6513 = vmatprep.subr.mxu0 0.0
        %6514 = vmatpush1.msra.mxu0 0.0
        %6515 = vmatprep.subr.mxu0 0.0
        %6516 = vmatpush1.msra.mxu0 0.0
        %6517 = vmatprep.subr.mxu0 0.0
        %6518 = vmatpush1.msra.mxu0 0.0
        %6519 = vmatprep.subr.mxu0 0.0
        %6520 = vmatpush1.msra.mxu0 0.0
        %6521 = vmatprep.subr.mxu0 0.0
        %6522 = vmatpush1.msra.mxu0 0.0
        %6523 = vmatprep.subr.mxu0 0.0
        %6524 = vmatpush1.msra.mxu0 0.0
        %6525 = vmatprep.subr.mxu0 0.0
        %6526 = vmatpush1.msra.mxu0 0.0
        %6527 = vmatprep.subr.mxu0 0.0
        %6528 = vmatpush1.msra.mxu0 0.0
        %6529 = vmatprep.mubr.f32.mxu0 0.0
        %6530 = vmatmul.mubr.f32.gmra.mrb[0].mxu0 %v6416
        %v6531 = vpop.f32.mrb[0].mxu0
        %v6532 = vadd.f32 0.0, %v6531
        %v6533 = vpop.f32.mrb[0].mxu0
        %6534 = vmatprep.mubr.f32.mxu0 0.0
        %6535 = vmatmul.mubr.f32.gmra.mrb[0].mxu0 %v6417
        %v6536 = vpop.f32.mrb[0].mxu0
        %v6537 = vadd.f32 0.0, %v6536
        %v6538 = vpop.f32.mrb[0].mxu0
        %6539 = vmatprep.mubr.f32.mxu0 0.0
        %6540 = vmatmul.mubr.f32.gmra.mrb[0].mxu0 %v6418
        %v6541 = vpop.f32.mrb[0].mxu0
        %v6542 = vadd.f32 0.0, %v6541
        %v6543 = vpop.f32.mrb[0].mxu0
        %6544 = vmatprep.mubr.f32.mxu0 0.0
        %6545 = vmatmul.mubr.f32.gmra.mrb[0].mxu0 %v6419
        %v6546 = vpop.f32.mrb[0].mxu0
        %v6547 = vadd.f32 0.0, %v6546
        %v6548 = vpop.f32.mrb[0].mxu0
        %6549 = vmatprep.mubr.f32.mxu0 0.0
        %6550 = vmatmul.mubr.f32.gmra.mrb[0].mxu0 %v6420
        %v6551 = vpop.f32.mrb[0].mxu0
        %v6552 = vadd.f32 0.0, %v6551
        %v6553 = vpop.f32.mrb[0].mxu0
        %6554 = vmatprep.mubr.f32.mxu0 0.0
        %6555 = vmatmul.mubr.f32.gmra.mrb[0].mxu0 %v6421
        %v6556 = vpop.f32.mrb[0].mxu0
        %v6557 = vadd.f32 0.0, %v6556
        %v6558 = vpop.f32.mrb[0].mxu0
        %6559 = vmatprep.mubr.f32.mxu0 0.0
        %6560 = vmatmul.mubr.f32.gmra.mrb[0].mxu0 %v6422
        %v6561 = vpop.f32.mrb[0].mxu0
        %v6562 = vadd.f32 0.0, %v6561
        %v6563 = vpop.f32.mrb[0].mxu0
        %6564 = vmatprep.mubr.f32.mxu0 0.0
        %6565 = vmatmul.mubr.f32.gmra.mrb[0].mxu0 %v6423
        %v6566 = vpop.f32.mrb[0].mxu0
        %v6567 = vadd.f32 0.0, %v6566
        %v6568 = vpop.f32.mrb[0].mxu0
        %6569 = vmatprep.mubr.f32.mxu0 0.0
        %6570 = vmatmul.mubr.f32.gmra.mrb[0].mxu0 %v6424
        %v6571 = vpop.f32.mrb[0].mxu0
        %v6572 = vadd.f32 0.0, %v6571
        %v6573 = vpop.f32.mrb[0].mxu0
        %6574 = vmatprep.mubr.f32.mxu0 0.0
        %6575 = vmatmul.mubr.f32.gmra.mrb[0].mxu0 %v6425
        %v6576 = vpop.f32.mrb[0].mxu0
        %v6577 = vadd.f32 0.0, %v6576
        %v6578 = vpop.f32.mrb[0].mxu0
        %6579 = vmatprep.mubr.f32.mxu0 0.0
        %6580 = vmatmul.mubr.f32.gmra.mrb[0].mxu0 %v6426
        %v6581 = vpop.f32.mrb[0].mxu0
        %v6582 = vadd.f32 0.0, %v6581
        %v6583 = vpop.f32.mrb[0].mxu0
        %6584 = vmatprep.mubr.f32.mxu0 0.0
        %6585 = vmatmul.mubr.f32.gmra.mrb[0].mxu0 %v6427
        %v6586 = vpop.f32.mrb[0].mxu0
        %v6587 = vadd.f32 0.0, %v6586
        %v6588 = vpop.f32.mrb[0].mxu0
        %6589 = vmatprep.mubr.f32.mxu0 0.0
        %6590 = vmatmul.mubr.f32.gmra.mrb[0].mxu0 %v6428
        %v6591 = vpop.f32.mrb[0].mxu0
        %v6592 = vadd.f32 0.0, %v6591
        %v6593 = vpop.f32.mrb[0].mxu0
        %6594 = vmatprep.mubr.f32.mxu0 0.0
        %6595 = vmatmul.mubr.f32.gmra.mrb[0].mxu0 %v6429
        %v6596 = vpop.f32.mrb[0].mxu0
        %v6597 = vadd.f32 0.0, %v6596
        %v6598 = vpop.f32.mrb[0].mxu0
        %6599 = vmatprep.mubr.f32.mxu0 0.0
        %6600 = vmatmul.mubr.f32.gmra.mrb[0].mxu0 %v6430
        %v6601 = vpop.f32.mrb[0].mxu0
        %v6602 = vadd.f32 0.0, %v6601
        %v6603 = vpop.f32.mrb[0].mxu0
        %6604 = vmatprep.mubr.f32.mxu0 0.0
        %6605 = vmatmul.mubr.f32.gmra.mrb[0].mxu0 %v6431
        %v6606 = vpop.f32.mrb[0].mxu0
        %v6607 = vadd.f32 0.0, %v6606
        %v6608 = vpop.f32.mrb[0].mxu0
        %6609 = vmatprep.mubr.f32.mxu0 0.0
        %6610 = vmatmul.mubr.f32.gmra.mrb[0].mxu0 %v6432
        %v6611 = vpop.f32.mrb[0].mxu0
        %v6612 = vadd.f32 0.0, %v6611
        %v6613 = vpop.f32.mrb[0].mxu0
        %6614 = vmatprep.mubr.f32.mxu0 0.0
        %6615 = vmatmul.mubr.f32.gmra.mrb[0].mxu0 %v6433
        %v6616 = vpop.f32.mrb[0].mxu0
        %v6617 = vadd.f32 0.0, %v6616
        %v6618 = vpop.f32.mrb[0].mxu0
        %6619 = vmatprep.mubr.f32.mxu0 0.0
        %6620 = vmatmul.mubr.f32.gmra.mrb[0].mxu0 %v6434
        %v6621 = vpop.f32.mrb[0].mxu0
        %v6622 = vadd.f32 0.0, %v6621
        %v6623 = vpop.f32.mrb[0].mxu0
        %6624 = vmatprep.mubr.f32.mxu0 0.0
        %6625 = vmatmul.mubr.f32.gmra.mrb[0].mxu0 %v6435
        %v6626 = vpop.f32.mrb[0].mxu0
        %v6627 = vadd.f32 0.0, %v6626
        %v6628 = vpop.f32.mrb[0].mxu0
        %6629 = vmatprep.mubr.f32.mxu0 0.0
        %6630 = vmatmul.mubr.f32.gmra.mrb[0].mxu0 %v6436
        %v6631 = vpop.f32.mrb[0].mxu0
        %v6632 = vadd.f32 0.0, %v6631
        %v6633 = vpop.f32.mrb[0].mxu0
        %6634 = vmatprep.mubr.f32.mxu0 0.0
        %6635 = vmatmul.mubr.f32.gmra.mrb[0].mxu0 %v6437
        %v6636 = vpop.f32.mrb[0].mxu0
        %v6637 = vadd.f32 0.0, %v6636
        %v6638 = vpop.f32.mrb[0].mxu0
        %6639 = vmatprep.mubr.f32.mxu0 0.0
        %6640 = vmatmul.mubr.f32.gmra.mrb[0].mxu0 %v6438
        %v6641 = vpop.f32.mrb[0].mxu0
        %v6642 = vadd.f32 0.0, %v6641
        %v6643 = vpop.f32.mrb[0].mxu0
        %6644 = vmatprep.mubr.f32.mxu0 0.0
        %6645 = vmatmul.mubr.f32.gmra.mrb[0].mxu0 %v6439
        %v6646 = vpop.f32.mrb[0].mxu0
        %v6647 = vadd.f32 0.0, %v6646
        %v6648 = vpop.f32.mrb[0].mxu0
        %6649 = vmatprep.mubr.f32.mxu0 0.0
        %6650 = vmatmul.mubr.f32.gmra.mrb[0].mxu0 %v6440
        %v6651 = vpop.f32.mrb[0].mxu0
        %v6652 = vadd.f32 0.0, %v6651
        %v6653 = vpop.f32.mrb[0].mxu0
        %6654 = vmatprep.mubr.f32.mxu0 0.0
        %6655 = vmatmul.mubr.f32.gmra.mrb[0].mxu0 %v6441
        %v6656 = vpop.f32.mrb[0].mxu0
        %v6657 = vadd.f32 0.0, %v6656
        %v6658 = vpop.f32.mrb[0].mxu0
        %6659 = vmatprep.mubr.f32.mxu0 0.0
        %6660 = vmatmul.mubr.f32.gmra.mrb[0].mxu0 %v6442
        %v6661 = vpop.f32.mrb[0].mxu0
        %v6662 = vadd.f32 0.0, %v6661
        %v6663 = vpop.f32.mrb[0].mxu0
        %6664 = vmatprep.mubr.f32.mxu0 0.0
        %6665 = vmatmul.mubr.f32.gmra.mrb[0].mxu0 %v6443
        %v6666 = vpop.f32.mrb[0].mxu0
        %v6667 = vadd.f32 0.0, %v6666
        %v6668 = vpop.f32.mrb[0].mxu0
        %6669 = vmatprep.mubr.f32.mxu0 0.0
        %6670 = vmatmul.mubr.f32.gmra.mrb[0].mxu0 %v6444
        %v6671 = vpop.f32.mrb[0].mxu0
        %v6672 = vadd.f32 0.0, %v6671
        %v6673 = vpop.f32.mrb[0].mxu0
        %6674 = vmatprep.mubr.f32.mxu0 0.0
        %6675 = vmatmul.mubr.f32.gmra.mrb[0].mxu0 %v6445
        %v6676 = vpop.f32.mrb[0].mxu0
        %v6677 = vadd.f32 0.0, %v6676
        %v6678 = vpop.f32.mrb[0].mxu0
        %6679 = vmatprep.mubr.f32.mxu0 0.0
        %6680 = vmatmul.mubr.f32.gmra.mrb[0].mxu0 %v6446
        %v6681 = vpop.f32.mrb[0].mxu0
        %v6682 = vadd.f32 0.0, %v6681
        %v6683 = vpop.f32.mrb[0].mxu0
        %6684 = vmatprep.mubr.f32.mxu0 0.0
        %6685 = vmatmul.mubr.f32.gmra.mrb[0].mxu0 %v6447
        %v6686 = vpop.f32.mrb[0].mxu0
        %v6687 = vadd.f32 0.0, %v6686
        %v6688 = vpop.f32.mrb[0].mxu0
        %6689 = vdwg.mxu0
        %v6690 = vld [vmem:[#allocation3] sm:$0xff]
        %v6691 = vld [vmem:[#allocation3 + $0x8] sm:$0xff]
        %v6692 = vld [vmem:[#allocation3 + $0x10] sm:$0xff]
        %v6693 = vld [vmem:[#allocation3 + $0x18] sm:$0xff]
        %v6694 = vld [vmem:[#allocation3 + $0x20] sm:$0xff]
        %v6695 = vld [vmem:[#allocation3 + $0x28] sm:$0xff]
        %v6696 = vld [vmem:[#allocation3 + $0x30] sm:$0xff]
        %v6697 = vld [vmem:[#allocation3 + $0x38] sm:$0xff]
        %v6698 = vld [vmem:[#allocation3 + $0x40] sm:$0xff]
        %v6699 = vld [vmem:[#allocation3 + $0x48] sm:$0xff]
        %v6700 = vld [vmem:[#allocation3 + $0x50] sm:$0xff]
        %v6701 = vld [vmem:[#allocation3 + $0x58] sm:$0xff]
        %v6702 = vld [vmem:[#allocation3 + $0x60] sm:$0xff]
        %v6703 = vld [vmem:[#allocation3 + $0x68] sm:$0xff]
        %v6704 = vld [vmem:[#allocation3 + $0x70] sm:$0xff]
        %v6705 = vld [vmem:[#allocation3 + $0x78] sm:$0xff]
        %v6706 = vld [vmem:[#allocation3 + $0x80] sm:$0xff]
        %v6707 = vld [vmem:[#allocation3 + $0x88] sm:$0xff]
        %v6708 = vld [vmem:[#allocation3 + $0x90] sm:$0xff]
        %v6709 = vld [vmem:[#allocation3 + $0x98] sm:$0xff]
        %v6710 = vld [vmem:[#allocation3 + $0xa0] sm:$0xff]
        %v6711 = vld [vmem:[#allocation3 + $0xa8] sm:$0xff]
        %v6712 = vld [vmem:[#allocation3 + $0xb0] sm:$0xff]
        %v6713 = vld [vmem:[#allocation3 + $0xb8] sm:$0xff]
        %v6714 = vld [vmem:[#allocation3 + $0xc0] sm:$0xff]
        %v6715 = vld [vmem:[#allocation3 + $0xc8] sm:$0xff]
        %v6716 = vld [vmem:[#allocation3 + $0xd0] sm:$0xff]
        %v6717 = vld [vmem:[#allocation3 + $0xd8] sm:$0xff]
        %v6718 = vld [vmem:[#allocation3 + $0xe0] sm:$0xff]
        %v6719 = vld [vmem:[#allocation3 + $0xe8] sm:$0xff]
        %v6720 = vld [vmem:[#allocation3 + $0xf0] sm:$0xff]
        %v6721 = vld [vmem:[#allocation3 + $0xf8] sm:$0xff]
        %v6722 = vadd.f32 %v6690, %v6532
        %v6723 = vadd.f32 %v6691, %v6537
        %v6724 = vadd.f32 %v6692, %v6542
        %v6725 = vadd.f32 %v6693, %v6547
        %v6726 = vadd.f32 %v6694, %v6552
        %v6727 = vadd.f32 %v6695, %v6557
        %v6728 = vadd.f32 %v6696, %v6562
        %v6729 = vadd.f32 %v6697, %v6567
        %v6730 = vadd.f32 %v6698, %v6572
        %v6731 = vadd.f32 %v6699, %v6577
        %v6732 = vadd.f32 %v6700, %v6582
        %v6733 = vadd.f32 %v6701, %v6587
        %v6734 = vadd.f32 %v6702, %v6592
        %v6735 = vadd.f32 %v6703, %v6597
        %v6736 = vadd.f32 %v6704, %v6602
        %v6737 = vadd.f32 %v6705, %v6607
        %v6738 = vadd.f32 %v6706, %v6612
        %v6739 = vadd.f32 %v6707, %v6617
        %v6740 = vadd.f32 %v6708, %v6622
        %v6741 = vadd.f32 %v6709, %v6627
        %v6742 = vadd.f32 %v6710, %v6632
        %v6743 = vadd.f32 %v6711, %v6637
        %v6744 = vadd.f32 %v6712, %v6642
        %v6745 = vadd.f32 %v6713, %v6647
        %v6746 = vadd.f32 %v6714, %v6652
        %v6747 = vadd.f32 %v6715, %v6657
        %v6748 = vadd.f32 %v6716, %v6662
        %v6749 = vadd.f32 %v6717, %v6667
        %v6750 = vadd.f32 %v6718, %v6672
        %v6751 = vadd.f32 %v6719, %v6677
        %v6752 = vadd.f32 %v6720, %v6682
        %v6753 = vadd.f32 %v6721, %v6687
        %6754 = vst [vmem:[#allocation3] sm:$0xff] %v6722
        %6755 = vst [vmem:[#allocation3 + $0x8] sm:$0xff] %v6723
        %6756 = vst [vmem:[#allocation3 + $0x10] sm:$0xff] %v6724
        %6757 = vst [vmem:[#allocation3 + $0x18] sm:$0xff] %v6725
        %6758 = vst [vmem:[#allocation3 + $0x20] sm:$0xff] %v6726
        %6759 = vst [vmem:[#allocation3 + $0x28] sm:$0xff] %v6727
        %6760 = vst [vmem:[#allocation3 + $0x30] sm:$0xff] %v6728
        %6761 = vst [vmem:[#allocation3 + $0x38] sm:$0xff] %v6729
        %6762 = vst [vmem:[#allocation3 + $0x40] sm:$0xff] %v6730
        %6763 = vst [vmem:[#allocation3 + $0x48] sm:$0xff] %v6731
        %6764 = vst [vmem:[#allocation3 + $0x50] sm:$0xff] %v6732
        %6765 = vst [vmem:[#allocation3 + $0x58] sm:$0xff] %v6733
        %6766 = vst [vmem:[#allocation3 + $0x60] sm:$0xff] %v6734
        %6767 = vst [vmem:[#allocation3 + $0x68] sm:$0xff] %v6735
        %6768 = vst [vmem:[#allocation3 + $0x70] sm:$0xff] %v6736
        %6769 = vst [vmem:[#allocation3 + $0x78] sm:$0xff] %v6737
        %6770 = vst [vmem:[#allocation3 + $0x80] sm:$0xff] %v6738
        %6771 = vst [vmem:[#allocation3 + $0x88] sm:$0xff] %v6739
        %6772 = vst [vmem:[#allocation3 + $0x90] sm:$0xff] %v6740
        %6773 = vst [vmem:[#allocation3 + $0x98] sm:$0xff] %v6741
        %6774 = vst [vmem:[#allocation3 + $0xa0] sm:$0xff] %v6742
        %6775 = vst [vmem:[#allocation3 + $0xa8] sm:$0xff] %v6743
        %6776 = vst [vmem:[#allocation3 + $0xb0] sm:$0xff] %v6744
        %6777 = vst [vmem:[#allocation3 + $0xb8] sm:$0xff] %v6745
        %6778 = vst [vmem:[#allocation3 + $0xc0] sm:$0xff] %v6746
        %6779 = vst [vmem:[#allocation3 + $0xc8] sm:$0xff] %v6747
        %6780 = vst [vmem:[#allocation3 + $0xd0] sm:$0xff] %v6748
        %6781 = vst [vmem:[#allocation3 + $0xd8] sm:$0xff] %v6749
        %6782 = vst [vmem:[#allocation3 + $0xe0] sm:$0xff] %v6750
        %6783 = vst [vmem:[#allocation3 + $0xe8] sm:$0xff] %v6751
        %6784 = vst [vmem:[#allocation3 + $0xf0] sm:$0xff] %v6752
        %6785 = vst [vmem:[#allocation3 + $0xf8] sm:$0xff] %v6753
        %v6786 = vld [vmem:[%s6045 + $0x9] sm:$0xff]
        %v6787 = vld [vmem:[%s6045 + $0x11] sm:$0xff]
        %v6788 = vld [vmem:[%s6045 + $0x29] sm:$0xff]
        %v6789 = vld [vmem:[%s6045 + $0x31] sm:$0xff]
        %v6790 = vld [vmem:[%s6045 + $0x49] sm:$0xff]
        %v6791 = vld [vmem:[%s6045 + $0x51] sm:$0xff]
        %v6792 = vld [vmem:[%s6045 + $0x69] sm:$0xff]
        %v6793 = vld [vmem:[%s6045 + $0x71] sm:$0xff]
        %v6794 = vld [vmem:[%s6045 + $0x89] sm:$0xff]
        %v6795 = vld [vmem:[%s6045 + $0x91] sm:$0xff]
        %v6796 = vld [vmem:[%s6045 + $0xa9] sm:$0xff]
        %v6797 = vld [vmem:[%s6045 + $0xb1] sm:$0xff]
        %v6798 = vld [vmem:[%s6045 + $0xc9] sm:$0xff]
        %v6799 = vld [vmem:[%s6045 + $0xd1] sm:$0xff]
        %v6800 = vld [vmem:[%s6045 + $0xe9] sm:$0xff]
        %v6801 = vld [vmem:[%s6045 + $0xf1] sm:$0xff]
        %v6802 = vld [vmem:[%s6045 + $0x109] sm:$0xff]
        %v6803 = vld [vmem:[%s6045 + $0x111] sm:$0xff]
        %v6804 = vld [vmem:[%s6045 + $0x129] sm:$0xff]
        %v6805 = vld [vmem:[%s6045 + $0x131] sm:$0xff]
        %v6806 = vld [vmem:[%s6045 + $0x149] sm:$0xff]
        %v6807 = vld [vmem:[%s6045 + $0x151] sm:$0xff]
        %v6808 = vld [vmem:[%s6045 + $0x169] sm:$0xff]
        %v6809 = vld [vmem:[%s6045 + $0x171] sm:$0xff]
        %v6810 = vld [vmem:[%s6045 + $0x189] sm:$0xff]
        %v6811 = vld [vmem:[%s6045 + $0x191] sm:$0xff]
        %v6812 = vld [vmem:[%s6045 + $0x1a9] sm:$0xff]
        %v6813 = vld [vmem:[%s6045 + $0x1b1] sm:$0xff]
        %v6814 = vld [vmem:[%s6045 + $0x1c9] sm:$0xff]
        %v6815 = vld [vmem:[%s6045 + $0x1d1] sm:$0xff]
        %v6816 = vld [vmem:[%s6045 + $0x1e9] sm:$0xff]
        %v6817 = vld [vmem:[%s6045 + $0x1f1] sm:$0xff]
        %s6818 = scalar_lea.vmem [#allocation12], 1024
        %v6819 = vld [vmem:[%s6818] sm:$0xff]
        %v6820 = vld [vmem:[%s6818 + $0x8] sm:$0xff]
        %v6821 = vld [vmem:[%s6818 + $0x10] sm:$0xff]
        %v6822 = vld [vmem:[%s6818 + $0x18] sm:$0xff]
        %v6823 = vld [vmem:[%s6818 + $0x20] sm:$0xff]
        %v6824 = vld [vmem:[%s6818 + $0x28] sm:$0xff]
        %v6825 = vld [vmem:[%s6818 + $0x30] sm:$0xff]
        %v6826 = vld [vmem:[%s6818 + $0x38] sm:$0xff]
        %v6827 = vld [vmem:[%s6818 + $0x40] sm:$0xff]
        %v6828 = vld [vmem:[%s6818 + $0x48] sm:$0xff]
        %v6829 = vld [vmem:[%s6818 + $0x50] sm:$0xff]
        %v6830 = vld [vmem:[%s6818 + $0x58] sm:$0xff]
        %v6831 = vld [vmem:[%s6818 + $0x60] sm:$0xff]
        %v6832 = vld [vmem:[%s6818 + $0x68] sm:$0xff]
        %v6833 = vld [vmem:[%s6818 + $0x70] sm:$0xff]
        %v6834 = vld [vmem:[%s6818 + $0x78] sm:$0xff]
        %6835 = vmatprep.subr.mxu0 0.0
        %6836 = vmatpush1.msra.mxu0 %v6819
        %6837 = vmatprep.subr.mxu0 0.0
        %6838 = vmatpush1.msra.mxu0 %v6820
        %6839 = vmatprep.subr.mxu0 0.0
        %6840 = vmatpush1.msra.mxu0 %v6821
        %6841 = vmatprep.subr.mxu0 0.0
        %6842 = vmatpush1.msra.mxu0 %v6822
        %6843 = vmatprep.subr.mxu0 0.0
        %6844 = vmatpush1.msra.mxu0 %v6823
        %6845 = vmatprep.subr.mxu0 0.0
        %6846 = vmatpush1.msra.mxu0 %v6824
        %6847 = vmatprep.subr.mxu0 0.0
        %6848 = vmatpush1.msra.mxu0 %v6825
        %6849 = vmatprep.subr.mxu0 0.0
        %6850 = vmatpush1.msra.mxu0 %v6826
        %6851 = vmatprep.subr.mxu0 0.0
        %6852 = vmatpush1.msra.mxu0 %v6827
        %6853 = vmatprep.subr.mxu0 0.0
        %6854 = vmatpush1.msra.mxu0 %v6828
        %6855 = vmatprep.subr.mxu0 0.0
        %6856 = vmatpush1.msra.mxu0 %v6829
        %6857 = vmatprep.subr.mxu0 0.0
        %6858 = vmatpush1.msra.mxu0 %v6830
        %6859 = vmatprep.subr.mxu0 0.0
        %6860 = vmatpush1.msra.mxu0 %v6831
        %6861 = vmatprep.subr.mxu0 0.0
        %6862 = vmatpush1.msra.mxu0 %v6832
        %6863 = vmatprep.subr.mxu0 0.0
        %6864 = vmatpush1.msra.mxu0 %v6833
        %6865 = vmatprep.subr.mxu0 0.0
        %6866 = vmatpush1.msra.mxu0 %v6834
        %6867 = vmatprep.subr.mxu0 0.0
        %6868 = vmatpush1.msra.mxu0 0.0
        %6869 = vmatprep.subr.mxu0 0.0
        %6870 = vmatpush1.msra.mxu0 0.0
        %6871 = vmatprep.subr.mxu0 0.0
        %6872 = vmatpush1.msra.mxu0 0.0
        %6873 = vmatprep.subr.mxu0 0.0
        %6874 = vmatpush1.msra.mxu0 0.0
        %6875 = vmatprep.subr.mxu0 0.0
        %6876 = vmatpush1.msra.mxu0 0.0
        %6877 = vmatprep.subr.mxu0 0.0
        %6878 = vmatpush1.msra.mxu0 0.0
        %6879 = vmatprep.subr.mxu0 0.0
        %6880 = vmatpush1.msra.mxu0 0.0
        %6881 = vmatprep.subr.mxu0 0.0
        %6882 = vmatpush1.msra.mxu0 0.0
        %6883 = vmatprep.subr.mxu0 0.0
        %6884 = vmatpush1.msra.mxu0 0.0
        %6885 = vmatprep.subr.mxu0 0.0
        %6886 = vmatpush1.msra.mxu0 0.0
        %6887 = vmatprep.subr.mxu0 0.0
        %6888 = vmatpush1.msra.mxu0 0.0
        %6889 = vmatprep.subr.mxu0 0.0
        %6890 = vmatpush1.msra.mxu0 0.0
        %6891 = vmatprep.subr.mxu0 0.0
        %6892 = vmatpush1.msra.mxu0 0.0
        %6893 = vmatprep.subr.mxu0 0.0
        %6894 = vmatpush1.msra.mxu0 0.0
        %6895 = vmatprep.subr.mxu0 0.0
        %6896 = vmatpush1.msra.mxu0 0.0
        %6897 = vmatprep.subr.mxu0 0.0
        %6898 = vmatpush1.msra.mxu0 0.0
        %6899 = vmatprep.mubr.f32.mxu0 0.0
        %6900 = vmatmul.mubr.f32.gmra.mrb[0].mxu0 %v6786
        %v6901 = vpop.f32.mrb[0].mxu0
        %v6902 = vadd.f32 0.0, %v6901
        %v6903 = vpop.f32.mrb[0].mxu0
        %6904 = vmatprep.mubr.f32.mxu0 0.0
        %6905 = vmatmul.mubr.f32.gmra.mrb[0].mxu0 %v6787
        %v6906 = vpop.f32.mrb[0].mxu0
        %v6907 = vadd.f32 0.0, %v6906
        %v6908 = vpop.f32.mrb[0].mxu0
        %6909 = vmatprep.mubr.f32.mxu0 0.0
        %6910 = vmatmul.mubr.f32.gmra.mrb[0].mxu0 %v6788
        %v6911 = vpop.f32.mrb[0].mxu0
        %v6912 = vadd.f32 0.0, %v6911
        %v6913 = vpop.f32.mrb[0].mxu0
        %6914 = vmatprep.mubr.f32.mxu0 0.0
        %6915 = vmatmul.mubr.f32.gmra.mrb[0].mxu0 %v6789
        %v6916 = vpop.f32.mrb[0].mxu0
        %v6917 = vadd.f32 0.0, %v6916
        %v6918 = vpop.f32.mrb[0].mxu0
        %6919 = vmatprep.mubr.f32.mxu0 0.0
        %6920 = vmatmul.mubr.f32.gmra.mrb[0].mxu0 %v6790
        %v6921 = vpop.f32.mrb[0].mxu0
        %v6922 = vadd.f32 0.0, %v6921
        %v6923 = vpop.f32.mrb[0].mxu0
        %6924 = vmatprep.mubr.f32.mxu0 0.0
        %6925 = vmatmul.mubr.f32.gmra.mrb[0].mxu0 %v6791
        %v6926 = vpop.f32.mrb[0].mxu0
        %v6927 = vadd.f32 0.0, %v6926
        %v6928 = vpop.f32.mrb[0].mxu0
        %6929 = vmatprep.mubr.f32.mxu0 0.0
        %6930 = vmatmul.mubr.f32.gmra.mrb[0].mxu0 %v6792
        %v6931 = vpop.f32.mrb[0].mxu0
        %v6932 = vadd.f32 0.0, %v6931
        %v6933 = vpop.f32.mrb[0].mxu0
        %6934 = vmatprep.mubr.f32.mxu0 0.0
        %6935 = vmatmul.mubr.f32.gmra.mrb[0].mxu0 %v6793
        %v6936 = vpop.f32.mrb[0].mxu0
        %v6937 = vadd.f32 0.0, %v6936
        %v6938 = vpop.f32.mrb[0].mxu0
        %6939 = vmatprep.mubr.f32.mxu0 0.0
        %6940 = vmatmul.mubr.f32.gmra.mrb[0].mxu0 %v6794
        %v6941 = vpop.f32.mrb[0].mxu0
        %v6942 = vadd.f32 0.0, %v6941
        %v6943 = vpop.f32.mrb[0].mxu0
        %6944 = vmatprep.mubr.f32.mxu0 0.0
        %6945 = vmatmul.mubr.f32.gmra.mrb[0].mxu0 %v6795
        %v6946 = vpop.f32.mrb[0].mxu0
        %v6947 = vadd.f32 0.0, %v6946
        %v6948 = vpop.f32.mrb[0].mxu0
        %6949 = vmatprep.mubr.f32.mxu0 0.0
        %6950 = vmatmul.mubr.f32.gmra.mrb[0].mxu0 %v6796
        %v6951 = vpop.f32.mrb[0].mxu0
        %v6952 = vadd.f32 0.0, %v6951
        %v6953 = vpop.f32.mrb[0].mxu0
        %6954 = vmatprep.mubr.f32.mxu0 0.0
        %6955 = vmatmul.mubr.f32.gmra.mrb[0].mxu0 %v6797
        %v6956 = vpop.f32.mrb[0].mxu0
        %v6957 = vadd.f32 0.0, %v6956
        %v6958 = vpop.f32.mrb[0].mxu0
        %6959 = vmatprep.mubr.f32.mxu0 0.0
        %6960 = vmatmul.mubr.f32.gmra.mrb[0].mxu0 %v6798
        %v6961 = vpop.f32.mrb[0].mxu0
        %v6962 = vadd.f32 0.0, %v6961
        %v6963 = vpop.f32.mrb[0].mxu0
        %6964 = vmatprep.mubr.f32.mxu0 0.0
        %6965 = vmatmul.mubr.f32.gmra.mrb[0].mxu0 %v6799
        %v6966 = vpop.f32.mrb[0].mxu0
        %v6967 = vadd.f32 0.0, %v6966
        %v6968 = vpop.f32.mrb[0].mxu0
        %6969 = vmatprep.mubr.f32.mxu0 0.0
        %6970 = vmatmul.mubr.f32.gmra.mrb[0].mxu0 %v6800
        %v6971 = vpop.f32.mrb[0].mxu0
        %v6972 = vadd.f32 0.0, %v6971
        %v6973 = vpop.f32.mrb[0].mxu0
        %6974 = vmatprep.mubr.f32.mxu0 0.0
        %6975 = vmatmul.mubr.f32.gmra.mrb[0].mxu0 %v6801
        %v6976 = vpop.f32.mrb[0].mxu0
        %v6977 = vadd.f32 0.0, %v6976
        %v6978 = vpop.f32.mrb[0].mxu0
        %6979 = vmatprep.mubr.f32.mxu0 0.0
        %6980 = vmatmul.mubr.f32.gmra.mrb[0].mxu0 %v6802
        %v6981 = vpop.f32.mrb[0].mxu0
        %v6982 = vadd.f32 0.0, %v6981
        %v6983 = vpop.f32.mrb[0].mxu0
        %6984 = vmatprep.mubr.f32.mxu0 0.0
        %6985 = vmatmul.mubr.f32.gmra.mrb[0].mxu0 %v6803
        %v6986 = vpop.f32.mrb[0].mxu0
        %v6987 = vadd.f32 0.0, %v6986
        %v6988 = vpop.f32.mrb[0].mxu0
        %6989 = vmatprep.mubr.f32.mxu0 0.0
        %6990 = vmatmul.mubr.f32.gmra.mrb[0].mxu0 %v6804
        %v6991 = vpop.f32.mrb[0].mxu0
        %v6992 = vadd.f32 0.0, %v6991
        %v6993 = vpop.f32.mrb[0].mxu0
        %6994 = vmatprep.mubr.f32.mxu0 0.0
        %6995 = vmatmul.mubr.f32.gmra.mrb[0].mxu0 %v6805
        %v6996 = vpop.f32.mrb[0].mxu0
        %v6997 = vadd.f32 0.0, %v6996
        %v6998 = vpop.f32.mrb[0].mxu0
        %6999 = vmatprep.mubr.f32.mxu0 0.0
        %7000 = vmatmul.mubr.f32.gmra.mrb[0].mxu0 %v6806
        %v7001 = vpop.f32.mrb[0].mxu0
        %v7002 = vadd.f32 0.0, %v7001
        %v7003 = vpop.f32.mrb[0].mxu0
        %7004 = vmatprep.mubr.f32.mxu0 0.0
        %7005 = vmatmul.mubr.f32.gmra.mrb[0].mxu0 %v6807
        %v7006 = vpop.f32.mrb[0].mxu0
        %v7007 = vadd.f32 0.0, %v7006
        %v7008 = vpop.f32.mrb[0].mxu0
        %7009 = vmatprep.mubr.f32.mxu0 0.0
        %7010 = vmatmul.mubr.f32.gmra.mrb[0].mxu0 %v6808
        %v7011 = vpop.f32.mrb[0].mxu0
        %v7012 = vadd.f32 0.0, %v7011
        %v7013 = vpop.f32.mrb[0].mxu0
        %7014 = vmatprep.mubr.f32.mxu0 0.0
        %7015 = vmatmul.mubr.f32.gmra.mrb[0].mxu0 %v6809
        %v7016 = vpop.f32.mrb[0].mxu0
        %v7017 = vadd.f32 0.0, %v7016
        %v7018 = vpop.f32.mrb[0].mxu0
        %7019 = vmatprep.mubr.f32.mxu0 0.0
        %7020 = vmatmul.mubr.f32.gmra.mrb[0].mxu0 %v6810
        %v7021 = vpop.f32.mrb[0].mxu0
        %v7022 = vadd.f32 0.0, %v7021
        %v7023 = vpop.f32.mrb[0].mxu0
        %7024 = vmatprep.mubr.f32.mxu0 0.0
        %7025 = vmatmul.mubr.f32.gmra.mrb[0].mxu0 %v6811
        %v7026 = vpop.f32.mrb[0].mxu0
        %v7027 = vadd.f32 0.0, %v7026
        %v7028 = vpop.f32.mrb[0].mxu0
        %7029 = vmatprep.mubr.f32.mxu0 0.0
        %7030 = vmatmul.mubr.f32.gmra.mrb[0].mxu0 %v6812
        %v7031 = vpop.f32.mrb[0].mxu0
        %v7032 = vadd.f32 0.0, %v7031
        %v7033 = vpop.f32.mrb[0].mxu0
        %7034 = vmatprep.mubr.f32.mxu0 0.0
        %7035 = vmatmul.mubr.f32.gmra.mrb[0].mxu0 %v6813
        %v7036 = vpop.f32.mrb[0].mxu0
        %v7037 = vadd.f32 0.0, %v7036
        %v7038 = vpop.f32.mrb[0].mxu0
        %7039 = vmatprep.mubr.f32.mxu0 0.0
        %7040 = vmatmul.mubr.f32.gmra.mrb[0].mxu0 %v6814
        %v7041 = vpop.f32.mrb[0].mxu0
        %v7042 = vadd.f32 0.0, %v7041
        %v7043 = vpop.f32.mrb[0].mxu0
        %7044 = vmatprep.mubr.f32.mxu0 0.0
        %7045 = vmatmul.mubr.f32.gmra.mrb[0].mxu0 %v6815
        %v7046 = vpop.f32.mrb[0].mxu0
        %v7047 = vadd.f32 0.0, %v7046
        %v7048 = vpop.f32.mrb[0].mxu0
        %7049 = vmatprep.mubr.f32.mxu0 0.0
        %7050 = vmatmul.mubr.f32.gmra.mrb[0].mxu0 %v6816
        %v7051 = vpop.f32.mrb[0].mxu0
        %v7052 = vadd.f32 0.0, %v7051
        %v7053 = vpop.f32.mrb[0].mxu0
        %7054 = vmatprep.mubr.f32.mxu0 0.0
        %7055 = vmatmul.mubr.f32.gmra.mrb[0].mxu0 %v6817
        %v7056 = vpop.f32.mrb[0].mxu0
        %v7057 = vadd.f32 0.0, %v7056
        %v7058 = vpop.f32.mrb[0].mxu0
        %7059 = vdwg.mxu0
        %v7060 = vld [vmem:[#allocation3] sm:$0xff]
        %v7061 = vld [vmem:[#allocation3 + $0x8] sm:$0xff]
        %v7062 = vld [vmem:[#allocation3 + $0x10] sm:$0xff]
        %v7063 = vld [vmem:[#allocation3 + $0x18] sm:$0xff]
        %v7064 = vld [vmem:[#allocation3 + $0x20] sm:$0xff]
        %v7065 = vld [vmem:[#allocation3 + $0x28] sm:$0xff]
        %v7066 = vld [vmem:[#allocation3 + $0x30] sm:$0xff]
        %v7067 = vld [vmem:[#allocation3 + $0x38] sm:$0xff]
        %v7068 = vld [vmem:[#allocation3 + $0x40] sm:$0xff]
        %v7069 = vld [vmem:[#allocation3 + $0x48] sm:$0xff]
        %v7070 = vld [vmem:[#allocation3 + $0x50] sm:$0xff]
        %v7071 = vld [vmem:[#allocation3 + $0x58] sm:$0xff]
        %v7072 = vld [vmem:[#allocation3 + $0x60] sm:$0xff]
        %v7073 = vld [vmem:[#allocation3 + $0x68] sm:$0xff]
        %v7074 = vld [vmem:[#allocation3 + $0x70] sm:$0xff]
        %v7075 = vld [vmem:[#allocation3 + $0x78] sm:$0xff]
        %v7076 = vld [vmem:[#allocation3 + $0x80] sm:$0xff]
        %v7077 = vld [vmem:[#allocation3 + $0x88] sm:$0xff]
        %v7078 = vld [vmem:[#allocation3 + $0x90] sm:$0xff]
        %v7079 = vld [vmem:[#allocation3 + $0x98] sm:$0xff]
        %v7080 = vld [vmem:[#allocation3 + $0xa0] sm:$0xff]
        %v7081 = vld [vmem:[#allocation3 + $0xa8] sm:$0xff]
        %v7082 = vld [vmem:[#allocation3 + $0xb0] sm:$0xff]
        %v7083 = vld [vmem:[#allocation3 + $0xb8] sm:$0xff]
        %v7084 = vld [vmem:[#allocation3 + $0xc0] sm:$0xff]
        %v7085 = vld [vmem:[#allocation3 + $0xc8] sm:$0xff]
        %v7086 = vld [vmem:[#allocation3 + $0xd0] sm:$0xff]
        %v7087 = vld [vmem:[#allocation3 + $0xd8] sm:$0xff]
        %v7088 = vld [vmem:[#allocation3 + $0xe0] sm:$0xff]
        %v7089 = vld [vmem:[#allocation3 + $0xe8] sm:$0xff]
        %v7090 = vld [vmem:[#allocation3 + $0xf0] sm:$0xff]
        %v7091 = vld [vmem:[#allocation3 + $0xf8] sm:$0xff]
        %v7092 = vadd.f32 %v7060, %v6902
        %v7093 = vadd.f32 %v7061, %v6907
        %v7094 = vadd.f32 %v7062, %v6912
        %v7095 = vadd.f32 %v7063, %v6917
        %v7096 = vadd.f32 %v7064, %v6922
        %v7097 = vadd.f32 %v7065, %v6927
        %v7098 = vadd.f32 %v7066, %v6932
        %v7099 = vadd.f32 %v7067, %v6937
        %v7100 = vadd.f32 %v7068, %v6942
        %v7101 = vadd.f32 %v7069, %v6947
        %v7102 = vadd.f32 %v7070, %v6952
        %v7103 = vadd.f32 %v7071, %v6957
        %v7104 = vadd.f32 %v7072, %v6962
        %v7105 = vadd.f32 %v7073, %v6967
        %v7106 = vadd.f32 %v7074, %v6972
        %v7107 = vadd.f32 %v7075, %v6977
        %v7108 = vadd.f32 %v7076, %v6982
        %v7109 = vadd.f32 %v7077, %v6987
        %v7110 = vadd.f32 %v7078, %v6992
        %v7111 = vadd.f32 %v7079, %v6997
        %v7112 = vadd.f32 %v7080, %v7002
        %v7113 = vadd.f32 %v7081, %v7007
        %v7114 = vadd.f32 %v7082, %v7012
        %v7115 = vadd.f32 %v7083, %v7017
        %v7116 = vadd.f32 %v7084, %v7022
        %v7117 = vadd.f32 %v7085, %v7027
        %v7118 = vadd.f32 %v7086, %v7032
        %v7119 = vadd.f32 %v7087, %v7037
        %v7120 = vadd.f32 %v7088, %v7042
        %v7121 = vadd.f32 %v7089, %v7047
        %v7122 = vadd.f32 %v7090, %v7052
        %v7123 = vadd.f32 %v7091, %v7057
        %7124 = vst [vmem:[#allocation3] sm:$0xff] %v7092
        %7125 = vst [vmem:[#allocation3 + $0x8] sm:$0xff] %v7093
        %7126 = vst [vmem:[#allocation3 + $0x10] sm:$0xff] %v7094
        %7127 = vst [vmem:[#allocation3 + $0x18] sm:$0xff] %v7095
        %7128 = vst [vmem:[#allocation3 + $0x20] sm:$0xff] %v7096
        %7129 = vst [vmem:[#allocation3 + $0x28] sm:$0xff] %v7097
        %7130 = vst [vmem:[#allocation3 + $0x30] sm:$0xff] %v7098
        %7131 = vst [vmem:[#allocation3 + $0x38] sm:$0xff] %v7099
        %7132 = vst [vmem:[#allocation3 + $0x40] sm:$0xff] %v7100
        %7133 = vst [vmem:[#allocation3 + $0x48] sm:$0xff] %v7101
        %7134 = vst [vmem:[#allocation3 + $0x50] sm:$0xff] %v7102
        %7135 = vst [vmem:[#allocation3 + $0x58] sm:$0xff] %v7103
        %7136 = vst [vmem:[#allocation3 + $0x60] sm:$0xff] %v7104
        %7137 = vst [vmem:[#allocation3 + $0x68] sm:$0xff] %v7105
        %7138 = vst [vmem:[#allocation3 + $0x70] sm:$0xff] %v7106
        %7139 = vst [vmem:[#allocation3 + $0x78] sm:$0xff] %v7107
        %7140 = vst [vmem:[#allocation3 + $0x80] sm:$0xff] %v7108
        %7141 = vst [vmem:[#allocation3 + $0x88] sm:$0xff] %v7109
        %7142 = vst [vmem:[#allocation3 + $0x90] sm:$0xff] %v7110
        %7143 = vst [vmem:[#allocation3 + $0x98] sm:$0xff] %v7111
        %7144 = vst [vmem:[#allocation3 + $0xa0] sm:$0xff] %v7112
        %7145 = vst [vmem:[#allocation3 + $0xa8] sm:$0xff] %v7113
        %7146 = vst [vmem:[#allocation3 + $0xb0] sm:$0xff] %v7114
        %7147 = vst [vmem:[#allocation3 + $0xb8] sm:$0xff] %v7115
        %7148 = vst [vmem:[#allocation3 + $0xc0] sm:$0xff] %v7116
        %7149 = vst [vmem:[#allocation3 + $0xc8] sm:$0xff] %v7117
        %7150 = vst [vmem:[#allocation3 + $0xd0] sm:$0xff] %v7118
        %7151 = vst [vmem:[#allocation3 + $0xd8] sm:$0xff] %v7119
        %7152 = vst [vmem:[#allocation3 + $0xe0] sm:$0xff] %v7120
        %7153 = vst [vmem:[#allocation3 + $0xe8] sm:$0xff] %v7121
        %7154 = vst [vmem:[#allocation3 + $0xf0] sm:$0xff] %v7122
        %7155 = vst [vmem:[#allocation3 + $0xf8] sm:$0xff] %v7123
        %v7156 = vld [vmem:[#allocation3] sm:$0xff]
        %v7157 = vld [vmem:[#allocation3 + $0x8] sm:$0xff]
        %v7158 = vld [vmem:[#allocation3 + $0x10] sm:$0xff]
        %v7159 = vld [vmem:[#allocation3 + $0x18] sm:$0xff]
        %v7160 = vld [vmem:[#allocation3 + $0x20] sm:$0xff]
        %v7161 = vld [vmem:[#allocation3 + $0x28] sm:$0xff]
        %v7162 = vld [vmem:[#allocation3 + $0x30] sm:$0xff]
        %v7163 = vld [vmem:[#allocation3 + $0x38] sm:$0xff]
        %v7164 = vld [vmem:[#allocation3 + $0x40] sm:$0xff]
        %v7165 = vld [vmem:[#allocation3 + $0x48] sm:$0xff]
        %v7166 = vld [vmem:[#allocation3 + $0x50] sm:$0xff]
        %v7167 = vld [vmem:[#allocation3 + $0x58] sm:$0xff]
        %v7168 = vld [vmem:[#allocation3 + $0x60] sm:$0xff]
        %v7169 = vld [vmem:[#allocation3 + $0x68] sm:$0xff]
        %v7170 = vld [vmem:[#allocation3 + $0x70] sm:$0xff]
        %v7171 = vld [vmem:[#allocation3 + $0x78] sm:$0xff]
        %v7172 = vld [vmem:[#allocation3 + $0x80] sm:$0xff]
        %v7173 = vld [vmem:[#allocation3 + $0x88] sm:$0xff]
        %v7174 = vld [vmem:[#allocation3 + $0x90] sm:$0xff]
        %v7175 = vld [vmem:[#allocation3 + $0x98] sm:$0xff]
        %v7176 = vld [vmem:[#allocation3 + $0xa0] sm:$0xff]
        %v7177 = vld [vmem:[#allocation3 + $0xa8] sm:$0xff]
        %v7178 = vld [vmem:[#allocation3 + $0xb0] sm:$0xff]
        %v7179 = vld [vmem:[#allocation3 + $0xb8] sm:$0xff]
        %v7180 = vld [vmem:[#allocation3 + $0xc0] sm:$0xff]
        %v7181 = vld [vmem:[#allocation3 + $0xc8] sm:$0xff]
        %v7182 = vld [vmem:[#allocation3 + $0xd0] sm:$0xff]
        %v7183 = vld [vmem:[#allocation3 + $0xd8] sm:$0xff]
        %v7184 = vld [vmem:[#allocation3 + $0xe0] sm:$0xff]
        %v7185 = vld [vmem:[#allocation3 + $0xe8] sm:$0xff]
        %v7186 = vld [vmem:[#allocation3 + $0xf0] sm:$0xff]
        %v7187 = vld [vmem:[#allocation3 + $0xf8] sm:$0xff]
        %v7188 = vld [vmem:[#allocation13] sm:$0x1]
        %v7190 = vlaneseq
        %v7191 = vshrl.u32 %v7190, 7
        %v7192 = vsub.s32 0, %v7191
        %v7193 = vrot.slane %v7188, %v7192
        %v7195 = vmul.f32 %v7156, %v7193
        %v7196 = vmul.f32 %v7157, %v7193
        %v7197 = vmul.f32 %v7158, %v7193
        %v7198 = vmul.f32 %v7159, %v7193
        %v7199 = vmul.f32 %v7160, %v7193
        %v7200 = vmul.f32 %v7161, %v7193
        %v7201 = vmul.f32 %v7162, %v7193
        %v7202 = vmul.f32 %v7163, %v7193
        %v7203 = vmul.f32 %v7164, %v7193
        %v7204 = vmul.f32 %v7165, %v7193
        %v7205 = vmul.f32 %v7166, %v7193
        %v7206 = vmul.f32 %v7167, %v7193
        %v7207 = vmul.f32 %v7168, %v7193
        %v7208 = vmul.f32 %v7169, %v7193
        %v7209 = vmul.f32 %v7170, %v7193
        %v7210 = vmul.f32 %v7171, %v7193
        %v7211 = vmul.f32 %v7172, %v7193
        %v7212 = vmul.f32 %v7173, %v7193
        %v7213 = vmul.f32 %v7174, %v7193
        %v7214 = vmul.f32 %v7175, %v7193
        %v7215 = vmul.f32 %v7176, %v7193
        %v7216 = vmul.f32 %v7177, %v7193
        %v7217 = vmul.f32 %v7178, %v7193
        %v7218 = vmul.f32 %v7179, %v7193
        %v7219 = vmul.f32 %v7180, %v7193
        %v7220 = vmul.f32 %v7181, %v7193
        %v7221 = vmul.f32 %v7182, %v7193
        %v7222 = vmul.f32 %v7183, %v7193
        %v7223 = vmul.f32 %v7184, %v7193
        %v7224 = vmul.f32 %v7185, %v7193
        %v7225 = vmul.f32 %v7186, %v7193
        %v7226 = vmul.f32 %v7187, %v7193
        %v7227 = vld [vmem:[#allocation15] sm:$0x1]
        %v7229 = vlaneseq
        %v7230 = vshrl.u32 %v7229, 7
        %v7231 = vsub.s32 0, %v7230
        %v7232 = vrot.slane %v7227, %v7231
        %v7234 = vadd.f32 %v7195, %v7232
        %v7235 = vadd.f32 %v7196, %v7232
        %v7236 = vadd.f32 %v7197, %v7232
        %v7237 = vadd.f32 %v7198, %v7232
        %v7238 = vadd.f32 %v7199, %v7232
        %v7239 = vadd.f32 %v7200, %v7232
        %v7240 = vadd.f32 %v7201, %v7232
        %v7241 = vadd.f32 %v7202, %v7232
        %v7242 = vadd.f32 %v7203, %v7232
        %v7243 = vadd.f32 %v7204, %v7232
        %v7244 = vadd.f32 %v7205, %v7232
        %v7245 = vadd.f32 %v7206, %v7232
        %v7246 = vadd.f32 %v7207, %v7232
        %v7247 = vadd.f32 %v7208, %v7232
        %v7248 = vadd.f32 %v7209, %v7232
        %v7249 = vadd.f32 %v7210, %v7232
        %v7250 = vadd.f32 %v7211, %v7232
        %v7251 = vadd.f32 %v7212, %v7232
        %v7252 = vadd.f32 %v7213, %v7232
        %v7253 = vadd.f32 %v7214, %v7232
        %v7254 = vadd.f32 %v7215, %v7232
        %v7255 = vadd.f32 %v7216, %v7232
        %v7256 = vadd.f32 %v7217, %v7232
        %v7257 = vadd.f32 %v7218, %v7232
        %v7258 = vadd.f32 %v7219, %v7232
        %v7259 = vadd.f32 %v7220, %v7232
        %v7260 = vadd.f32 %v7221, %v7232
        %v7261 = vadd.f32 %v7222, %v7232
        %v7262 = vadd.f32 %v7223, %v7232
        %v7263 = vadd.f32 %v7224, %v7232
        %v7264 = vadd.f32 %v7225, %v7232
        %v7265 = vadd.f32 %v7226, %v7232
        %v7266 = vmax.f32 %v7234, 0.0
        %v7267 = vmax.f32 %v7235, 0.0
        %v7268 = vmax.f32 %v7236, 0.0
        %v7269 = vmax.f32 %v7237, 0.0
        %v7270 = vmax.f32 %v7238, 0.0
        %v7271 = vmax.f32 %v7239, 0.0
        %v7272 = vmax.f32 %v7240, 0.0
        %v7273 = vmax.f32 %v7241, 0.0
        %v7274 = vmax.f32 %v7242, 0.0
        %v7275 = vmax.f32 %v7243, 0.0
        %v7276 = vmax.f32 %v7244, 0.0
        %v7277 = vmax.f32 %v7245, 0.0
        %v7278 = vmax.f32 %v7246, 0.0
        %v7279 = vmax.f32 %v7247, 0.0
        %v7280 = vmax.f32 %v7248, 0.0
        %v7281 = vmax.f32 %v7249, 0.0
        %v7282 = vmax.f32 %v7250, 0.0
        %v7283 = vmax.f32 %v7251, 0.0
        %v7284 = vmax.f32 %v7252, 0.0
        %v7285 = vmax.f32 %v7253, 0.0
        %v7286 = vmax.f32 %v7254, 0.0
        %v7287 = vmax.f32 %v7255, 0.0
        %v7288 = vmax.f32 %v7256, 0.0
        %v7289 = vmax.f32 %v7257, 0.0
        %v7290 = vmax.f32 %v7258, 0.0
        %v7291 = vmax.f32 %v7259, 0.0
        %v7292 = vmax.f32 %v7260, 0.0
        %v7293 = vmax.f32 %v7261, 0.0
        %v7294 = vmax.f32 %v7262, 0.0
        %v7295 = vmax.f32 %v7263, 0.0
        %v7296 = vmax.f32 %v7264, 0.0
        %v7297 = vmax.f32 %v7265, 0.0
        %7298 = vst [vmem:[%s375] sm:$0xff] %v7266
        %7299 = vst [vmem:[%s375 + $0x8] sm:$0xff] %v7267
        %7300 = vst [vmem:[%s375 + $0x10] sm:$0xff] %v7268
        %7301 = vst [vmem:[%s375 + $0x18] sm:$0xff] %v7269
        %7302 = vst [vmem:[%s375 + $0x20] sm:$0xff] %v7270
        %7303 = vst [vmem:[%s375 + $0x28] sm:$0xff] %v7271
        %7304 = vst [vmem:[%s375 + $0x30] sm:$0xff] %v7272
        %7305 = vst [vmem:[%s375 + $0x38] sm:$0xff] %v7273
        %7306 = vst [vmem:[%s375 + $0x40] sm:$0xff] %v7274
        %7307 = vst [vmem:[%s375 + $0x48] sm:$0xff] %v7275
        %7308 = vst [vmem:[%s375 + $0x50] sm:$0xff] %v7276
        %7309 = vst [vmem:[%s375 + $0x58] sm:$0xff] %v7277
        %7310 = vst [vmem:[%s375 + $0x60] sm:$0xff] %v7278
        %7311 = vst [vmem:[%s375 + $0x68] sm:$0xff] %v7279
        %7312 = vst [vmem:[%s375 + $0x70] sm:$0xff] %v7280
        %7313 = vst [vmem:[%s375 + $0x78] sm:$0xff] %v7281
        %7314 = vst [vmem:[%s375 + $0x80] sm:$0xff] %v7282
        %7315 = vst [vmem:[%s375 + $0x88] sm:$0xff] %v7283
        %7316 = vst [vmem:[%s375 + $0x90] sm:$0xff] %v7284
        %7317 = vst [vmem:[%s375 + $0x98] sm:$0xff] %v7285
        %7318 = vst [vmem:[%s375 + $0xa0] sm:$0xff] %v7286
        %7319 = vst [vmem:[%s375 + $0xa8] sm:$0xff] %v7287
        %7320 = vst [vmem:[%s375 + $0xb0] sm:$0xff] %v7288
        %7321 = vst [vmem:[%s375 + $0xb8] sm:$0xff] %v7289
        %7322 = vst [vmem:[%s375 + $0xc0] sm:$0xff] %v7290
        %7323 = vst [vmem:[%s375 + $0xc8] sm:$0xff] %v7291
        %7324 = vst [vmem:[%s375 + $0xd0] sm:$0xff] %v7292
        %7325 = vst [vmem:[%s375 + $0xd8] sm:$0xff] %v7293
        %7326 = vst [vmem:[%s375 + $0xe0] sm:$0xff] %v7294
        %7327 = vst [vmem:[%s375 + $0xe8] sm:$0xff] %v7295
        %7328 = vst [vmem:[%s375 + $0xf0] sm:$0xff] %v7296
        %7329 = vst [vmem:[%s375 + $0xf8] sm:$0xff] %v7297
        %s7330 = sand.u32 %s187, 1
        %s7331 = scalar_lea.sflag [#allocation6], %s7330
        %s7332 = sand.u32 %s187, 1
        %s7333 = smul.addr %s7332, 256
        %s7334 = scalar_lea.vmem [#allocation16], %s7333
        // Predicated region
        $region77: #{tpu_custom_call.1} parent=47 // pred_check
          %p7335 = pneg %p197
        $region78: #{tpu_custom_call.1} parent=47 // pred_check_branch
          %7337 = sbr.rel (%p7335) target = $region80
        $region79: #{tpu_custom_call.1} parent=47 // pred_region
          %s7339 = ssub.s32 4096, 4096
          %7340 = vsyncadd %s7331, %s7339
          %s7341 = smul.addr %s27, 32
          %s7342 = smul.addr %s7341, 128
          %s7343 = scalar_lea.hbm %s7, %s7342
          %s7344 = sshll.u32 %s7334, 4
          %s7345 = int_to_ptr.vmem [resolvable:$true] %s7344
          %7350 = dma.vmem_to_hbm [thread:$0]  %s7345, 4096, %s7343, %s7331, 128, 128, 8
        $region80: #{tpu_custom_call.1} parent=47 // pred_fallthru
          _
      $region48: #{tpu_custom_call.1} parent=5 // pred_fallthru
        _
      %p7351 = scmp.le.s32.totalorder 2, %s22
      // Predicated region
      $region81: #{tpu_custom_call.1} parent=5 // pred_check
        %p7352 = pneg %p7351
      $region82: #{tpu_custom_call.1} parent=5 // pred_check_branch
        %7354 = sbr.rel (%p7352) target = $region84
      $region83: #{tpu_custom_call.1} parent=5 // pred_region
        %s7355 = ssub.s32 %s22, 2
        // Predicated region
        $region85: #{tpu_custom_call.1} parent=83 // pred_check
          %p7356 = pneg %p203
        $region86: #{tpu_custom_call.1} parent=83 // pred_check_branch
          %7358 = sbr.rel (%p7356) target = $region88
        $region87: #{tpu_custom_call.1} parent=83 // pred_region
          %s7359 = sand.u32 %s188, 1
          %s7360 = scalar_lea.sflag [#allocation6], %s7359
          %s7361 = sand.u32 %s188, 1
          %s7362 = smul.addr %s7361, 256
          %s7363 = scalar_lea.vmem [#allocation16], %s7362
          %7364 = dma.done %s7360, 4096
        $region88: #{tpu_custom_call.1} parent=83 // pred_fallthru
          _
      $region84: #{tpu_custom_call.1} parent=5 // pred_fallthru
        _
    $region6: #{tpu_custom_call.1} parent=1 // loop_footer
      %s26 = sadd.s32 1, %s22
    $region7: #{tpu_custom_call.1} parent=1 // loop_footer_branch
      %21 = sbr.rel target = $region3
    $region8: #{tpu_custom_call.1} parent=1 // loop_exit
      _
    %7365 = vsyncpa [#allocation5], 1
    %s7366 = scalar_lea.sflag [#allocation5], 1
    %7367 = vsyncpa %s7366, 1
    %7368 = vsyncpa [#allocation8], 1
    %7369 = vsyncpa [#allocation11], 1
    %7370 = vsyncpa [#allocation14], 1
    %7371 = vsyncpa [#allocation6], 1
    %s7372 = scalar_lea.sflag [#allocation6], 1
    %7373 = vsyncpa %s7372, 1

</llo_original>
